<compile_context>
chip_gen: v7x
topology: tpu7x:2x2x1
jax: 0.10.0
libtpu: 0.0.40
codegen_flags: <defaults>
</compile_context>

<pallas_src>
import functools
import numpy as np
import jax
import jax.numpy as jnp
from jax.experimental import pallas as pl
from jax.experimental.pallas import tpu as pltpu


# ------------------------------ fused Pallas kernel ------------------------------

def _cond_crp_kernel(x_ref, w_ref, gab_ref, o_ref, *, H, W, C, n_stages, B):
    """One grid step processes B batch samples.

    x_ref   : (B, C, H*W)   channels on sublanes, flattened spatial on lanes
    w_ref   : (S, 9, C, C)  conv weights; [stage, dy*3+dx, cout, cin]
    gab_ref : (B, S, C, 3)  per-sample class-conditional (gamma, alpha, beta)
    o_ref   : (B, C, H*W)
    """
    HW = H * W
    f32 = jnp.float32
    eps = 1e-5

    # Flat-spatial index helpers for halo masking (built once, reused by every stage).
    pos = jax.lax.broadcasted_iota(jnp.int32, (1, 1, HW), 2)        # h*W + w
    if (W & (W - 1)) == 0:
        w_pos = jnp.bitwise_and(pos, W - 1)                         # w
    else:
        w_pos = pos % W

    def shifted(v, oy, ox):
        # t[b, c, h*W + w] = v[b, c, (h+oy)*W + (w+ox)] inside the HxW image, else 0.
        # Spatial shifts are lane rotations (XLU) + compare/select masks: no padded
        # copies are materialized and the VALU critical path is untouched.
        off = oy * W + ox
        t = pltpu.roll(v, shift=(-off) % HW, axis=2) if off % HW else v
        conds = []
        if oy < 0:
            conds.append(pos >= (-oy) * W)
        elif oy > 0:
            conds.append(pos < (H - oy) * W)
        if ox < 0:
            conds.append(w_pos >= -ox)
        elif ox > 0:
            conds.append(w_pos < W - ox)
        if not conds:
            return t
        valid = conds[0]
        for cnd in conds[1:]:
            valid = valid & cnd
        return jnp.where(valid, t, 0.0)

    def avgpool5(p):
        # Separable 5x5, stride 1, pad 2, count_include_pad=True  ->  window sum / 25.
        acc_h = p
        for oy in (-2, -1, 1, 2):
            acc_h = acc_h + shifted(p, oy, 0)
        acc = acc_h
        for ox in (-2, -1, 1, 2):
            acc = acc + shifted(acc_h, 0, ox)
        return acc * (1.0 / 25.0)

    x = jnp.maximum(x_ref[...].astype(f32), 0.0)        # act = ReLU (full-lane)
    path = x
    inv_hw = 1.0 / HW

    for i in range(n_stages):                            # tiny static loop, unrolled
        # ---- ConditionalInstanceNorm2dPlus (bias=True), one-pass statistics ----
        gamma = gab_ref[:, i, :, 0:1].astype(f32)        # (B, C, 1) point-of-use loads
        alpha = gab_ref[:, i, :, 1:2].astype(f32)
        beta = gab_ref[:, i, :, 2:3].astype(f32)
        s1 = jnp.sum(path, axis=2, keepdims=True)               # (B, C, 1)
        s2 = jnp.sum(path * path, axis=2, keepdims=True)
        mu = s1 * inv_hw                                        # per-channel spatial mean
        var = jnp.maximum(s2 * inv_hw - mu * mu, 0.0)           # biased (InstanceNorm2d)
        r = jax.lax.rsqrt(var + eps)
        m = jnp.mean(mu, axis=1, keepdims=True)                 # cross-channel mean
        v = jnp.sum((mu - m) ** 2, axis=1, keepdims=True) / (C - 1)   # unbiased (torch.var)
        mn = (mu - m) * jax.lax.rsqrt(v + eps)
        scale = gamma * r                                       # whole norm folded into one
        shift = gamma * (mn * alpha - mu * r) + beta            # per-channel scale / shift
        p = path * scale + shift                                # (B, C, HW) full-lane FMA

        # ---- AvgPool2d(kernel=5, stride=1, pad=2) ----
        p = avgpool5(p)

        # ---- 3x3 conv, stride 1, pad 1, bias=False ----
        # 9 accumulating (Cout,Cin)@(Cin,HW) MXU matmuls; only one (C,HW) tap and one
        # (C,C) weight tile are live at a time (no im2col tensor, no spills).
        outs = [jnp.zeros((C, HW), f32) for _ in range(B)]
        for dy in range(3):
            rows = shifted(p, dy - 1, 0)
            for dx in range(3):
                tap = shifted(rows, 0, dx - 1)                   # (B, C, HW)
                w_tap = w_ref[i, dy * 3 + dx].astype(f32)        # (Cout, Cin)
                for b in range(B):
                    outs[b] = outs[b] + jnp.dot(w_tap, tap[b],
                                                preferred_element_type=f32)
        path = jnp.stack(outs, axis=0)                           # (B, C, HW)
        x = x + path

    o_ref[...] = x.astype(o_ref.dtype)                           # lane-dense (256) store


def cond_crp_forward(params, x_nchw, y, *, block_batch=1):
    """CondCRPBlock forward. x_nchw: (N, C, H, W) float32, y: (N,) int class labels."""
    N, C, H, W = x_nchw.shape
    HW = H * W
    conv_w = params['conv_w']                       # (S, 3, 3, Cin, Cout)  HWIO per stage
    S = conv_w.shape[0]
    # (S, 9, Cout, Cin): w2[s, dy*3+dx, co, ci] = conv_w[s, dy, dx, ci, co]
    w2 = jnp.transpose(conv_w, (0, 1, 2, 4, 3)).reshape(S, 9, C, C)

    # Class-conditional affine params: the nn.Embedding gather stays in plain JAX.
    emb = params['embed']                           # (S, num_classes, 3*C) = [gamma|alpha|beta]
    sel = jnp.transpose(emb[:, y, :], (1, 0, 2))    # (N, S, 3*C)
    gab = jnp.stack([sel[..., :C], sel[..., C:2 * C], sel[..., 2 * C:]], axis=-1)  # (N,S,C,3)

    # NCHW -> (N, C, H*W): a free reshape (no transpose); spatial goes on lanes.
    x_flat = x_nchw.reshape(N, C, HW)

    B = block_batch
    assert B >= 1 and N % B == 0, (N, B)
    kernel = functools.partial(_cond_crp_kernel, H=H, W=W, C=C, n_stages=S, B=B)
    out_flat = pl.pallas_call(
        kernel,
        out_shape=jax.ShapeDtypeStruct((N, C, HW), x_nchw.dtype),
        grid=(N // B,),
        in_specs=[
            pl.BlockSpec((B, C, HW), lambda n: (n, 0, 0)),        # x (B samples / step)
            pl.BlockSpec((S, 9, C, C), lambda n: (0, 0, 0, 0)),   # conv weights (resident)
            pl.BlockSpec((B, S, C, 3), lambda n: (n, 0, 0, 0)),   # gamma / alpha / beta
        ],
        out_specs=pl.BlockSpec((B, C, HW), lambda n: (n, 0, 0)),
        compiler_params=pltpu.CompilerParams(dimension_semantics=("parallel",)),
    )(x_flat, w2, gab)
    return out_flat.reshape(N, C, H, W)


# ------------------------------- parameter init ----------------------------------

def init_cond_crp_params(key, features, n_stages, num_classes):
    """Synthetic params matching CondCRPBlock(features, n_stages, num_classes, CondInstanceNorm2dPlus)."""
    kw, kg, kb = jax.random.split(key, 3)
    conv_w = jax.random.normal(
        kw, (n_stages, 3, 3, features, features), jnp.float32) * 0.1       # bias=False convs
    # ConditionalInstanceNorm2dPlus embedding: gamma/alpha ~ N(1, 0.02); beta small (0 in the
    # PyTorch init, randomized slightly here so the beta path is actually exercised).
    ga = 1.0 + 0.02 * jax.random.normal(kg, (n_stages, num_classes, 2 * features), jnp.float32)
    beta = 0.05 * jax.random.normal(kb, (n_stages, num_classes, features), jnp.float32)
    embed = jnp.concatenate([ga, beta], axis=-1)                            # (S, num_classes, 3*C)
    return {'conv_w': conv_w, 'embed': embed}


# -------------------------- plain-JAX reference (checking) -----------------------

def _ref_norm(x, gamma, alpha, beta):
    # ConditionalInstanceNorm2dPlus on NCHW x; gamma/alpha/beta: (N, C).
    C = x.shape[1]
    means = jnp.mean(x, axis=(2, 3))                                  # (N, C)
    m = jnp.mean(means, axis=1, keepdims=True)
    v = jnp.sum((means - m) ** 2, axis=1, keepdims=True) / (C - 1)    # unbiased
    means_n = (means - m) / jnp.sqrt(v + 1e-5)
    mu = jnp.mean(x, axis=(2, 3), keepdims=True)
    var = jnp.mean((x - mu) ** 2, axis=(2, 3), keepdims=True)
    h = (x - mu) / jnp.sqrt(var + 1e-5)
    h = h + (means_n * alpha)[:, :, None, None]
    return gamma[:, :, None, None] * h + beta[:, :, None, None]


def _ref_pool(x):
    # AvgPool2d(5, stride=1, padding=2), count_include_pad=True.
    s = jax.lax.reduce_window(x, 0.0, jax.lax.add, (1, 1, 5, 5), (1, 1, 1, 1),
                              ((0, 0), (0, 0), (2, 2), (2, 2)))
    return s / 25.0


def _ref_conv(x, w_hwio):
    return jax.lax.conv_general_dilated(
        x, w_hwio, window_strides=(1, 1), padding=((1, 1), (1, 1)),
        dimension_numbers=('NCHW', 'HWIO', 'NCHW'),
        precision=jax.lax.Precision.HIGHEST)


def _ref_forward(params, x, y):
    C = x.shape[1]
    S = params['conv_w'].shape[0]
    x = jnp.maximum(x, 0.0)
    path = x
    for i in range(S):
        e = params['embed'][i][y]                                      # (N, 3C)
        gamma, alpha, beta = e[:, :C], e[:, C:2 * C], e[:, 2 * C:]
        path = _ref_norm(path, gamma, alpha, beta)
        path = _ref_pool(path)
        path = _ref_conv(path, params['conv_w'][i])
        x = path + x
    return x


# ------------------------------------ main ---------------------------------------

if __name__ == "__main__":
    key = jax.random.PRNGKey(0)
    N, C, H, W = 4, 32, 16, 16
    n_stages = 2
    num_classes = 10

    kx, kp = jax.random.split(key, 2)
    x = jax.random.normal(kx, (N, C, H, W), jnp.float32)
    y = jnp.array([1, 7, 3, 0], dtype=jnp.int32)
    params = init_cond_crp_params(kp, C, n_stages, num_classes)

    # block_batch=2 -> grid=(2,): batch blocking + an even grid so both v7x TCs are used.
    out = cond_crp_forward(params, x, y, block_batch=2)
    out = jax.block_until_ready(out)
    assert out.shape == (N, C, H, W), out.shape

    ref = _ref_forward(params, x, y)
    np.testing.assert_allclose(np.asarray(out), np.asarray(ref), rtol=1e-3, atol=1e-3)
    print("KERNEL_OK")
</pallas_src>

<mosaic_0001>
module attributes {stable_mosaic.version = 11 : i64} {
  func.func @_cond_crp_kernel(%arg0: i32, %arg1: memref<2x32x256xf32, #tpu.memory_space<vmem>>, %arg2: memref<2x9x32x32xf32, #tpu.memory_space<vmem>>, %arg3: memref<2x2x32x3xf32, #tpu.memory_space<vmem>>, %arg4: memref<2x32x256xf32, #tpu.memory_space<vmem>>) attributes {dimension_semantics = [#tpu.dimension_semantics<parallel>], iteration_bounds = array<i64: 2>, scalar_prefetch = 0 : i64, scratch_operands = 0 : i64, tpu.core_type = #tpu.core_type<tc>, window_params = [{transform_indices = @transform_0, window_bounds = array<i64: 2, 32, 256>}, {pipeline_mode = #tpu.pipeline_mode<synchronous>, transform_indices = @transform_1, window_bounds = array<i64: 2, 9, 32, 32>}, {transform_indices = @transform_2, window_bounds = array<i64: 2, 2, 32, 3>}, {transform_indices = @transform_3, window_bounds = array<i64: 2, 32, 256>}]} {
    %0 = tpu.iota {dimensions = array<i32: 2>} : vector<1x1x256xi32>
    %c15_i32 = arith.constant 15 : i32
    %1 = vector.broadcast %c15_i32 : i32 to vector<1x1x256xi32>
    %2 = arith.andi %0, %1 : vector<1x1x256xi32>
    %c0 = arith.constant 0 : index
    %c0_0 = arith.constant 0 : index
    %c0_1 = arith.constant 0 : index
    %3 = vector.load %arg1[%c0, %c0_0, %c0_1] : memref<2x32x256xf32, #tpu.memory_space<vmem>>, vector<2x32x256xf32>
    %cst = arith.constant 0.000000e+00 : f32
    %4 = vector.broadcast %cst : f32 to vector<2x32x256xf32>
    %5 = arith.maximumf %3, %4 : vector<2x32x256xf32>
    %c0_2 = arith.constant 0 : index
    %c0_3 = arith.constant 0 : index
    %c0_4 = arith.constant 0 : index
    %c0_5 = arith.constant 0 : index
    %6 = vector.load %arg3[%c0_2, %c0_3, %c0_4, %c0_5] : memref<2x2x32x3xf32, #tpu.memory_space<vmem>>, vector<2x1x32x1xf32>
    %7 = vector.shape_cast %6 : vector<2x1x32x1xf32> to vector<2x32x1xf32>
    %c0_6 = arith.constant 0 : index
    %c0_7 = arith.constant 0 : index
    %c0_8 = arith.constant 0 : index
    %c1 = arith.constant 1 : index
    %8 = vector.load %arg3[%c0_6, %c0_7, %c0_8, %c1] : memref<2x2x32x3xf32, #tpu.memory_space<vmem>>, vector<2x1x32x1xf32>
    %9 = vector.shape_cast %8 : vector<2x1x32x1xf32> to vector<2x32x1xf32>
    %c0_9 = arith.constant 0 : index
    %c0_10 = arith.constant 0 : index
    %c0_11 = arith.constant 0 : index
    %c2 = arith.constant 2 : index
    %10 = vector.load %arg3[%c0_9, %c0_10, %c0_11, %c2] : memref<2x2x32x3xf32, #tpu.memory_space<vmem>>, vector<2x1x32x1xf32>
    %11 = vector.shape_cast %10 : vector<2x1x32x1xf32> to vector<2x32x1xf32>
    %cst_12 = arith.constant dense<0.000000e+00> : vector<2x32xf32>
    %12 = vector.multi_reduction <add>, %5, %cst_12 [2] : vector<2x32x256xf32> to vector<2x32xf32>
    %13 = vector.shape_cast %12 : vector<2x32xf32> to vector<2x32x1xf32>
    %14 = arith.mulf %5, %5 : vector<2x32x256xf32>
    %cst_13 = arith.constant dense<0.000000e+00> : vector<2x32xf32>
    %15 = vector.multi_reduction <add>, %14, %cst_13 [2] : vector<2x32x256xf32> to vector<2x32xf32>
    %16 = vector.shape_cast %15 : vector<2x32xf32> to vector<2x32x1xf32>
    %cst_14 = arith.constant 3.906250e-03 : f32
    %17 = vector.broadcast %cst_14 : f32 to vector<2x32x1xf32>
    %18 = arith.mulf %13, %17 : vector<2x32x1xf32>
    %cst_15 = arith.constant 3.906250e-03 : f32
    %19 = vector.broadcast %cst_15 : f32 to vector<2x32x1xf32>
    %20 = arith.mulf %16, %19 : vector<2x32x1xf32>
    %21 = arith.mulf %18, %18 : vector<2x32x1xf32>
    %22 = arith.subf %20, %21 : vector<2x32x1xf32>
    %cst_16 = arith.constant 0.000000e+00 : f32
    %23 = vector.broadcast %cst_16 : f32 to vector<2x32x1xf32>
    %24 = arith.maximumf %22, %23 : vector<2x32x1xf32>
    %cst_17 = arith.constant 9.99999974E-6 : f32
    %25 = vector.broadcast %cst_17 : f32 to vector<2x32x1xf32>
    %26 = arith.addf %24, %25 : vector<2x32x1xf32>
    %27 = math.rsqrt %26 : vector<2x32x1xf32>
    %cst_18 = arith.constant dense<0.000000e+00> : vector<2x1xf32>
    %28 = vector.multi_reduction <add>, %18, %cst_18 [1] : vector<2x32x1xf32> to vector<2x1xf32>
    %29 = vector.shape_cast %28 : vector<2x1xf32> to vector<2x1x1xf32>
    %cst_19 = arith.constant 3.200000e+01 : f32
    %30 = vector.broadcast %cst_19 : f32 to vector<2x1x1xf32>
    %31 = arith.divf %29, %30 : vector<2x1x1xf32>
    %32 = vector.broadcast %31 : vector<2x1x1xf32> to vector<2x32x1xf32>
    %33 = arith.subf %18, %32 : vector<2x32x1xf32>
    %34 = arith.mulf %33, %33 : vector<2x32x1xf32>
    %cst_20 = arith.constant dense<0.000000e+00> : vector<2x1xf32>
    %35 = vector.multi_reduction <add>, %34, %cst_20 [1] : vector<2x32x1xf32> to vector<2x1xf32>
    %36 = vector.shape_cast %35 : vector<2x1xf32> to vector<2x1x1xf32>
    %cst_21 = arith.constant 3.100000e+01 : f32
    %37 = vector.broadcast %cst_21 : f32 to vector<2x1x1xf32>
    %38 = arith.divf %36, %37 : vector<2x1x1xf32>
    %39 = vector.broadcast %31 : vector<2x1x1xf32> to vector<2x32x1xf32>
    %40 = arith.subf %18, %39 : vector<2x32x1xf32>
    %cst_22 = arith.constant 9.99999974E-6 : f32
    %41 = vector.broadcast %cst_22 : f32 to vector<2x1x1xf32>
    %42 = arith.addf %38, %41 : vector<2x1x1xf32>
    %43 = math.rsqrt %42 : vector<2x1x1xf32>
    %44 = vector.broadcast %43 : vector<2x1x1xf32> to vector<2x32x1xf32>
    %45 = arith.mulf %40, %44 : vector<2x32x1xf32>
    %46 = arith.mulf %7, %27 : vector<2x32x1xf32>
    %47 = arith.mulf %45, %9 : vector<2x32x1xf32>
    %48 = arith.mulf %18, %27 : vector<2x32x1xf32>
    %49 = arith.subf %47, %48 : vector<2x32x1xf32>
    %50 = arith.mulf %7, %49 : vector<2x32x1xf32>
    %51 = arith.addf %50, %11 : vector<2x32x1xf32>
    %52 = vector.broadcast %46 : vector<2x32x1xf32> to vector<2x32x256xf32>
    %53 = arith.mulf %5, %52 : vector<2x32x256xf32>
    %54 = vector.broadcast %51 : vector<2x32x1xf32> to vector<2x32x256xf32>
    %55 = arith.addf %53, %54 : vector<2x32x256xf32>
    %c32_i32 = arith.constant 32 : i32
    %56 = tpu.dynamic_rotate %55 by %c32_i32 dim 2 : vector<2x32x256xf32>, i32 -> vector<2x32x256xf32>
    %c32_i32_23 = arith.constant 32 : i32
    %57 = vector.broadcast %c32_i32_23 : i32 to vector<1x1x256xi32>
    %58 = arith.cmpi sge, %0, %57 : vector<1x1x256xi32>
    %cst_24 = arith.constant 0.000000e+00 : f32
    %59 = vector.shape_cast %58 : vector<1x1x256xi1> to vector<1x1x256xi1>
    %60 = vector.broadcast %59 : vector<1x1x256xi1> to vector<2x32x256xi1>
    %61 = vector.broadcast %cst_24 : f32 to vector<2x32x256xf32>
    %62 = arith.select %60, %56, %61 : vector<2x32x256xi1>, vector<2x32x256xf32>
    %63 = arith.addf %55, %62 : vector<2x32x256xf32>
    %c16_i32 = arith.constant 16 : i32
    %64 = tpu.dynamic_rotate %55 by %c16_i32 dim 2 : vector<2x32x256xf32>, i32 -> vector<2x32x256xf32>
    %c16_i32_25 = arith.constant 16 : i32
    %65 = vector.broadcast %c16_i32_25 : i32 to vector<1x1x256xi32>
    %66 = arith.cmpi sge, %0, %65 : vector<1x1x256xi32>
    %cst_26 = arith.constant 0.000000e+00 : f32
    %67 = vector.shape_cast %66 : vector<1x1x256xi1> to vector<1x1x256xi1>
    %68 = vector.broadcast %67 : vector<1x1x256xi1> to vector<2x32x256xi1>
    %69 = vector.broadcast %cst_26 : f32 to vector<2x32x256xf32>
    %70 = arith.select %68, %64, %69 : vector<2x32x256xi1>, vector<2x32x256xf32>
    %71 = arith.addf %63, %70 : vector<2x32x256xf32>
    %c240_i32 = arith.constant 240 : i32
    %72 = tpu.dynamic_rotate %55 by %c240_i32 dim 2 : vector<2x32x256xf32>, i32 -> vector<2x32x256xf32>
    %c240_i32_27 = arith.constant 240 : i32
    %73 = vector.broadcast %c240_i32_27 : i32 to vector<1x1x256xi32>
    %74 = arith.cmpi slt, %0, %73 : vector<1x1x256xi32>
    %cst_28 = arith.constant 0.000000e+00 : f32
    %75 = vector.shape_cast %74 : vector<1x1x256xi1> to vector<1x1x256xi1>
    %76 = vector.broadcast %75 : vector<1x1x256xi1> to vector<2x32x256xi1>
    %77 = vector.broadcast %cst_28 : f32 to vector<2x32x256xf32>
    %78 = arith.select %76, %72, %77 : vector<2x32x256xi1>, vector<2x32x256xf32>
    %79 = arith.addf %71, %78 : vector<2x32x256xf32>
    %c224_i32 = arith.constant 224 : i32
    %80 = tpu.dynamic_rotate %55 by %c224_i32 dim 2 : vector<2x32x256xf32>, i32 -> vector<2x32x256xf32>
    %c224_i32_29 = arith.constant 224 : i32
    %81 = vector.broadcast %c224_i32_29 : i32 to vector<1x1x256xi32>
    %82 = arith.cmpi slt, %0, %81 : vector<1x1x256xi32>
    %cst_30 = arith.constant 0.000000e+00 : f32
    %83 = vector.shape_cast %82 : vector<1x1x256xi1> to vector<1x1x256xi1>
    %84 = vector.broadcast %83 : vector<1x1x256xi1> to vector<2x32x256xi1>
    %85 = vector.broadcast %cst_30 : f32 to vector<2x32x256xf32>
    %86 = arith.select %84, %80, %85 : vector<2x32x256xi1>, vector<2x32x256xf32>
    %87 = arith.addf %79, %86 : vector<2x32x256xf32>
    %c2_i32 = arith.constant 2 : i32
    %88 = tpu.dynamic_rotate %87 by %c2_i32 dim 2 : vector<2x32x256xf32>, i32 -> vector<2x32x256xf32>
    %c2_i32_31 = arith.constant 2 : i32
    %89 = vector.broadcast %c2_i32_31 : i32 to vector<1x1x256xi32>
    %90 = arith.cmpi sge, %2, %89 : vector<1x1x256xi32>
    %cst_32 = arith.constant 0.000000e+00 : f32
    %91 = vector.shape_cast %90 : vector<1x1x256xi1> to vector<1x1x256xi1>
    %92 = vector.broadcast %91 : vector<1x1x256xi1> to vector<2x32x256xi1>
    %93 = vector.broadcast %cst_32 : f32 to vector<2x32x256xf32>
    %94 = arith.select %92, %88, %93 : vector<2x32x256xi1>, vector<2x32x256xf32>
    %95 = arith.addf %87, %94 : vector<2x32x256xf32>
    %c1_i32 = arith.constant 1 : i32
    %96 = tpu.dynamic_rotate %87 by %c1_i32 dim 2 : vector<2x32x256xf32>, i32 -> vector<2x32x256xf32>
    %c1_i32_33 = arith.constant 1 : i32
    %97 = vector.broadcast %c1_i32_33 : i32 to vector<1x1x256xi32>
    %98 = arith.cmpi sge, %2, %97 : vector<1x1x256xi32>
    %cst_34 = arith.constant 0.000000e+00 : f32
    %99 = vector.shape_cast %98 : vector<1x1x256xi1> to vector<1x1x256xi1>
    %100 = vector.broadcast %99 : vector<1x1x256xi1> to vector<2x32x256xi1>
    %101 = vector.broadcast %cst_34 : f32 to vector<2x32x256xf32>
    %102 = arith.select %100, %96, %101 : vector<2x32x256xi1>, vector<2x32x256xf32>
    %103 = arith.addf %95, %102 : vector<2x32x256xf32>
    %c255_i32 = arith.constant 255 : i32
    %104 = tpu.dynamic_rotate %87 by %c255_i32 dim 2 : vector<2x32x256xf32>, i32 -> vector<2x32x256xf32>
    %c15_i32_35 = arith.constant 15 : i32
    %105 = vector.broadcast %c15_i32_35 : i32 to vector<1x1x256xi32>
    %106 = arith.cmpi slt, %2, %105 : vector<1x1x256xi32>
    %cst_36 = arith.constant 0.000000e+00 : f32
    %107 = vector.shape_cast %106 : vector<1x1x256xi1> to vector<1x1x256xi1>
    %108 = vector.broadcast %107 : vector<1x1x256xi1> to vector<2x32x256xi1>
    %109 = vector.broadcast %cst_36 : f32 to vector<2x32x256xf32>
    %110 = arith.select %108, %104, %109 : vector<2x32x256xi1>, vector<2x32x256xf32>
    %111 = arith.addf %103, %110 : vector<2x32x256xf32>
    %c254_i32 = arith.constant 254 : i32
    %112 = tpu.dynamic_rotate %87 by %c254_i32 dim 2 : vector<2x32x256xf32>, i32 -> vector<2x32x256xf32>
    %c14_i32 = arith.constant 14 : i32
    %113 = vector.broadcast %c14_i32 : i32 to vector<1x1x256xi32>
    %114 = arith.cmpi slt, %2, %113 : vector<1x1x256xi32>
    %cst_37 = arith.constant 0.000000e+00 : f32
    %115 = vector.shape_cast %114 : vector<1x1x256xi1> to vector<1x1x256xi1>
    %116 = vector.broadcast %115 : vector<1x1x256xi1> to vector<2x32x256xi1>
    %117 = vector.broadcast %cst_37 : f32 to vector<2x32x256xf32>
    %118 = arith.select %116, %112, %117 : vector<2x32x256xi1>, vector<2x32x256xf32>
    %119 = arith.addf %111, %118 : vector<2x32x256xf32>
    %cst_38 = arith.constant 4.000000e-02 : f32
    %120 = vector.broadcast %cst_38 : f32 to vector<2x32x256xf32>
    %121 = arith.mulf %119, %120 : vector<2x32x256xf32>
    %cst_39 = arith.constant 0.000000e+00 : f32
    %122 = vector.broadcast %cst_39 : f32 to vector<32x256xf32>
    %cst_40 = arith.constant 0.000000e+00 : f32
    %123 = vector.broadcast %cst_40 : f32 to vector<32x256xf32>
    %c16_i32_41 = arith.constant 16 : i32
    %124 = tpu.dynamic_rotate %121 by %c16_i32_41 dim 2 : vector<2x32x256xf32>, i32 -> vector<2x32x256xf32>
    %c16_i32_42 = arith.constant 16 : i32
    %125 = vector.broadcast %c16_i32_42 : i32 to vector<1x1x256xi32>
    %126 = arith.cmpi sge, %0, %125 : vector<1x1x256xi32>
    %cst_43 = arith.constant 0.000000e+00 : f32
    %127 = vector.shape_cast %126 : vector<1x1x256xi1> to vector<1x1x256xi1>
    %128 = vector.broadcast %127 : vector<1x1x256xi1> to vector<2x32x256xi1>
    %129 = vector.broadcast %cst_43 : f32 to vector<2x32x256xf32>
    %130 = arith.select %128, %124, %129 : vector<2x32x256xi1>, vector<2x32x256xf32>
    %c1_i32_44 = arith.constant 1 : i32
    %131 = tpu.dynamic_rotate %130 by %c1_i32_44 dim 2 : vector<2x32x256xf32>, i32 -> vector<2x32x256xf32>
    %c1_i32_45 = arith.constant 1 : i32
    %132 = vector.broadcast %c1_i32_45 : i32 to vector<1x1x256xi32>
    %133 = arith.cmpi sge, %2, %132 : vector<1x1x256xi32>
    %cst_46 = arith.constant 0.000000e+00 : f32
    %134 = vector.shape_cast %133 : vector<1x1x256xi1> to vector<1x1x256xi1>
    %135 = vector.broadcast %134 : vector<1x1x256xi1> to vector<2x32x256xi1>
    %136 = vector.broadcast %cst_46 : f32 to vector<2x32x256xf32>
    %137 = arith.select %135, %131, %136 : vector<2x32x256xi1>, vector<2x32x256xf32>
    %c0_47 = arith.constant 0 : index
    %c0_48 = arith.constant 0 : index
    %c0_49 = arith.constant 0 : index
    %c0_50 = arith.constant 0 : index
    %138 = vector.load %arg2[%c0_47, %c0_48, %c0_49, %c0_50] : memref<2x9x32x32xf32, #tpu.memory_space<vmem>>, vector<1x1x32x32xf32>
    %139 = vector.shape_cast %138 : vector<1x1x32x32xf32> to vector<32x32xf32>
    %140 = vector.extract_strided_slice %137 {offsets = [0, 0, 0], sizes = [1, 32, 256], strides = [1, 1, 1]} : vector<2x32x256xf32> to vector<1x32x256xf32>
    %141 = vector.shape_cast %140 : vector<1x32x256xf32> to vector<32x256xf32>
    %cst_51 = arith.constant dense<0.000000e+00> : vector<32x256xf32>
    %142 = tpu.matmul %139, %141, %cst_51 {dimension_numbers = #tpu.dot_dimension_numbers<[1], [0], [0], [1], [0, 0, 1, 1], [], []>} : vector<32x32xf32>, vector<32x256xf32>, vector<32x256xf32> -> vector<32x256xf32>
    %143 = arith.addf %122, %142 : vector<32x256xf32>
    %144 = vector.extract_strided_slice %137 {offsets = [1, 0, 0], sizes = [1, 32, 256], strides = [1, 1, 1]} : vector<2x32x256xf32> to vector<1x32x256xf32>
    %145 = vector.shape_cast %144 : vector<1x32x256xf32> to vector<32x256xf32>
    %cst_52 = arith.constant dense<0.000000e+00> : vector<32x256xf32>
    %146 = tpu.matmul %139, %145, %cst_52 {dimension_numbers = #tpu.dot_dimension_numbers<[1], [0], [0], [1], [0, 0, 1, 1], [], []>} : vector<32x32xf32>, vector<32x256xf32>, vector<32x256xf32> -> vector<32x256xf32>
    %147 = arith.addf %123, %146 : vector<32x256xf32>
    %c0_53 = arith.constant 0 : index
    %c1_54 = arith.constant 1 : index
    %c0_55 = arith.constant 0 : index
    %c0_56 = arith.constant 0 : index
    %148 = vector.load %arg2[%c0_53, %c1_54, %c0_55, %c0_56] : memref<2x9x32x32xf32, #tpu.memory_space<vmem>>, vector<1x1x32x32xf32>
    %149 = vector.shape_cast %148 : vector<1x1x32x32xf32> to vector<32x32xf32>
    %150 = vector.extract_strided_slice %130 {offsets = [0, 0, 0], sizes = [1, 32, 256], strides = [1, 1, 1]} : vector<2x32x256xf32> to vector<1x32x256xf32>
    %151 = vector.shape_cast %150 : vector<1x32x256xf32> to vector<32x256xf32>
    %cst_57 = arith.constant dense<0.000000e+00> : vector<32x256xf32>
    %152 = tpu.matmul %149, %151, %cst_57 {dimension_numbers = #tpu.dot_dimension_numbers<[1], [0], [0], [1], [0, 0, 1, 1], [], []>} : vector<32x32xf32>, vector<32x256xf32>, vector<32x256xf32> -> vector<32x256xf32>
    %153 = arith.addf %143, %152 : vector<32x256xf32>
    %154 = vector.extract_strided_slice %130 {offsets = [1, 0, 0], sizes = [1, 32, 256], strides = [1, 1, 1]} : vector<2x32x256xf32> to vector<1x32x256xf32>
    %155 = vector.shape_cast %154 : vector<1x32x256xf32> to vector<32x256xf32>
    %cst_58 = arith.constant dense<0.000000e+00> : vector<32x256xf32>
    %156 = tpu.matmul %149, %155, %cst_58 {dimension_numbers = #tpu.dot_dimension_numbers<[1], [0], [0], [1], [0, 0, 1, 1], [], []>} : vector<32x32xf32>, vector<32x256xf32>, vector<32x256xf32> -> vector<32x256xf32>
    %157 = arith.addf %147, %156 : vector<32x256xf32>
    %c255_i32_59 = arith.constant 255 : i32
    %158 = tpu.dynamic_rotate %130 by %c255_i32_59 dim 2 : vector<2x32x256xf32>, i32 -> vector<2x32x256xf32>
    %c15_i32_60 = arith.constant 15 : i32
    %159 = vector.broadcast %c15_i32_60 : i32 to vector<1x1x256xi32>
    %160 = arith.cmpi slt, %2, %159 : vector<1x1x256xi32>
    %cst_61 = arith.constant 0.000000e+00 : f32
    %161 = vector.shape_cast %160 : vector<1x1x256xi1> to vector<1x1x256xi1>
    %162 = vector.broadcast %161 : vector<1x1x256xi1> to vector<2x32x256xi1>
    %163 = vector.broadcast %cst_61 : f32 to vector<2x32x256xf32>
    %164 = arith.select %162, %158, %163 : vector<2x32x256xi1>, vector<2x32x256xf32>
    %c0_62 = arith.constant 0 : index
    %c2_63 = arith.constant 2 : index
    %c0_64 = arith.constant 0 : index
    %c0_65 = arith.constant 0 : index
    %165 = vector.load %arg2[%c0_62, %c2_63, %c0_64, %c0_65] : memref<2x9x32x32xf32, #tpu.memory_space<vmem>>, vector<1x1x32x32xf32>
    %166 = vector.shape_cast %165 : vector<1x1x32x32xf32> to vector<32x32xf32>
    %167 = vector.extract_strided_slice %164 {offsets = [0, 0, 0], sizes = [1, 32, 256], strides = [1, 1, 1]} : vector<2x32x256xf32> to vector<1x32x256xf32>
    %168 = vector.shape_cast %167 : vector<1x32x256xf32> to vector<32x256xf32>
    %cst_66 = arith.constant dense<0.000000e+00> : vector<32x256xf32>
    %169 = tpu.matmul %166, %168, %cst_66 {dimension_numbers = #tpu.dot_dimension_numbers<[1], [0], [0], [1], [0, 0, 1, 1], [], []>} : vector<32x32xf32>, vector<32x256xf32>, vector<32x256xf32> -> vector<32x256xf32>
    %170 = arith.addf %153, %169 : vector<32x256xf32>
    %171 = vector.extract_strided_slice %164 {offsets = [1, 0, 0], sizes = [1, 32, 256], strides = [1, 1, 1]} : vector<2x32x256xf32> to vector<1x32x256xf32>
    %172 = vector.shape_cast %171 : vector<1x32x256xf32> to vector<32x256xf32>
    %cst_67 = arith.constant dense<0.000000e+00> : vector<32x256xf32>
    %173 = tpu.matmul %166, %172, %cst_67 {dimension_numbers = #tpu.dot_dimension_numbers<[1], [0], [0], [1], [0, 0, 1, 1], [], []>} : vector<32x32xf32>, vector<32x256xf32>, vector<32x256xf32> -> vector<32x256xf32>
    %174 = arith.addf %157, %173 : vector<32x256xf32>
    %c1_i32_68 = arith.constant 1 : i32
    %175 = tpu.dynamic_rotate %121 by %c1_i32_68 dim 2 : vector<2x32x256xf32>, i32 -> vector<2x32x256xf32>
    %c1_i32_69 = arith.constant 1 : i32
    %176 = vector.broadcast %c1_i32_69 : i32 to vector<1x1x256xi32>
    %177 = arith.cmpi sge, %2, %176 : vector<1x1x256xi32>
    %cst_70 = arith.constant 0.000000e+00 : f32
    %178 = vector.shape_cast %177 : vector<1x1x256xi1> to vector<1x1x256xi1>
    %179 = vector.broadcast %178 : vector<1x1x256xi1> to vector<2x32x256xi1>
    %180 = vector.broadcast %cst_70 : f32 to vector<2x32x256xf32>
    %181 = arith.select %179, %175, %180 : vector<2x32x256xi1>, vector<2x32x256xf32>
    %c0_71 = arith.constant 0 : index
    %c3 = arith.constant 3 : index
    %c0_72 = arith.constant 0 : index
    %c0_73 = arith.constant 0 : index
    %182 = vector.load %arg2[%c0_71, %c3, %c0_72, %c0_73] : memref<2x9x32x32xf32, #tpu.memory_space<vmem>>, vector<1x1x32x32xf32>
    %183 = vector.shape_cast %182 : vector<1x1x32x32xf32> to vector<32x32xf32>
    %184 = vector.extract_strided_slice %181 {offsets = [0, 0, 0], sizes = [1, 32, 256], strides = [1, 1, 1]} : vector<2x32x256xf32> to vector<1x32x256xf32>
    %185 = vector.shape_cast %184 : vector<1x32x256xf32> to vector<32x256xf32>
    %cst_74 = arith.constant dense<0.000000e+00> : vector<32x256xf32>
    %186 = tpu.matmul %183, %185, %cst_74 {dimension_numbers = #tpu.dot_dimension_numbers<[1], [0], [0], [1], [0, 0, 1, 1], [], []>} : vector<32x32xf32>, vector<32x256xf32>, vector<32x256xf32> -> vector<32x256xf32>
    %187 = arith.addf %170, %186 : vector<32x256xf32>
    %188 = vector.extract_strided_slice %181 {offsets = [1, 0, 0], sizes = [1, 32, 256], strides = [1, 1, 1]} : vector<2x32x256xf32> to vector<1x32x256xf32>
    %189 = vector.shape_cast %188 : vector<1x32x256xf32> to vector<32x256xf32>
    %cst_75 = arith.constant dense<0.000000e+00> : vector<32x256xf32>
    %190 = tpu.matmul %183, %189, %cst_75 {dimension_numbers = #tpu.dot_dimension_numbers<[1], [0], [0], [1], [0, 0, 1, 1], [], []>} : vector<32x32xf32>, vector<32x256xf32>, vector<32x256xf32> -> vector<32x256xf32>
    %191 = arith.addf %174, %190 : vector<32x256xf32>
    %c0_76 = arith.constant 0 : index
    %c4 = arith.constant 4 : index
    %c0_77 = arith.constant 0 : index
    %c0_78 = arith.constant 0 : index
    %192 = vector.load %arg2[%c0_76, %c4, %c0_77, %c0_78] : memref<2x9x32x32xf32, #tpu.memory_space<vmem>>, vector<1x1x32x32xf32>
    %193 = vector.shape_cast %192 : vector<1x1x32x32xf32> to vector<32x32xf32>
    %194 = vector.extract_strided_slice %121 {offsets = [0, 0, 0], sizes = [1, 32, 256], strides = [1, 1, 1]} : vector<2x32x256xf32> to vector<1x32x256xf32>
    %195 = vector.shape_cast %194 : vector<1x32x256xf32> to vector<32x256xf32>
    %cst_79 = arith.constant dense<0.000000e+00> : vector<32x256xf32>
    %196 = tpu.matmul %193, %195, %cst_79 {dimension_numbers = #tpu.dot_dimension_numbers<[1], [0], [0], [1], [0, 0, 1, 1], [], []>} : vector<32x32xf32>, vector<32x256xf32>, vector<32x256xf32> -> vector<32x256xf32>
    %197 = arith.addf %187, %196 : vector<32x256xf32>
    %198 = vector.extract_strided_slice %121 {offsets = [1, 0, 0], sizes = [1, 32, 256], strides = [1, 1, 1]} : vector<2x32x256xf32> to vector<1x32x256xf32>
    %199 = vector.shape_cast %198 : vector<1x32x256xf32> to vector<32x256xf32>
    %cst_80 = arith.constant dense<0.000000e+00> : vector<32x256xf32>
    %200 = tpu.matmul %193, %199, %cst_80 {dimension_numbers = #tpu.dot_dimension_numbers<[1], [0], [0], [1], [0, 0, 1, 1], [], []>} : vector<32x32xf32>, vector<32x256xf32>, vector<32x256xf32> -> vector<32x256xf32>
    %201 = arith.addf %191, %200 : vector<32x256xf32>
    %c255_i32_81 = arith.constant 255 : i32
    %202 = tpu.dynamic_rotate %121 by %c255_i32_81 dim 2 : vector<2x32x256xf32>, i32 -> vector<2x32x256xf32>
    %c15_i32_82 = arith.constant 15 : i32
    %203 = vector.broadcast %c15_i32_82 : i32 to vector<1x1x256xi32>
    %204 = arith.cmpi slt, %2, %203 : vector<1x1x256xi32>
    %cst_83 = arith.constant 0.000000e+00 : f32
    %205 = vector.shape_cast %204 : vector<1x1x256xi1> to vector<1x1x256xi1>
    %206 = vector.broadcast %205 : vector<1x1x256xi1> to vector<2x32x256xi1>
    %207 = vector.broadcast %cst_83 : f32 to vector<2x32x256xf32>
    %208 = arith.select %206, %202, %207 : vector<2x32x256xi1>, vector<2x32x256xf32>
    %c0_84 = arith.constant 0 : index
    %c5 = arith.constant 5 : index
    %c0_85 = arith.constant 0 : index
    %c0_86 = arith.constant 0 : index
    %209 = vector.load %arg2[%c0_84, %c5, %c0_85, %c0_86] : memref<2x9x32x32xf32, #tpu.memory_space<vmem>>, vector<1x1x32x32xf32>
    %210 = vector.shape_cast %209 : vector<1x1x32x32xf32> to vector<32x32xf32>
    %211 = vector.extract_strided_slice %208 {offsets = [0, 0, 0], sizes = [1, 32, 256], strides = [1, 1, 1]} : vector<2x32x256xf32> to vector<1x32x256xf32>
    %212 = vector.shape_cast %211 : vector<1x32x256xf32> to vector<32x256xf32>
    %cst_87 = arith.constant dense<0.000000e+00> : vector<32x256xf32>
    %213 = tpu.matmul %210, %212, %cst_87 {dimension_numbers = #tpu.dot_dimension_numbers<[1], [0], [0], [1], [0, 0, 1, 1], [], []>} : vector<32x32xf32>, vector<32x256xf32>, vector<32x256xf32> -> vector<32x256xf32>
    %214 = arith.addf %197, %213 : vector<32x256xf32>
    %215 = vector.extract_strided_slice %208 {offsets = [1, 0, 0], sizes = [1, 32, 256], strides = [1, 1, 1]} : vector<2x32x256xf32> to vector<1x32x256xf32>
    %216 = vector.shape_cast %215 : vector<1x32x256xf32> to vector<32x256xf32>
    %cst_88 = arith.constant dense<0.000000e+00> : vector<32x256xf32>
    %217 = tpu.matmul %210, %216, %cst_88 {dimension_numbers = #tpu.dot_dimension_numbers<[1], [0], [0], [1], [0, 0, 1, 1], [], []>} : vector<32x32xf32>, vector<32x256xf32>, vector<32x256xf32> -> vector<32x256xf32>
    %218 = arith.addf %201, %217 : vector<32x256xf32>
    %c240_i32_89 = arith.constant 240 : i32
    %219 = tpu.dynamic_rotate %121 by %c240_i32_89 dim 2 : vector<2x32x256xf32>, i32 -> vector<2x32x256xf32>
    %c240_i32_90 = arith.constant 240 : i32
    %220 = vector.broadcast %c240_i32_90 : i32 to vector<1x1x256xi32>
    %221 = arith.cmpi slt, %0, %220 : vector<1x1x256xi32>
    %cst_91 = arith.constant 0.000000e+00 : f32
    %222 = vector.shape_cast %221 : vector<1x1x256xi1> to vector<1x1x256xi1>
    %223 = vector.broadcast %222 : vector<1x1x256xi1> to vector<2x32x256xi1>
    %224 = vector.broadcast %cst_91 : f32 to vector<2x32x256xf32>
    %225 = arith.select %223, %219, %224 : vector<2x32x256xi1>, vector<2x32x256xf32>
    %c1_i32_92 = arith.constant 1 : i32
    %226 = tpu.dynamic_rotate %225 by %c1_i32_92 dim 2 : vector<2x32x256xf32>, i32 -> vector<2x32x256xf32>
    %c1_i32_93 = arith.constant 1 : i32
    %227 = vector.broadcast %c1_i32_93 : i32 to vector<1x1x256xi32>
    %228 = arith.cmpi sge, %2, %227 : vector<1x1x256xi32>
    %cst_94 = arith.constant 0.000000e+00 : f32
    %229 = vector.shape_cast %228 : vector<1x1x256xi1> to vector<1x1x256xi1>
    %230 = vector.broadcast %229 : vector<1x1x256xi1> to vector<2x32x256xi1>
    %231 = vector.broadcast %cst_94 : f32 to vector<2x32x256xf32>
    %232 = arith.select %230, %226, %231 : vector<2x32x256xi1>, vector<2x32x256xf32>
    %c0_95 = arith.constant 0 : index
    %c6 = arith.constant 6 : index
    %c0_96 = arith.constant 0 : index
    %c0_97 = arith.constant 0 : index
    %233 = vector.load %arg2[%c0_95, %c6, %c0_96, %c0_97] : memref<2x9x32x32xf32, #tpu.memory_space<vmem>>, vector<1x1x32x32xf32>
    %234 = vector.shape_cast %233 : vector<1x1x32x32xf32> to vector<32x32xf32>
    %235 = vector.extract_strided_slice %232 {offsets = [0, 0, 0], sizes = [1, 32, 256], strides = [1, 1, 1]} : vector<2x32x256xf32> to vector<1x32x256xf32>
    %236 = vector.shape_cast %235 : vector<1x32x256xf32> to vector<32x256xf32>
    %cst_98 = arith.constant dense<0.000000e+00> : vector<32x256xf32>
    %237 = tpu.matmul %234, %236, %cst_98 {dimension_numbers = #tpu.dot_dimension_numbers<[1], [0], [0], [1], [0, 0, 1, 1], [], []>} : vector<32x32xf32>, vector<32x256xf32>, vector<32x256xf32> -> vector<32x256xf32>
    %238 = arith.addf %214, %237 : vector<32x256xf32>
    %239 = vector.extract_strided_slice %232 {offsets = [1, 0, 0], sizes = [1, 32, 256], strides = [1, 1, 1]} : vector<2x32x256xf32> to vector<1x32x256xf32>
    %240 = vector.shape_cast %239 : vector<1x32x256xf32> to vector<32x256xf32>
    %cst_99 = arith.constant dense<0.000000e+00> : vector<32x256xf32>
    %241 = tpu.matmul %234, %240, %cst_99 {dimension_numbers = #tpu.dot_dimension_numbers<[1], [0], [0], [1], [0, 0, 1, 1], [], []>} : vector<32x32xf32>, vector<32x256xf32>, vector<32x256xf32> -> vector<32x256xf32>
    %242 = arith.addf %218, %241 : vector<32x256xf32>
    %c0_100 = arith.constant 0 : index
    %c7 = arith.constant 7 : index
    %c0_101 = arith.constant 0 : index
    %c0_102 = arith.constant 0 : index
    %243 = vector.load %arg2[%c0_100, %c7, %c0_101, %c0_102] : memref<2x9x32x32xf32, #tpu.memory_space<vmem>>, vector<1x1x32x32xf32>
    %244 = vector.shape_cast %243 : vector<1x1x32x32xf32> to vector<32x32xf32>
    %245 = vector.extract_strided_slice %225 {offsets = [0, 0, 0], sizes = [1, 32, 256], strides = [1, 1, 1]} : vector<2x32x256xf32> to vector<1x32x256xf32>
    %246 = vector.shape_cast %245 : vector<1x32x256xf32> to vector<32x256xf32>
    %cst_103 = arith.constant dense<0.000000e+00> : vector<32x256xf32>
    %247 = tpu.matmul %244, %246, %cst_103 {dimension_numbers = #tpu.dot_dimension_numbers<[1], [0], [0], [1], [0, 0, 1, 1], [], []>} : vector<32x32xf32>, vector<32x256xf32>, vector<32x256xf32> -> vector<32x256xf32>
    %248 = arith.addf %238, %247 : vector<32x256xf32>
    %249 = vector.extract_strided_slice %225 {offsets = [1, 0, 0], sizes = [1, 32, 256], strides = [1, 1, 1]} : vector<2x32x256xf32> to vector<1x32x256xf32>
    %250 = vector.shape_cast %249 : vector<1x32x256xf32> to vector<32x256xf32>
    %cst_104 = arith.constant dense<0.000000e+00> : vector<32x256xf32>
    %251 = tpu.matmul %244, %250, %cst_104 {dimension_numbers = #tpu.dot_dimension_numbers<[1], [0], [0], [1], [0, 0, 1, 1], [], []>} : vector<32x32xf32>, vector<32x256xf32>, vector<32x256xf32> -> vector<32x256xf32>
    %252 = arith.addf %242, %251 : vector<32x256xf32>
    %c255_i32_105 = arith.constant 255 : i32
    %253 = tpu.dynamic_rotate %225 by %c255_i32_105 dim 2 : vector<2x32x256xf32>, i32 -> vector<2x32x256xf32>
    %c15_i32_106 = arith.constant 15 : i32
    %254 = vector.broadcast %c15_i32_106 : i32 to vector<1x1x256xi32>
    %255 = arith.cmpi slt, %2, %254 : vector<1x1x256xi32>
    %cst_107 = arith.constant 0.000000e+00 : f32
    %256 = vector.shape_cast %255 : vector<1x1x256xi1> to vector<1x1x256xi1>
    %257 = vector.broadcast %256 : vector<1x1x256xi1> to vector<2x32x256xi1>
    %258 = vector.broadcast %cst_107 : f32 to vector<2x32x256xf32>
    %259 = arith.select %257, %253, %258 : vector<2x32x256xi1>, vector<2x32x256xf32>
    %c0_108 = arith.constant 0 : index
    %c8 = arith.constant 8 : index
    %c0_109 = arith.constant 0 : index
    %c0_110 = arith.constant 0 : index
    %260 = vector.load %arg2[%c0_108, %c8, %c0_109, %c0_110] : memref<2x9x32x32xf32, #tpu.memory_space<vmem>>, vector<1x1x32x32xf32>
    %261 = vector.shape_cast %260 : vector<1x1x32x32xf32> to vector<32x32xf32>
    %262 = vector.extract_strided_slice %259 {offsets = [0, 0, 0], sizes = [1, 32, 256], strides = [1, 1, 1]} : vector<2x32x256xf32> to vector<1x32x256xf32>
    %263 = vector.shape_cast %262 : vector<1x32x256xf32> to vector<32x256xf32>
    %cst_111 = arith.constant dense<0.000000e+00> : vector<32x256xf32>
    %264 = tpu.matmul %261, %263, %cst_111 {dimension_numbers = #tpu.dot_dimension_numbers<[1], [0], [0], [1], [0, 0, 1, 1], [], []>} : vector<32x32xf32>, vector<32x256xf32>, vector<32x256xf32> -> vector<32x256xf32>
    %265 = arith.addf %248, %264 : vector<32x256xf32>
    %266 = vector.extract_strided_slice %259 {offsets = [1, 0, 0], sizes = [1, 32, 256], strides = [1, 1, 1]} : vector<2x32x256xf32> to vector<1x32x256xf32>
    %267 = vector.shape_cast %266 : vector<1x32x256xf32> to vector<32x256xf32>
    %cst_112 = arith.constant dense<0.000000e+00> : vector<32x256xf32>
    %268 = tpu.matmul %261, %267, %cst_112 {dimension_numbers = #tpu.dot_dimension_numbers<[1], [0], [0], [1], [0, 0, 1, 1], [], []>} : vector<32x32xf32>, vector<32x256xf32>, vector<32x256xf32> -> vector<32x256xf32>
    %269 = arith.addf %252, %268 : vector<32x256xf32>
    %270 = vector.shape_cast %265 : vector<32x256xf32> to vector<1x32x256xf32>
    %271 = vector.shape_cast %269 : vector<32x256xf32> to vector<1x32x256xf32>
    %272 = tpu.concatenate %270, %271 in 0 : vector<1x32x256xf32>, vector<1x32x256xf32> -> vector<2x32x256xf32>
    %273 = arith.addf %5, %272 : vector<2x32x256xf32>
    %c0_113 = arith.constant 0 : index
    %c1_114 = arith.constant 1 : index
    %c0_115 = arith.constant 0 : index
    %c0_116 = arith.constant 0 : index
    %274 = vector.load %arg3[%c0_113, %c1_114, %c0_115, %c0_116] : memref<2x2x32x3xf32, #tpu.memory_space<vmem>>, vector<2x1x32x1xf32>
    %275 = vector.shape_cast %274 : vector<2x1x32x1xf32> to vector<2x32x1xf32>
    %c0_117 = arith.constant 0 : index
    %c1_118 = arith.constant 1 : index
    %c0_119 = arith.constant 0 : index
    %c1_120 = arith.constant 1 : index
    %276 = vector.load %arg3[%c0_117, %c1_118, %c0_119, %c1_120] : memref<2x2x32x3xf32, #tpu.memory_space<vmem>>, vector<2x1x32x1xf32>
    %277 = vector.shape_cast %276 : vector<2x1x32x1xf32> to vector<2x32x1xf32>
    %c0_121 = arith.constant 0 : index
    %c1_122 = arith.constant 1 : index
    %c0_123 = arith.constant 0 : index
    %c2_124 = arith.constant 2 : index
    %278 = vector.load %arg3[%c0_121, %c1_122, %c0_123, %c2_124] : memref<2x2x32x3xf32, #tpu.memory_space<vmem>>, vector<2x1x32x1xf32>
    %279 = vector.shape_cast %278 : vector<2x1x32x1xf32> to vector<2x32x1xf32>
    %cst_125 = arith.constant dense<0.000000e+00> : vector<2x32xf32>
    %280 = vector.multi_reduction <add>, %272, %cst_125 [2] : vector<2x32x256xf32> to vector<2x32xf32>
    %281 = vector.shape_cast %280 : vector<2x32xf32> to vector<2x32x1xf32>
    %282 = arith.mulf %272, %272 : vector<2x32x256xf32>
    %cst_126 = arith.constant dense<0.000000e+00> : vector<2x32xf32>
    %283 = vector.multi_reduction <add>, %282, %cst_126 [2] : vector<2x32x256xf32> to vector<2x32xf32>
    %284 = vector.shape_cast %283 : vector<2x32xf32> to vector<2x32x1xf32>
    %cst_127 = arith.constant 3.906250e-03 : f32
    %285 = vector.broadcast %cst_127 : f32 to vector<2x32x1xf32>
    %286 = arith.mulf %281, %285 : vector<2x32x1xf32>
    %cst_128 = arith.constant 3.906250e-03 : f32
    %287 = vector.broadcast %cst_128 : f32 to vector<2x32x1xf32>
    %288 = arith.mulf %284, %287 : vector<2x32x1xf32>
    %289 = arith.mulf %286, %286 : vector<2x32x1xf32>
    %290 = arith.subf %288, %289 : vector<2x32x1xf32>
    %cst_129 = arith.constant 0.000000e+00 : f32
    %291 = vector.broadcast %cst_129 : f32 to vector<2x32x1xf32>
    %292 = arith.maximumf %290, %291 : vector<2x32x1xf32>
    %cst_130 = arith.constant 9.99999974E-6 : f32
    %293 = vector.broadcast %cst_130 : f32 to vector<2x32x1xf32>
    %294 = arith.addf %292, %293 : vector<2x32x1xf32>
    %295 = math.rsqrt %294 : vector<2x32x1xf32>
    %cst_131 = arith.constant dense<0.000000e+00> : vector<2x1xf32>
    %296 = vector.multi_reduction <add>, %286, %cst_131 [1] : vector<2x32x1xf32> to vector<2x1xf32>
    %297 = vector.shape_cast %296 : vector<2x1xf32> to vector<2x1x1xf32>
    %cst_132 = arith.constant 3.200000e+01 : f32
    %298 = vector.broadcast %cst_132 : f32 to vector<2x1x1xf32>
    %299 = arith.divf %297, %298 : vector<2x1x1xf32>
    %300 = vector.broadcast %299 : vector<2x1x1xf32> to vector<2x32x1xf32>
    %301 = arith.subf %286, %300 : vector<2x32x1xf32>
    %302 = arith.mulf %301, %301 : vector<2x32x1xf32>
    %cst_133 = arith.constant dense<0.000000e+00> : vector<2x1xf32>
    %303 = vector.multi_reduction <add>, %302, %cst_133 [1] : vector<2x32x1xf32> to vector<2x1xf32>
    %304 = vector.shape_cast %303 : vector<2x1xf32> to vector<2x1x1xf32>
    %cst_134 = arith.constant 3.100000e+01 : f32
    %305 = vector.broadcast %cst_134 : f32 to vector<2x1x1xf32>
    %306 = arith.divf %304, %305 : vector<2x1x1xf32>
    %307 = vector.broadcast %299 : vector<2x1x1xf32> to vector<2x32x1xf32>
    %308 = arith.subf %286, %307 : vector<2x32x1xf32>
    %cst_135 = arith.constant 9.99999974E-6 : f32
    %309 = vector.broadcast %cst_135 : f32 to vector<2x1x1xf32>
    %310 = arith.addf %306, %309 : vector<2x1x1xf32>
    %311 = math.rsqrt %310 : vector<2x1x1xf32>
    %312 = vector.broadcast %311 : vector<2x1x1xf32> to vector<2x32x1xf32>
    %313 = arith.mulf %308, %312 : vector<2x32x1xf32>
    %314 = arith.mulf %275, %295 : vector<2x32x1xf32>
    %315 = arith.mulf %313, %277 : vector<2x32x1xf32>
    %316 = arith.mulf %286, %295 : vector<2x32x1xf32>
    %317 = arith.subf %315, %316 : vector<2x32x1xf32>
    %318 = arith.mulf %275, %317 : vector<2x32x1xf32>
    %319 = arith.addf %318, %279 : vector<2x32x1xf32>
    %320 = vector.broadcast %314 : vector<2x32x1xf32> to vector<2x32x256xf32>
    %321 = arith.mulf %272, %320 : vector<2x32x256xf32>
    %322 = vector.broadcast %319 : vector<2x32x1xf32> to vector<2x32x256xf32>
    %323 = arith.addf %321, %322 : vector<2x32x256xf32>
    %c32_i32_136 = arith.constant 32 : i32
    %324 = tpu.dynamic_rotate %323 by %c32_i32_136 dim 2 : vector<2x32x256xf32>, i32 -> vector<2x32x256xf32>
    %c32_i32_137 = arith.constant 32 : i32
    %325 = vector.broadcast %c32_i32_137 : i32 to vector<1x1x256xi32>
    %326 = arith.cmpi sge, %0, %325 : vector<1x1x256xi32>
    %cst_138 = arith.constant 0.000000e+00 : f32
    %327 = vector.shape_cast %326 : vector<1x1x256xi1> to vector<1x1x256xi1>
    %328 = vector.broadcast %327 : vector<1x1x256xi1> to vector<2x32x256xi1>
    %329 = vector.broadcast %cst_138 : f32 to vector<2x32x256xf32>
    %330 = arith.select %328, %324, %329 : vector<2x32x256xi1>, vector<2x32x256xf32>
    %331 = arith.addf %323, %330 : vector<2x32x256xf32>
    %c16_i32_139 = arith.constant 16 : i32
    %332 = tpu.dynamic_rotate %323 by %c16_i32_139 dim 2 : vector<2x32x256xf32>, i32 -> vector<2x32x256xf32>
    %c16_i32_140 = arith.constant 16 : i32
    %333 = vector.broadcast %c16_i32_140 : i32 to vector<1x1x256xi32>
    %334 = arith.cmpi sge, %0, %333 : vector<1x1x256xi32>
    %cst_141 = arith.constant 0.000000e+00 : f32
    %335 = vector.shape_cast %334 : vector<1x1x256xi1> to vector<1x1x256xi1>
    %336 = vector.broadcast %335 : vector<1x1x256xi1> to vector<2x32x256xi1>
    %337 = vector.broadcast %cst_141 : f32 to vector<2x32x256xf32>
    %338 = arith.select %336, %332, %337 : vector<2x32x256xi1>, vector<2x32x256xf32>
    %339 = arith.addf %331, %338 : vector<2x32x256xf32>
    %c240_i32_142 = arith.constant 240 : i32
    %340 = tpu.dynamic_rotate %323 by %c240_i32_142 dim 2 : vector<2x32x256xf32>, i32 -> vector<2x32x256xf32>
    %c240_i32_143 = arith.constant 240 : i32
    %341 = vector.broadcast %c240_i32_143 : i32 to vector<1x1x256xi32>
    %342 = arith.cmpi slt, %0, %341 : vector<1x1x256xi32>
    %cst_144 = arith.constant 0.000000e+00 : f32
    %343 = vector.shape_cast %342 : vector<1x1x256xi1> to vector<1x1x256xi1>
    %344 = vector.broadcast %343 : vector<1x1x256xi1> to vector<2x32x256xi1>
    %345 = vector.broadcast %cst_144 : f32 to vector<2x32x256xf32>
    %346 = arith.select %344, %340, %345 : vector<2x32x256xi1>, vector<2x32x256xf32>
    %347 = arith.addf %339, %346 : vector<2x32x256xf32>
    %c224_i32_145 = arith.constant 224 : i32
    %348 = tpu.dynamic_rotate %323 by %c224_i32_145 dim 2 : vector<2x32x256xf32>, i32 -> vector<2x32x256xf32>
    %c224_i32_146 = arith.constant 224 : i32
    %349 = vector.broadcast %c224_i32_146 : i32 to vector<1x1x256xi32>
    %350 = arith.cmpi slt, %0, %349 : vector<1x1x256xi32>
    %cst_147 = arith.constant 0.000000e+00 : f32
    %351 = vector.shape_cast %350 : vector<1x1x256xi1> to vector<1x1x256xi1>
    %352 = vector.broadcast %351 : vector<1x1x256xi1> to vector<2x32x256xi1>
    %353 = vector.broadcast %cst_147 : f32 to vector<2x32x256xf32>
    %354 = arith.select %352, %348, %353 : vector<2x32x256xi1>, vector<2x32x256xf32>
    %355 = arith.addf %347, %354 : vector<2x32x256xf32>
    %c2_i32_148 = arith.constant 2 : i32
    %356 = tpu.dynamic_rotate %355 by %c2_i32_148 dim 2 : vector<2x32x256xf32>, i32 -> vector<2x32x256xf32>
    %c2_i32_149 = arith.constant 2 : i32
    %357 = vector.broadcast %c2_i32_149 : i32 to vector<1x1x256xi32>
    %358 = arith.cmpi sge, %2, %357 : vector<1x1x256xi32>
    %cst_150 = arith.constant 0.000000e+00 : f32
    %359 = vector.shape_cast %358 : vector<1x1x256xi1> to vector<1x1x256xi1>
    %360 = vector.broadcast %359 : vector<1x1x256xi1> to vector<2x32x256xi1>
    %361 = vector.broadcast %cst_150 : f32 to vector<2x32x256xf32>
    %362 = arith.select %360, %356, %361 : vector<2x32x256xi1>, vector<2x32x256xf32>
    %363 = arith.addf %355, %362 : vector<2x32x256xf32>
    %c1_i32_151 = arith.constant 1 : i32
    %364 = tpu.dynamic_rotate %355 by %c1_i32_151 dim 2 : vector<2x32x256xf32>, i32 -> vector<2x32x256xf32>
    %c1_i32_152 = arith.constant 1 : i32
    %365 = vector.broadcast %c1_i32_152 : i32 to vector<1x1x256xi32>
    %366 = arith.cmpi sge, %2, %365 : vector<1x1x256xi32>
    %cst_153 = arith.constant 0.000000e+00 : f32
    %367 = vector.shape_cast %366 : vector<1x1x256xi1> to vector<1x1x256xi1>
    %368 = vector.broadcast %367 : vector<1x1x256xi1> to vector<2x32x256xi1>
    %369 = vector.broadcast %cst_153 : f32 to vector<2x32x256xf32>
    %370 = arith.select %368, %364, %369 : vector<2x32x256xi1>, vector<2x32x256xf32>
    %371 = arith.addf %363, %370 : vector<2x32x256xf32>
    %c255_i32_154 = arith.constant 255 : i32
    %372 = tpu.dynamic_rotate %355 by %c255_i32_154 dim 2 : vector<2x32x256xf32>, i32 -> vector<2x32x256xf32>
    %c15_i32_155 = arith.constant 15 : i32
    %373 = vector.broadcast %c15_i32_155 : i32 to vector<1x1x256xi32>
    %374 = arith.cmpi slt, %2, %373 : vector<1x1x256xi32>
    %cst_156 = arith.constant 0.000000e+00 : f32
    %375 = vector.shape_cast %374 : vector<1x1x256xi1> to vector<1x1x256xi1>
    %376 = vector.broadcast %375 : vector<1x1x256xi1> to vector<2x32x256xi1>
    %377 = vector.broadcast %cst_156 : f32 to vector<2x32x256xf32>
    %378 = arith.select %376, %372, %377 : vector<2x32x256xi1>, vector<2x32x256xf32>
    %379 = arith.addf %371, %378 : vector<2x32x256xf32>
    %c254_i32_157 = arith.constant 254 : i32
    %380 = tpu.dynamic_rotate %355 by %c254_i32_157 dim 2 : vector<2x32x256xf32>, i32 -> vector<2x32x256xf32>
    %c14_i32_158 = arith.constant 14 : i32
    %381 = vector.broadcast %c14_i32_158 : i32 to vector<1x1x256xi32>
    %382 = arith.cmpi slt, %2, %381 : vector<1x1x256xi32>
    %cst_159 = arith.constant 0.000000e+00 : f32
    %383 = vector.shape_cast %382 : vector<1x1x256xi1> to vector<1x1x256xi1>
    %384 = vector.broadcast %383 : vector<1x1x256xi1> to vector<2x32x256xi1>
    %385 = vector.broadcast %cst_159 : f32 to vector<2x32x256xf32>
    %386 = arith.select %384, %380, %385 : vector<2x32x256xi1>, vector<2x32x256xf32>
    %387 = arith.addf %379, %386 : vector<2x32x256xf32>
    %cst_160 = arith.constant 4.000000e-02 : f32
    %388 = vector.broadcast %cst_160 : f32 to vector<2x32x256xf32>
    %389 = arith.mulf %387, %388 : vector<2x32x256xf32>
    %cst_161 = arith.constant 0.000000e+00 : f32
    %390 = vector.broadcast %cst_161 : f32 to vector<32x256xf32>
    %cst_162 = arith.constant 0.000000e+00 : f32
    %391 = vector.broadcast %cst_162 : f32 to vector<32x256xf32>
    %c16_i32_163 = arith.constant 16 : i32
    %392 = tpu.dynamic_rotate %389 by %c16_i32_163 dim 2 : vector<2x32x256xf32>, i32 -> vector<2x32x256xf32>
    %c16_i32_164 = arith.constant 16 : i32
    %393 = vector.broadcast %c16_i32_164 : i32 to vector<1x1x256xi32>
    %394 = arith.cmpi sge, %0, %393 : vector<1x1x256xi32>
    %cst_165 = arith.constant 0.000000e+00 : f32
    %395 = vector.shape_cast %394 : vector<1x1x256xi1> to vector<1x1x256xi1>
    %396 = vector.broadcast %395 : vector<1x1x256xi1> to vector<2x32x256xi1>
    %397 = vector.broadcast %cst_165 : f32 to vector<2x32x256xf32>
    %398 = arith.select %396, %392, %397 : vector<2x32x256xi1>, vector<2x32x256xf32>
    %c1_i32_166 = arith.constant 1 : i32
    %399 = tpu.dynamic_rotate %398 by %c1_i32_166 dim 2 : vector<2x32x256xf32>, i32 -> vector<2x32x256xf32>
    %c1_i32_167 = arith.constant 1 : i32
    %400 = vector.broadcast %c1_i32_167 : i32 to vector<1x1x256xi32>
    %401 = arith.cmpi sge, %2, %400 : vector<1x1x256xi32>
    %cst_168 = arith.constant 0.000000e+00 : f32
    %402 = vector.shape_cast %401 : vector<1x1x256xi1> to vector<1x1x256xi1>
    %403 = vector.broadcast %402 : vector<1x1x256xi1> to vector<2x32x256xi1>
    %404 = vector.broadcast %cst_168 : f32 to vector<2x32x256xf32>
    %405 = arith.select %403, %399, %404 : vector<2x32x256xi1>, vector<2x32x256xf32>
    %c1_169 = arith.constant 1 : index
    %c0_170 = arith.constant 0 : index
    %c0_171 = arith.constant 0 : index
    %c0_172 = arith.constant 0 : index
    %406 = vector.load %arg2[%c1_169, %c0_170, %c0_171, %c0_172] : memref<2x9x32x32xf32, #tpu.memory_space<vmem>>, vector<1x1x32x32xf32>
    %407 = vector.shape_cast %406 : vector<1x1x32x32xf32> to vector<32x32xf32>
    %408 = vector.extract_strided_slice %405 {offsets = [0, 0, 0], sizes = [1, 32, 256], strides = [1, 1, 1]} : vector<2x32x256xf32> to vector<1x32x256xf32>
    %409 = vector.shape_cast %408 : vector<1x32x256xf32> to vector<32x256xf32>
    %cst_173 = arith.constant dense<0.000000e+00> : vector<32x256xf32>
    %410 = tpu.matmul %407, %409, %cst_173 {dimension_numbers = #tpu.dot_dimension_numbers<[1], [0], [0], [1], [0, 0, 1, 1], [], []>} : vector<32x32xf32>, vector<32x256xf32>, vector<32x256xf32> -> vector<32x256xf32>
    %411 = arith.addf %390, %410 : vector<32x256xf32>
    %412 = vector.extract_strided_slice %405 {offsets = [1, 0, 0], sizes = [1, 32, 256], strides = [1, 1, 1]} : vector<2x32x256xf32> to vector<1x32x256xf32>
    %413 = vector.shape_cast %412 : vector<1x32x256xf32> to vector<32x256xf32>
    %cst_174 = arith.constant dense<0.000000e+00> : vector<32x256xf32>
    %414 = tpu.matmul %407, %413, %cst_174 {dimension_numbers = #tpu.dot_dimension_numbers<[1], [0], [0], [1], [0, 0, 1, 1], [], []>} : vector<32x32xf32>, vector<32x256xf32>, vector<32x256xf32> -> vector<32x256xf32>
    %415 = arith.addf %391, %414 : vector<32x256xf32>
    %c1_175 = arith.constant 1 : index
    %c1_176 = arith.constant 1 : index
    %c0_177 = arith.constant 0 : index
    %c0_178 = arith.constant 0 : index
    %416 = vector.load %arg2[%c1_175, %c1_176, %c0_177, %c0_178] : memref<2x9x32x32xf32, #tpu.memory_space<vmem>>, vector<1x1x32x32xf32>
    %417 = vector.shape_cast %416 : vector<1x1x32x32xf32> to vector<32x32xf32>
    %418 = vector.extract_strided_slice %398 {offsets = [0, 0, 0], sizes = [1, 32, 256], strides = [1, 1, 1]} : vector<2x32x256xf32> to vector<1x32x256xf32>
    %419 = vector.shape_cast %418 : vector<1x32x256xf32> to vector<32x256xf32>
    %cst_179 = arith.constant dense<0.000000e+00> : vector<32x256xf32>
    %420 = tpu.matmul %417, %419, %cst_179 {dimension_numbers = #tpu.dot_dimension_numbers<[1], [0], [0], [1], [0, 0, 1, 1], [], []>} : vector<32x32xf32>, vector<32x256xf32>, vector<32x256xf32> -> vector<32x256xf32>
    %421 = arith.addf %411, %420 : vector<32x256xf32>
    %422 = vector.extract_strided_slice %398 {offsets = [1, 0, 0], sizes = [1, 32, 256], strides = [1, 1, 1]} : vector<2x32x256xf32> to vector<1x32x256xf32>
    %423 = vector.shape_cast %422 : vector<1x32x256xf32> to vector<32x256xf32>
    %cst_180 = arith.constant dense<0.000000e+00> : vector<32x256xf32>
    %424 = tpu.matmul %417, %423, %cst_180 {dimension_numbers = #tpu.dot_dimension_numbers<[1], [0], [0], [1], [0, 0, 1, 1], [], []>} : vector<32x32xf32>, vector<32x256xf32>, vector<32x256xf32> -> vector<32x256xf32>
    %425 = arith.addf %415, %424 : vector<32x256xf32>
    %c255_i32_181 = arith.constant 255 : i32
    %426 = tpu.dynamic_rotate %398 by %c255_i32_181 dim 2 : vector<2x32x256xf32>, i32 -> vector<2x32x256xf32>
    %c15_i32_182 = arith.constant 15 : i32
    %427 = vector.broadcast %c15_i32_182 : i32 to vector<1x1x256xi32>
    %428 = arith.cmpi slt, %2, %427 : vector<1x1x256xi32>
    %cst_183 = arith.constant 0.000000e+00 : f32
    %429 = vector.shape_cast %428 : vector<1x1x256xi1> to vector<1x1x256xi1>
    %430 = vector.broadcast %429 : vector<1x1x256xi1> to vector<2x32x256xi1>
    %431 = vector.broadcast %cst_183 : f32 to vector<2x32x256xf32>
    %432 = arith.select %430, %426, %431 : vector<2x32x256xi1>, vector<2x32x256xf32>
    %c1_184 = arith.constant 1 : index
    %c2_185 = arith.constant 2 : index
    %c0_186 = arith.constant 0 : index
    %c0_187 = arith.constant 0 : index
    %433 = vector.load %arg2[%c1_184, %c2_185, %c0_186, %c0_187] : memref<2x9x32x32xf32, #tpu.memory_space<vmem>>, vector<1x1x32x32xf32>
    %434 = vector.shape_cast %433 : vector<1x1x32x32xf32> to vector<32x32xf32>
    %435 = vector.extract_strided_slice %432 {offsets = [0, 0, 0], sizes = [1, 32, 256], strides = [1, 1, 1]} : vector<2x32x256xf32> to vector<1x32x256xf32>
    %436 = vector.shape_cast %435 : vector<1x32x256xf32> to vector<32x256xf32>
    %cst_188 = arith.constant dense<0.000000e+00> : vector<32x256xf32>
    %437 = tpu.matmul %434, %436, %cst_188 {dimension_numbers = #tpu.dot_dimension_numbers<[1], [0], [0], [1], [0, 0, 1, 1], [], []>} : vector<32x32xf32>, vector<32x256xf32>, vector<32x256xf32> -> vector<32x256xf32>
    %438 = arith.addf %421, %437 : vector<32x256xf32>
    %439 = vector.extract_strided_slice %432 {offsets = [1, 0, 0], sizes = [1, 32, 256], strides = [1, 1, 1]} : vector<2x32x256xf32> to vector<1x32x256xf32>
    %440 = vector.shape_cast %439 : vector<1x32x256xf32> to vector<32x256xf32>
    %cst_189 = arith.constant dense<0.000000e+00> : vector<32x256xf32>
    %441 = tpu.matmul %434, %440, %cst_189 {dimension_numbers = #tpu.dot_dimension_numbers<[1], [0], [0], [1], [0, 0, 1, 1], [], []>} : vector<32x32xf32>, vector<32x256xf32>, vector<32x256xf32> -> vector<32x256xf32>
    %442 = arith.addf %425, %441 : vector<32x256xf32>
    %c1_i32_190 = arith.constant 1 : i32
    %443 = tpu.dynamic_rotate %389 by %c1_i32_190 dim 2 : vector<2x32x256xf32>, i32 -> vector<2x32x256xf32>
    %c1_i32_191 = arith.constant 1 : i32
    %444 = vector.broadcast %c1_i32_191 : i32 to vector<1x1x256xi32>
    %445 = arith.cmpi sge, %2, %444 : vector<1x1x256xi32>
    %cst_192 = arith.constant 0.000000e+00 : f32
    %446 = vector.shape_cast %445 : vector<1x1x256xi1> to vector<1x1x256xi1>
    %447 = vector.broadcast %446 : vector<1x1x256xi1> to vector<2x32x256xi1>
    %448 = vector.broadcast %cst_192 : f32 to vector<2x32x256xf32>
    %449 = arith.select %447, %443, %448 : vector<2x32x256xi1>, vector<2x32x256xf32>
    %c1_193 = arith.constant 1 : index
    %c3_194 = arith.constant 3 : index
    %c0_195 = arith.constant 0 : index
    %c0_196 = arith.constant 0 : index
    %450 = vector.load %arg2[%c1_193, %c3_194, %c0_195, %c0_196] : memref<2x9x32x32xf32, #tpu.memory_space<vmem>>, vector<1x1x32x32xf32>
    %451 = vector.shape_cast %450 : vector<1x1x32x32xf32> to vector<32x32xf32>
    %452 = vector.extract_strided_slice %449 {offsets = [0, 0, 0], sizes = [1, 32, 256], strides = [1, 1, 1]} : vector<2x32x256xf32> to vector<1x32x256xf32>
    %453 = vector.shape_cast %452 : vector<1x32x256xf32> to vector<32x256xf32>
    %cst_197 = arith.constant dense<0.000000e+00> : vector<32x256xf32>
    %454 = tpu.matmul %451, %453, %cst_197 {dimension_numbers = #tpu.dot_dimension_numbers<[1], [0], [0], [1], [0, 0, 1, 1], [], []>} : vector<32x32xf32>, vector<32x256xf32>, vector<32x256xf32> -> vector<32x256xf32>
    %455 = arith.addf %438, %454 : vector<32x256xf32>
    %456 = vector.extract_strided_slice %449 {offsets = [1, 0, 0], sizes = [1, 32, 256], strides = [1, 1, 1]} : vector<2x32x256xf32> to vector<1x32x256xf32>
    %457 = vector.shape_cast %456 : vector<1x32x256xf32> to vector<32x256xf32>
    %cst_198 = arith.constant dense<0.000000e+00> : vector<32x256xf32>
    %458 = tpu.matmul %451, %457, %cst_198 {dimension_numbers = #tpu.dot_dimension_numbers<[1], [0], [0], [1], [0, 0, 1, 1], [], []>} : vector<32x32xf32>, vector<32x256xf32>, vector<32x256xf32> -> vector<32x256xf32>
    %459 = arith.addf %442, %458 : vector<32x256xf32>
    %c1_199 = arith.constant 1 : index
    %c4_200 = arith.constant 4 : index
    %c0_201 = arith.constant 0 : index
    %c0_202 = arith.constant 0 : index
    %460 = vector.load %arg2[%c1_199, %c4_200, %c0_201, %c0_202] : memref<2x9x32x32xf32, #tpu.memory_space<vmem>>, vector<1x1x32x32xf32>
    %461 = vector.shape_cast %460 : vector<1x1x32x32xf32> to vector<32x32xf32>
    %462 = vector.extract_strided_slice %389 {offsets = [0, 0, 0], sizes = [1, 32, 256], strides = [1, 1, 1]} : vector<2x32x256xf32> to vector<1x32x256xf32>
    %463 = vector.shape_cast %462 : vector<1x32x256xf32> to vector<32x256xf32>
    %cst_203 = arith.constant dense<0.000000e+00> : vector<32x256xf32>
    %464 = tpu.matmul %461, %463, %cst_203 {dimension_numbers = #tpu.dot_dimension_numbers<[1], [0], [0], [1], [0, 0, 1, 1], [], []>} : vector<32x32xf32>, vector<32x256xf32>, vector<32x256xf32> -> vector<32x256xf32>
    %465 = arith.addf %455, %464 : vector<32x256xf32>
    %466 = vector.extract_strided_slice %389 {offsets = [1, 0, 0], sizes = [1, 32, 256], strides = [1, 1, 1]} : vector<2x32x256xf32> to vector<1x32x256xf32>
    %467 = vector.shape_cast %466 : vector<1x32x256xf32> to vector<32x256xf32>
    %cst_204 = arith.constant dense<0.000000e+00> : vector<32x256xf32>
    %468 = tpu.matmul %461, %467, %cst_204 {dimension_numbers = #tpu.dot_dimension_numbers<[1], [0], [0], [1], [0, 0, 1, 1], [], []>} : vector<32x32xf32>, vector<32x256xf32>, vector<32x256xf32> -> vector<32x256xf32>
    %469 = arith.addf %459, %468 : vector<32x256xf32>
    %c255_i32_205 = arith.constant 255 : i32
    %470 = tpu.dynamic_rotate %389 by %c255_i32_205 dim 2 : vector<2x32x256xf32>, i32 -> vector<2x32x256xf32>
    %c15_i32_206 = arith.constant 15 : i32
    %471 = vector.broadcast %c15_i32_206 : i32 to vector<1x1x256xi32>
    %472 = arith.cmpi slt, %2, %471 : vector<1x1x256xi32>
    %cst_207 = arith.constant 0.000000e+00 : f32
    %473 = vector.shape_cast %472 : vector<1x1x256xi1> to vector<1x1x256xi1>
    %474 = vector.broadcast %473 : vector<1x1x256xi1> to vector<2x32x256xi1>
    %475 = vector.broadcast %cst_207 : f32 to vector<2x32x256xf32>
    %476 = arith.select %474, %470, %475 : vector<2x32x256xi1>, vector<2x32x256xf32>
    %c1_208 = arith.constant 1 : index
    %c5_209 = arith.constant 5 : index
    %c0_210 = arith.constant 0 : index
    %c0_211 = arith.constant 0 : index
    %477 = vector.load %arg2[%c1_208, %c5_209, %c0_210, %c0_211] : memref<2x9x32x32xf32, #tpu.memory_space<vmem>>, vector<1x1x32x32xf32>
    %478 = vector.shape_cast %477 : vector<1x1x32x32xf32> to vector<32x32xf32>
    %479 = vector.extract_strided_slice %476 {offsets = [0, 0, 0], sizes = [1, 32, 256], strides = [1, 1, 1]} : vector<2x32x256xf32> to vector<1x32x256xf32>
    %480 = vector.shape_cast %479 : vector<1x32x256xf32> to vector<32x256xf32>
    %cst_212 = arith.constant dense<0.000000e+00> : vector<32x256xf32>
    %481 = tpu.matmul %478, %480, %cst_212 {dimension_numbers = #tpu.dot_dimension_numbers<[1], [0], [0], [1], [0, 0, 1, 1], [], []>} : vector<32x32xf32>, vector<32x256xf32>, vector<32x256xf32> -> vector<32x256xf32>
    %482 = arith.addf %465, %481 : vector<32x256xf32>
    %483 = vector.extract_strided_slice %476 {offsets = [1, 0, 0], sizes = [1, 32, 256], strides = [1, 1, 1]} : vector<2x32x256xf32> to vector<1x32x256xf32>
    %484 = vector.shape_cast %483 : vector<1x32x256xf32> to vector<32x256xf32>
    %cst_213 = arith.constant dense<0.000000e+00> : vector<32x256xf32>
    %485 = tpu.matmul %478, %484, %cst_213 {dimension_numbers = #tpu.dot_dimension_numbers<[1], [0], [0], [1], [0, 0, 1, 1], [], []>} : vector<32x32xf32>, vector<32x256xf32>, vector<32x256xf32> -> vector<32x256xf32>
    %486 = arith.addf %469, %485 : vector<32x256xf32>
    %c240_i32_214 = arith.constant 240 : i32
    %487 = tpu.dynamic_rotate %389 by %c240_i32_214 dim 2 : vector<2x32x256xf32>, i32 -> vector<2x32x256xf32>
    %c240_i32_215 = arith.constant 240 : i32
    %488 = vector.broadcast %c240_i32_215 : i32 to vector<1x1x256xi32>
    %489 = arith.cmpi slt, %0, %488 : vector<1x1x256xi32>
    %cst_216 = arith.constant 0.000000e+00 : f32
    %490 = vector.shape_cast %489 : vector<1x1x256xi1> to vector<1x1x256xi1>
    %491 = vector.broadcast %490 : vector<1x1x256xi1> to vector<2x32x256xi1>
    %492 = vector.broadcast %cst_216 : f32 to vector<2x32x256xf32>
    %493 = arith.select %491, %487, %492 : vector<2x32x256xi1>, vector<2x32x256xf32>
    %c1_i32_217 = arith.constant 1 : i32
    %494 = tpu.dynamic_rotate %493 by %c1_i32_217 dim 2 : vector<2x32x256xf32>, i32 -> vector<2x32x256xf32>
    %c1_i32_218 = arith.constant 1 : i32
    %495 = vector.broadcast %c1_i32_218 : i32 to vector<1x1x256xi32>
    %496 = arith.cmpi sge, %2, %495 : vector<1x1x256xi32>
    %cst_219 = arith.constant 0.000000e+00 : f32
    %497 = vector.shape_cast %496 : vector<1x1x256xi1> to vector<1x1x256xi1>
    %498 = vector.broadcast %497 : vector<1x1x256xi1> to vector<2x32x256xi1>
    %499 = vector.broadcast %cst_219 : f32 to vector<2x32x256xf32>
    %500 = arith.select %498, %494, %499 : vector<2x32x256xi1>, vector<2x32x256xf32>
    %c1_220 = arith.constant 1 : index
    %c6_221 = arith.constant 6 : index
    %c0_222 = arith.constant 0 : index
    %c0_223 = arith.constant 0 : index
    %501 = vector.load %arg2[%c1_220, %c6_221, %c0_222, %c0_223] : memref<2x9x32x32xf32, #tpu.memory_space<vmem>>, vector<1x1x32x32xf32>
    %502 = vector.shape_cast %501 : vector<1x1x32x32xf32> to vector<32x32xf32>
    %503 = vector.extract_strided_slice %500 {offsets = [0, 0, 0], sizes = [1, 32, 256], strides = [1, 1, 1]} : vector<2x32x256xf32> to vector<1x32x256xf32>
    %504 = vector.shape_cast %503 : vector<1x32x256xf32> to vector<32x256xf32>
    %cst_224 = arith.constant dense<0.000000e+00> : vector<32x256xf32>
    %505 = tpu.matmul %502, %504, %cst_224 {dimension_numbers = #tpu.dot_dimension_numbers<[1], [0], [0], [1], [0, 0, 1, 1], [], []>} : vector<32x32xf32>, vector<32x256xf32>, vector<32x256xf32> -> vector<32x256xf32>
    %506 = arith.addf %482, %505 : vector<32x256xf32>
    %507 = vector.extract_strided_slice %500 {offsets = [1, 0, 0], sizes = [1, 32, 256], strides = [1, 1, 1]} : vector<2x32x256xf32> to vector<1x32x256xf32>
    %508 = vector.shape_cast %507 : vector<1x32x256xf32> to vector<32x256xf32>
    %cst_225 = arith.constant dense<0.000000e+00> : vector<32x256xf32>
    %509 = tpu.matmul %502, %508, %cst_225 {dimension_numbers = #tpu.dot_dimension_numbers<[1], [0], [0], [1], [0, 0, 1, 1], [], []>} : vector<32x32xf32>, vector<32x256xf32>, vector<32x256xf32> -> vector<32x256xf32>
    %510 = arith.addf %486, %509 : vector<32x256xf32>
    %c1_226 = arith.constant 1 : index
    %c7_227 = arith.constant 7 : index
    %c0_228 = arith.constant 0 : index
    %c0_229 = arith.constant 0 : index
    %511 = vector.load %arg2[%c1_226, %c7_227, %c0_228, %c0_229] : memref<2x9x32x32xf32, #tpu.memory_space<vmem>>, vector<1x1x32x32xf32>
    %512 = vector.shape_cast %511 : vector<1x1x32x32xf32> to vector<32x32xf32>
    %513 = vector.extract_strided_slice %493 {offsets = [0, 0, 0], sizes = [1, 32, 256], strides = [1, 1, 1]} : vector<2x32x256xf32> to vector<1x32x256xf32>
    %514 = vector.shape_cast %513 : vector<1x32x256xf32> to vector<32x256xf32>
    %cst_230 = arith.constant dense<0.000000e+00> : vector<32x256xf32>
    %515 = tpu.matmul %512, %514, %cst_230 {dimension_numbers = #tpu.dot_dimension_numbers<[1], [0], [0], [1], [0, 0, 1, 1], [], []>} : vector<32x32xf32>, vector<32x256xf32>, vector<32x256xf32> -> vector<32x256xf32>
    %516 = arith.addf %506, %515 : vector<32x256xf32>
    %517 = vector.extract_strided_slice %493 {offsets = [1, 0, 0], sizes = [1, 32, 256], strides = [1, 1, 1]} : vector<2x32x256xf32> to vector<1x32x256xf32>
    %518 = vector.shape_cast %517 : vector<1x32x256xf32> to vector<32x256xf32>
    %cst_231 = arith.constant dense<0.000000e+00> : vector<32x256xf32>
    %519 = tpu.matmul %512, %518, %cst_231 {dimension_numbers = #tpu.dot_dimension_numbers<[1], [0], [0], [1], [0, 0, 1, 1], [], []>} : vector<32x32xf32>, vector<32x256xf32>, vector<32x256xf32> -> vector<32x256xf32>
    %520 = arith.addf %510, %519 : vector<32x256xf32>
    %c255_i32_232 = arith.constant 255 : i32
    %521 = tpu.dynamic_rotate %493 by %c255_i32_232 dim 2 : vector<2x32x256xf32>, i32 -> vector<2x32x256xf32>
    %c15_i32_233 = arith.constant 15 : i32
    %522 = vector.broadcast %c15_i32_233 : i32 to vector<1x1x256xi32>
    %523 = arith.cmpi slt, %2, %522 : vector<1x1x256xi32>
    %cst_234 = arith.constant 0.000000e+00 : f32
    %524 = vector.shape_cast %523 : vector<1x1x256xi1> to vector<1x1x256xi1>
    %525 = vector.broadcast %524 : vector<1x1x256xi1> to vector<2x32x256xi1>
    %526 = vector.broadcast %cst_234 : f32 to vector<2x32x256xf32>
    %527 = arith.select %525, %521, %526 : vector<2x32x256xi1>, vector<2x32x256xf32>
    %c1_235 = arith.constant 1 : index
    %c8_236 = arith.constant 8 : index
    %c0_237 = arith.constant 0 : index
    %c0_238 = arith.constant 0 : index
    %528 = vector.load %arg2[%c1_235, %c8_236, %c0_237, %c0_238] : memref<2x9x32x32xf32, #tpu.memory_space<vmem>>, vector<1x1x32x32xf32>
    %529 = vector.shape_cast %528 : vector<1x1x32x32xf32> to vector<32x32xf32>
    %530 = vector.extract_strided_slice %527 {offsets = [0, 0, 0], sizes = [1, 32, 256], strides = [1, 1, 1]} : vector<2x32x256xf32> to vector<1x32x256xf32>
    %531 = vector.shape_cast %530 : vector<1x32x256xf32> to vector<32x256xf32>
    %cst_239 = arith.constant dense<0.000000e+00> : vector<32x256xf32>
    %532 = tpu.matmul %529, %531, %cst_239 {dimension_numbers = #tpu.dot_dimension_numbers<[1], [0], [0], [1], [0, 0, 1, 1], [], []>} : vector<32x32xf32>, vector<32x256xf32>, vector<32x256xf32> -> vector<32x256xf32>
    %533 = arith.addf %516, %532 : vector<32x256xf32>
    %534 = vector.extract_strided_slice %527 {offsets = [1, 0, 0], sizes = [1, 32, 256], strides = [1, 1, 1]} : vector<2x32x256xf32> to vector<1x32x256xf32>
    %535 = vector.shape_cast %534 : vector<1x32x256xf32> to vector<32x256xf32>
    %cst_240 = arith.constant dense<0.000000e+00> : vector<32x256xf32>
    %536 = tpu.matmul %529, %535, %cst_240 {dimension_numbers = #tpu.dot_dimension_numbers<[1], [0], [0], [1], [0, 0, 1, 1], [], []>} : vector<32x32xf32>, vector<32x256xf32>, vector<32x256xf32> -> vector<32x256xf32>
    %537 = arith.addf %520, %536 : vector<32x256xf32>
    %538 = vector.shape_cast %533 : vector<32x256xf32> to vector<1x32x256xf32>
    %539 = vector.shape_cast %537 : vector<32x256xf32> to vector<1x32x256xf32>
    %540 = tpu.concatenate %538, %539 in 0 : vector<1x32x256xf32>, vector<1x32x256xf32> -> vector<2x32x256xf32>
    %541 = arith.addf %273, %540 : vector<2x32x256xf32>
    %c0_241 = arith.constant 0 : index
    %c0_242 = arith.constant 0 : index
    %c0_243 = arith.constant 0 : index
    %542 = vector.load %arg4[%c0_241, %c0_242, %c0_243] : memref<2x32x256xf32, #tpu.memory_space<vmem>>, vector<2x32x256xf32>
    tpu.vector_store %arg4[%c0_241, %c0_242, %c0_243], %541 {strides = array<i32>} : memref<2x32x256xf32, #tpu.memory_space<vmem>>, vector<2x32x256xf32>,
    return
  }
  func.func @transform_0(%arg0: i32) -> (i32, i32, i32) {
    %c0_i32 = arith.constant 0 : i32
    %c0_i32_0 = arith.constant 0 : i32
    %c0_i32_1 = arith.constant 0 : i32
    return %arg0, %c0_i32, %c0_i32_0 : i32, i32, i32
  }
  func.func @transform_1(%arg0: i32) -> (i32, i32, i32, i32) {
    %c0_i32 = arith.constant 0 : i32
    %c0_i32_0 = arith.constant 0 : i32
    %c0_i32_1 = arith.constant 0 : i32
    %c0_i32_2 = arith.constant 0 : i32
    %c0_i32_3 = arith.constant 0 : i32
    return %c0_i32, %c0_i32_0, %c0_i32_1, %c0_i32_2 : i32, i32, i32, i32
  }
  func.func @transform_2(%arg0: i32) -> (i32, i32, i32, i32) {
    %c0_i32 = arith.constant 0 : i32
    %c0_i32_0 = arith.constant 0 : i32
    %c0_i32_1 = arith.constant 0 : i32
    %c0_i32_2 = arith.constant 0 : i32
    return %arg0, %c0_i32, %c0_i32_0, %c0_i32_1 : i32, i32, i32, i32
  }
  func.func @transform_3(%arg0: i32) -> (i32, i32, i32) {
    %c0_i32 = arith.constant 0 : i32
    %c0_i32_0 = arith.constant 0 : i32
    %c0_i32_1 = arith.constant 0 : i32
    return %arg0, %c0_i32, %c0_i32_0 : i32, i32, i32
  }
}

</mosaic_0001>

<llo_original>
// kernel: tpu_custom_call.1
$region0: #{tpu_custom_call.1}
  #allocation0 [shape = 'u32[]', space=smem, size = 0x4, offset = 0x4, fixed_abs, tag = 'smem constant byte address 0x4 - core index']
  #allocation1 [shape = 'u32[144,128]{1,0:T(1,128)}', space=vmem, size = 0x12000, scoped, tag = 'internal scratch']
  %s0 = inlined_call_operand.vmem [shape: f32[4,32,256], index: 0, kind: input, shape index: {}]
  %s1 = inlined_call_operand.hbm [shape: f32[2,9,32,32], index: 1, kind: input, shape index: {}]
  %s2 = inlined_call_operand.vmem [shape: f32[4,2,32,3], index: 2, kind: input, shape index: {}]
  %s3 = inlined_call_operand.hbm [shape: f32[4,32,256], index: 3, kind: output, shape index: {}]
  %s4 = sld [smem:[#allocation0]]
  $region49: #{tpu_custom_call.1} parent=0
    _
  %s6 = ssub.s32 1, %s4
  %s7 = scalar_select 0, %s6, %s4
  $region1: #{tpu_custom_call.1} parent=0
    #allocation2 [shape = 'u8[294912]{0}', space=vmem, size = 0x48000, scoped, tag = 'input window, operand 1, single buffered']
    #allocation3 [shape = 's32[2]{0}', space=sflag, size = 0x8, scoped, tag = 'scoped memory for tpu_custom_call.1']
    #allocation4 [shape = 's32[2]{0}', space=sflag, size = 0x8, scoped, tag = 'scoped memory for tpu_custom_call.1']
    #allocation5 [shape = 'u8[131072]{0}', space=vmem, size = 0x20000, scoped, tag = 'output window, operand 0']
    %8 = vsyncpa [#allocation3], 0
    %9 = vsyncpa [#allocation4], 0
    %s10 = scalar_lea.sflag [#allocation4], 1
    %11 = vsyncpa %s10, 0
    loop: start=0, step=1, limit=4
    $region2: #{tpu_custom_call.1} parent=1 // loop_pre_header
      _
    $region3: #{tpu_custom_call.1} parent=1 // loop_header
      %s13 = sphi 0, %s17
      %p14 = scmp.ge.s32.totalorder %s13, 4
      %s23 = sphi 0, %s25
      %s26 = sphi 0, %s23
      %s27 = sphi 0, %s26
      %s43 = sphi 0, %s27
      %s47 = sphi 0, %s47
      %s49 = sphi 0, %s47
      %s50 = sphi 0, %s49
      %s64 = sphi 0, %s50
      %s70 = sphi 0, %s72
      %s73 = sphi 0, %s70
      %s74 = sphi 0, %s73
      %s90 = sphi 0, %s74
      %s96 = sphi 0, %s98
      %s99 = sphi 0, %s96
      %s100 = sphi 0, %s99
      %s116 = sphi 0, %s100
    $region4: #{tpu_custom_call.1} parent=1 // loop_header_branch
      %16 = sbr.rel (%p14) target = $region8
    $region5: #{tpu_custom_call.1} parent=1 // loop_body
      %s18 = ssub.s32 %s13, 1
      %s19 = ssub.s32 %s13, 2
      %s20 = sadd.s32 %s13, 1
      %s21 = ssub.s32 %s13, %s20
      %p22 = scmp.eq.s32.totalorder %s21, 0
      %s24 = sadd.s32 %s23, 1
      %s25 = scalar_select %p22, %s23, %s24
      %p28 = pneg %p22
      %p29 = scmp.eq.s32.totalorder %s13, 1
      %p30 = por %p28, %p29
      %p31 = scmp.ne.s32.totalorder %s23, %s26
      %p32 = scmp.eq.s32.totalorder %s13, 0
      %p33 = por %p31, %p32
      %p34 = scmp.ne.s32.totalorder %s23, %s26
      %p35 = scmp.eq.s32.totalorder %s18, 1
      %p36 = por %p34, %p35
      %p37 = scmp.ne.s32.totalorder %s26, %s27
      %p38 = scmp.eq.s32.totalorder %s18, 0
      %p39 = por %p37, %p38
      %p40 = scmp.ne.s32.totalorder %s26, %s27
      %p41 = scmp.eq.s32.totalorder %s19, 1
      %p42 = por %p40, %p41
      %p44 = scmp.ne.s32.totalorder %s27, %s43
      %p45 = scmp.eq.s32.totalorder %s19, 0
      %p46 = por %p44, %p45
      %s48 = sadd.s32 %s47, 1
      %p51 = scmp.eq.s32.totalorder %s13, 1
      %p52 = scmp.ne.s32.totalorder %s47, %s49
      %p53 = scmp.eq.s32.totalorder %s13, 0
      %p54 = por %p52, %p53
      %p55 = scmp.ne.s32.totalorder %s47, %s49
      %p56 = scmp.eq.s32.totalorder %s18, 1
      %p57 = por %p55, %p56
      %p58 = scmp.ne.s32.totalorder %s49, %s50
      %p59 = scmp.eq.s32.totalorder %s18, 0
      %p60 = por %p58, %p59
      %p61 = scmp.ne.s32.totalorder %s49, %s50
      %p62 = scmp.eq.s32.totalorder %s19, 1
      %p63 = por %p61, %p62
      %p65 = scmp.ne.s32.totalorder %s50, %s64
      %p66 = scmp.eq.s32.totalorder %s19, 0
      %p67 = por %p65, %p66
      %s68 = ssub.s32 %s13, %s20
      %p69 = scmp.eq.s32.totalorder %s68, 0
      %s71 = sadd.s32 %s70, 1
      %s72 = scalar_select %p69, %s70, %s71
      %p75 = pneg %p69
      %p76 = scmp.eq.s32.totalorder %s13, 1
      %p77 = por %p75, %p76
      %p78 = scmp.ne.s32.totalorder %s70, %s73
      %p79 = scmp.eq.s32.totalorder %s13, 0
      %p80 = por %p78, %p79
      %p81 = scmp.ne.s32.totalorder %s70, %s73
      %p82 = scmp.eq.s32.totalorder %s18, 1
      %p83 = por %p81, %p82
      %p84 = scmp.ne.s32.totalorder %s73, %s74
      %p85 = scmp.eq.s32.totalorder %s18, 0
      %p86 = por %p84, %p85
      %p87 = scmp.ne.s32.totalorder %s73, %s74
      %p88 = scmp.eq.s32.totalorder %s19, 1
      %p89 = por %p87, %p88
      %p91 = scmp.ne.s32.totalorder %s74, %s90
      %p92 = scmp.eq.s32.totalorder %s19, 0
      %p93 = por %p91, %p92
      %s94 = ssub.s32 %s13, %s20
      %p95 = scmp.eq.s32.totalorder %s94, 0
      %s97 = sadd.s32 %s96, 1
      %s98 = scalar_select %p95, %s96, %s97
      %p101 = pneg %p95
      %p102 = scmp.eq.s32.totalorder %s13, 1
      %p103 = por %p101, %p102
      %p104 = scmp.ne.s32.totalorder %s96, %s99
      %p105 = scmp.eq.s32.totalorder %s13, 0
      %p106 = por %p104, %p105
      %p107 = scmp.ne.s32.totalorder %s96, %s99
      %p108 = scmp.eq.s32.totalorder %s18, 1
      %p109 = por %p107, %p108
      %p110 = scmp.ne.s32.totalorder %s99, %s100
      %p111 = scmp.eq.s32.totalorder %s18, 0
      %p112 = por %p110, %p111
      %p113 = scmp.ne.s32.totalorder %s99, %s100
      %p114 = scmp.eq.s32.totalorder %s19, 1
      %p115 = por %p113, %p114
      %p117 = scmp.ne.s32.totalorder %s100, %s116
      %p118 = scmp.eq.s32.totalorder %s19, 0
      %p119 = por %p117, %p118
      %p120 = scmp.le.s32.totalorder 1, %s13
      %p121 = scmp.lt.s32.totalorder %s13, 3
      %p122 = pnand %p120, %p121
      %p123 = pneg %p122
      // Predicated region
      $region9: #{tpu_custom_call.1} parent=5 // pred_check
        _
      $region10: #{tpu_custom_call.1} parent=5 // pred_check_branch
        %125 = sbr.rel (%p122) target = $region12
      $region11: #{tpu_custom_call.1} parent=5 // pred_region
        %s126 = ssub.s32 %s13, 1
        // Predicated region
        $region13: #{tpu_custom_call.1} parent=11 // pred_check
          %p127 = pneg %p60
        $region14: #{tpu_custom_call.1} parent=11 // pred_check_branch
          %129 = sbr.rel (%p127) target = $region16
        $region15: #{tpu_custom_call.1} parent=11 // pred_region
          %s131 = ssub.s32 9216, 9216
          %132 = vsyncadd [#allocation3], %s131
          %s133 = sshll.u32 [#allocation2], 4
          %s134 = int_to_ptr.vmem [resolvable:$true] %s133
          %139 = dma.hbm_to_vmem [thread:$0]  %s1, 9216, %s134, [#allocation3], 128, 128, 8
        $region16: #{tpu_custom_call.1} parent=11 // pred_fallthru
          _
      $region12: #{tpu_custom_call.1} parent=5 // pred_fallthru
        _
      %p140 = scmp.lt.s32.totalorder %s13, 2
      // Predicated region
      $region17: #{tpu_custom_call.1} parent=5 // pred_check
        %p141 = pneg %p140
      $region18: #{tpu_custom_call.1} parent=5 // pred_check_branch
        %143 = sbr.rel (%p141) target = $region20
      $region19: #{tpu_custom_call.1} parent=5 // pred_region
        // Predicated region
        $region21: #{tpu_custom_call.1} parent=19 // pred_check
          %p144 = pneg %p33
        $region22: #{tpu_custom_call.1} parent=19 // pred_check_branch
          %146 = sbr.rel (%p144) target = $region24
        $region23: #{tpu_custom_call.1} parent=19 // pred_region
          %s147 = smul.u32 2, %s13
          %p148 = scmp.lt.s32.totalorder %s147, 3
          %s149 = scalar_select %p148, %s147, 3
          %s150 = smul.addr %s149, 8
          %s151 = smul.addr %s150, 8
          %s152 = scalar_lea.vmem %s0, %s151
          %s153 = smul.u32 2, %s13
        $region24: #{tpu_custom_call.1} parent=19 // pred_fallthru
          _
        // Predicated region
        $region25: #{tpu_custom_call.1} parent=19 // pred_check
          %p154 = pneg %p80
        $region26: #{tpu_custom_call.1} parent=19 // pred_check_branch
          %156 = sbr.rel (%p154) target = $region28
        $region27: #{tpu_custom_call.1} parent=19 // pred_region
          %s157 = smul.u32 2, %s13
          %p158 = scmp.lt.s32.totalorder %s157, 3
          %s159 = scalar_select %p158, %s157, 3
          %s160 = smul.addr %s159, 8
          %s161 = smul.addr %s160, 8
          %s162 = scalar_lea.vmem %s2, %s161
          %s163 = smul.u32 2, %s13
        $region28: #{tpu_custom_call.1} parent=19 // pred_fallthru
          _
      $region20: #{tpu_custom_call.1} parent=5 // pred_fallthru
        _
      %p164 = scmp.le.s32.totalorder 1, %s13
      %p165 = scmp.lt.s32.totalorder %s13, 3
      %p166 = pnand %p164, %p165
      %p167 = pneg %p166
      // Predicated region
      $region29: #{tpu_custom_call.1} parent=5 // pred_check
        _
      $region30: #{tpu_custom_call.1} parent=5 // pred_check_branch
        %169 = sbr.rel (%p166) target = $region32
      $region31: #{tpu_custom_call.1} parent=5 // pred_region
        %s170 = ssub.s32 %s13, 1
        // Predicated region
        $region33: #{tpu_custom_call.1} parent=31 // pred_check
          %p171 = pneg %p60
        $region34: #{tpu_custom_call.1} parent=31 // pred_check_branch
          %173 = sbr.rel (%p171) target = $region36
        $region35: #{tpu_custom_call.1} parent=31 // pred_region
          %174 = dma.done [#allocation3], 9216
        $region36: #{tpu_custom_call.1} parent=31 // pred_fallthru
          _
        %s175 = smul.u32 2, %s18
        %p176 = scmp.lt.s32.totalorder %s175, 3
        %s177 = scalar_select %p176, %s175, 3
        %s178 = smul.addr %s177, 8
        %s179 = smul.addr %s178, 8
        %s180 = scalar_lea.vmem %s0, %s179
        %p181 = pneg %p39
        %p182 = pneg %p36
        %p183 = pneg %p60
        %p184 = pneg %p57
        %s185 = smul.u32 2, %s18
        %p186 = scmp.lt.s32.totalorder %s185, 3
        %s187 = scalar_select %p186, %s185, 3
        %s188 = smul.addr %s187, 8
        %s189 = smul.addr %s188, 8
        %s190 = scalar_lea.vmem %s2, %s189
        %p191 = pneg %p86
        %p192 = pneg %p83
        %p193 = pneg %p112
        %p194 = pneg %p109
        %s195 = sand.u32 %s99, 1
        %s196 = scalar_lea.sflag [#allocation4], %s195
        %s197 = sand.u32 %s99, 1
        %s198 = smul.addr %s197, 128
        %s199 = scalar_lea.vmem [#allocation5], %s198
        %s200 = smul.u32 2, %s18
        %p201 = scmp.lt.s32.totalorder %s200, 3
        %s202 = scalar_select %p201, %s200, 3
        %s203 = smul.addr %s202, 8
        %s204 = smul.addr %s203, 8
        %s205 = scalar_lea.vmem %s0, %s204
        %s206 = smul.u32 2, %s18
        %s207 = smul.u32 2, %s18
        %p208 = scmp.lt.s32.totalorder %s207, 3
        %s209 = scalar_select %p208, %s207, 3
        %s210 = smul.addr %s209, 8
        %s211 = smul.addr %s210, 8
        %s212 = scalar_lea.vmem %s2, %s211
        %s213 = smul.u32 2, %s18
        %s214 = smul.u32 2, %s18
        %v215 = vlaneseq
        %v216 = vand.u32 %v215, 127
        %v217 = vadd.s32 %v216, 128
        %v218 = vand.u32 %v216, 15
        %v219 = vand.u32 %v217, 15
        %v220 = vld [vmem:[%s205] sm:$0xff]
        %v221 = vld [vmem:[%s205 + $0x8] sm:$0xff]
        %v222 = vld [vmem:[%s205 + $0x10] sm:$0xff]
        %v223 = vld [vmem:[%s205 + $0x18] sm:$0xff]
        %v224 = vld [vmem:[%s205 + $0x20] sm:$0xff]
        %v225 = vld [vmem:[%s205 + $0x28] sm:$0xff]
        %v226 = vld [vmem:[%s205 + $0x30] sm:$0xff]
        %v227 = vld [vmem:[%s205 + $0x38] sm:$0xff]
        %v228 = vld [vmem:[%s205 + $0x40] sm:$0xff]
        %v229 = vld [vmem:[%s205 + $0x48] sm:$0xff]
        %v230 = vld [vmem:[%s205 + $0x50] sm:$0xff]
        %v231 = vld [vmem:[%s205 + $0x58] sm:$0xff]
        %v232 = vld [vmem:[%s205 + $0x60] sm:$0xff]
        %v233 = vld [vmem:[%s205 + $0x68] sm:$0xff]
        %v234 = vld [vmem:[%s205 + $0x70] sm:$0xff]
        %v235 = vld [vmem:[%s205 + $0x78] sm:$0xff]
        %v236 = vmax.f32 %v220, 0.0
        %v237 = vmax.f32 %v221, 0.0
        %v238 = vmax.f32 %v222, 0.0
        %v239 = vmax.f32 %v223, 0.0
        %v240 = vmax.f32 %v224, 0.0
        %v241 = vmax.f32 %v225, 0.0
        %v242 = vmax.f32 %v226, 0.0
        %v243 = vmax.f32 %v227, 0.0
        %v244 = vmax.f32 %v228, 0.0
        %v245 = vmax.f32 %v229, 0.0
        %v246 = vmax.f32 %v230, 0.0
        %v247 = vmax.f32 %v231, 0.0
        %v248 = vmax.f32 %v232, 0.0
        %v249 = vmax.f32 %v233, 0.0
        %v250 = vmax.f32 %v234, 0.0
        %v251 = vmax.f32 %v235, 0.0
        %v252 = vld [vmem:[%s212] sm:$0xff]
        %v253 = vld [vmem:[%s212 + $0x8] sm:$0xff]
        %v254 = vld [vmem:[%s212 + $0x10] sm:$0xff]
        %v255 = vld [vmem:[%s212 + $0x18] sm:$0xff]
        %v256 = vld [vmem:[%s212 + $0x40] sm:$0xff]
        %v257 = vld [vmem:[%s212 + $0x48] sm:$0xff]
        %v258 = vld [vmem:[%s212 + $0x50] sm:$0xff]
        %v259 = vld [vmem:[%s212 + $0x58] sm:$0xff]
        %v260 = vadd.f32 %v236, %v237
        %261 = vadd.xlane.f32.xlu0 %v260
        %v262 = vpop.xlane.xlu0 %261
        %v263 = vadd.f32 %v238, %v239
        %264 = vadd.xlane.f32.xlu0 %v263
        %v265 = vpop.xlane.xlu0 %264
        %v266 = vadd.f32 %v240, %v241
        %267 = vadd.xlane.f32.xlu0 %v266
        %v268 = vpop.xlane.xlu0 %267
        %v269 = vadd.f32 %v242, %v243
        %270 = vadd.xlane.f32.xlu0 %v269
        %v271 = vpop.xlane.xlu0 %270
        %v272 = vadd.f32 %v244, %v245
        %273 = vadd.xlane.f32.xlu0 %v272
        %v274 = vpop.xlane.xlu0 %273
        %v275 = vadd.f32 %v246, %v247
        %276 = vadd.xlane.f32.xlu0 %v275
        %v277 = vpop.xlane.xlu0 %276
        %v278 = vadd.f32 %v248, %v249
        %279 = vadd.xlane.f32.xlu0 %v278
        %v280 = vpop.xlane.xlu0 %279
        %v281 = vadd.f32 %v250, %v251
        %282 = vadd.xlane.f32.xlu0 %v281
        %v283 = vpop.xlane.xlu0 %282
        %v284 = vmul.f32 %v236, %v236
        %v285 = vmul.f32 %v237, %v237
        %v286 = vmul.f32 %v238, %v238
        %v287 = vmul.f32 %v239, %v239
        %v288 = vmul.f32 %v240, %v240
        %v289 = vmul.f32 %v241, %v241
        %v290 = vmul.f32 %v242, %v242
        %v291 = vmul.f32 %v243, %v243
        %v292 = vmul.f32 %v244, %v244
        %v293 = vmul.f32 %v245, %v245
        %v294 = vmul.f32 %v246, %v246
        %v295 = vmul.f32 %v247, %v247
        %v296 = vmul.f32 %v248, %v248
        %v297 = vmul.f32 %v249, %v249
        %v298 = vmul.f32 %v250, %v250
        %v299 = vmul.f32 %v251, %v251
        %v300 = vadd.f32 %v284, %v285
        %301 = vadd.xlane.f32.xlu0 %v300
        %v302 = vpop.xlane.xlu0 %301
        %v303 = vadd.f32 %v286, %v287
        %304 = vadd.xlane.f32.xlu0 %v303
        %v305 = vpop.xlane.xlu0 %304
        %v306 = vadd.f32 %v288, %v289
        %307 = vadd.xlane.f32.xlu0 %v306
        %v308 = vpop.xlane.xlu0 %307
        %v309 = vadd.f32 %v290, %v291
        %310 = vadd.xlane.f32.xlu0 %v309
        %v311 = vpop.xlane.xlu0 %310
        %v312 = vadd.f32 %v292, %v293
        %313 = vadd.xlane.f32.xlu0 %v312
        %v314 = vpop.xlane.xlu0 %313
        %v315 = vadd.f32 %v294, %v295
        %316 = vadd.xlane.f32.xlu0 %v315
        %v317 = vpop.xlane.xlu0 %316
        %v318 = vadd.f32 %v296, %v297
        %319 = vadd.xlane.f32.xlu0 %v318
        %v320 = vpop.xlane.xlu0 %319
        %v321 = vadd.f32 %v298, %v299
        %322 = vadd.xlane.f32.xlu0 %v321
        %v323 = vpop.xlane.xlu0 %322
        %v324 = vmul.f32 %v262, 0.00390625
        %v325 = vmul.f32 %v265, 0.00390625
        %v326 = vmul.f32 %v268, 0.00390625
        %v327 = vmul.f32 %v271, 0.00390625
        %v328 = vmul.f32 %v274, 0.00390625
        %v329 = vmul.f32 %v277, 0.00390625
        %v330 = vmul.f32 %v280, 0.00390625
        %v331 = vmul.f32 %v283, 0.00390625
        %v332 = vmul.f32 %v302, 0.00390625
        %v333 = vmul.f32 %v305, 0.00390625
        %v334 = vmul.f32 %v308, 0.00390625
        %v335 = vmul.f32 %v311, 0.00390625
        %v336 = vmul.f32 %v314, 0.00390625
        %v337 = vmul.f32 %v317, 0.00390625
        %v338 = vmul.f32 %v320, 0.00390625
        %v339 = vmul.f32 %v323, 0.00390625
        %v340 = vmul.f32 %v324, %v324
        %v341 = vmul.f32 %v325, %v325
        %v342 = vmul.f32 %v326, %v326
        %v343 = vmul.f32 %v327, %v327
        %v344 = vmul.f32 %v328, %v328
        %v345 = vmul.f32 %v329, %v329
        %v346 = vmul.f32 %v330, %v330
        %v347 = vmul.f32 %v331, %v331
        %v348 = vsub.f32 %v332, %v340
        %v349 = vsub.f32 %v333, %v341
        %v350 = vsub.f32 %v334, %v342
        %v351 = vsub.f32 %v335, %v343
        %v352 = vsub.f32 %v336, %v344
        %v353 = vsub.f32 %v337, %v345
        %v354 = vsub.f32 %v338, %v346
        %v355 = vsub.f32 %v339, %v347
        %v356 = vmax.f32 %v348, 0.0
        %v357 = vmax.f32 %v349, 0.0
        %v358 = vmax.f32 %v350, 0.0
        %v359 = vmax.f32 %v351, 0.0
        %v360 = vmax.f32 %v352, 0.0
        %v361 = vmax.f32 %v353, 0.0
        %v362 = vmax.f32 %v354, 0.0
        %v363 = vmax.f32 %v355, 0.0
        %v364 = vadd.f32 %v356, 1e-05
        %v365 = vadd.f32 %v357, 1e-05
        %v366 = vadd.f32 %v358, 1e-05
        %v367 = vadd.f32 %v359, 1e-05
        %v368 = vadd.f32 %v360, 1e-05
        %v369 = vadd.f32 %v361, 1e-05
        %v370 = vadd.f32 %v362, 1e-05
        %v371 = vadd.f32 %v363, 1e-05
        %v372 = vrsqrt.pop %v364
        %v373 = vrsqrt.pop %v365
        %v374 = vrsqrt.pop %v366
        %v375 = vrsqrt.pop %v367
        %v376 = vrsqrt.pop %v368
        %v377 = vrsqrt.pop %v369
        %v378 = vrsqrt.pop %v370
        %v379 = vrsqrt.pop %v371
        %v380 = vadd.f32 %v324, %v325
        %v381 = vadd.f32 %v380, %v326
        %v382 = vadd.f32 %v381, %v327
        %v383 = vrot.slane %v382, 4
        %v384 = vadd.f32 %v382, %v383
        %v385 = vrot.slane %v384, 2
        %v386 = vadd.f32 %v384, %v385
        %v387 = vrot.slane %v386, 1
        %v388 = vadd.f32 %v386, %v387
        %v389 = vadd.f32 %v328, %v329
        %v390 = vadd.f32 %v389, %v330
        %v391 = vadd.f32 %v390, %v331
        %v392 = vrot.slane %v391, 4
        %v393 = vadd.f32 %v391, %v392
        %v394 = vrot.slane %v393, 2
        %v395 = vadd.f32 %v393, %v394
        %v396 = vrot.slane %v395, 1
        %v397 = vadd.f32 %v395, %v396
        %v398 = vrcp.pop 32.0
        %v399 = vmul.f32 %v388, %v398
        %v400 = vmul.f32 %v397, %v398
        %v401 = vsub.f32 %v324, %v399
        %v402 = vsub.f32 %v325, %v399
        %v403 = vsub.f32 %v326, %v399
        %v404 = vsub.f32 %v327, %v399
        %v405 = vsub.f32 %v328, %v400
        %v406 = vsub.f32 %v329, %v400
        %v407 = vsub.f32 %v330, %v400
        %v408 = vsub.f32 %v331, %v400
        %v409 = vmul.f32 %v401, %v401
        %v410 = vmul.f32 %v402, %v402
        %v411 = vmul.f32 %v403, %v403
        %v412 = vmul.f32 %v404, %v404
        %v413 = vmul.f32 %v405, %v405
        %v414 = vmul.f32 %v406, %v406
        %v415 = vmul.f32 %v407, %v407
        %v416 = vmul.f32 %v408, %v408
        %v417 = vadd.f32 %v409, %v410
        %v418 = vadd.f32 %v417, %v411
        %v419 = vadd.f32 %v418, %v412
        %v420 = vrot.slane %v419, 4
        %v421 = vadd.f32 %v419, %v420
        %v422 = vrot.slane %v421, 2
        %v423 = vadd.f32 %v421, %v422
        %v424 = vrot.slane %v423, 1
        %v425 = vadd.f32 %v423, %v424
        %v426 = vadd.f32 %v413, %v414
        %v427 = vadd.f32 %v426, %v415
        %v428 = vadd.f32 %v427, %v416
        %v429 = vrot.slane %v428, 4
        %v430 = vadd.f32 %v428, %v429
        %v431 = vrot.slane %v430, 2
        %v432 = vadd.f32 %v430, %v431
        %v433 = vrot.slane %v432, 1
        %v434 = vadd.f32 %v432, %v433
        %v435 = vrcp.pop 31.0
        %v436 = vmul.f32 %v425, %v435
        %v437 = vmul.f32 %v434, %v435
        %v438 = vadd.f32 %v436, 1e-05
        %v439 = vadd.f32 %v437, 1e-05
        %v440 = vrsqrt.pop %v438
        %v441 = vrsqrt.pop %v439
        %v442 = vmul.f32 %v401, %v440
        %v443 = vmul.f32 %v402, %v440
        %v444 = vmul.f32 %v403, %v440
        %v445 = vmul.f32 %v404, %v440
        %v446 = vmul.f32 %v405, %v441
        %v447 = vmul.f32 %v406, %v441
        %v448 = vmul.f32 %v407, %v441
        %v449 = vmul.f32 %v408, %v441
        %v450 = vmul.f32 %v252, %v372
        %v451 = vmul.f32 %v253, %v373
        %v452 = vmul.f32 %v254, %v374
        %v453 = vmul.f32 %v255, %v375
        %v454 = vmul.f32 %v256, %v376
        %v455 = vmul.f32 %v257, %v377
        %v456 = vmul.f32 %v258, %v378
        %v457 = vmul.f32 %v259, %v379
        %v458 = vmul.f32 %v442, %v252
        %v459 = vmul.f32 %v443, %v253
        %v460 = vmul.f32 %v444, %v254
        %v461 = vmul.f32 %v445, %v255
        %v462 = vmul.f32 %v446, %v256
        %v463 = vmul.f32 %v447, %v257
        %v464 = vmul.f32 %v448, %v258
        %v465 = vmul.f32 %v449, %v259
        %v466 = vmul.f32 %v324, %v372
        %v467 = vmul.f32 %v325, %v373
        %v468 = vmul.f32 %v326, %v374
        %v469 = vmul.f32 %v327, %v375
        %v470 = vmul.f32 %v328, %v376
        %v471 = vmul.f32 %v329, %v377
        %v472 = vmul.f32 %v330, %v378
        %v473 = vmul.f32 %v331, %v379
        %v474 = vsub.f32 %v458, %v466
        %v475 = vsub.f32 %v459, %v467
        %v476 = vsub.f32 %v460, %v468
        %v477 = vsub.f32 %v461, %v469
        %v478 = vsub.f32 %v462, %v470
        %v479 = vsub.f32 %v463, %v471
        %v480 = vsub.f32 %v464, %v472
        %v481 = vsub.f32 %v465, %v473
        %490 = vrot.lane.b32.xlu0 %v474, 127
        %v491 = vpop.permute.xlu0 %490
        %492 = vrot.lane.b32.xlu0 %v475, 127
        %v493 = vpop.permute.xlu0 %492
        %494 = vrot.lane.b32.xlu0 %v476, 127
        %v495 = vpop.permute.xlu0 %494
        %496 = vrot.lane.b32.xlu0 %v477, 127
        %v497 = vpop.permute.xlu0 %496
        %498 = vrot.lane.b32.xlu0 %v478, 127
        %v499 = vpop.permute.xlu0 %498
        %500 = vrot.lane.b32.xlu0 %v479, 127
        %v501 = vpop.permute.xlu0 %500
        %502 = vrot.lane.b32.xlu0 %v480, 127
        %v503 = vpop.permute.xlu0 %502
        %504 = vrot.lane.b32.xlu0 %v481, 127
        %v505 = vpop.permute.xlu0 %504
        %v514 = vmul.f32 %v252, %v491
        %v515 = vmul.f32 %v253, %v493
        %v516 = vmul.f32 %v254, %v495
        %v517 = vmul.f32 %v255, %v497
        %v518 = vmul.f32 %v256, %v499
        %v519 = vmul.f32 %v257, %v501
        %v520 = vmul.f32 %v258, %v503
        %v521 = vmul.f32 %v259, %v505
        %530 = vrot.lane.b32.xlu0 %v252, 126
        %v531 = vpop.permute.xlu0 %530
        %532 = vrot.lane.b32.xlu0 %v253, 126
        %v533 = vpop.permute.xlu0 %532
        %534 = vrot.lane.b32.xlu0 %v254, 126
        %v535 = vpop.permute.xlu0 %534
        %536 = vrot.lane.b32.xlu0 %v255, 126
        %v537 = vpop.permute.xlu0 %536
        %538 = vrot.lane.b32.xlu0 %v256, 126
        %v539 = vpop.permute.xlu0 %538
        %540 = vrot.lane.b32.xlu0 %v257, 126
        %v541 = vpop.permute.xlu0 %540
        %542 = vrot.lane.b32.xlu0 %v258, 126
        %v543 = vpop.permute.xlu0 %542
        %544 = vrot.lane.b32.xlu0 %v259, 126
        %v545 = vpop.permute.xlu0 %544
        %v554 = vadd.f32 %v514, %v531
        %v555 = vadd.f32 %v515, %v533
        %v556 = vadd.f32 %v516, %v535
        %v557 = vadd.f32 %v517, %v537
        %v558 = vadd.f32 %v518, %v539
        %v559 = vadd.f32 %v519, %v541
        %v560 = vadd.f32 %v520, %v543
        %v561 = vadd.f32 %v521, %v545
        %563 = vset.pattern.permute.xlu0 0
        %564 = vperm.xlu0 %563, %v450
        %v565 = vpop.permute.xlu0 %564
        %568 = vset.pattern.permute.xlu0 0
        %569 = vperm.xlu0 %568, %v451
        %v570 = vpop.permute.xlu0 %569
        %573 = vset.pattern.permute.xlu0 0
        %574 = vperm.xlu0 %573, %v452
        %v575 = vpop.permute.xlu0 %574
        %578 = vset.pattern.permute.xlu0 0
        %579 = vperm.xlu0 %578, %v453
        %v580 = vpop.permute.xlu0 %579
        %583 = vset.pattern.permute.xlu0 0
        %584 = vperm.xlu0 %583, %v454
        %v585 = vpop.permute.xlu0 %584
        %588 = vset.pattern.permute.xlu0 0
        %589 = vperm.xlu0 %588, %v455
        %v590 = vpop.permute.xlu0 %589
        %593 = vset.pattern.permute.xlu0 0
        %594 = vperm.xlu0 %593, %v456
        %v595 = vpop.permute.xlu0 %594
        %598 = vset.pattern.permute.xlu0 0
        %599 = vperm.xlu0 %598, %v457
        %v600 = vpop.permute.xlu0 %599
        %v602 = vmul.f32 %v236, %v565
        %v603 = vmul.f32 %v237, %v565
        %v604 = vmul.f32 %v238, %v570
        %v605 = vmul.f32 %v239, %v570
        %v606 = vmul.f32 %v240, %v575
        %v607 = vmul.f32 %v241, %v575
        %v608 = vmul.f32 %v242, %v580
        %v609 = vmul.f32 %v243, %v580
        %v610 = vmul.f32 %v244, %v585
        %v611 = vmul.f32 %v245, %v585
        %v612 = vmul.f32 %v246, %v590
        %v613 = vmul.f32 %v247, %v590
        %v614 = vmul.f32 %v248, %v595
        %v615 = vmul.f32 %v249, %v595
        %v616 = vmul.f32 %v250, %v600
        %v617 = vmul.f32 %v251, %v600
        %619 = vset.pattern.permute.xlu0 0
        %620 = vperm.xlu0 %619, %v554
        %v621 = vpop.permute.xlu0 %620
        %624 = vset.pattern.permute.xlu0 0
        %625 = vperm.xlu0 %624, %v555
        %v626 = vpop.permute.xlu0 %625
        %629 = vset.pattern.permute.xlu0 0
        %630 = vperm.xlu0 %629, %v556
        %v631 = vpop.permute.xlu0 %630
        %634 = vset.pattern.permute.xlu0 0
        %635 = vperm.xlu0 %634, %v557
        %v636 = vpop.permute.xlu0 %635
        %639 = vset.pattern.permute.xlu0 0
        %640 = vperm.xlu0 %639, %v558
        %v641 = vpop.permute.xlu0 %640
        %644 = vset.pattern.permute.xlu0 0
        %645 = vperm.xlu0 %644, %v559
        %v646 = vpop.permute.xlu0 %645
        %649 = vset.pattern.permute.xlu0 0
        %650 = vperm.xlu0 %649, %v560
        %v651 = vpop.permute.xlu0 %650
        %654 = vset.pattern.permute.xlu0 0
        %655 = vperm.xlu0 %654, %v561
        %v656 = vpop.permute.xlu0 %655
        %v658 = vadd.f32 %v602, %v621
        %v659 = vadd.f32 %v603, %v621
        %v660 = vadd.f32 %v604, %v626
        %v661 = vadd.f32 %v605, %v626
        %v662 = vadd.f32 %v606, %v631
        %v663 = vadd.f32 %v607, %v631
        %v664 = vadd.f32 %v608, %v636
        %v665 = vadd.f32 %v609, %v636
        %v666 = vadd.f32 %v610, %v641
        %v667 = vadd.f32 %v611, %v641
        %v668 = vadd.f32 %v612, %v646
        %v669 = vadd.f32 %v613, %v646
        %v670 = vadd.f32 %v614, %v651
        %v671 = vadd.f32 %v615, %v651
        %v672 = vadd.f32 %v616, %v656
        %v673 = vadd.f32 %v617, %v656
        %674 = vrot.lane.b32.xlu0 %v658, 32
        %v675 = vpop.permute.xlu0 %674
        %676 = vrot.lane.b32.xlu0 %v660, 32
        %v677 = vpop.permute.xlu0 %676
        %678 = vrot.lane.b32.xlu0 %v662, 32
        %v679 = vpop.permute.xlu0 %678
        %680 = vrot.lane.b32.xlu0 %v664, 32
        %v681 = vpop.permute.xlu0 %680
        %682 = vrot.lane.b32.xlu0 %v666, 32
        %v683 = vpop.permute.xlu0 %682
        %684 = vrot.lane.b32.xlu0 %v668, 32
        %v685 = vpop.permute.xlu0 %684
        %686 = vrot.lane.b32.xlu0 %v670, 32
        %v687 = vpop.permute.xlu0 %686
        %688 = vrot.lane.b32.xlu0 %v672, 32
        %v689 = vpop.permute.xlu0 %688
        %690 = vrot.lane.b32.xlu0 %v659, 32
        %v691 = vpop.permute.xlu0 %690
        %692 = vrot.lane.b32.xlu0 %v661, 32
        %v693 = vpop.permute.xlu0 %692
        %694 = vrot.lane.b32.xlu0 %v663, 32
        %v695 = vpop.permute.xlu0 %694
        %696 = vrot.lane.b32.xlu0 %v665, 32
        %v697 = vpop.permute.xlu0 %696
        %698 = vrot.lane.b32.xlu0 %v667, 32
        %v699 = vpop.permute.xlu0 %698
        %700 = vrot.lane.b32.xlu0 %v669, 32
        %v701 = vpop.permute.xlu0 %700
        %702 = vrot.lane.b32.xlu0 %v671, 32
        %v703 = vpop.permute.xlu0 %702
        %704 = vrot.lane.b32.xlu0 %v673, 32
        %v705 = vpop.permute.xlu0 %704
        %vm706 = vcmp.lt.s32.totalorder %v216, 32
        %v707 = vsel %vm706, %v675, %v691
        %v708 = vsel %vm706, %v677, %v693
        %v709 = vsel %vm706, %v679, %v695
        %v710 = vsel %vm706, %v681, %v697
        %v711 = vsel %vm706, %v683, %v699
        %v712 = vsel %vm706, %v685, %v701
        %v713 = vsel %vm706, %v687, %v703
        %v714 = vsel %vm706, %v689, %v705
        %v715 = vsel %vm706, %v691, %v675
        %v716 = vsel %vm706, %v693, %v677
        %v717 = vsel %vm706, %v695, %v679
        %v718 = vsel %vm706, %v697, %v681
        %v719 = vsel %vm706, %v699, %v683
        %v720 = vsel %vm706, %v701, %v685
        %v721 = vsel %vm706, %v703, %v687
        %v722 = vsel %vm706, %v705, %v689
        %vm723 = vcmp.ge.s32.totalorder %v216, 32
        %vm724 = vcmp.ge.s32.totalorder %v217, 32
        %v725 = vsel %vm723, 1, 0
        %v726 = vsel %vm724, 1, 0
        %vm727 = vcmp.eq.s32.totalorder %v725, 1
        %vm728 = vcmp.eq.s32.totalorder %v726, 1
        %v729 = vsel %vm727, %v715, 0.0
        %v730 = vsel %vm728, %v707, 0.0
        %v731 = vsel %vm727, %v716, 0.0
        %v732 = vsel %vm728, %v708, 0.0
        %v733 = vsel %vm727, %v717, 0.0
        %v734 = vsel %vm728, %v709, 0.0
        %v735 = vsel %vm727, %v718, 0.0
        %v736 = vsel %vm728, %v710, 0.0
        %v737 = vsel %vm727, %v719, 0.0
        %v738 = vsel %vm728, %v711, 0.0
        %v739 = vsel %vm727, %v720, 0.0
        %v740 = vsel %vm728, %v712, 0.0
        %v741 = vsel %vm727, %v721, 0.0
        %v742 = vsel %vm728, %v713, 0.0
        %v743 = vsel %vm727, %v722, 0.0
        %v744 = vsel %vm728, %v714, 0.0
        %v745 = vadd.f32 %v658, %v729
        %v746 = vadd.f32 %v659, %v730
        %v747 = vadd.f32 %v660, %v731
        %v748 = vadd.f32 %v661, %v732
        %v749 = vadd.f32 %v662, %v733
        %v750 = vadd.f32 %v663, %v734
        %v751 = vadd.f32 %v664, %v735
        %v752 = vadd.f32 %v665, %v736
        %v753 = vadd.f32 %v666, %v737
        %v754 = vadd.f32 %v667, %v738
        %v755 = vadd.f32 %v668, %v739
        %v756 = vadd.f32 %v669, %v740
        %v757 = vadd.f32 %v670, %v741
        %v758 = vadd.f32 %v671, %v742
        %v759 = vadd.f32 %v672, %v743
        %v760 = vadd.f32 %v673, %v744
        %761 = vrot.lane.b32.xlu0 %v658, 16
        %v762 = vpop.permute.xlu0 %761
        %763 = vrot.lane.b32.xlu0 %v660, 16
        %v764 = vpop.permute.xlu0 %763
        %765 = vrot.lane.b32.xlu0 %v662, 16
        %v766 = vpop.permute.xlu0 %765
        %767 = vrot.lane.b32.xlu0 %v664, 16
        %v768 = vpop.permute.xlu0 %767
        %769 = vrot.lane.b32.xlu0 %v666, 16
        %v770 = vpop.permute.xlu0 %769
        %771 = vrot.lane.b32.xlu0 %v668, 16
        %v772 = vpop.permute.xlu0 %771
        %773 = vrot.lane.b32.xlu0 %v670, 16
        %v774 = vpop.permute.xlu0 %773
        %775 = vrot.lane.b32.xlu0 %v672, 16
        %v776 = vpop.permute.xlu0 %775
        %777 = vrot.lane.b32.xlu0 %v659, 16
        %v778 = vpop.permute.xlu0 %777
        %779 = vrot.lane.b32.xlu0 %v661, 16
        %v780 = vpop.permute.xlu0 %779
        %781 = vrot.lane.b32.xlu0 %v663, 16
        %v782 = vpop.permute.xlu0 %781
        %783 = vrot.lane.b32.xlu0 %v665, 16
        %v784 = vpop.permute.xlu0 %783
        %785 = vrot.lane.b32.xlu0 %v667, 16
        %v786 = vpop.permute.xlu0 %785
        %787 = vrot.lane.b32.xlu0 %v669, 16
        %v788 = vpop.permute.xlu0 %787
        %789 = vrot.lane.b32.xlu0 %v671, 16
        %v790 = vpop.permute.xlu0 %789
        %791 = vrot.lane.b32.xlu0 %v673, 16
        %v792 = vpop.permute.xlu0 %791
        %vm793 = vcmp.lt.s32.totalorder %v216, 16
        %v794 = vsel %vm793, %v762, %v778
        %v795 = vsel %vm793, %v764, %v780
        %v796 = vsel %vm793, %v766, %v782
        %v797 = vsel %vm793, %v768, %v784
        %v798 = vsel %vm793, %v770, %v786
        %v799 = vsel %vm793, %v772, %v788
        %v800 = vsel %vm793, %v774, %v790
        %v801 = vsel %vm793, %v776, %v792
        %v802 = vsel %vm793, %v778, %v762
        %v803 = vsel %vm793, %v780, %v764
        %v804 = vsel %vm793, %v782, %v766
        %v805 = vsel %vm793, %v784, %v768
        %v806 = vsel %vm793, %v786, %v770
        %v807 = vsel %vm793, %v788, %v772
        %v808 = vsel %vm793, %v790, %v774
        %v809 = vsel %vm793, %v792, %v776
        %vm810 = vcmp.ge.s32.totalorder %v216, 16
        %vm811 = vcmp.ge.s32.totalorder %v217, 16
        %v812 = vsel %vm810, 1, 0
        %v813 = vsel %vm811, 1, 0
        %vm814 = vcmp.eq.s32.totalorder %v812, 1
        %vm815 = vcmp.eq.s32.totalorder %v813, 1
        %v816 = vsel %vm814, %v802, 0.0
        %v817 = vsel %vm815, %v794, 0.0
        %v818 = vsel %vm814, %v803, 0.0
        %v819 = vsel %vm815, %v795, 0.0
        %v820 = vsel %vm814, %v804, 0.0
        %v821 = vsel %vm815, %v796, 0.0
        %v822 = vsel %vm814, %v805, 0.0
        %v823 = vsel %vm815, %v797, 0.0
        %v824 = vsel %vm814, %v806, 0.0
        %v825 = vsel %vm815, %v798, 0.0
        %v826 = vsel %vm814, %v807, 0.0
        %v827 = vsel %vm815, %v799, 0.0
        %v828 = vsel %vm814, %v808, 0.0
        %v829 = vsel %vm815, %v800, 0.0
        %v830 = vsel %vm814, %v809, 0.0
        %v831 = vsel %vm815, %v801, 0.0
        %v832 = vadd.f32 %v745, %v816
        %v833 = vadd.f32 %v746, %v817
        %v834 = vadd.f32 %v747, %v818
        %v835 = vadd.f32 %v748, %v819
        %v836 = vadd.f32 %v749, %v820
        %v837 = vadd.f32 %v750, %v821
        %v838 = vadd.f32 %v751, %v822
        %v839 = vadd.f32 %v752, %v823
        %v840 = vadd.f32 %v753, %v824
        %v841 = vadd.f32 %v754, %v825
        %v842 = vadd.f32 %v755, %v826
        %v843 = vadd.f32 %v756, %v827
        %v844 = vadd.f32 %v757, %v828
        %v845 = vadd.f32 %v758, %v829
        %v846 = vadd.f32 %v759, %v830
        %v847 = vadd.f32 %v760, %v831
        %848 = vrot.lane.b32.xlu0 %v658, 112
        %v849 = vpop.permute.xlu0 %848
        %850 = vrot.lane.b32.xlu0 %v660, 112
        %v851 = vpop.permute.xlu0 %850
        %852 = vrot.lane.b32.xlu0 %v662, 112
        %v853 = vpop.permute.xlu0 %852
        %854 = vrot.lane.b32.xlu0 %v664, 112
        %v855 = vpop.permute.xlu0 %854
        %856 = vrot.lane.b32.xlu0 %v666, 112
        %v857 = vpop.permute.xlu0 %856
        %858 = vrot.lane.b32.xlu0 %v668, 112
        %v859 = vpop.permute.xlu0 %858
        %860 = vrot.lane.b32.xlu0 %v670, 112
        %v861 = vpop.permute.xlu0 %860
        %862 = vrot.lane.b32.xlu0 %v672, 112
        %v863 = vpop.permute.xlu0 %862
        %864 = vrot.lane.b32.xlu0 %v659, 112
        %v865 = vpop.permute.xlu0 %864
        %866 = vrot.lane.b32.xlu0 %v661, 112
        %v867 = vpop.permute.xlu0 %866
        %868 = vrot.lane.b32.xlu0 %v663, 112
        %v869 = vpop.permute.xlu0 %868
        %870 = vrot.lane.b32.xlu0 %v665, 112
        %v871 = vpop.permute.xlu0 %870
        %872 = vrot.lane.b32.xlu0 %v667, 112
        %v873 = vpop.permute.xlu0 %872
        %874 = vrot.lane.b32.xlu0 %v669, 112
        %v875 = vpop.permute.xlu0 %874
        %876 = vrot.lane.b32.xlu0 %v671, 112
        %v877 = vpop.permute.xlu0 %876
        %878 = vrot.lane.b32.xlu0 %v673, 112
        %v879 = vpop.permute.xlu0 %878
        %vm880 = vcmp.lt.s32.totalorder %v216, 112
        %v881 = vsel %vm880, %v849, %v865
        %v882 = vsel %vm880, %v851, %v867
        %v883 = vsel %vm880, %v853, %v869
        %v884 = vsel %vm880, %v855, %v871
        %v885 = vsel %vm880, %v857, %v873
        %v886 = vsel %vm880, %v859, %v875
        %v887 = vsel %vm880, %v861, %v877
        %v888 = vsel %vm880, %v863, %v879
        %v889 = vsel %vm880, %v865, %v849
        %v890 = vsel %vm880, %v867, %v851
        %v891 = vsel %vm880, %v869, %v853
        %v892 = vsel %vm880, %v871, %v855
        %v893 = vsel %vm880, %v873, %v857
        %v894 = vsel %vm880, %v875, %v859
        %v895 = vsel %vm880, %v877, %v861
        %v896 = vsel %vm880, %v879, %v863
        %vm897 = vcmp.lt.s32.totalorder %v216, 240
        %vm898 = vcmp.lt.s32.totalorder %v217, 240
        %v899 = vsel %vm897, 1, 0
        %v900 = vsel %vm898, 1, 0
        %vm901 = vcmp.eq.s32.totalorder %v899, 1
        %vm902 = vcmp.eq.s32.totalorder %v900, 1
        %v903 = vsel %vm901, %v881, 0.0
        %v904 = vsel %vm902, %v889, 0.0
        %v905 = vsel %vm901, %v882, 0.0
        %v906 = vsel %vm902, %v890, 0.0
        %v907 = vsel %vm901, %v883, 0.0
        %v908 = vsel %vm902, %v891, 0.0
        %v909 = vsel %vm901, %v884, 0.0
        %v910 = vsel %vm902, %v892, 0.0
        %v911 = vsel %vm901, %v885, 0.0
        %v912 = vsel %vm902, %v893, 0.0
        %v913 = vsel %vm901, %v886, 0.0
        %v914 = vsel %vm902, %v894, 0.0
        %v915 = vsel %vm901, %v887, 0.0
        %v916 = vsel %vm902, %v895, 0.0
        %v917 = vsel %vm901, %v888, 0.0
        %v918 = vsel %vm902, %v896, 0.0
        %v919 = vadd.f32 %v832, %v903
        %v920 = vadd.f32 %v833, %v904
        %v921 = vadd.f32 %v834, %v905
        %v922 = vadd.f32 %v835, %v906
        %v923 = vadd.f32 %v836, %v907
        %v924 = vadd.f32 %v837, %v908
        %v925 = vadd.f32 %v838, %v909
        %v926 = vadd.f32 %v839, %v910
        %v927 = vadd.f32 %v840, %v911
        %v928 = vadd.f32 %v841, %v912
        %v929 = vadd.f32 %v842, %v913
        %v930 = vadd.f32 %v843, %v914
        %v931 = vadd.f32 %v844, %v915
        %v932 = vadd.f32 %v845, %v916
        %v933 = vadd.f32 %v846, %v917
        %v934 = vadd.f32 %v847, %v918
        %935 = vrot.lane.b32.xlu0 %v658, 96
        %v936 = vpop.permute.xlu0 %935
        %937 = vrot.lane.b32.xlu0 %v660, 96
        %v938 = vpop.permute.xlu0 %937
        %939 = vrot.lane.b32.xlu0 %v662, 96
        %v940 = vpop.permute.xlu0 %939
        %941 = vrot.lane.b32.xlu0 %v664, 96
        %v942 = vpop.permute.xlu0 %941
        %943 = vrot.lane.b32.xlu0 %v666, 96
        %v944 = vpop.permute.xlu0 %943
        %945 = vrot.lane.b32.xlu0 %v668, 96
        %v946 = vpop.permute.xlu0 %945
        %947 = vrot.lane.b32.xlu0 %v670, 96
        %v948 = vpop.permute.xlu0 %947
        %949 = vrot.lane.b32.xlu0 %v672, 96
        %v950 = vpop.permute.xlu0 %949
        %951 = vrot.lane.b32.xlu0 %v659, 96
        %v952 = vpop.permute.xlu0 %951
        %953 = vrot.lane.b32.xlu0 %v661, 96
        %v954 = vpop.permute.xlu0 %953
        %955 = vrot.lane.b32.xlu0 %v663, 96
        %v956 = vpop.permute.xlu0 %955
        %957 = vrot.lane.b32.xlu0 %v665, 96
        %v958 = vpop.permute.xlu0 %957
        %959 = vrot.lane.b32.xlu0 %v667, 96
        %v960 = vpop.permute.xlu0 %959
        %961 = vrot.lane.b32.xlu0 %v669, 96
        %v962 = vpop.permute.xlu0 %961
        %963 = vrot.lane.b32.xlu0 %v671, 96
        %v964 = vpop.permute.xlu0 %963
        %965 = vrot.lane.b32.xlu0 %v673, 96
        %v966 = vpop.permute.xlu0 %965
        %vm967 = vcmp.lt.s32.totalorder %v216, 96
        %v968 = vsel %vm967, %v936, %v952
        %v969 = vsel %vm967, %v938, %v954
        %v970 = vsel %vm967, %v940, %v956
        %v971 = vsel %vm967, %v942, %v958
        %v972 = vsel %vm967, %v944, %v960
        %v973 = vsel %vm967, %v946, %v962
        %v974 = vsel %vm967, %v948, %v964
        %v975 = vsel %vm967, %v950, %v966
        %v976 = vsel %vm967, %v952, %v936
        %v977 = vsel %vm967, %v954, %v938
        %v978 = vsel %vm967, %v956, %v940
        %v979 = vsel %vm967, %v958, %v942
        %v980 = vsel %vm967, %v960, %v944
        %v981 = vsel %vm967, %v962, %v946
        %v982 = vsel %vm967, %v964, %v948
        %v983 = vsel %vm967, %v966, %v950
        %vm984 = vcmp.lt.s32.totalorder %v216, 224
        %vm985 = vcmp.lt.s32.totalorder %v217, 224
        %v986 = vsel %vm984, 1, 0
        %v987 = vsel %vm985, 1, 0
        %vm988 = vcmp.eq.s32.totalorder %v986, 1
        %vm989 = vcmp.eq.s32.totalorder %v987, 1
        %v990 = vsel %vm988, %v968, 0.0
        %v991 = vsel %vm989, %v976, 0.0
        %v992 = vsel %vm988, %v969, 0.0
        %v993 = vsel %vm989, %v977, 0.0
        %v994 = vsel %vm988, %v970, 0.0
        %v995 = vsel %vm989, %v978, 0.0
        %v996 = vsel %vm988, %v971, 0.0
        %v997 = vsel %vm989, %v979, 0.0
        %v998 = vsel %vm988, %v972, 0.0
        %v999 = vsel %vm989, %v980, 0.0
        %v1000 = vsel %vm988, %v973, 0.0
        %v1001 = vsel %vm989, %v981, 0.0
        %v1002 = vsel %vm988, %v974, 0.0
        %v1003 = vsel %vm989, %v982, 0.0
        %v1004 = vsel %vm988, %v975, 0.0
        %v1005 = vsel %vm989, %v983, 0.0
        %v1006 = vadd.f32 %v919, %v990
        %v1007 = vadd.f32 %v920, %v991
        %v1008 = vadd.f32 %v921, %v992
        %v1009 = vadd.f32 %v922, %v993
        %v1010 = vadd.f32 %v923, %v994
        %v1011 = vadd.f32 %v924, %v995
        %v1012 = vadd.f32 %v925, %v996
        %v1013 = vadd.f32 %v926, %v997
        %v1014 = vadd.f32 %v927, %v998
        %v1015 = vadd.f32 %v928, %v999
        %v1016 = vadd.f32 %v929, %v1000
        %v1017 = vadd.f32 %v930, %v1001
        %v1018 = vadd.f32 %v931, %v1002
        %v1019 = vadd.f32 %v932, %v1003
        %v1020 = vadd.f32 %v933, %v1004
        %v1021 = vadd.f32 %v934, %v1005
        %1022 = vrot.lane.b32.xlu0 %v1006, 2
        %v1023 = vpop.permute.xlu0 %1022
        %1024 = vrot.lane.b32.xlu0 %v1008, 2
        %v1025 = vpop.permute.xlu0 %1024
        %1026 = vrot.lane.b32.xlu0 %v1010, 2
        %v1027 = vpop.permute.xlu0 %1026
        %1028 = vrot.lane.b32.xlu0 %v1012, 2
        %v1029 = vpop.permute.xlu0 %1028
        %1030 = vrot.lane.b32.xlu0 %v1014, 2
        %v1031 = vpop.permute.xlu0 %1030
        %1032 = vrot.lane.b32.xlu0 %v1016, 2
        %v1033 = vpop.permute.xlu0 %1032
        %1034 = vrot.lane.b32.xlu0 %v1018, 2
        %v1035 = vpop.permute.xlu0 %1034
        %1036 = vrot.lane.b32.xlu0 %v1020, 2
        %v1037 = vpop.permute.xlu0 %1036
        %1038 = vrot.lane.b32.xlu0 %v1007, 2
        %v1039 = vpop.permute.xlu0 %1038
        %1040 = vrot.lane.b32.xlu0 %v1009, 2
        %v1041 = vpop.permute.xlu0 %1040
        %1042 = vrot.lane.b32.xlu0 %v1011, 2
        %v1043 = vpop.permute.xlu0 %1042
        %1044 = vrot.lane.b32.xlu0 %v1013, 2
        %v1045 = vpop.permute.xlu0 %1044
        %1046 = vrot.lane.b32.xlu0 %v1015, 2
        %v1047 = vpop.permute.xlu0 %1046
        %1048 = vrot.lane.b32.xlu0 %v1017, 2
        %v1049 = vpop.permute.xlu0 %1048
        %1050 = vrot.lane.b32.xlu0 %v1019, 2
        %v1051 = vpop.permute.xlu0 %1050
        %1052 = vrot.lane.b32.xlu0 %v1021, 2
        %v1053 = vpop.permute.xlu0 %1052
        %vm1054 = vcmp.lt.s32.totalorder %v216, 2
        %v1055 = vsel %vm1054, %v1023, %v1039
        %v1056 = vsel %vm1054, %v1025, %v1041
        %v1057 = vsel %vm1054, %v1027, %v1043
        %v1058 = vsel %vm1054, %v1029, %v1045
        %v1059 = vsel %vm1054, %v1031, %v1047
        %v1060 = vsel %vm1054, %v1033, %v1049
        %v1061 = vsel %vm1054, %v1035, %v1051
        %v1062 = vsel %vm1054, %v1037, %v1053
        %v1063 = vsel %vm1054, %v1039, %v1023
        %v1064 = vsel %vm1054, %v1041, %v1025
        %v1065 = vsel %vm1054, %v1043, %v1027
        %v1066 = vsel %vm1054, %v1045, %v1029
        %v1067 = vsel %vm1054, %v1047, %v1031
        %v1068 = vsel %vm1054, %v1049, %v1033
        %v1069 = vsel %vm1054, %v1051, %v1035
        %v1070 = vsel %vm1054, %v1053, %v1037
        %vm1071 = vcmp.ge.s32.totalorder %v218, 2
        %vm1072 = vcmp.ge.s32.totalorder %v219, 2
        %v1073 = vsel %vm1071, 1, 0
        %v1074 = vsel %vm1072, 1, 0
        %vm1075 = vcmp.eq.s32.totalorder %v1073, 1
        %vm1076 = vcmp.eq.s32.totalorder %v1074, 1
        %v1077 = vsel %vm1075, %v1063, 0.0
        %v1078 = vsel %vm1076, %v1055, 0.0
        %v1079 = vsel %vm1075, %v1064, 0.0
        %v1080 = vsel %vm1076, %v1056, 0.0
        %v1081 = vsel %vm1075, %v1065, 0.0
        %v1082 = vsel %vm1076, %v1057, 0.0
        %v1083 = vsel %vm1075, %v1066, 0.0
        %v1084 = vsel %vm1076, %v1058, 0.0
        %v1085 = vsel %vm1075, %v1067, 0.0
        %v1086 = vsel %vm1076, %v1059, 0.0
        %v1087 = vsel %vm1075, %v1068, 0.0
        %v1088 = vsel %vm1076, %v1060, 0.0
        %v1089 = vsel %vm1075, %v1069, 0.0
        %v1090 = vsel %vm1076, %v1061, 0.0
        %v1091 = vsel %vm1075, %v1070, 0.0
        %v1092 = vsel %vm1076, %v1062, 0.0
        %v1093 = vadd.f32 %v1006, %v1077
        %v1094 = vadd.f32 %v1007, %v1078
        %v1095 = vadd.f32 %v1008, %v1079
        %v1096 = vadd.f32 %v1009, %v1080
        %v1097 = vadd.f32 %v1010, %v1081
        %v1098 = vadd.f32 %v1011, %v1082
        %v1099 = vadd.f32 %v1012, %v1083
        %v1100 = vadd.f32 %v1013, %v1084
        %v1101 = vadd.f32 %v1014, %v1085
        %v1102 = vadd.f32 %v1015, %v1086
        %v1103 = vadd.f32 %v1016, %v1087
        %v1104 = vadd.f32 %v1017, %v1088
        %v1105 = vadd.f32 %v1018, %v1089
        %v1106 = vadd.f32 %v1019, %v1090
        %v1107 = vadd.f32 %v1020, %v1091
        %v1108 = vadd.f32 %v1021, %v1092
        %1109 = vrot.lane.b32.xlu0 %v1006, 1
        %v1110 = vpop.permute.xlu0 %1109
        %1111 = vrot.lane.b32.xlu0 %v1008, 1
        %v1112 = vpop.permute.xlu0 %1111
        %1113 = vrot.lane.b32.xlu0 %v1010, 1
        %v1114 = vpop.permute.xlu0 %1113
        %1115 = vrot.lane.b32.xlu0 %v1012, 1
        %v1116 = vpop.permute.xlu0 %1115
        %1117 = vrot.lane.b32.xlu0 %v1014, 1
        %v1118 = vpop.permute.xlu0 %1117
        %1119 = vrot.lane.b32.xlu0 %v1016, 1
        %v1120 = vpop.permute.xlu0 %1119
        %1121 = vrot.lane.b32.xlu0 %v1018, 1
        %v1122 = vpop.permute.xlu0 %1121
        %1123 = vrot.lane.b32.xlu0 %v1020, 1
        %v1124 = vpop.permute.xlu0 %1123
        %1125 = vrot.lane.b32.xlu0 %v1007, 1
        %v1126 = vpop.permute.xlu0 %1125
        %1127 = vrot.lane.b32.xlu0 %v1009, 1
        %v1128 = vpop.permute.xlu0 %1127
        %1129 = vrot.lane.b32.xlu0 %v1011, 1
        %v1130 = vpop.permute.xlu0 %1129
        %1131 = vrot.lane.b32.xlu0 %v1013, 1
        %v1132 = vpop.permute.xlu0 %1131
        %1133 = vrot.lane.b32.xlu0 %v1015, 1
        %v1134 = vpop.permute.xlu0 %1133
        %1135 = vrot.lane.b32.xlu0 %v1017, 1
        %v1136 = vpop.permute.xlu0 %1135
        %1137 = vrot.lane.b32.xlu0 %v1019, 1
        %v1138 = vpop.permute.xlu0 %1137
        %1139 = vrot.lane.b32.xlu0 %v1021, 1
        %v1140 = vpop.permute.xlu0 %1139
        %vm1141 = vcmp.lt.s32.totalorder %v216, 1
        %v1142 = vsel %vm1141, %v1110, %v1126
        %v1143 = vsel %vm1141, %v1112, %v1128
        %v1144 = vsel %vm1141, %v1114, %v1130
        %v1145 = vsel %vm1141, %v1116, %v1132
        %v1146 = vsel %vm1141, %v1118, %v1134
        %v1147 = vsel %vm1141, %v1120, %v1136
        %v1148 = vsel %vm1141, %v1122, %v1138
        %v1149 = vsel %vm1141, %v1124, %v1140
        %v1150 = vsel %vm1141, %v1126, %v1110
        %v1151 = vsel %vm1141, %v1128, %v1112
        %v1152 = vsel %vm1141, %v1130, %v1114
        %v1153 = vsel %vm1141, %v1132, %v1116
        %v1154 = vsel %vm1141, %v1134, %v1118
        %v1155 = vsel %vm1141, %v1136, %v1120
        %v1156 = vsel %vm1141, %v1138, %v1122
        %v1157 = vsel %vm1141, %v1140, %v1124
        %vm1158 = vcmp.ge.s32.totalorder %v218, 1
        %vm1159 = vcmp.ge.s32.totalorder %v219, 1
        %v1160 = vsel %vm1158, 1, 0
        %v1161 = vsel %vm1159, 1, 0
        %vm1162 = vcmp.eq.s32.totalorder %v1160, 1
        %vm1163 = vcmp.eq.s32.totalorder %v1161, 1
        %v1164 = vsel %vm1162, %v1150, 0.0
        %v1165 = vsel %vm1163, %v1142, 0.0
        %v1166 = vsel %vm1162, %v1151, 0.0
        %v1167 = vsel %vm1163, %v1143, 0.0
        %v1168 = vsel %vm1162, %v1152, 0.0
        %v1169 = vsel %vm1163, %v1144, 0.0
        %v1170 = vsel %vm1162, %v1153, 0.0
        %v1171 = vsel %vm1163, %v1145, 0.0
        %v1172 = vsel %vm1162, %v1154, 0.0
        %v1173 = vsel %vm1163, %v1146, 0.0
        %v1174 = vsel %vm1162, %v1155, 0.0
        %v1175 = vsel %vm1163, %v1147, 0.0
        %v1176 = vsel %vm1162, %v1156, 0.0
        %v1177 = vsel %vm1163, %v1148, 0.0
        %v1178 = vsel %vm1162, %v1157, 0.0
        %v1179 = vsel %vm1163, %v1149, 0.0
        %v1180 = vadd.f32 %v1093, %v1164
        %v1181 = vadd.f32 %v1094, %v1165
        %v1182 = vadd.f32 %v1095, %v1166
        %v1183 = vadd.f32 %v1096, %v1167
        %v1184 = vadd.f32 %v1097, %v1168
        %v1185 = vadd.f32 %v1098, %v1169
        %v1186 = vadd.f32 %v1099, %v1170
        %v1187 = vadd.f32 %v1100, %v1171
        %v1188 = vadd.f32 %v1101, %v1172
        %v1189 = vadd.f32 %v1102, %v1173
        %v1190 = vadd.f32 %v1103, %v1174
        %v1191 = vadd.f32 %v1104, %v1175
        %v1192 = vadd.f32 %v1105, %v1176
        %v1193 = vadd.f32 %v1106, %v1177
        %v1194 = vadd.f32 %v1107, %v1178
        %v1195 = vadd.f32 %v1108, %v1179
        %1196 = vrot.lane.b32.xlu0 %v1006, 127
        %v1197 = vpop.permute.xlu0 %1196
        %1198 = vrot.lane.b32.xlu0 %v1008, 127
        %v1199 = vpop.permute.xlu0 %1198
        %1200 = vrot.lane.b32.xlu0 %v1010, 127
        %v1201 = vpop.permute.xlu0 %1200
        %1202 = vrot.lane.b32.xlu0 %v1012, 127
        %v1203 = vpop.permute.xlu0 %1202
        %1204 = vrot.lane.b32.xlu0 %v1014, 127
        %v1205 = vpop.permute.xlu0 %1204
        %1206 = vrot.lane.b32.xlu0 %v1016, 127
        %v1207 = vpop.permute.xlu0 %1206
        %1208 = vrot.lane.b32.xlu0 %v1018, 127
        %v1209 = vpop.permute.xlu0 %1208
        %1210 = vrot.lane.b32.xlu0 %v1020, 127
        %v1211 = vpop.permute.xlu0 %1210
        %1212 = vrot.lane.b32.xlu0 %v1007, 127
        %v1213 = vpop.permute.xlu0 %1212
        %1214 = vrot.lane.b32.xlu0 %v1009, 127
        %v1215 = vpop.permute.xlu0 %1214
        %1216 = vrot.lane.b32.xlu0 %v1011, 127
        %v1217 = vpop.permute.xlu0 %1216
        %1218 = vrot.lane.b32.xlu0 %v1013, 127
        %v1219 = vpop.permute.xlu0 %1218
        %1220 = vrot.lane.b32.xlu0 %v1015, 127
        %v1221 = vpop.permute.xlu0 %1220
        %1222 = vrot.lane.b32.xlu0 %v1017, 127
        %v1223 = vpop.permute.xlu0 %1222
        %1224 = vrot.lane.b32.xlu0 %v1019, 127
        %v1225 = vpop.permute.xlu0 %1224
        %1226 = vrot.lane.b32.xlu0 %v1021, 127
        %v1227 = vpop.permute.xlu0 %1226
        %vm1228 = vcmp.lt.s32.totalorder %v216, 127
        %v1229 = vsel %vm1228, %v1197, %v1213
        %v1230 = vsel %vm1228, %v1199, %v1215
        %v1231 = vsel %vm1228, %v1201, %v1217
        %v1232 = vsel %vm1228, %v1203, %v1219
        %v1233 = vsel %vm1228, %v1205, %v1221
        %v1234 = vsel %vm1228, %v1207, %v1223
        %v1235 = vsel %vm1228, %v1209, %v1225
        %v1236 = vsel %vm1228, %v1211, %v1227
        %v1237 = vsel %vm1228, %v1213, %v1197
        %v1238 = vsel %vm1228, %v1215, %v1199
        %v1239 = vsel %vm1228, %v1217, %v1201
        %v1240 = vsel %vm1228, %v1219, %v1203
        %v1241 = vsel %vm1228, %v1221, %v1205
        %v1242 = vsel %vm1228, %v1223, %v1207
        %v1243 = vsel %vm1228, %v1225, %v1209
        %v1244 = vsel %vm1228, %v1227, %v1211
        %vm1245 = vcmp.lt.s32.totalorder %v218, 15
        %vm1246 = vcmp.lt.s32.totalorder %v219, 15
        %v1247 = vsel %vm1245, 1, 0
        %v1248 = vsel %vm1246, 1, 0
        %vm1249 = vcmp.eq.s32.totalorder %v1247, 1
        %vm1250 = vcmp.eq.s32.totalorder %v1248, 1
        %v1251 = vsel %vm1249, %v1229, 0.0
        %v1252 = vsel %vm1250, %v1237, 0.0
        %v1253 = vsel %vm1249, %v1230, 0.0
        %v1254 = vsel %vm1250, %v1238, 0.0
        %v1255 = vsel %vm1249, %v1231, 0.0
        %v1256 = vsel %vm1250, %v1239, 0.0
        %v1257 = vsel %vm1249, %v1232, 0.0
        %v1258 = vsel %vm1250, %v1240, 0.0
        %v1259 = vsel %vm1249, %v1233, 0.0
        %v1260 = vsel %vm1250, %v1241, 0.0
        %v1261 = vsel %vm1249, %v1234, 0.0
        %v1262 = vsel %vm1250, %v1242, 0.0
        %v1263 = vsel %vm1249, %v1235, 0.0
        %v1264 = vsel %vm1250, %v1243, 0.0
        %v1265 = vsel %vm1249, %v1236, 0.0
        %v1266 = vsel %vm1250, %v1244, 0.0
        %v1267 = vadd.f32 %v1180, %v1251
        %v1268 = vadd.f32 %v1181, %v1252
        %v1269 = vadd.f32 %v1182, %v1253
        %v1270 = vadd.f32 %v1183, %v1254
        %v1271 = vadd.f32 %v1184, %v1255
        %v1272 = vadd.f32 %v1185, %v1256
        %v1273 = vadd.f32 %v1186, %v1257
        %v1274 = vadd.f32 %v1187, %v1258
        %v1275 = vadd.f32 %v1188, %v1259
        %v1276 = vadd.f32 %v1189, %v1260
        %v1277 = vadd.f32 %v1190, %v1261
        %v1278 = vadd.f32 %v1191, %v1262
        %v1279 = vadd.f32 %v1192, %v1263
        %v1280 = vadd.f32 %v1193, %v1264
        %v1281 = vadd.f32 %v1194, %v1265
        %v1282 = vadd.f32 %v1195, %v1266
        %1283 = vrot.lane.b32.xlu0 %v1006, 126
        %v1284 = vpop.permute.xlu0 %1283
        %1285 = vrot.lane.b32.xlu0 %v1008, 126
        %v1286 = vpop.permute.xlu0 %1285
        %1287 = vrot.lane.b32.xlu0 %v1010, 126
        %v1288 = vpop.permute.xlu0 %1287
        %1289 = vrot.lane.b32.xlu0 %v1012, 126
        %v1290 = vpop.permute.xlu0 %1289
        %1291 = vrot.lane.b32.xlu0 %v1014, 126
        %v1292 = vpop.permute.xlu0 %1291
        %1293 = vrot.lane.b32.xlu0 %v1016, 126
        %v1294 = vpop.permute.xlu0 %1293
        %1295 = vrot.lane.b32.xlu0 %v1018, 126
        %v1296 = vpop.permute.xlu0 %1295
        %1297 = vrot.lane.b32.xlu0 %v1020, 126
        %v1298 = vpop.permute.xlu0 %1297
        %1299 = vrot.lane.b32.xlu0 %v1007, 126
        %v1300 = vpop.permute.xlu0 %1299
        %1301 = vrot.lane.b32.xlu0 %v1009, 126
        %v1302 = vpop.permute.xlu0 %1301
        %1303 = vrot.lane.b32.xlu0 %v1011, 126
        %v1304 = vpop.permute.xlu0 %1303
        %1305 = vrot.lane.b32.xlu0 %v1013, 126
        %v1306 = vpop.permute.xlu0 %1305
        %1307 = vrot.lane.b32.xlu0 %v1015, 126
        %v1308 = vpop.permute.xlu0 %1307
        %1309 = vrot.lane.b32.xlu0 %v1017, 126
        %v1310 = vpop.permute.xlu0 %1309
        %1311 = vrot.lane.b32.xlu0 %v1019, 126
        %v1312 = vpop.permute.xlu0 %1311
        %1313 = vrot.lane.b32.xlu0 %v1021, 126
        %v1314 = vpop.permute.xlu0 %1313
        %vm1315 = vcmp.lt.s32.totalorder %v216, 126
        %v1316 = vsel %vm1315, %v1284, %v1300
        %v1317 = vsel %vm1315, %v1286, %v1302
        %v1318 = vsel %vm1315, %v1288, %v1304
        %v1319 = vsel %vm1315, %v1290, %v1306
        %v1320 = vsel %vm1315, %v1292, %v1308
        %v1321 = vsel %vm1315, %v1294, %v1310
        %v1322 = vsel %vm1315, %v1296, %v1312
        %v1323 = vsel %vm1315, %v1298, %v1314
        %v1324 = vsel %vm1315, %v1300, %v1284
        %v1325 = vsel %vm1315, %v1302, %v1286
        %v1326 = vsel %vm1315, %v1304, %v1288
        %v1327 = vsel %vm1315, %v1306, %v1290
        %v1328 = vsel %vm1315, %v1308, %v1292
        %v1329 = vsel %vm1315, %v1310, %v1294
        %v1330 = vsel %vm1315, %v1312, %v1296
        %v1331 = vsel %vm1315, %v1314, %v1298
        %vm1332 = vcmp.lt.s32.totalorder %v218, 14
        %vm1333 = vcmp.lt.s32.totalorder %v219, 14
        %v1334 = vsel %vm1332, 1, 0
        %v1335 = vsel %vm1333, 1, 0
        %vm1336 = vcmp.eq.s32.totalorder %v1334, 1
        %vm1337 = vcmp.eq.s32.totalorder %v1335, 1
        %v1338 = vsel %vm1336, %v1316, 0.0
        %v1339 = vsel %vm1337, %v1324, 0.0
        %v1340 = vsel %vm1336, %v1317, 0.0
        %v1341 = vsel %vm1337, %v1325, 0.0
        %v1342 = vsel %vm1336, %v1318, 0.0
        %v1343 = vsel %vm1337, %v1326, 0.0
        %v1344 = vsel %vm1336, %v1319, 0.0
        %v1345 = vsel %vm1337, %v1327, 0.0
        %v1346 = vsel %vm1336, %v1320, 0.0
        %v1347 = vsel %vm1337, %v1328, 0.0
        %v1348 = vsel %vm1336, %v1321, 0.0
        %v1349 = vsel %vm1337, %v1329, 0.0
        %v1350 = vsel %vm1336, %v1322, 0.0
        %v1351 = vsel %vm1337, %v1330, 0.0
        %v1352 = vsel %vm1336, %v1323, 0.0
        %v1353 = vsel %vm1337, %v1331, 0.0
        %v1354 = vadd.f32 %v1267, %v1338
        %v1355 = vadd.f32 %v1268, %v1339
        %v1356 = vadd.f32 %v1269, %v1340
        %v1357 = vadd.f32 %v1270, %v1341
        %v1358 = vadd.f32 %v1271, %v1342
        %v1359 = vadd.f32 %v1272, %v1343
        %v1360 = vadd.f32 %v1273, %v1344
        %v1361 = vadd.f32 %v1274, %v1345
        %v1362 = vadd.f32 %v1275, %v1346
        %v1363 = vadd.f32 %v1276, %v1347
        %v1364 = vadd.f32 %v1277, %v1348
        %v1365 = vadd.f32 %v1278, %v1349
        %v1366 = vadd.f32 %v1279, %v1350
        %v1367 = vadd.f32 %v1280, %v1351
        %v1368 = vadd.f32 %v1281, %v1352
        %v1369 = vadd.f32 %v1282, %v1353
        %v1370 = vmul.f32 %v1354, 0.04
        %v1371 = vmul.f32 %v1355, 0.04
        %v1372 = vmul.f32 %v1356, 0.04
        %v1373 = vmul.f32 %v1357, 0.04
        %v1374 = vmul.f32 %v1358, 0.04
        %v1375 = vmul.f32 %v1359, 0.04
        %v1376 = vmul.f32 %v1360, 0.04
        %v1377 = vmul.f32 %v1361, 0.04
        %v1378 = vmul.f32 %v1362, 0.04
        %v1379 = vmul.f32 %v1363, 0.04
        %v1380 = vmul.f32 %v1364, 0.04
        %v1381 = vmul.f32 %v1365, 0.04
        %v1382 = vmul.f32 %v1366, 0.04
        %v1383 = vmul.f32 %v1367, 0.04
        %v1384 = vmul.f32 %v1368, 0.04
        %v1385 = vmul.f32 %v1369, 0.04
        %1386 = vrot.lane.b32.xlu0 %v1370, 16
        %v1387 = vpop.permute.xlu0 %1386
        %1388 = vrot.lane.b32.xlu0 %v1372, 16
        %v1389 = vpop.permute.xlu0 %1388
        %1390 = vrot.lane.b32.xlu0 %v1374, 16
        %v1391 = vpop.permute.xlu0 %1390
        %1392 = vrot.lane.b32.xlu0 %v1376, 16
        %v1393 = vpop.permute.xlu0 %1392
        %1394 = vrot.lane.b32.xlu0 %v1378, 16
        %v1395 = vpop.permute.xlu0 %1394
        %1396 = vrot.lane.b32.xlu0 %v1380, 16
        %v1397 = vpop.permute.xlu0 %1396
        %1398 = vrot.lane.b32.xlu0 %v1382, 16
        %v1399 = vpop.permute.xlu0 %1398
        %1400 = vrot.lane.b32.xlu0 %v1384, 16
        %v1401 = vpop.permute.xlu0 %1400
        %1402 = vrot.lane.b32.xlu0 %v1371, 16
        %v1403 = vpop.permute.xlu0 %1402
        %1404 = vrot.lane.b32.xlu0 %v1373, 16
        %v1405 = vpop.permute.xlu0 %1404
        %1406 = vrot.lane.b32.xlu0 %v1375, 16
        %v1407 = vpop.permute.xlu0 %1406
        %1408 = vrot.lane.b32.xlu0 %v1377, 16
        %v1409 = vpop.permute.xlu0 %1408
        %1410 = vrot.lane.b32.xlu0 %v1379, 16
        %v1411 = vpop.permute.xlu0 %1410
        %1412 = vrot.lane.b32.xlu0 %v1381, 16
        %v1413 = vpop.permute.xlu0 %1412
        %1414 = vrot.lane.b32.xlu0 %v1383, 16
        %v1415 = vpop.permute.xlu0 %1414
        %1416 = vrot.lane.b32.xlu0 %v1385, 16
        %v1417 = vpop.permute.xlu0 %1416
        %v1418 = vsel %vm793, %v1387, %v1403
        %v1419 = vsel %vm793, %v1389, %v1405
        %v1420 = vsel %vm793, %v1391, %v1407
        %v1421 = vsel %vm793, %v1393, %v1409
        %v1422 = vsel %vm793, %v1395, %v1411
        %v1423 = vsel %vm793, %v1397, %v1413
        %v1424 = vsel %vm793, %v1399, %v1415
        %v1425 = vsel %vm793, %v1401, %v1417
        %v1426 = vsel %vm793, %v1403, %v1387
        %v1427 = vsel %vm793, %v1405, %v1389
        %v1428 = vsel %vm793, %v1407, %v1391
        %v1429 = vsel %vm793, %v1409, %v1393
        %v1430 = vsel %vm793, %v1411, %v1395
        %v1431 = vsel %vm793, %v1413, %v1397
        %v1432 = vsel %vm793, %v1415, %v1399
        %v1433 = vsel %vm793, %v1417, %v1401
        %v1434 = vsel %vm814, %v1426, 0.0
        %v1435 = vsel %vm815, %v1418, 0.0
        %v1436 = vsel %vm814, %v1427, 0.0
        %v1437 = vsel %vm815, %v1419, 0.0
        %v1438 = vsel %vm814, %v1428, 0.0
        %v1439 = vsel %vm815, %v1420, 0.0
        %v1440 = vsel %vm814, %v1429, 0.0
        %v1441 = vsel %vm815, %v1421, 0.0
        %v1442 = vsel %vm814, %v1430, 0.0
        %v1443 = vsel %vm815, %v1422, 0.0
        %v1444 = vsel %vm814, %v1431, 0.0
        %v1445 = vsel %vm815, %v1423, 0.0
        %v1446 = vsel %vm814, %v1432, 0.0
        %v1447 = vsel %vm815, %v1424, 0.0
        %v1448 = vsel %vm814, %v1433, 0.0
        %v1449 = vsel %vm815, %v1425, 0.0
        %1450 = vrot.lane.b32.xlu0 %v1434, 1
        %v1451 = vpop.permute.xlu0 %1450
        %1452 = vrot.lane.b32.xlu0 %v1436, 1
        %v1453 = vpop.permute.xlu0 %1452
        %1454 = vrot.lane.b32.xlu0 %v1438, 1
        %v1455 = vpop.permute.xlu0 %1454
        %1456 = vrot.lane.b32.xlu0 %v1440, 1
        %v1457 = vpop.permute.xlu0 %1456
        %1458 = vrot.lane.b32.xlu0 %v1442, 1
        %v1459 = vpop.permute.xlu0 %1458
        %1460 = vrot.lane.b32.xlu0 %v1444, 1
        %v1461 = vpop.permute.xlu0 %1460
        %1462 = vrot.lane.b32.xlu0 %v1446, 1
        %v1463 = vpop.permute.xlu0 %1462
        %1464 = vrot.lane.b32.xlu0 %v1448, 1
        %v1465 = vpop.permute.xlu0 %1464
        %1466 = vrot.lane.b32.xlu0 %v1435, 1
        %v1467 = vpop.permute.xlu0 %1466
        %1468 = vrot.lane.b32.xlu0 %v1437, 1
        %v1469 = vpop.permute.xlu0 %1468
        %1470 = vrot.lane.b32.xlu0 %v1439, 1
        %v1471 = vpop.permute.xlu0 %1470
        %1472 = vrot.lane.b32.xlu0 %v1441, 1
        %v1473 = vpop.permute.xlu0 %1472
        %1474 = vrot.lane.b32.xlu0 %v1443, 1
        %v1475 = vpop.permute.xlu0 %1474
        %1476 = vrot.lane.b32.xlu0 %v1445, 1
        %v1477 = vpop.permute.xlu0 %1476
        %1478 = vrot.lane.b32.xlu0 %v1447, 1
        %v1479 = vpop.permute.xlu0 %1478
        %1480 = vrot.lane.b32.xlu0 %v1449, 1
        %v1481 = vpop.permute.xlu0 %1480
        %v1482 = vsel %vm1141, %v1451, %v1467
        %v1483 = vsel %vm1141, %v1453, %v1469
        %v1484 = vsel %vm1141, %v1455, %v1471
        %v1485 = vsel %vm1141, %v1457, %v1473
        %v1486 = vsel %vm1141, %v1459, %v1475
        %v1487 = vsel %vm1141, %v1461, %v1477
        %v1488 = vsel %vm1141, %v1463, %v1479
        %v1489 = vsel %vm1141, %v1465, %v1481
        %v1490 = vsel %vm1141, %v1467, %v1451
        %v1491 = vsel %vm1141, %v1469, %v1453
        %v1492 = vsel %vm1141, %v1471, %v1455
        %v1493 = vsel %vm1141, %v1473, %v1457
        %v1494 = vsel %vm1141, %v1475, %v1459
        %v1495 = vsel %vm1141, %v1477, %v1461
        %v1496 = vsel %vm1141, %v1479, %v1463
        %v1497 = vsel %vm1141, %v1481, %v1465
        %v1498 = vsel %vm1162, %v1490, 0.0
        %v1499 = vsel %vm1163, %v1482, 0.0
        %v1500 = vsel %vm1162, %v1491, 0.0
        %v1501 = vsel %vm1163, %v1483, 0.0
        %v1502 = vsel %vm1162, %v1492, 0.0
        %v1503 = vsel %vm1163, %v1484, 0.0
        %v1504 = vsel %vm1162, %v1493, 0.0
        %v1505 = vsel %vm1163, %v1485, 0.0
        %v1506 = vsel %vm1162, %v1494, 0.0
        %v1507 = vsel %vm1163, %v1486, 0.0
        %v1508 = vsel %vm1162, %v1495, 0.0
        %v1509 = vsel %vm1163, %v1487, 0.0
        %v1510 = vsel %vm1162, %v1496, 0.0
        %v1511 = vsel %vm1163, %v1488, 0.0
        %v1512 = vsel %vm1162, %v1497, 0.0
        %v1513 = vsel %vm1163, %v1489, 0.0
        %v1514 = vld [vmem:[#allocation2] sm:$0xff]
        %v1515 = vld [vmem:[#allocation2 + $0x8] sm:$0xff]
        %v1516 = vld [vmem:[#allocation2 + $0x10] sm:$0xff]
        %v1517 = vld [vmem:[#allocation2 + $0x18] sm:$0xff]
        %s1518 = scalar_lea.vmem [#allocation2], 32
        %v1519 = vld [vmem:[%s1518] sm:$0xff]
        %v1520 = vld [vmem:[%s1518 + $0x8] sm:$0xff]
        %v1521 = vld [vmem:[%s1518 + $0x10] sm:$0xff]
        %v1522 = vld [vmem:[%s1518 + $0x18] sm:$0xff]
        %vm1523 = vcmask 261120
        %v1525 = vsel %vm1523, %v1519, 0
        %v1528 = vsel %vm1523, %v1520, 0
        %v1531 = vsel %vm1523, %v1521, 0
        %v1534 = vsel %vm1523, %v1522, 0
        %1536 = vmatprep.subr.mxu0 %v1435
        %1537 = vmatpush1.msra.mxu0 %v1434
        %1538 = vmatprep.subr.mxu0 %v1437
        %1539 = vmatpush1.msra.mxu0 %v1436
        %1540 = vmatprep.subr.mxu0 %v1439
        %1541 = vmatpush1.msra.mxu0 %v1438
        %1542 = vmatprep.subr.mxu0 %v1441
        %1543 = vmatpush1.msra.mxu0 %v1440
        %1544 = vmatprep.subr.mxu0 0.0
        %1545 = vmatpush1.msra.mxu0 0.0
        %1546 = vmatprep.subr.mxu0 0.0
        %1547 = vmatpush1.msra.mxu0 0.0
        %1548 = vmatprep.subr.mxu0 0.0
        %1549 = vmatpush1.msra.mxu0 0.0
        %1550 = vmatprep.subr.mxu0 0.0
        %1551 = vmatpush1.msra.mxu0 0.0
        %1552 = vmatprep.subr.mxu0 0.0
        %1553 = vmatpush1.msra.mxu0 0.0
        %1554 = vmatprep.subr.mxu0 0.0
        %1555 = vmatpush1.msra.mxu0 0.0
        %1556 = vmatprep.subr.mxu0 0.0
        %1557 = vmatpush1.msra.mxu0 0.0
        %1558 = vmatprep.subr.mxu0 0.0
        %1559 = vmatpush1.msra.mxu0 0.0
        %1560 = vmatprep.subr.mxu0 0.0
        %1561 = vmatpush1.msra.mxu0 0.0
        %1562 = vmatprep.subr.mxu0 0.0
        %1563 = vmatpush1.msra.mxu0 0.0
        %1564 = vmatprep.subr.mxu0 0.0
        %1565 = vmatpush1.msra.mxu0 0.0
        %1566 = vmatprep.subr.mxu0 0.0
        %1567 = vmatpush1.msra.mxu0 0.0
        %1568 = vmatprep.subr.mxu0 0.0
        %1569 = vmatpush1.msra.mxu0 0.0
        %1570 = vmatprep.subr.mxu0 0.0
        %1571 = vmatpush1.msra.mxu0 0.0
        %1572 = vmatprep.subr.mxu0 0.0
        %1573 = vmatpush1.msra.mxu0 0.0
        %1574 = vmatprep.subr.mxu0 0.0
        %1575 = vmatpush1.msra.mxu0 0.0
        %1576 = vmatprep.subr.mxu0 0.0
        %1577 = vmatpush1.msra.mxu0 0.0
        %1578 = vmatprep.subr.mxu0 0.0
        %1579 = vmatpush1.msra.mxu0 0.0
        %1580 = vmatprep.subr.mxu0 0.0
        %1581 = vmatpush1.msra.mxu0 0.0
        %1582 = vmatprep.subr.mxu0 0.0
        %1583 = vmatpush1.msra.mxu0 0.0
        %1584 = vmatprep.subr.mxu0 0.0
        %1585 = vmatpush1.msra.mxu0 0.0
        %1586 = vmatprep.subr.mxu0 0.0
        %1587 = vmatpush1.msra.mxu0 0.0
        %1588 = vmatprep.subr.mxu0 0.0
        %1589 = vmatpush1.msra.mxu0 0.0
        %1590 = vmatprep.subr.mxu0 0.0
        %1591 = vmatpush1.msra.mxu0 0.0
        %1592 = vmatprep.subr.mxu0 0.0
        %1593 = vmatpush1.msra.mxu0 0.0
        %1594 = vmatprep.subr.mxu0 0.0
        %1595 = vmatpush1.msra.mxu0 0.0
        %1596 = vmatprep.subr.mxu0 0.0
        %1597 = vmatpush1.msra.mxu0 0.0
        %1598 = vmatprep.subr.mxu0 0.0
        %1599 = vmatpush1.msra.mxu0 0.0
        %1600 = vmatprep.mubr.f32.mxu0 0.0
        %1601 = vmatmul.mubr.f32.gmra.mrb[0].mxu0 %v1525
        %v1602 = vpop.f32.mrb[0].mxu0
        %v1603 = vadd.f32 0.0, %v1602
        %v1604 = vpop.f32.mrb[0].mxu0
        %v1605 = vadd.f32 0.0, %v1604
        %1606 = vmatprep.mubr.f32.mxu0 0.0
        %1607 = vmatmul.mubr.f32.gmra.mrb[0].mxu0 %v1528
        %v1608 = vpop.f32.mrb[0].mxu0
        %v1609 = vadd.f32 0.0, %v1608
        %v1610 = vpop.f32.mrb[0].mxu0
        %v1611 = vadd.f32 0.0, %v1610
        %1612 = vmatprep.mubr.f32.mxu0 0.0
        %1613 = vmatmul.mubr.f32.gmra.mrb[0].mxu0 %v1531
        %v1614 = vpop.f32.mrb[0].mxu0
        %v1615 = vadd.f32 0.0, %v1614
        %v1616 = vpop.f32.mrb[0].mxu0
        %v1617 = vadd.f32 0.0, %v1616
        %1618 = vmatprep.mubr.f32.mxu0 0.0
        %1619 = vmatmul.mubr.f32.gmra.mrb[0].mxu0 %v1534
        %v1620 = vpop.f32.mrb[0].mxu0
        %v1621 = vadd.f32 0.0, %v1620
        %v1622 = vpop.f32.mrb[0].mxu0
        %v1623 = vadd.f32 0.0, %v1622
        %1624 = vdwg.mxu0
        %v1626 = vsel %vm1523, %v1514, 0
        %v1629 = vsel %vm1523, %v1515, 0
        %v1632 = vsel %vm1523, %v1516, 0
        %v1635 = vsel %vm1523, %v1517, 0
        %1637 = vmatprep.subr.mxu0 %v1499
        %1638 = vmatpush1.msra.mxu0 %v1498
        %1639 = vmatprep.subr.mxu0 %v1501
        %1640 = vmatpush1.msra.mxu0 %v1500
        %1641 = vmatprep.subr.mxu0 %v1503
        %1642 = vmatpush1.msra.mxu0 %v1502
        %1643 = vmatprep.subr.mxu0 %v1505
        %1644 = vmatpush1.msra.mxu0 %v1504
        %1645 = vmatprep.subr.mxu0 0.0
        %1646 = vmatpush1.msra.mxu0 0.0
        %1647 = vmatprep.subr.mxu0 0.0
        %1648 = vmatpush1.msra.mxu0 0.0
        %1649 = vmatprep.subr.mxu0 0.0
        %1650 = vmatpush1.msra.mxu0 0.0
        %1651 = vmatprep.subr.mxu0 0.0
        %1652 = vmatpush1.msra.mxu0 0.0
        %1653 = vmatprep.subr.mxu0 0.0
        %1654 = vmatpush1.msra.mxu0 0.0
        %1655 = vmatprep.subr.mxu0 0.0
        %1656 = vmatpush1.msra.mxu0 0.0
        %1657 = vmatprep.subr.mxu0 0.0
        %1658 = vmatpush1.msra.mxu0 0.0
        %1659 = vmatprep.subr.mxu0 0.0
        %1660 = vmatpush1.msra.mxu0 0.0
        %1661 = vmatprep.subr.mxu0 0.0
        %1662 = vmatpush1.msra.mxu0 0.0
        %1663 = vmatprep.subr.mxu0 0.0
        %1664 = vmatpush1.msra.mxu0 0.0
        %1665 = vmatprep.subr.mxu0 0.0
        %1666 = vmatpush1.msra.mxu0 0.0
        %1667 = vmatprep.subr.mxu0 0.0
        %1668 = vmatpush1.msra.mxu0 0.0
        %1669 = vmatprep.subr.mxu0 0.0
        %1670 = vmatpush1.msra.mxu0 0.0
        %1671 = vmatprep.subr.mxu0 0.0
        %1672 = vmatpush1.msra.mxu0 0.0
        %1673 = vmatprep.subr.mxu0 0.0
        %1674 = vmatpush1.msra.mxu0 0.0
        %1675 = vmatprep.subr.mxu0 0.0
        %1676 = vmatpush1.msra.mxu0 0.0
        %1677 = vmatprep.subr.mxu0 0.0
        %1678 = vmatpush1.msra.mxu0 0.0
        %1679 = vmatprep.subr.mxu0 0.0
        %1680 = vmatpush1.msra.mxu0 0.0
        %1681 = vmatprep.subr.mxu0 0.0
        %1682 = vmatpush1.msra.mxu0 0.0
        %1683 = vmatprep.subr.mxu0 0.0
        %1684 = vmatpush1.msra.mxu0 0.0
        %1685 = vmatprep.subr.mxu0 0.0
        %1686 = vmatpush1.msra.mxu0 0.0
        %1687 = vmatprep.subr.mxu0 0.0
        %1688 = vmatpush1.msra.mxu0 0.0
        %1689 = vmatprep.subr.mxu0 0.0
        %1690 = vmatpush1.msra.mxu0 0.0
        %1691 = vmatprep.subr.mxu0 0.0
        %1692 = vmatpush1.msra.mxu0 0.0
        %1693 = vmatprep.subr.mxu0 0.0
        %1694 = vmatpush1.msra.mxu0 0.0
        %1695 = vmatprep.subr.mxu0 0.0
        %1696 = vmatpush1.msra.mxu0 0.0
        %1697 = vmatprep.subr.mxu0 0.0
        %1698 = vmatpush1.msra.mxu0 0.0
        %1699 = vmatprep.subr.mxu0 0.0
        %1700 = vmatpush1.msra.mxu0 0.0
        %1701 = vmatprep.mubr.f32.mxu0 0.0
        %1702 = vmatmul.mubr.f32.gmra.mrb[0].mxu0 %v1626
        %v1703 = vpop.f32.mrb[0].mxu0
        %v1704 = vadd.f32 %v1603, %v1703
        %v1705 = vpop.f32.mrb[0].mxu0
        %v1706 = vadd.f32 %v1605, %v1705
        %1707 = vmatprep.mubr.f32.mxu0 0.0
        %1708 = vmatmul.mubr.f32.gmra.mrb[0].mxu0 %v1629
        %v1709 = vpop.f32.mrb[0].mxu0
        %v1710 = vadd.f32 %v1609, %v1709
        %v1711 = vpop.f32.mrb[0].mxu0
        %v1712 = vadd.f32 %v1611, %v1711
        %1713 = vmatprep.mubr.f32.mxu0 0.0
        %1714 = vmatmul.mubr.f32.gmra.mrb[0].mxu0 %v1632
        %v1715 = vpop.f32.mrb[0].mxu0
        %v1716 = vadd.f32 %v1615, %v1715
        %v1717 = vpop.f32.mrb[0].mxu0
        %v1718 = vadd.f32 %v1617, %v1717
        %1719 = vmatprep.mubr.f32.mxu0 0.0
        %1720 = vmatmul.mubr.f32.gmra.mrb[0].mxu0 %v1635
        %v1721 = vpop.f32.mrb[0].mxu0
        %v1722 = vadd.f32 %v1621, %v1721
        %v1723 = vpop.f32.mrb[0].mxu0
        %v1724 = vadd.f32 %v1623, %v1723
        %1725 = vdwg.mxu0
        %1726 = vmatprep.subr.mxu0 %v1443
        %1727 = vmatpush1.msra.mxu0 %v1442
        %1728 = vmatprep.subr.mxu0 %v1445
        %1729 = vmatpush1.msra.mxu0 %v1444
        %1730 = vmatprep.subr.mxu0 %v1447
        %1731 = vmatpush1.msra.mxu0 %v1446
        %1732 = vmatprep.subr.mxu0 %v1449
        %1733 = vmatpush1.msra.mxu0 %v1448
        %1734 = vmatprep.subr.mxu0 0.0
        %1735 = vmatpush1.msra.mxu0 0.0
        %1736 = vmatprep.subr.mxu0 0.0
        %1737 = vmatpush1.msra.mxu0 0.0
        %1738 = vmatprep.subr.mxu0 0.0
        %1739 = vmatpush1.msra.mxu0 0.0
        %1740 = vmatprep.subr.mxu0 0.0
        %1741 = vmatpush1.msra.mxu0 0.0
        %1742 = vmatprep.subr.mxu0 0.0
        %1743 = vmatpush1.msra.mxu0 0.0
        %1744 = vmatprep.subr.mxu0 0.0
        %1745 = vmatpush1.msra.mxu0 0.0
        %1746 = vmatprep.subr.mxu0 0.0
        %1747 = vmatpush1.msra.mxu0 0.0
        %1748 = vmatprep.subr.mxu0 0.0
        %1749 = vmatpush1.msra.mxu0 0.0
        %1750 = vmatprep.subr.mxu0 0.0
        %1751 = vmatpush1.msra.mxu0 0.0
        %1752 = vmatprep.subr.mxu0 0.0
        %1753 = vmatpush1.msra.mxu0 0.0
        %1754 = vmatprep.subr.mxu0 0.0
        %1755 = vmatpush1.msra.mxu0 0.0
        %1756 = vmatprep.subr.mxu0 0.0
        %1757 = vmatpush1.msra.mxu0 0.0
        %1758 = vmatprep.subr.mxu0 0.0
        %1759 = vmatpush1.msra.mxu0 0.0
        %1760 = vmatprep.subr.mxu0 0.0
        %1761 = vmatpush1.msra.mxu0 0.0
        %1762 = vmatprep.subr.mxu0 0.0
        %1763 = vmatpush1.msra.mxu0 0.0
        %1764 = vmatprep.subr.mxu0 0.0
        %1765 = vmatpush1.msra.mxu0 0.0
        %1766 = vmatprep.subr.mxu0 0.0
        %1767 = vmatpush1.msra.mxu0 0.0
        %1768 = vmatprep.subr.mxu0 0.0
        %1769 = vmatpush1.msra.mxu0 0.0
        %1770 = vmatprep.subr.mxu0 0.0
        %1771 = vmatpush1.msra.mxu0 0.0
        %1772 = vmatprep.subr.mxu0 0.0
        %1773 = vmatpush1.msra.mxu0 0.0
        %1774 = vmatprep.subr.mxu0 0.0
        %1775 = vmatpush1.msra.mxu0 0.0
        %1776 = vmatprep.subr.mxu0 0.0
        %1777 = vmatpush1.msra.mxu0 0.0
        %1778 = vmatprep.subr.mxu0 0.0
        %1779 = vmatpush1.msra.mxu0 0.0
        %1780 = vmatprep.subr.mxu0 0.0
        %1781 = vmatpush1.msra.mxu0 0.0
        %1782 = vmatprep.subr.mxu0 0.0
        %1783 = vmatpush1.msra.mxu0 0.0
        %1784 = vmatprep.subr.mxu0 0.0
        %1785 = vmatpush1.msra.mxu0 0.0
        %1786 = vmatprep.subr.mxu0 0.0
        %1787 = vmatpush1.msra.mxu0 0.0
        %1788 = vmatprep.subr.mxu0 0.0
        %1789 = vmatpush1.msra.mxu0 0.0
        %1790 = vmatprep.mubr.f32.mxu0 0.0
        %1791 = vmatmul.mubr.f32.gmra.mrb[0].mxu0 %v1525
        %v1792 = vpop.f32.mrb[0].mxu0
        %v1793 = vadd.f32 0.0, %v1792
        %v1794 = vpop.f32.mrb[0].mxu0
        %v1795 = vadd.f32 0.0, %v1794
        %1796 = vmatprep.mubr.f32.mxu0 0.0
        %1797 = vmatmul.mubr.f32.gmra.mrb[0].mxu0 %v1528
        %v1798 = vpop.f32.mrb[0].mxu0
        %v1799 = vadd.f32 0.0, %v1798
        %v1800 = vpop.f32.mrb[0].mxu0
        %v1801 = vadd.f32 0.0, %v1800
        %1802 = vmatprep.mubr.f32.mxu0 0.0
        %1803 = vmatmul.mubr.f32.gmra.mrb[0].mxu0 %v1531
        %v1804 = vpop.f32.mrb[0].mxu0
        %v1805 = vadd.f32 0.0, %v1804
        %v1806 = vpop.f32.mrb[0].mxu0
        %v1807 = vadd.f32 0.0, %v1806
        %1808 = vmatprep.mubr.f32.mxu0 0.0
        %1809 = vmatmul.mubr.f32.gmra.mrb[0].mxu0 %v1534
        %v1810 = vpop.f32.mrb[0].mxu0
        %v1811 = vadd.f32 0.0, %v1810
        %v1812 = vpop.f32.mrb[0].mxu0
        %v1813 = vadd.f32 0.0, %v1812
        %1814 = vdwg.mxu0
        %1815 = vmatprep.subr.mxu0 %v1507
        %1816 = vmatpush1.msra.mxu0 %v1506
        %1817 = vmatprep.subr.mxu0 %v1509
        %1818 = vmatpush1.msra.mxu0 %v1508
        %1819 = vmatprep.subr.mxu0 %v1511
        %1820 = vmatpush1.msra.mxu0 %v1510
        %1821 = vmatprep.subr.mxu0 %v1513
        %1822 = vmatpush1.msra.mxu0 %v1512
        %1823 = vmatprep.subr.mxu0 0.0
        %1824 = vmatpush1.msra.mxu0 0.0
        %1825 = vmatprep.subr.mxu0 0.0
        %1826 = vmatpush1.msra.mxu0 0.0
        %1827 = vmatprep.subr.mxu0 0.0
        %1828 = vmatpush1.msra.mxu0 0.0
        %1829 = vmatprep.subr.mxu0 0.0
        %1830 = vmatpush1.msra.mxu0 0.0
        %1831 = vmatprep.subr.mxu0 0.0
        %1832 = vmatpush1.msra.mxu0 0.0
        %1833 = vmatprep.subr.mxu0 0.0
        %1834 = vmatpush1.msra.mxu0 0.0
        %1835 = vmatprep.subr.mxu0 0.0
        %1836 = vmatpush1.msra.mxu0 0.0
        %1837 = vmatprep.subr.mxu0 0.0
        %1838 = vmatpush1.msra.mxu0 0.0
        %1839 = vmatprep.subr.mxu0 0.0
        %1840 = vmatpush1.msra.mxu0 0.0
        %1841 = vmatprep.subr.mxu0 0.0
        %1842 = vmatpush1.msra.mxu0 0.0
        %1843 = vmatprep.subr.mxu0 0.0
        %1844 = vmatpush1.msra.mxu0 0.0
        %1845 = vmatprep.subr.mxu0 0.0
        %1846 = vmatpush1.msra.mxu0 0.0
        %1847 = vmatprep.subr.mxu0 0.0
        %1848 = vmatpush1.msra.mxu0 0.0
        %1849 = vmatprep.subr.mxu0 0.0
        %1850 = vmatpush1.msra.mxu0 0.0
        %1851 = vmatprep.subr.mxu0 0.0
        %1852 = vmatpush1.msra.mxu0 0.0
        %1853 = vmatprep.subr.mxu0 0.0
        %1854 = vmatpush1.msra.mxu0 0.0
        %1855 = vmatprep.subr.mxu0 0.0
        %1856 = vmatpush1.msra.mxu0 0.0
        %1857 = vmatprep.subr.mxu0 0.0
        %1858 = vmatpush1.msra.mxu0 0.0
        %1859 = vmatprep.subr.mxu0 0.0
        %1860 = vmatpush1.msra.mxu0 0.0
        %1861 = vmatprep.subr.mxu0 0.0
        %1862 = vmatpush1.msra.mxu0 0.0
        %1863 = vmatprep.subr.mxu0 0.0
        %1864 = vmatpush1.msra.mxu0 0.0
        %1865 = vmatprep.subr.mxu0 0.0
        %1866 = vmatpush1.msra.mxu0 0.0
        %1867 = vmatprep.subr.mxu0 0.0
        %1868 = vmatpush1.msra.mxu0 0.0
        %1869 = vmatprep.subr.mxu0 0.0
        %1870 = vmatpush1.msra.mxu0 0.0
        %1871 = vmatprep.subr.mxu0 0.0
        %1872 = vmatpush1.msra.mxu0 0.0
        %1873 = vmatprep.subr.mxu0 0.0
        %1874 = vmatpush1.msra.mxu0 0.0
        %1875 = vmatprep.subr.mxu0 0.0
        %1876 = vmatpush1.msra.mxu0 0.0
        %1877 = vmatprep.subr.mxu0 0.0
        %1878 = vmatpush1.msra.mxu0 0.0
        %1879 = vmatprep.mubr.f32.mxu0 0.0
        %1880 = vmatmul.mubr.f32.gmra.mrb[0].mxu0 %v1626
        %v1881 = vpop.f32.mrb[0].mxu0
        %v1882 = vadd.f32 %v1793, %v1881
        %v1883 = vpop.f32.mrb[0].mxu0
        %v1884 = vadd.f32 %v1795, %v1883
        %1885 = vmatprep.mubr.f32.mxu0 0.0
        %1886 = vmatmul.mubr.f32.gmra.mrb[0].mxu0 %v1629
        %v1887 = vpop.f32.mrb[0].mxu0
        %v1888 = vadd.f32 %v1799, %v1887
        %v1889 = vpop.f32.mrb[0].mxu0
        %v1890 = vadd.f32 %v1801, %v1889
        %1891 = vmatprep.mubr.f32.mxu0 0.0
        %1892 = vmatmul.mubr.f32.gmra.mrb[0].mxu0 %v1632
        %v1893 = vpop.f32.mrb[0].mxu0
        %v1894 = vadd.f32 %v1805, %v1893
        %v1895 = vpop.f32.mrb[0].mxu0
        %v1896 = vadd.f32 %v1807, %v1895
        %1897 = vmatprep.mubr.f32.mxu0 0.0
        %1898 = vmatmul.mubr.f32.gmra.mrb[0].mxu0 %v1635
        %v1899 = vpop.f32.mrb[0].mxu0
        %v1900 = vadd.f32 %v1811, %v1899
        %v1901 = vpop.f32.mrb[0].mxu0
        %v1902 = vadd.f32 %v1813, %v1901
        %1903 = vdwg.mxu0
        %1904 = vrot.lane.b32.xlu0 %v1434, 127
        %v1905 = vpop.permute.xlu0 %1904
        %1906 = vrot.lane.b32.xlu0 %v1436, 127
        %v1907 = vpop.permute.xlu0 %1906
        %1908 = vrot.lane.b32.xlu0 %v1438, 127
        %v1909 = vpop.permute.xlu0 %1908
        %1910 = vrot.lane.b32.xlu0 %v1440, 127
        %v1911 = vpop.permute.xlu0 %1910
        %1912 = vrot.lane.b32.xlu0 %v1442, 127
        %v1913 = vpop.permute.xlu0 %1912
        %1914 = vrot.lane.b32.xlu0 %v1444, 127
        %v1915 = vpop.permute.xlu0 %1914
        %1916 = vrot.lane.b32.xlu0 %v1446, 127
        %v1917 = vpop.permute.xlu0 %1916
        %1918 = vrot.lane.b32.xlu0 %v1448, 127
        %v1919 = vpop.permute.xlu0 %1918
        %1920 = vrot.lane.b32.xlu0 %v1435, 127
        %v1921 = vpop.permute.xlu0 %1920
        %1922 = vrot.lane.b32.xlu0 %v1437, 127
        %v1923 = vpop.permute.xlu0 %1922
        %1924 = vrot.lane.b32.xlu0 %v1439, 127
        %v1925 = vpop.permute.xlu0 %1924
        %1926 = vrot.lane.b32.xlu0 %v1441, 127
        %v1927 = vpop.permute.xlu0 %1926
        %1928 = vrot.lane.b32.xlu0 %v1443, 127
        %v1929 = vpop.permute.xlu0 %1928
        %1930 = vrot.lane.b32.xlu0 %v1445, 127
        %v1931 = vpop.permute.xlu0 %1930
        %1932 = vrot.lane.b32.xlu0 %v1447, 127
        %v1933 = vpop.permute.xlu0 %1932
        %1934 = vrot.lane.b32.xlu0 %v1449, 127
        %v1935 = vpop.permute.xlu0 %1934
        %v1936 = vsel %vm1228, %v1905, %v1921
        %v1937 = vsel %vm1228, %v1907, %v1923
        %v1938 = vsel %vm1228, %v1909, %v1925
        %v1939 = vsel %vm1228, %v1911, %v1927
        %v1940 = vsel %vm1228, %v1913, %v1929
        %v1941 = vsel %vm1228, %v1915, %v1931
        %v1942 = vsel %vm1228, %v1917, %v1933
        %v1943 = vsel %vm1228, %v1919, %v1935
        %v1944 = vsel %vm1228, %v1921, %v1905
        %v1945 = vsel %vm1228, %v1923, %v1907
        %v1946 = vsel %vm1228, %v1925, %v1909
        %v1947 = vsel %vm1228, %v1927, %v1911
        %v1948 = vsel %vm1228, %v1929, %v1913
        %v1949 = vsel %vm1228, %v1931, %v1915
        %v1950 = vsel %vm1228, %v1933, %v1917
        %v1951 = vsel %vm1228, %v1935, %v1919
        %v1952 = vsel %vm1249, %v1936, 0.0
        %v1953 = vsel %vm1250, %v1944, 0.0
        %v1954 = vsel %vm1249, %v1937, 0.0
        %v1955 = vsel %vm1250, %v1945, 0.0
        %v1956 = vsel %vm1249, %v1938, 0.0
        %v1957 = vsel %vm1250, %v1946, 0.0
        %v1958 = vsel %vm1249, %v1939, 0.0
        %v1959 = vsel %vm1250, %v1947, 0.0
        %v1960 = vsel %vm1249, %v1940, 0.0
        %v1961 = vsel %vm1250, %v1948, 0.0
        %v1962 = vsel %vm1249, %v1941, 0.0
        %v1963 = vsel %vm1250, %v1949, 0.0
        %v1964 = vsel %vm1249, %v1942, 0.0
        %v1965 = vsel %vm1250, %v1950, 0.0
        %v1966 = vsel %vm1249, %v1943, 0.0
        %v1967 = vsel %vm1250, %v1951, 0.0
        %s1968 = scalar_lea.vmem [#allocation2], 64
        %v1969 = vld [vmem:[%s1968] sm:$0xff]
        %v1970 = vld [vmem:[%s1968 + $0x8] sm:$0xff]
        %v1971 = vld [vmem:[%s1968 + $0x10] sm:$0xff]
        %v1972 = vld [vmem:[%s1968 + $0x18] sm:$0xff]
        %v1974 = vsel %vm1523, %v1969, 0
        %v1977 = vsel %vm1523, %v1970, 0
        %v1980 = vsel %vm1523, %v1971, 0
        %v1983 = vsel %vm1523, %v1972, 0
        %1985 = vmatprep.subr.mxu0 %v1953
        %1986 = vmatpush1.msra.mxu0 %v1952
        %1987 = vmatprep.subr.mxu0 %v1955
        %1988 = vmatpush1.msra.mxu0 %v1954
        %1989 = vmatprep.subr.mxu0 %v1957
        %1990 = vmatpush1.msra.mxu0 %v1956
        %1991 = vmatprep.subr.mxu0 %v1959
        %1992 = vmatpush1.msra.mxu0 %v1958
        %1993 = vmatprep.subr.mxu0 0.0
        %1994 = vmatpush1.msra.mxu0 0.0
        %1995 = vmatprep.subr.mxu0 0.0
        %1996 = vmatpush1.msra.mxu0 0.0
        %1997 = vmatprep.subr.mxu0 0.0
        %1998 = vmatpush1.msra.mxu0 0.0
        %1999 = vmatprep.subr.mxu0 0.0
        %2000 = vmatpush1.msra.mxu0 0.0
        %2001 = vmatprep.subr.mxu0 0.0
        %2002 = vmatpush1.msra.mxu0 0.0
        %2003 = vmatprep.subr.mxu0 0.0
        %2004 = vmatpush1.msra.mxu0 0.0
        %2005 = vmatprep.subr.mxu0 0.0
        %2006 = vmatpush1.msra.mxu0 0.0
        %2007 = vmatprep.subr.mxu0 0.0
        %2008 = vmatpush1.msra.mxu0 0.0
        %2009 = vmatprep.subr.mxu0 0.0
        %2010 = vmatpush1.msra.mxu0 0.0
        %2011 = vmatprep.subr.mxu0 0.0
        %2012 = vmatpush1.msra.mxu0 0.0
        %2013 = vmatprep.subr.mxu0 0.0
        %2014 = vmatpush1.msra.mxu0 0.0
        %2015 = vmatprep.subr.mxu0 0.0
        %2016 = vmatpush1.msra.mxu0 0.0
        %2017 = vmatprep.subr.mxu0 0.0
        %2018 = vmatpush1.msra.mxu0 0.0
        %2019 = vmatprep.subr.mxu0 0.0
        %2020 = vmatpush1.msra.mxu0 0.0
        %2021 = vmatprep.subr.mxu0 0.0
        %2022 = vmatpush1.msra.mxu0 0.0
        %2023 = vmatprep.subr.mxu0 0.0
        %2024 = vmatpush1.msra.mxu0 0.0
        %2025 = vmatprep.subr.mxu0 0.0
        %2026 = vmatpush1.msra.mxu0 0.0
        %2027 = vmatprep.subr.mxu0 0.0
        %2028 = vmatpush1.msra.mxu0 0.0
        %2029 = vmatprep.subr.mxu0 0.0
        %2030 = vmatpush1.msra.mxu0 0.0
        %2031 = vmatprep.subr.mxu0 0.0
        %2032 = vmatpush1.msra.mxu0 0.0
        %2033 = vmatprep.subr.mxu0 0.0
        %2034 = vmatpush1.msra.mxu0 0.0
        %2035 = vmatprep.subr.mxu0 0.0
        %2036 = vmatpush1.msra.mxu0 0.0
        %2037 = vmatprep.subr.mxu0 0.0
        %2038 = vmatpush1.msra.mxu0 0.0
        %2039 = vmatprep.subr.mxu0 0.0
        %2040 = vmatpush1.msra.mxu0 0.0
        %2041 = vmatprep.subr.mxu0 0.0
        %2042 = vmatpush1.msra.mxu0 0.0
        %2043 = vmatprep.subr.mxu0 0.0
        %2044 = vmatpush1.msra.mxu0 0.0
        %2045 = vmatprep.subr.mxu0 0.0
        %2046 = vmatpush1.msra.mxu0 0.0
        %2047 = vmatprep.subr.mxu0 0.0
        %2048 = vmatpush1.msra.mxu0 0.0
        %2049 = vmatprep.mubr.f32.mxu0 0.0
        %2050 = vmatmul.mubr.f32.gmra.mrb[0].mxu0 %v1974
        %v2051 = vpop.f32.mrb[0].mxu0
        %v2052 = vadd.f32 0.0, %v2051
        %v2053 = vpop.f32.mrb[0].mxu0
        %v2054 = vadd.f32 0.0, %v2053
        %2055 = vmatprep.mubr.f32.mxu0 0.0
        %2056 = vmatmul.mubr.f32.gmra.mrb[0].mxu0 %v1977
        %v2057 = vpop.f32.mrb[0].mxu0
        %v2058 = vadd.f32 0.0, %v2057
        %v2059 = vpop.f32.mrb[0].mxu0
        %v2060 = vadd.f32 0.0, %v2059
        %2061 = vmatprep.mubr.f32.mxu0 0.0
        %2062 = vmatmul.mubr.f32.gmra.mrb[0].mxu0 %v1980
        %v2063 = vpop.f32.mrb[0].mxu0
        %v2064 = vadd.f32 0.0, %v2063
        %v2065 = vpop.f32.mrb[0].mxu0
        %v2066 = vadd.f32 0.0, %v2065
        %2067 = vmatprep.mubr.f32.mxu0 0.0
        %2068 = vmatmul.mubr.f32.gmra.mrb[0].mxu0 %v1983
        %v2069 = vpop.f32.mrb[0].mxu0
        %v2070 = vadd.f32 0.0, %v2069
        %v2071 = vpop.f32.mrb[0].mxu0
        %v2072 = vadd.f32 0.0, %v2071
        %2073 = vdwg.mxu0
        %v2074 = vadd.f32 %v1704, %v2052
        %v2075 = vadd.f32 %v1706, %v2054
        %v2076 = vadd.f32 %v1710, %v2058
        %v2077 = vadd.f32 %v1712, %v2060
        %v2078 = vadd.f32 %v1716, %v2064
        %v2079 = vadd.f32 %v1718, %v2066
        %v2080 = vadd.f32 %v1722, %v2070
        %v2081 = vadd.f32 %v1724, %v2072
        %2082 = vmatprep.subr.mxu0 %v1961
        %2083 = vmatpush1.msra.mxu0 %v1960
        %2084 = vmatprep.subr.mxu0 %v1963
        %2085 = vmatpush1.msra.mxu0 %v1962
        %2086 = vmatprep.subr.mxu0 %v1965
        %2087 = vmatpush1.msra.mxu0 %v1964
        %2088 = vmatprep.subr.mxu0 %v1967
        %2089 = vmatpush1.msra.mxu0 %v1966
        %2090 = vmatprep.subr.mxu0 0.0
        %2091 = vmatpush1.msra.mxu0 0.0
        %2092 = vmatprep.subr.mxu0 0.0
        %2093 = vmatpush1.msra.mxu0 0.0
        %2094 = vmatprep.subr.mxu0 0.0
        %2095 = vmatpush1.msra.mxu0 0.0
        %2096 = vmatprep.subr.mxu0 0.0
        %2097 = vmatpush1.msra.mxu0 0.0
        %2098 = vmatprep.subr.mxu0 0.0
        %2099 = vmatpush1.msra.mxu0 0.0
        %2100 = vmatprep.subr.mxu0 0.0
        %2101 = vmatpush1.msra.mxu0 0.0
        %2102 = vmatprep.subr.mxu0 0.0
        %2103 = vmatpush1.msra.mxu0 0.0
        %2104 = vmatprep.subr.mxu0 0.0
        %2105 = vmatpush1.msra.mxu0 0.0
        %2106 = vmatprep.subr.mxu0 0.0
        %2107 = vmatpush1.msra.mxu0 0.0
        %2108 = vmatprep.subr.mxu0 0.0
        %2109 = vmatpush1.msra.mxu0 0.0
        %2110 = vmatprep.subr.mxu0 0.0
        %2111 = vmatpush1.msra.mxu0 0.0
        %2112 = vmatprep.subr.mxu0 0.0
        %2113 = vmatpush1.msra.mxu0 0.0
        %2114 = vmatprep.subr.mxu0 0.0
        %2115 = vmatpush1.msra.mxu0 0.0
        %2116 = vmatprep.subr.mxu0 0.0
        %2117 = vmatpush1.msra.mxu0 0.0
        %2118 = vmatprep.subr.mxu0 0.0
        %2119 = vmatpush1.msra.mxu0 0.0
        %2120 = vmatprep.subr.mxu0 0.0
        %2121 = vmatpush1.msra.mxu0 0.0
        %2122 = vmatprep.subr.mxu0 0.0
        %2123 = vmatpush1.msra.mxu0 0.0
        %2124 = vmatprep.subr.mxu0 0.0
        %2125 = vmatpush1.msra.mxu0 0.0
        %2126 = vmatprep.subr.mxu0 0.0
        %2127 = vmatpush1.msra.mxu0 0.0
        %2128 = vmatprep.subr.mxu0 0.0
        %2129 = vmatpush1.msra.mxu0 0.0
        %2130 = vmatprep.subr.mxu0 0.0
        %2131 = vmatpush1.msra.mxu0 0.0
        %2132 = vmatprep.subr.mxu0 0.0
        %2133 = vmatpush1.msra.mxu0 0.0
        %2134 = vmatprep.subr.mxu0 0.0
        %2135 = vmatpush1.msra.mxu0 0.0
        %2136 = vmatprep.subr.mxu0 0.0
        %2137 = vmatpush1.msra.mxu0 0.0
        %2138 = vmatprep.subr.mxu0 0.0
        %2139 = vmatpush1.msra.mxu0 0.0
        %2140 = vmatprep.subr.mxu0 0.0
        %2141 = vmatpush1.msra.mxu0 0.0
        %2142 = vmatprep.subr.mxu0 0.0
        %2143 = vmatpush1.msra.mxu0 0.0
        %2144 = vmatprep.subr.mxu0 0.0
        %2145 = vmatpush1.msra.mxu0 0.0
        %2146 = vmatprep.mubr.f32.mxu0 0.0
        %2147 = vmatmul.mubr.f32.gmra.mrb[0].mxu0 %v1974
        %v2148 = vpop.f32.mrb[0].mxu0
        %v2149 = vadd.f32 0.0, %v2148
        %v2150 = vpop.f32.mrb[0].mxu0
        %v2151 = vadd.f32 0.0, %v2150
        %2152 = vmatprep.mubr.f32.mxu0 0.0
        %2153 = vmatmul.mubr.f32.gmra.mrb[0].mxu0 %v1977
        %v2154 = vpop.f32.mrb[0].mxu0
        %v2155 = vadd.f32 0.0, %v2154
        %v2156 = vpop.f32.mrb[0].mxu0
        %v2157 = vadd.f32 0.0, %v2156
        %2158 = vmatprep.mubr.f32.mxu0 0.0
        %2159 = vmatmul.mubr.f32.gmra.mrb[0].mxu0 %v1980
        %v2160 = vpop.f32.mrb[0].mxu0
        %v2161 = vadd.f32 0.0, %v2160
        %v2162 = vpop.f32.mrb[0].mxu0
        %v2163 = vadd.f32 0.0, %v2162
        %2164 = vmatprep.mubr.f32.mxu0 0.0
        %2165 = vmatmul.mubr.f32.gmra.mrb[0].mxu0 %v1983
        %v2166 = vpop.f32.mrb[0].mxu0
        %v2167 = vadd.f32 0.0, %v2166
        %v2168 = vpop.f32.mrb[0].mxu0
        %v2169 = vadd.f32 0.0, %v2168
        %2170 = vdwg.mxu0
        %v2171 = vadd.f32 %v1882, %v2149
        %v2172 = vadd.f32 %v1884, %v2151
        %v2173 = vadd.f32 %v1888, %v2155
        %v2174 = vadd.f32 %v1890, %v2157
        %v2175 = vadd.f32 %v1894, %v2161
        %v2176 = vadd.f32 %v1896, %v2163
        %v2177 = vadd.f32 %v1900, %v2167
        %v2178 = vadd.f32 %v1902, %v2169
        %2179 = vrot.lane.b32.xlu0 %v1370, 1
        %v2180 = vpop.permute.xlu0 %2179
        %2181 = vrot.lane.b32.xlu0 %v1372, 1
        %v2182 = vpop.permute.xlu0 %2181
        %2183 = vrot.lane.b32.xlu0 %v1374, 1
        %v2184 = vpop.permute.xlu0 %2183
        %2185 = vrot.lane.b32.xlu0 %v1376, 1
        %v2186 = vpop.permute.xlu0 %2185
        %2187 = vrot.lane.b32.xlu0 %v1378, 1
        %v2188 = vpop.permute.xlu0 %2187
        %2189 = vrot.lane.b32.xlu0 %v1380, 1
        %v2190 = vpop.permute.xlu0 %2189
        %2191 = vrot.lane.b32.xlu0 %v1382, 1
        %v2192 = vpop.permute.xlu0 %2191
        %2193 = vrot.lane.b32.xlu0 %v1384, 1
        %v2194 = vpop.permute.xlu0 %2193
        %2195 = vrot.lane.b32.xlu0 %v1371, 1
        %v2196 = vpop.permute.xlu0 %2195
        %2197 = vrot.lane.b32.xlu0 %v1373, 1
        %v2198 = vpop.permute.xlu0 %2197
        %2199 = vrot.lane.b32.xlu0 %v1375, 1
        %v2200 = vpop.permute.xlu0 %2199
        %2201 = vrot.lane.b32.xlu0 %v1377, 1
        %v2202 = vpop.permute.xlu0 %2201
        %2203 = vrot.lane.b32.xlu0 %v1379, 1
        %v2204 = vpop.permute.xlu0 %2203
        %2205 = vrot.lane.b32.xlu0 %v1381, 1
        %v2206 = vpop.permute.xlu0 %2205
        %2207 = vrot.lane.b32.xlu0 %v1383, 1
        %v2208 = vpop.permute.xlu0 %2207
        %2209 = vrot.lane.b32.xlu0 %v1385, 1
        %v2210 = vpop.permute.xlu0 %2209
        %v2211 = vsel %vm1141, %v2180, %v2196
        %v2212 = vsel %vm1141, %v2182, %v2198
        %v2213 = vsel %vm1141, %v2184, %v2200
        %v2214 = vsel %vm1141, %v2186, %v2202
        %v2215 = vsel %vm1141, %v2188, %v2204
        %v2216 = vsel %vm1141, %v2190, %v2206
        %v2217 = vsel %vm1141, %v2192, %v2208
        %v2218 = vsel %vm1141, %v2194, %v2210
        %v2219 = vsel %vm1141, %v2196, %v2180
        %v2220 = vsel %vm1141, %v2198, %v2182
        %v2221 = vsel %vm1141, %v2200, %v2184
        %v2222 = vsel %vm1141, %v2202, %v2186
        %v2223 = vsel %vm1141, %v2204, %v2188
        %v2224 = vsel %vm1141, %v2206, %v2190
        %v2225 = vsel %vm1141, %v2208, %v2192
        %v2226 = vsel %vm1141, %v2210, %v2194
        %v2227 = vsel %vm1162, %v2219, 0.0
        %v2228 = vsel %vm1163, %v2211, 0.0
        %v2229 = vsel %vm1162, %v2220, 0.0
        %v2230 = vsel %vm1163, %v2212, 0.0
        %v2231 = vsel %vm1162, %v2221, 0.0
        %v2232 = vsel %vm1163, %v2213, 0.0
        %v2233 = vsel %vm1162, %v2222, 0.0
        %v2234 = vsel %vm1163, %v2214, 0.0
        %v2235 = vsel %vm1162, %v2223, 0.0
        %v2236 = vsel %vm1163, %v2215, 0.0
        %v2237 = vsel %vm1162, %v2224, 0.0
        %v2238 = vsel %vm1163, %v2216, 0.0
        %v2239 = vsel %vm1162, %v2225, 0.0
        %v2240 = vsel %vm1163, %v2217, 0.0
        %v2241 = vsel %vm1162, %v2226, 0.0
        %v2242 = vsel %vm1163, %v2218, 0.0
        %s2243 = scalar_lea.vmem [#allocation2], 96
        %v2244 = vld [vmem:[%s2243] sm:$0xff]
        %v2245 = vld [vmem:[%s2243 + $0x8] sm:$0xff]
        %v2246 = vld [vmem:[%s2243 + $0x10] sm:$0xff]
        %v2247 = vld [vmem:[%s2243 + $0x18] sm:$0xff]
        %v2249 = vsel %vm1523, %v2244, 0
        %v2252 = vsel %vm1523, %v2245, 0
        %v2255 = vsel %vm1523, %v2246, 0
        %v2258 = vsel %vm1523, %v2247, 0
        %2260 = vmatprep.subr.mxu0 %v2228
        %2261 = vmatpush1.msra.mxu0 %v2227
        %2262 = vmatprep.subr.mxu0 %v2230
        %2263 = vmatpush1.msra.mxu0 %v2229
        %2264 = vmatprep.subr.mxu0 %v2232
        %2265 = vmatpush1.msra.mxu0 %v2231
        %2266 = vmatprep.subr.mxu0 %v2234
        %2267 = vmatpush1.msra.mxu0 %v2233
        %2268 = vmatprep.subr.mxu0 0.0
        %2269 = vmatpush1.msra.mxu0 0.0
        %2270 = vmatprep.subr.mxu0 0.0
        %2271 = vmatpush1.msra.mxu0 0.0
        %2272 = vmatprep.subr.mxu0 0.0
        %2273 = vmatpush1.msra.mxu0 0.0
        %2274 = vmatprep.subr.mxu0 0.0
        %2275 = vmatpush1.msra.mxu0 0.0
        %2276 = vmatprep.subr.mxu0 0.0
        %2277 = vmatpush1.msra.mxu0 0.0
        %2278 = vmatprep.subr.mxu0 0.0
        %2279 = vmatpush1.msra.mxu0 0.0
        %2280 = vmatprep.subr.mxu0 0.0
        %2281 = vmatpush1.msra.mxu0 0.0
        %2282 = vmatprep.subr.mxu0 0.0
        %2283 = vmatpush1.msra.mxu0 0.0
        %2284 = vmatprep.subr.mxu0 0.0
        %2285 = vmatpush1.msra.mxu0 0.0
        %2286 = vmatprep.subr.mxu0 0.0
        %2287 = vmatpush1.msra.mxu0 0.0
        %2288 = vmatprep.subr.mxu0 0.0
        %2289 = vmatpush1.msra.mxu0 0.0
        %2290 = vmatprep.subr.mxu0 0.0
        %2291 = vmatpush1.msra.mxu0 0.0
        %2292 = vmatprep.subr.mxu0 0.0
        %2293 = vmatpush1.msra.mxu0 0.0
        %2294 = vmatprep.subr.mxu0 0.0
        %2295 = vmatpush1.msra.mxu0 0.0
        %2296 = vmatprep.subr.mxu0 0.0
        %2297 = vmatpush1.msra.mxu0 0.0
        %2298 = vmatprep.subr.mxu0 0.0
        %2299 = vmatpush1.msra.mxu0 0.0
        %2300 = vmatprep.subr.mxu0 0.0
        %2301 = vmatpush1.msra.mxu0 0.0
        %2302 = vmatprep.subr.mxu0 0.0
        %2303 = vmatpush1.msra.mxu0 0.0
        %2304 = vmatprep.subr.mxu0 0.0
        %2305 = vmatpush1.msra.mxu0 0.0
        %2306 = vmatprep.subr.mxu0 0.0
        %2307 = vmatpush1.msra.mxu0 0.0
        %2308 = vmatprep.subr.mxu0 0.0
        %2309 = vmatpush1.msra.mxu0 0.0
        %2310 = vmatprep.subr.mxu0 0.0
        %2311 = vmatpush1.msra.mxu0 0.0
        %2312 = vmatprep.subr.mxu0 0.0
        %2313 = vmatpush1.msra.mxu0 0.0
        %2314 = vmatprep.subr.mxu0 0.0
        %2315 = vmatpush1.msra.mxu0 0.0
        %2316 = vmatprep.subr.mxu0 0.0
        %2317 = vmatpush1.msra.mxu0 0.0
        %2318 = vmatprep.subr.mxu0 0.0
        %2319 = vmatpush1.msra.mxu0 0.0
        %2320 = vmatprep.subr.mxu0 0.0
        %2321 = vmatpush1.msra.mxu0 0.0
        %2322 = vmatprep.subr.mxu0 0.0
        %2323 = vmatpush1.msra.mxu0 0.0
        %2324 = vmatprep.mubr.f32.mxu0 0.0
        %2325 = vmatmul.mubr.f32.gmra.mrb[0].mxu0 %v2249
        %v2326 = vpop.f32.mrb[0].mxu0
        %v2327 = vadd.f32 0.0, %v2326
        %v2328 = vpop.f32.mrb[0].mxu0
        %v2329 = vadd.f32 0.0, %v2328
        %2330 = vmatprep.mubr.f32.mxu0 0.0
        %2331 = vmatmul.mubr.f32.gmra.mrb[0].mxu0 %v2252
        %v2332 = vpop.f32.mrb[0].mxu0
        %v2333 = vadd.f32 0.0, %v2332
        %v2334 = vpop.f32.mrb[0].mxu0
        %v2335 = vadd.f32 0.0, %v2334
        %2336 = vmatprep.mubr.f32.mxu0 0.0
        %2337 = vmatmul.mubr.f32.gmra.mrb[0].mxu0 %v2255
        %v2338 = vpop.f32.mrb[0].mxu0
        %v2339 = vadd.f32 0.0, %v2338
        %v2340 = vpop.f32.mrb[0].mxu0
        %v2341 = vadd.f32 0.0, %v2340
        %2342 = vmatprep.mubr.f32.mxu0 0.0
        %2343 = vmatmul.mubr.f32.gmra.mrb[0].mxu0 %v2258
        %v2344 = vpop.f32.mrb[0].mxu0
        %v2345 = vadd.f32 0.0, %v2344
        %v2346 = vpop.f32.mrb[0].mxu0
        %v2347 = vadd.f32 0.0, %v2346
        %2348 = vdwg.mxu0
        %v2349 = vadd.f32 %v2074, %v2327
        %v2350 = vadd.f32 %v2075, %v2329
        %v2351 = vadd.f32 %v2076, %v2333
        %v2352 = vadd.f32 %v2077, %v2335
        %v2353 = vadd.f32 %v2078, %v2339
        %v2354 = vadd.f32 %v2079, %v2341
        %v2355 = vadd.f32 %v2080, %v2345
        %v2356 = vadd.f32 %v2081, %v2347
        %2357 = vmatprep.subr.mxu0 %v2236
        %2358 = vmatpush1.msra.mxu0 %v2235
        %2359 = vmatprep.subr.mxu0 %v2238
        %2360 = vmatpush1.msra.mxu0 %v2237
        %2361 = vmatprep.subr.mxu0 %v2240
        %2362 = vmatpush1.msra.mxu0 %v2239
        %2363 = vmatprep.subr.mxu0 %v2242
        %2364 = vmatpush1.msra.mxu0 %v2241
        %2365 = vmatprep.subr.mxu0 0.0
        %2366 = vmatpush1.msra.mxu0 0.0
        %2367 = vmatprep.subr.mxu0 0.0
        %2368 = vmatpush1.msra.mxu0 0.0
        %2369 = vmatprep.subr.mxu0 0.0
        %2370 = vmatpush1.msra.mxu0 0.0
        %2371 = vmatprep.subr.mxu0 0.0
        %2372 = vmatpush1.msra.mxu0 0.0
        %2373 = vmatprep.subr.mxu0 0.0
        %2374 = vmatpush1.msra.mxu0 0.0
        %2375 = vmatprep.subr.mxu0 0.0
        %2376 = vmatpush1.msra.mxu0 0.0
        %2377 = vmatprep.subr.mxu0 0.0
        %2378 = vmatpush1.msra.mxu0 0.0
        %2379 = vmatprep.subr.mxu0 0.0
        %2380 = vmatpush1.msra.mxu0 0.0
        %2381 = vmatprep.subr.mxu0 0.0
        %2382 = vmatpush1.msra.mxu0 0.0
        %2383 = vmatprep.subr.mxu0 0.0
        %2384 = vmatpush1.msra.mxu0 0.0
        %2385 = vmatprep.subr.mxu0 0.0
        %2386 = vmatpush1.msra.mxu0 0.0
        %2387 = vmatprep.subr.mxu0 0.0
        %2388 = vmatpush1.msra.mxu0 0.0
        %2389 = vmatprep.subr.mxu0 0.0
        %2390 = vmatpush1.msra.mxu0 0.0
        %2391 = vmatprep.subr.mxu0 0.0
        %2392 = vmatpush1.msra.mxu0 0.0
        %2393 = vmatprep.subr.mxu0 0.0
        %2394 = vmatpush1.msra.mxu0 0.0
        %2395 = vmatprep.subr.mxu0 0.0
        %2396 = vmatpush1.msra.mxu0 0.0
        %2397 = vmatprep.subr.mxu0 0.0
        %2398 = vmatpush1.msra.mxu0 0.0
        %2399 = vmatprep.subr.mxu0 0.0
        %2400 = vmatpush1.msra.mxu0 0.0
        %2401 = vmatprep.subr.mxu0 0.0
        %2402 = vmatpush1.msra.mxu0 0.0
        %2403 = vmatprep.subr.mxu0 0.0
        %2404 = vmatpush1.msra.mxu0 0.0
        %2405 = vmatprep.subr.mxu0 0.0
        %2406 = vmatpush1.msra.mxu0 0.0
        %2407 = vmatprep.subr.mxu0 0.0
        %2408 = vmatpush1.msra.mxu0 0.0
        %2409 = vmatprep.subr.mxu0 0.0
        %2410 = vmatpush1.msra.mxu0 0.0
        %2411 = vmatprep.subr.mxu0 0.0
        %2412 = vmatpush1.msra.mxu0 0.0
        %2413 = vmatprep.subr.mxu0 0.0
        %2414 = vmatpush1.msra.mxu0 0.0
        %2415 = vmatprep.subr.mxu0 0.0
        %2416 = vmatpush1.msra.mxu0 0.0
        %2417 = vmatprep.subr.mxu0 0.0
        %2418 = vmatpush1.msra.mxu0 0.0
        %2419 = vmatprep.subr.mxu0 0.0
        %2420 = vmatpush1.msra.mxu0 0.0
        %2421 = vmatprep.mubr.f32.mxu0 0.0
        %2422 = vmatmul.mubr.f32.gmra.mrb[0].mxu0 %v2249
        %v2423 = vpop.f32.mrb[0].mxu0
        %v2424 = vadd.f32 0.0, %v2423
        %v2425 = vpop.f32.mrb[0].mxu0
        %v2426 = vadd.f32 0.0, %v2425
        %2427 = vmatprep.mubr.f32.mxu0 0.0
        %2428 = vmatmul.mubr.f32.gmra.mrb[0].mxu0 %v2252
        %v2429 = vpop.f32.mrb[0].mxu0
        %v2430 = vadd.f32 0.0, %v2429
        %v2431 = vpop.f32.mrb[0].mxu0
        %v2432 = vadd.f32 0.0, %v2431
        %2433 = vmatprep.mubr.f32.mxu0 0.0
        %2434 = vmatmul.mubr.f32.gmra.mrb[0].mxu0 %v2255
        %v2435 = vpop.f32.mrb[0].mxu0
        %v2436 = vadd.f32 0.0, %v2435
        %v2437 = vpop.f32.mrb[0].mxu0
        %v2438 = vadd.f32 0.0, %v2437
        %2439 = vmatprep.mubr.f32.mxu0 0.0
        %2440 = vmatmul.mubr.f32.gmra.mrb[0].mxu0 %v2258
        %v2441 = vpop.f32.mrb[0].mxu0
        %v2442 = vadd.f32 0.0, %v2441
        %v2443 = vpop.f32.mrb[0].mxu0
        %v2444 = vadd.f32 0.0, %v2443
        %2445 = vdwg.mxu0
        %v2446 = vadd.f32 %v2171, %v2424
        %v2447 = vadd.f32 %v2172, %v2426
        %v2448 = vadd.f32 %v2173, %v2430
        %v2449 = vadd.f32 %v2174, %v2432
        %v2450 = vadd.f32 %v2175, %v2436
        %v2451 = vadd.f32 %v2176, %v2438
        %v2452 = vadd.f32 %v2177, %v2442
        %v2453 = vadd.f32 %v2178, %v2444
        %s2454 = scalar_lea.vmem [#allocation2], 128
        %v2455 = vld [vmem:[%s2454] sm:$0xff]
        %v2456 = vld [vmem:[%s2454 + $0x8] sm:$0xff]
        %v2457 = vld [vmem:[%s2454 + $0x10] sm:$0xff]
        %v2458 = vld [vmem:[%s2454 + $0x18] sm:$0xff]
        %v2460 = vsel %vm1523, %v2455, 0
        %v2463 = vsel %vm1523, %v2456, 0
        %v2466 = vsel %vm1523, %v2457, 0
        %v2469 = vsel %vm1523, %v2458, 0
        %2471 = vmatprep.subr.mxu0 %v1371
        %2472 = vmatpush1.msra.mxu0 %v1370
        %2473 = vmatprep.subr.mxu0 %v1373
        %2474 = vmatpush1.msra.mxu0 %v1372
        %2475 = vmatprep.subr.mxu0 %v1375
        %2476 = vmatpush1.msra.mxu0 %v1374
        %2477 = vmatprep.subr.mxu0 %v1377
        %2478 = vmatpush1.msra.mxu0 %v1376
        %2479 = vmatprep.subr.mxu0 0.0
        %2480 = vmatpush1.msra.mxu0 0.0
        %2481 = vmatprep.subr.mxu0 0.0
        %2482 = vmatpush1.msra.mxu0 0.0
        %2483 = vmatprep.subr.mxu0 0.0
        %2484 = vmatpush1.msra.mxu0 0.0
        %2485 = vmatprep.subr.mxu0 0.0
        %2486 = vmatpush1.msra.mxu0 0.0
        %2487 = vmatprep.subr.mxu0 0.0
        %2488 = vmatpush1.msra.mxu0 0.0
        %2489 = vmatprep.subr.mxu0 0.0
        %2490 = vmatpush1.msra.mxu0 0.0
        %2491 = vmatprep.subr.mxu0 0.0
        %2492 = vmatpush1.msra.mxu0 0.0
        %2493 = vmatprep.subr.mxu0 0.0
        %2494 = vmatpush1.msra.mxu0 0.0
        %2495 = vmatprep.subr.mxu0 0.0
        %2496 = vmatpush1.msra.mxu0 0.0
        %2497 = vmatprep.subr.mxu0 0.0
        %2498 = vmatpush1.msra.mxu0 0.0
        %2499 = vmatprep.subr.mxu0 0.0
        %2500 = vmatpush1.msra.mxu0 0.0
        %2501 = vmatprep.subr.mxu0 0.0
        %2502 = vmatpush1.msra.mxu0 0.0
        %2503 = vmatprep.subr.mxu0 0.0
        %2504 = vmatpush1.msra.mxu0 0.0
        %2505 = vmatprep.subr.mxu0 0.0
        %2506 = vmatpush1.msra.mxu0 0.0
        %2507 = vmatprep.subr.mxu0 0.0
        %2508 = vmatpush1.msra.mxu0 0.0
        %2509 = vmatprep.subr.mxu0 0.0
        %2510 = vmatpush1.msra.mxu0 0.0
        %2511 = vmatprep.subr.mxu0 0.0
        %2512 = vmatpush1.msra.mxu0 0.0
        %2513 = vmatprep.subr.mxu0 0.0
        %2514 = vmatpush1.msra.mxu0 0.0
        %2515 = vmatprep.subr.mxu0 0.0
        %2516 = vmatpush1.msra.mxu0 0.0
        %2517 = vmatprep.subr.mxu0 0.0
        %2518 = vmatpush1.msra.mxu0 0.0
        %2519 = vmatprep.subr.mxu0 0.0
        %2520 = vmatpush1.msra.mxu0 0.0
        %2521 = vmatprep.subr.mxu0 0.0
        %2522 = vmatpush1.msra.mxu0 0.0
        %2523 = vmatprep.subr.mxu0 0.0
        %2524 = vmatpush1.msra.mxu0 0.0
        %2525 = vmatprep.subr.mxu0 0.0
        %2526 = vmatpush1.msra.mxu0 0.0
        %2527 = vmatprep.subr.mxu0 0.0
        %2528 = vmatpush1.msra.mxu0 0.0
        %2529 = vmatprep.subr.mxu0 0.0
        %2530 = vmatpush1.msra.mxu0 0.0
        %2531 = vmatprep.subr.mxu0 0.0
        %2532 = vmatpush1.msra.mxu0 0.0
        %2533 = vmatprep.subr.mxu0 0.0
        %2534 = vmatpush1.msra.mxu0 0.0
        %2535 = vmatprep.mubr.f32.mxu0 0.0
        %2536 = vmatmul.mubr.f32.gmra.mrb[0].mxu0 %v2460
        %v2537 = vpop.f32.mrb[0].mxu0
        %v2538 = vadd.f32 0.0, %v2537
        %v2539 = vpop.f32.mrb[0].mxu0
        %v2540 = vadd.f32 0.0, %v2539
        %2541 = vmatprep.mubr.f32.mxu0 0.0
        %2542 = vmatmul.mubr.f32.gmra.mrb[0].mxu0 %v2463
        %v2543 = vpop.f32.mrb[0].mxu0
        %v2544 = vadd.f32 0.0, %v2543
        %v2545 = vpop.f32.mrb[0].mxu0
        %v2546 = vadd.f32 0.0, %v2545
        %2547 = vmatprep.mubr.f32.mxu0 0.0
        %2548 = vmatmul.mubr.f32.gmra.mrb[0].mxu0 %v2466
        %v2549 = vpop.f32.mrb[0].mxu0
        %v2550 = vadd.f32 0.0, %v2549
        %v2551 = vpop.f32.mrb[0].mxu0
        %v2552 = vadd.f32 0.0, %v2551
        %2553 = vmatprep.mubr.f32.mxu0 0.0
        %2554 = vmatmul.mubr.f32.gmra.mrb[0].mxu0 %v2469
        %v2555 = vpop.f32.mrb[0].mxu0
        %v2556 = vadd.f32 0.0, %v2555
        %v2557 = vpop.f32.mrb[0].mxu0
        %v2558 = vadd.f32 0.0, %v2557
        %2559 = vdwg.mxu0
        %v2560 = vadd.f32 %v2349, %v2538
        %v2561 = vadd.f32 %v2350, %v2540
        %v2562 = vadd.f32 %v2351, %v2544
        %v2563 = vadd.f32 %v2352, %v2546
        %v2564 = vadd.f32 %v2353, %v2550
        %v2565 = vadd.f32 %v2354, %v2552
        %v2566 = vadd.f32 %v2355, %v2556
        %v2567 = vadd.f32 %v2356, %v2558
        %2568 = vmatprep.subr.mxu0 %v1379
        %2569 = vmatpush1.msra.mxu0 %v1378
        %2570 = vmatprep.subr.mxu0 %v1381
        %2571 = vmatpush1.msra.mxu0 %v1380
        %2572 = vmatprep.subr.mxu0 %v1383
        %2573 = vmatpush1.msra.mxu0 %v1382
        %2574 = vmatprep.subr.mxu0 %v1385
        %2575 = vmatpush1.msra.mxu0 %v1384
        %2576 = vmatprep.subr.mxu0 0.0
        %2577 = vmatpush1.msra.mxu0 0.0
        %2578 = vmatprep.subr.mxu0 0.0
        %2579 = vmatpush1.msra.mxu0 0.0
        %2580 = vmatprep.subr.mxu0 0.0
        %2581 = vmatpush1.msra.mxu0 0.0
        %2582 = vmatprep.subr.mxu0 0.0
        %2583 = vmatpush1.msra.mxu0 0.0
        %2584 = vmatprep.subr.mxu0 0.0
        %2585 = vmatpush1.msra.mxu0 0.0
        %2586 = vmatprep.subr.mxu0 0.0
        %2587 = vmatpush1.msra.mxu0 0.0
        %2588 = vmatprep.subr.mxu0 0.0
        %2589 = vmatpush1.msra.mxu0 0.0
        %2590 = vmatprep.subr.mxu0 0.0
        %2591 = vmatpush1.msra.mxu0 0.0
        %2592 = vmatprep.subr.mxu0 0.0
        %2593 = vmatpush1.msra.mxu0 0.0
        %2594 = vmatprep.subr.mxu0 0.0
        %2595 = vmatpush1.msra.mxu0 0.0
        %2596 = vmatprep.subr.mxu0 0.0
        %2597 = vmatpush1.msra.mxu0 0.0
        %2598 = vmatprep.subr.mxu0 0.0
        %2599 = vmatpush1.msra.mxu0 0.0
        %2600 = vmatprep.subr.mxu0 0.0
        %2601 = vmatpush1.msra.mxu0 0.0
        %2602 = vmatprep.subr.mxu0 0.0
        %2603 = vmatpush1.msra.mxu0 0.0
        %2604 = vmatprep.subr.mxu0 0.0
        %2605 = vmatpush1.msra.mxu0 0.0
        %2606 = vmatprep.subr.mxu0 0.0
        %2607 = vmatpush1.msra.mxu0 0.0
        %2608 = vmatprep.subr.mxu0 0.0
        %2609 = vmatpush1.msra.mxu0 0.0
        %2610 = vmatprep.subr.mxu0 0.0
        %2611 = vmatpush1.msra.mxu0 0.0
        %2612 = vmatprep.subr.mxu0 0.0
        %2613 = vmatpush1.msra.mxu0 0.0
        %2614 = vmatprep.subr.mxu0 0.0
        %2615 = vmatpush1.msra.mxu0 0.0
        %2616 = vmatprep.subr.mxu0 0.0
        %2617 = vmatpush1.msra.mxu0 0.0
        %2618 = vmatprep.subr.mxu0 0.0
        %2619 = vmatpush1.msra.mxu0 0.0
        %2620 = vmatprep.subr.mxu0 0.0
        %2621 = vmatpush1.msra.mxu0 0.0
        %2622 = vmatprep.subr.mxu0 0.0
        %2623 = vmatpush1.msra.mxu0 0.0
        %2624 = vmatprep.subr.mxu0 0.0
        %2625 = vmatpush1.msra.mxu0 0.0
        %2626 = vmatprep.subr.mxu0 0.0
        %2627 = vmatpush1.msra.mxu0 0.0
        %2628 = vmatprep.subr.mxu0 0.0
        %2629 = vmatpush1.msra.mxu0 0.0
        %2630 = vmatprep.subr.mxu0 0.0
        %2631 = vmatpush1.msra.mxu0 0.0
        %2632 = vmatprep.mubr.f32.mxu0 0.0
        %2633 = vmatmul.mubr.f32.gmra.mrb[0].mxu0 %v2460
        %v2634 = vpop.f32.mrb[0].mxu0
        %v2635 = vadd.f32 0.0, %v2634
        %v2636 = vpop.f32.mrb[0].mxu0
        %v2637 = vadd.f32 0.0, %v2636
        %2638 = vmatprep.mubr.f32.mxu0 0.0
        %2639 = vmatmul.mubr.f32.gmra.mrb[0].mxu0 %v2463
        %v2640 = vpop.f32.mrb[0].mxu0
        %v2641 = vadd.f32 0.0, %v2640
        %v2642 = vpop.f32.mrb[0].mxu0
        %v2643 = vadd.f32 0.0, %v2642
        %2644 = vmatprep.mubr.f32.mxu0 0.0
        %2645 = vmatmul.mubr.f32.gmra.mrb[0].mxu0 %v2466
        %v2646 = vpop.f32.mrb[0].mxu0
        %v2647 = vadd.f32 0.0, %v2646
        %v2648 = vpop.f32.mrb[0].mxu0
        %v2649 = vadd.f32 0.0, %v2648
        %2650 = vmatprep.mubr.f32.mxu0 0.0
        %2651 = vmatmul.mubr.f32.gmra.mrb[0].mxu0 %v2469
        %v2652 = vpop.f32.mrb[0].mxu0
        %v2653 = vadd.f32 0.0, %v2652
        %v2654 = vpop.f32.mrb[0].mxu0
        %v2655 = vadd.f32 0.0, %v2654
        %2656 = vdwg.mxu0
        %v2657 = vadd.f32 %v2446, %v2635
        %v2658 = vadd.f32 %v2447, %v2637
        %v2659 = vadd.f32 %v2448, %v2641
        %v2660 = vadd.f32 %v2449, %v2643
        %v2661 = vadd.f32 %v2450, %v2647
        %v2662 = vadd.f32 %v2451, %v2649
        %v2663 = vadd.f32 %v2452, %v2653
        %v2664 = vadd.f32 %v2453, %v2655
        %2665 = vrot.lane.b32.xlu0 %v1370, 127
        %v2666 = vpop.permute.xlu0 %2665
        %2667 = vrot.lane.b32.xlu0 %v1372, 127
        %v2668 = vpop.permute.xlu0 %2667
        %2669 = vrot.lane.b32.xlu0 %v1374, 127
        %v2670 = vpop.permute.xlu0 %2669
        %2671 = vrot.lane.b32.xlu0 %v1376, 127
        %v2672 = vpop.permute.xlu0 %2671
        %2673 = vrot.lane.b32.xlu0 %v1378, 127
        %v2674 = vpop.permute.xlu0 %2673
        %2675 = vrot.lane.b32.xlu0 %v1380, 127
        %v2676 = vpop.permute.xlu0 %2675
        %2677 = vrot.lane.b32.xlu0 %v1382, 127
        %v2678 = vpop.permute.xlu0 %2677
        %2679 = vrot.lane.b32.xlu0 %v1384, 127
        %v2680 = vpop.permute.xlu0 %2679
        %2681 = vrot.lane.b32.xlu0 %v1371, 127
        %v2682 = vpop.permute.xlu0 %2681
        %2683 = vrot.lane.b32.xlu0 %v1373, 127
        %v2684 = vpop.permute.xlu0 %2683
        %2685 = vrot.lane.b32.xlu0 %v1375, 127
        %v2686 = vpop.permute.xlu0 %2685
        %2687 = vrot.lane.b32.xlu0 %v1377, 127
        %v2688 = vpop.permute.xlu0 %2687
        %2689 = vrot.lane.b32.xlu0 %v1379, 127
        %v2690 = vpop.permute.xlu0 %2689
        %2691 = vrot.lane.b32.xlu0 %v1381, 127
        %v2692 = vpop.permute.xlu0 %2691
        %2693 = vrot.lane.b32.xlu0 %v1383, 127
        %v2694 = vpop.permute.xlu0 %2693
        %2695 = vrot.lane.b32.xlu0 %v1385, 127
        %v2696 = vpop.permute.xlu0 %2695
        %v2697 = vsel %vm1228, %v2666, %v2682
        %v2698 = vsel %vm1228, %v2668, %v2684
        %v2699 = vsel %vm1228, %v2670, %v2686
        %v2700 = vsel %vm1228, %v2672, %v2688
        %v2701 = vsel %vm1228, %v2674, %v2690
        %v2702 = vsel %vm1228, %v2676, %v2692
        %v2703 = vsel %vm1228, %v2678, %v2694
        %v2704 = vsel %vm1228, %v2680, %v2696
        %v2705 = vsel %vm1228, %v2682, %v2666
        %v2706 = vsel %vm1228, %v2684, %v2668
        %v2707 = vsel %vm1228, %v2686, %v2670
        %v2708 = vsel %vm1228, %v2688, %v2672
        %v2709 = vsel %vm1228, %v2690, %v2674
        %v2710 = vsel %vm1228, %v2692, %v2676
        %v2711 = vsel %vm1228, %v2694, %v2678
        %v2712 = vsel %vm1228, %v2696, %v2680
        %v2713 = vsel %vm1249, %v2697, 0.0
        %v2714 = vsel %vm1250, %v2705, 0.0
        %v2715 = vsel %vm1249, %v2698, 0.0
        %v2716 = vsel %vm1250, %v2706, 0.0
        %v2717 = vsel %vm1249, %v2699, 0.0
        %v2718 = vsel %vm1250, %v2707, 0.0
        %v2719 = vsel %vm1249, %v2700, 0.0
        %v2720 = vsel %vm1250, %v2708, 0.0
        %v2721 = vsel %vm1249, %v2701, 0.0
        %v2722 = vsel %vm1250, %v2709, 0.0
        %v2723 = vsel %vm1249, %v2702, 0.0
        %v2724 = vsel %vm1250, %v2710, 0.0
        %v2725 = vsel %vm1249, %v2703, 0.0
        %v2726 = vsel %vm1250, %v2711, 0.0
        %v2727 = vsel %vm1249, %v2704, 0.0
        %v2728 = vsel %vm1250, %v2712, 0.0
        %s2729 = scalar_lea.vmem [#allocation2], 160
        %v2730 = vld [vmem:[%s2729] sm:$0xff]
        %v2731 = vld [vmem:[%s2729 + $0x8] sm:$0xff]
        %v2732 = vld [vmem:[%s2729 + $0x10] sm:$0xff]
        %v2733 = vld [vmem:[%s2729 + $0x18] sm:$0xff]
        %v2735 = vsel %vm1523, %v2730, 0
        %v2738 = vsel %vm1523, %v2731, 0
        %v2741 = vsel %vm1523, %v2732, 0
        %v2744 = vsel %vm1523, %v2733, 0
        %2746 = vmatprep.subr.mxu0 %v2714
        %2747 = vmatpush1.msra.mxu0 %v2713
        %2748 = vmatprep.subr.mxu0 %v2716
        %2749 = vmatpush1.msra.mxu0 %v2715
        %2750 = vmatprep.subr.mxu0 %v2718
        %2751 = vmatpush1.msra.mxu0 %v2717
        %2752 = vmatprep.subr.mxu0 %v2720
        %2753 = vmatpush1.msra.mxu0 %v2719
        %2754 = vmatprep.subr.mxu0 0.0
        %2755 = vmatpush1.msra.mxu0 0.0
        %2756 = vmatprep.subr.mxu0 0.0
        %2757 = vmatpush1.msra.mxu0 0.0
        %2758 = vmatprep.subr.mxu0 0.0
        %2759 = vmatpush1.msra.mxu0 0.0
        %2760 = vmatprep.subr.mxu0 0.0
        %2761 = vmatpush1.msra.mxu0 0.0
        %2762 = vmatprep.subr.mxu0 0.0
        %2763 = vmatpush1.msra.mxu0 0.0
        %2764 = vmatprep.subr.mxu0 0.0
        %2765 = vmatpush1.msra.mxu0 0.0
        %2766 = vmatprep.subr.mxu0 0.0
        %2767 = vmatpush1.msra.mxu0 0.0
        %2768 = vmatprep.subr.mxu0 0.0
        %2769 = vmatpush1.msra.mxu0 0.0
        %2770 = vmatprep.subr.mxu0 0.0
        %2771 = vmatpush1.msra.mxu0 0.0
        %2772 = vmatprep.subr.mxu0 0.0
        %2773 = vmatpush1.msra.mxu0 0.0
        %2774 = vmatprep.subr.mxu0 0.0
        %2775 = vmatpush1.msra.mxu0 0.0
        %2776 = vmatprep.subr.mxu0 0.0
        %2777 = vmatpush1.msra.mxu0 0.0
        %2778 = vmatprep.subr.mxu0 0.0
        %2779 = vmatpush1.msra.mxu0 0.0
        %2780 = vmatprep.subr.mxu0 0.0
        %2781 = vmatpush1.msra.mxu0 0.0
        %2782 = vmatprep.subr.mxu0 0.0
        %2783 = vmatpush1.msra.mxu0 0.0
        %2784 = vmatprep.subr.mxu0 0.0
        %2785 = vmatpush1.msra.mxu0 0.0
        %2786 = vmatprep.subr.mxu0 0.0
        %2787 = vmatpush1.msra.mxu0 0.0
        %2788 = vmatprep.subr.mxu0 0.0
        %2789 = vmatpush1.msra.mxu0 0.0
        %2790 = vmatprep.subr.mxu0 0.0
        %2791 = vmatpush1.msra.mxu0 0.0
        %2792 = vmatprep.subr.mxu0 0.0
        %2793 = vmatpush1.msra.mxu0 0.0
        %2794 = vmatprep.subr.mxu0 0.0
        %2795 = vmatpush1.msra.mxu0 0.0
        %2796 = vmatprep.subr.mxu0 0.0
        %2797 = vmatpush1.msra.mxu0 0.0
        %2798 = vmatprep.subr.mxu0 0.0
        %2799 = vmatpush1.msra.mxu0 0.0
        %2800 = vmatprep.subr.mxu0 0.0
        %2801 = vmatpush1.msra.mxu0 0.0
        %2802 = vmatprep.subr.mxu0 0.0
        %2803 = vmatpush1.msra.mxu0 0.0
        %2804 = vmatprep.subr.mxu0 0.0
        %2805 = vmatpush1.msra.mxu0 0.0
        %2806 = vmatprep.subr.mxu0 0.0
        %2807 = vmatpush1.msra.mxu0 0.0
        %2808 = vmatprep.subr.mxu0 0.0
        %2809 = vmatpush1.msra.mxu0 0.0
        %2810 = vmatprep.mubr.f32.mxu0 0.0
        %2811 = vmatmul.mubr.f32.gmra.mrb[0].mxu0 %v2735
        %v2812 = vpop.f32.mrb[0].mxu0
        %v2813 = vadd.f32 0.0, %v2812
        %v2814 = vpop.f32.mrb[0].mxu0
        %v2815 = vadd.f32 0.0, %v2814
        %2816 = vmatprep.mubr.f32.mxu0 0.0
        %2817 = vmatmul.mubr.f32.gmra.mrb[0].mxu0 %v2738
        %v2818 = vpop.f32.mrb[0].mxu0
        %v2819 = vadd.f32 0.0, %v2818
        %v2820 = vpop.f32.mrb[0].mxu0
        %v2821 = vadd.f32 0.0, %v2820
        %2822 = vmatprep.mubr.f32.mxu0 0.0
        %2823 = vmatmul.mubr.f32.gmra.mrb[0].mxu0 %v2741
        %v2824 = vpop.f32.mrb[0].mxu0
        %v2825 = vadd.f32 0.0, %v2824
        %v2826 = vpop.f32.mrb[0].mxu0
        %v2827 = vadd.f32 0.0, %v2826
        %2828 = vmatprep.mubr.f32.mxu0 0.0
        %2829 = vmatmul.mubr.f32.gmra.mrb[0].mxu0 %v2744
        %v2830 = vpop.f32.mrb[0].mxu0
        %v2831 = vadd.f32 0.0, %v2830
        %v2832 = vpop.f32.mrb[0].mxu0
        %v2833 = vadd.f32 0.0, %v2832
        %2834 = vdwg.mxu0
        %v2835 = vadd.f32 %v2560, %v2813
        %v2836 = vadd.f32 %v2561, %v2815
        %v2837 = vadd.f32 %v2562, %v2819
        %v2838 = vadd.f32 %v2563, %v2821
        %v2839 = vadd.f32 %v2564, %v2825
        %v2840 = vadd.f32 %v2565, %v2827
        %v2841 = vadd.f32 %v2566, %v2831
        %v2842 = vadd.f32 %v2567, %v2833
        %2843 = vmatprep.subr.mxu0 %v2722
        %2844 = vmatpush1.msra.mxu0 %v2721
        %2845 = vmatprep.subr.mxu0 %v2724
        %2846 = vmatpush1.msra.mxu0 %v2723
        %2847 = vmatprep.subr.mxu0 %v2726
        %2848 = vmatpush1.msra.mxu0 %v2725
        %2849 = vmatprep.subr.mxu0 %v2728
        %2850 = vmatpush1.msra.mxu0 %v2727
        %2851 = vmatprep.subr.mxu0 0.0
        %2852 = vmatpush1.msra.mxu0 0.0
        %2853 = vmatprep.subr.mxu0 0.0
        %2854 = vmatpush1.msra.mxu0 0.0
        %2855 = vmatprep.subr.mxu0 0.0
        %2856 = vmatpush1.msra.mxu0 0.0
        %2857 = vmatprep.subr.mxu0 0.0
        %2858 = vmatpush1.msra.mxu0 0.0
        %2859 = vmatprep.subr.mxu0 0.0
        %2860 = vmatpush1.msra.mxu0 0.0
        %2861 = vmatprep.subr.mxu0 0.0
        %2862 = vmatpush1.msra.mxu0 0.0
        %2863 = vmatprep.subr.mxu0 0.0
        %2864 = vmatpush1.msra.mxu0 0.0
        %2865 = vmatprep.subr.mxu0 0.0
        %2866 = vmatpush1.msra.mxu0 0.0
        %2867 = vmatprep.subr.mxu0 0.0
        %2868 = vmatpush1.msra.mxu0 0.0
        %2869 = vmatprep.subr.mxu0 0.0
        %2870 = vmatpush1.msra.mxu0 0.0
        %2871 = vmatprep.subr.mxu0 0.0
        %2872 = vmatpush1.msra.mxu0 0.0
        %2873 = vmatprep.subr.mxu0 0.0
        %2874 = vmatpush1.msra.mxu0 0.0
        %2875 = vmatprep.subr.mxu0 0.0
        %2876 = vmatpush1.msra.mxu0 0.0
        %2877 = vmatprep.subr.mxu0 0.0
        %2878 = vmatpush1.msra.mxu0 0.0
        %2879 = vmatprep.subr.mxu0 0.0
        %2880 = vmatpush1.msra.mxu0 0.0
        %2881 = vmatprep.subr.mxu0 0.0
        %2882 = vmatpush1.msra.mxu0 0.0
        %2883 = vmatprep.subr.mxu0 0.0
        %2884 = vmatpush1.msra.mxu0 0.0
        %2885 = vmatprep.subr.mxu0 0.0
        %2886 = vmatpush1.msra.mxu0 0.0
        %2887 = vmatprep.subr.mxu0 0.0
        %2888 = vmatpush1.msra.mxu0 0.0
        %2889 = vmatprep.subr.mxu0 0.0
        %2890 = vmatpush1.msra.mxu0 0.0
        %2891 = vmatprep.subr.mxu0 0.0
        %2892 = vmatpush1.msra.mxu0 0.0
        %2893 = vmatprep.subr.mxu0 0.0
        %2894 = vmatpush1.msra.mxu0 0.0
        %2895 = vmatprep.subr.mxu0 0.0
        %2896 = vmatpush1.msra.mxu0 0.0
        %2897 = vmatprep.subr.mxu0 0.0
        %2898 = vmatpush1.msra.mxu0 0.0
        %2899 = vmatprep.subr.mxu0 0.0
        %2900 = vmatpush1.msra.mxu0 0.0
        %2901 = vmatprep.subr.mxu0 0.0
        %2902 = vmatpush1.msra.mxu0 0.0
        %2903 = vmatprep.subr.mxu0 0.0
        %2904 = vmatpush1.msra.mxu0 0.0
        %2905 = vmatprep.subr.mxu0 0.0
        %2906 = vmatpush1.msra.mxu0 0.0
        %2907 = vmatprep.mubr.f32.mxu0 0.0
        %2908 = vmatmul.mubr.f32.gmra.mrb[0].mxu0 %v2735
        %v2909 = vpop.f32.mrb[0].mxu0
        %v2910 = vadd.f32 0.0, %v2909
        %v2911 = vpop.f32.mrb[0].mxu0
        %v2912 = vadd.f32 0.0, %v2911
        %2913 = vmatprep.mubr.f32.mxu0 0.0
        %2914 = vmatmul.mubr.f32.gmra.mrb[0].mxu0 %v2738
        %v2915 = vpop.f32.mrb[0].mxu0
        %v2916 = vadd.f32 0.0, %v2915
        %v2917 = vpop.f32.mrb[0].mxu0
        %v2918 = vadd.f32 0.0, %v2917
        %2919 = vmatprep.mubr.f32.mxu0 0.0
        %2920 = vmatmul.mubr.f32.gmra.mrb[0].mxu0 %v2741
        %v2921 = vpop.f32.mrb[0].mxu0
        %v2922 = vadd.f32 0.0, %v2921
        %v2923 = vpop.f32.mrb[0].mxu0
        %v2924 = vadd.f32 0.0, %v2923
        %2925 = vmatprep.mubr.f32.mxu0 0.0
        %2926 = vmatmul.mubr.f32.gmra.mrb[0].mxu0 %v2744
        %v2927 = vpop.f32.mrb[0].mxu0
        %v2928 = vadd.f32 0.0, %v2927
        %v2929 = vpop.f32.mrb[0].mxu0
        %v2930 = vadd.f32 0.0, %v2929
        %2931 = vdwg.mxu0
        %v2932 = vadd.f32 %v2657, %v2910
        %v2933 = vadd.f32 %v2658, %v2912
        %v2934 = vadd.f32 %v2659, %v2916
        %v2935 = vadd.f32 %v2660, %v2918
        %v2936 = vadd.f32 %v2661, %v2922
        %v2937 = vadd.f32 %v2662, %v2924
        %v2938 = vadd.f32 %v2663, %v2928
        %v2939 = vadd.f32 %v2664, %v2930
        %2940 = vrot.lane.b32.xlu0 %v1370, 112
        %v2941 = vpop.permute.xlu0 %2940
        %2942 = vrot.lane.b32.xlu0 %v1372, 112
        %v2943 = vpop.permute.xlu0 %2942
        %2944 = vrot.lane.b32.xlu0 %v1374, 112
        %v2945 = vpop.permute.xlu0 %2944
        %2946 = vrot.lane.b32.xlu0 %v1376, 112
        %v2947 = vpop.permute.xlu0 %2946
        %2948 = vrot.lane.b32.xlu0 %v1378, 112
        %v2949 = vpop.permute.xlu0 %2948
        %2950 = vrot.lane.b32.xlu0 %v1380, 112
        %v2951 = vpop.permute.xlu0 %2950
        %2952 = vrot.lane.b32.xlu0 %v1382, 112
        %v2953 = vpop.permute.xlu0 %2952
        %2954 = vrot.lane.b32.xlu0 %v1384, 112
        %v2955 = vpop.permute.xlu0 %2954
        %2956 = vrot.lane.b32.xlu0 %v1371, 112
        %v2957 = vpop.permute.xlu0 %2956
        %2958 = vrot.lane.b32.xlu0 %v1373, 112
        %v2959 = vpop.permute.xlu0 %2958
        %2960 = vrot.lane.b32.xlu0 %v1375, 112
        %v2961 = vpop.permute.xlu0 %2960
        %2962 = vrot.lane.b32.xlu0 %v1377, 112
        %v2963 = vpop.permute.xlu0 %2962
        %2964 = vrot.lane.b32.xlu0 %v1379, 112
        %v2965 = vpop.permute.xlu0 %2964
        %2966 = vrot.lane.b32.xlu0 %v1381, 112
        %v2967 = vpop.permute.xlu0 %2966
        %2968 = vrot.lane.b32.xlu0 %v1383, 112
        %v2969 = vpop.permute.xlu0 %2968
        %2970 = vrot.lane.b32.xlu0 %v1385, 112
        %v2971 = vpop.permute.xlu0 %2970
        %v2972 = vsel %vm880, %v2941, %v2957
        %v2973 = vsel %vm880, %v2943, %v2959
        %v2974 = vsel %vm880, %v2945, %v2961
        %v2975 = vsel %vm880, %v2947, %v2963
        %v2976 = vsel %vm880, %v2949, %v2965
        %v2977 = vsel %vm880, %v2951, %v2967
        %v2978 = vsel %vm880, %v2953, %v2969
        %v2979 = vsel %vm880, %v2955, %v2971
        %v2980 = vsel %vm880, %v2957, %v2941
        %v2981 = vsel %vm880, %v2959, %v2943
        %v2982 = vsel %vm880, %v2961, %v2945
        %v2983 = vsel %vm880, %v2963, %v2947
        %v2984 = vsel %vm880, %v2965, %v2949
        %v2985 = vsel %vm880, %v2967, %v2951
        %v2986 = vsel %vm880, %v2969, %v2953
        %v2987 = vsel %vm880, %v2971, %v2955
        %v2988 = vsel %vm901, %v2972, 0.0
        %v2989 = vsel %vm902, %v2980, 0.0
        %v2990 = vsel %vm901, %v2973, 0.0
        %v2991 = vsel %vm902, %v2981, 0.0
        %v2992 = vsel %vm901, %v2974, 0.0
        %v2993 = vsel %vm902, %v2982, 0.0
        %v2994 = vsel %vm901, %v2975, 0.0
        %v2995 = vsel %vm902, %v2983, 0.0
        %v2996 = vsel %vm901, %v2976, 0.0
        %v2997 = vsel %vm902, %v2984, 0.0
        %v2998 = vsel %vm901, %v2977, 0.0
        %v2999 = vsel %vm902, %v2985, 0.0
        %v3000 = vsel %vm901, %v2978, 0.0
        %v3001 = vsel %vm902, %v2986, 0.0
        %v3002 = vsel %vm901, %v2979, 0.0
        %v3003 = vsel %vm902, %v2987, 0.0
        %3004 = vrot.lane.b32.xlu0 %v2988, 1
        %v3005 = vpop.permute.xlu0 %3004
        %3006 = vrot.lane.b32.xlu0 %v2990, 1
        %v3007 = vpop.permute.xlu0 %3006
        %3008 = vrot.lane.b32.xlu0 %v2992, 1
        %v3009 = vpop.permute.xlu0 %3008
        %3010 = vrot.lane.b32.xlu0 %v2994, 1
        %v3011 = vpop.permute.xlu0 %3010
        %3012 = vrot.lane.b32.xlu0 %v2996, 1
        %v3013 = vpop.permute.xlu0 %3012
        %3014 = vrot.lane.b32.xlu0 %v2998, 1
        %v3015 = vpop.permute.xlu0 %3014
        %3016 = vrot.lane.b32.xlu0 %v3000, 1
        %v3017 = vpop.permute.xlu0 %3016
        %3018 = vrot.lane.b32.xlu0 %v3002, 1
        %v3019 = vpop.permute.xlu0 %3018
        %3020 = vrot.lane.b32.xlu0 %v2989, 1
        %v3021 = vpop.permute.xlu0 %3020
        %3022 = vrot.lane.b32.xlu0 %v2991, 1
        %v3023 = vpop.permute.xlu0 %3022
        %3024 = vrot.lane.b32.xlu0 %v2993, 1
        %v3025 = vpop.permute.xlu0 %3024
        %3026 = vrot.lane.b32.xlu0 %v2995, 1
        %v3027 = vpop.permute.xlu0 %3026
        %3028 = vrot.lane.b32.xlu0 %v2997, 1
        %v3029 = vpop.permute.xlu0 %3028
        %3030 = vrot.lane.b32.xlu0 %v2999, 1
        %v3031 = vpop.permute.xlu0 %3030
        %3032 = vrot.lane.b32.xlu0 %v3001, 1
        %v3033 = vpop.permute.xlu0 %3032
        %3034 = vrot.lane.b32.xlu0 %v3003, 1
        %v3035 = vpop.permute.xlu0 %3034
        %v3036 = vsel %vm1141, %v3005, %v3021
        %v3037 = vsel %vm1141, %v3007, %v3023
        %v3038 = vsel %vm1141, %v3009, %v3025
        %v3039 = vsel %vm1141, %v3011, %v3027
        %v3040 = vsel %vm1141, %v3013, %v3029
        %v3041 = vsel %vm1141, %v3015, %v3031
        %v3042 = vsel %vm1141, %v3017, %v3033
        %v3043 = vsel %vm1141, %v3019, %v3035
        %v3044 = vsel %vm1141, %v3021, %v3005
        %v3045 = vsel %vm1141, %v3023, %v3007
        %v3046 = vsel %vm1141, %v3025, %v3009
        %v3047 = vsel %vm1141, %v3027, %v3011
        %v3048 = vsel %vm1141, %v3029, %v3013
        %v3049 = vsel %vm1141, %v3031, %v3015
        %v3050 = vsel %vm1141, %v3033, %v3017
        %v3051 = vsel %vm1141, %v3035, %v3019
        %v3052 = vsel %vm1162, %v3044, 0.0
        %v3053 = vsel %vm1163, %v3036, 0.0
        %v3054 = vsel %vm1162, %v3045, 0.0
        %v3055 = vsel %vm1163, %v3037, 0.0
        %v3056 = vsel %vm1162, %v3046, 0.0
        %v3057 = vsel %vm1163, %v3038, 0.0
        %v3058 = vsel %vm1162, %v3047, 0.0
        %v3059 = vsel %vm1163, %v3039, 0.0
        %v3060 = vsel %vm1162, %v3048, 0.0
        %v3061 = vsel %vm1163, %v3040, 0.0
        %v3062 = vsel %vm1162, %v3049, 0.0
        %v3063 = vsel %vm1163, %v3041, 0.0
        %v3064 = vsel %vm1162, %v3050, 0.0
        %v3065 = vsel %vm1163, %v3042, 0.0
        %v3066 = vsel %vm1162, %v3051, 0.0
        %v3067 = vsel %vm1163, %v3043, 0.0
        %s3068 = scalar_lea.vmem [#allocation2], 192
        %v3069 = vld [vmem:[%s3068] sm:$0xff]
        %v3070 = vld [vmem:[%s3068 + $0x8] sm:$0xff]
        %v3071 = vld [vmem:[%s3068 + $0x10] sm:$0xff]
        %v3072 = vld [vmem:[%s3068 + $0x18] sm:$0xff]
        %v3074 = vsel %vm1523, %v3069, 0
        %v3077 = vsel %vm1523, %v3070, 0
        %v3080 = vsel %vm1523, %v3071, 0
        %v3083 = vsel %vm1523, %v3072, 0
        %3085 = vmatprep.subr.mxu0 %v3053
        %3086 = vmatpush1.msra.mxu0 %v3052
        %3087 = vmatprep.subr.mxu0 %v3055
        %3088 = vmatpush1.msra.mxu0 %v3054
        %3089 = vmatprep.subr.mxu0 %v3057
        %3090 = vmatpush1.msra.mxu0 %v3056
        %3091 = vmatprep.subr.mxu0 %v3059
        %3092 = vmatpush1.msra.mxu0 %v3058
        %3093 = vmatprep.subr.mxu0 0.0
        %3094 = vmatpush1.msra.mxu0 0.0
        %3095 = vmatprep.subr.mxu0 0.0
        %3096 = vmatpush1.msra.mxu0 0.0
        %3097 = vmatprep.subr.mxu0 0.0
        %3098 = vmatpush1.msra.mxu0 0.0
        %3099 = vmatprep.subr.mxu0 0.0
        %3100 = vmatpush1.msra.mxu0 0.0
        %3101 = vmatprep.subr.mxu0 0.0
        %3102 = vmatpush1.msra.mxu0 0.0
        %3103 = vmatprep.subr.mxu0 0.0
        %3104 = vmatpush1.msra.mxu0 0.0
        %3105 = vmatprep.subr.mxu0 0.0
        %3106 = vmatpush1.msra.mxu0 0.0
        %3107 = vmatprep.subr.mxu0 0.0
        %3108 = vmatpush1.msra.mxu0 0.0
        %3109 = vmatprep.subr.mxu0 0.0
        %3110 = vmatpush1.msra.mxu0 0.0
        %3111 = vmatprep.subr.mxu0 0.0
        %3112 = vmatpush1.msra.mxu0 0.0
        %3113 = vmatprep.subr.mxu0 0.0
        %3114 = vmatpush1.msra.mxu0 0.0
        %3115 = vmatprep.subr.mxu0 0.0
        %3116 = vmatpush1.msra.mxu0 0.0
        %3117 = vmatprep.subr.mxu0 0.0
        %3118 = vmatpush1.msra.mxu0 0.0
        %3119 = vmatprep.subr.mxu0 0.0
        %3120 = vmatpush1.msra.mxu0 0.0
        %3121 = vmatprep.subr.mxu0 0.0
        %3122 = vmatpush1.msra.mxu0 0.0
        %3123 = vmatprep.subr.mxu0 0.0
        %3124 = vmatpush1.msra.mxu0 0.0
        %3125 = vmatprep.subr.mxu0 0.0
        %3126 = vmatpush1.msra.mxu0 0.0
        %3127 = vmatprep.subr.mxu0 0.0
        %3128 = vmatpush1.msra.mxu0 0.0
        %3129 = vmatprep.subr.mxu0 0.0
        %3130 = vmatpush1.msra.mxu0 0.0
        %3131 = vmatprep.subr.mxu0 0.0
        %3132 = vmatpush1.msra.mxu0 0.0
        %3133 = vmatprep.subr.mxu0 0.0
        %3134 = vmatpush1.msra.mxu0 0.0
        %3135 = vmatprep.subr.mxu0 0.0
        %3136 = vmatpush1.msra.mxu0 0.0
        %3137 = vmatprep.subr.mxu0 0.0
        %3138 = vmatpush1.msra.mxu0 0.0
        %3139 = vmatprep.subr.mxu0 0.0
        %3140 = vmatpush1.msra.mxu0 0.0
        %3141 = vmatprep.subr.mxu0 0.0
        %3142 = vmatpush1.msra.mxu0 0.0
        %3143 = vmatprep.subr.mxu0 0.0
        %3144 = vmatpush1.msra.mxu0 0.0
        %3145 = vmatprep.subr.mxu0 0.0
        %3146 = vmatpush1.msra.mxu0 0.0
        %3147 = vmatprep.subr.mxu0 0.0
        %3148 = vmatpush1.msra.mxu0 0.0
        %3149 = vmatprep.mubr.f32.mxu0 0.0
        %3150 = vmatmul.mubr.f32.gmra.mrb[0].mxu0 %v3074
        %v3151 = vpop.f32.mrb[0].mxu0
        %v3152 = vadd.f32 0.0, %v3151
        %v3153 = vpop.f32.mrb[0].mxu0
        %v3154 = vadd.f32 0.0, %v3153
        %3155 = vmatprep.mubr.f32.mxu0 0.0
        %3156 = vmatmul.mubr.f32.gmra.mrb[0].mxu0 %v3077
        %v3157 = vpop.f32.mrb[0].mxu0
        %v3158 = vadd.f32 0.0, %v3157
        %v3159 = vpop.f32.mrb[0].mxu0
        %v3160 = vadd.f32 0.0, %v3159
        %3161 = vmatprep.mubr.f32.mxu0 0.0
        %3162 = vmatmul.mubr.f32.gmra.mrb[0].mxu0 %v3080
        %v3163 = vpop.f32.mrb[0].mxu0
        %v3164 = vadd.f32 0.0, %v3163
        %v3165 = vpop.f32.mrb[0].mxu0
        %v3166 = vadd.f32 0.0, %v3165
        %3167 = vmatprep.mubr.f32.mxu0 0.0
        %3168 = vmatmul.mubr.f32.gmra.mrb[0].mxu0 %v3083
        %v3169 = vpop.f32.mrb[0].mxu0
        %v3170 = vadd.f32 0.0, %v3169
        %v3171 = vpop.f32.mrb[0].mxu0
        %v3172 = vadd.f32 0.0, %v3171
        %3173 = vdwg.mxu0
        %v3174 = vadd.f32 %v2835, %v3152
        %v3175 = vadd.f32 %v2836, %v3154
        %v3176 = vadd.f32 %v2837, %v3158
        %v3177 = vadd.f32 %v2838, %v3160
        %v3178 = vadd.f32 %v2839, %v3164
        %v3179 = vadd.f32 %v2840, %v3166
        %v3180 = vadd.f32 %v2841, %v3170
        %v3181 = vadd.f32 %v2842, %v3172
        %3182 = vmatprep.subr.mxu0 %v3061
        %3183 = vmatpush1.msra.mxu0 %v3060
        %3184 = vmatprep.subr.mxu0 %v3063
        %3185 = vmatpush1.msra.mxu0 %v3062
        %3186 = vmatprep.subr.mxu0 %v3065
        %3187 = vmatpush1.msra.mxu0 %v3064
        %3188 = vmatprep.subr.mxu0 %v3067
        %3189 = vmatpush1.msra.mxu0 %v3066
        %3190 = vmatprep.subr.mxu0 0.0
        %3191 = vmatpush1.msra.mxu0 0.0
        %3192 = vmatprep.subr.mxu0 0.0
        %3193 = vmatpush1.msra.mxu0 0.0
        %3194 = vmatprep.subr.mxu0 0.0
        %3195 = vmatpush1.msra.mxu0 0.0
        %3196 = vmatprep.subr.mxu0 0.0
        %3197 = vmatpush1.msra.mxu0 0.0
        %3198 = vmatprep.subr.mxu0 0.0
        %3199 = vmatpush1.msra.mxu0 0.0
        %3200 = vmatprep.subr.mxu0 0.0
        %3201 = vmatpush1.msra.mxu0 0.0
        %3202 = vmatprep.subr.mxu0 0.0
        %3203 = vmatpush1.msra.mxu0 0.0
        %3204 = vmatprep.subr.mxu0 0.0
        %3205 = vmatpush1.msra.mxu0 0.0
        %3206 = vmatprep.subr.mxu0 0.0
        %3207 = vmatpush1.msra.mxu0 0.0
        %3208 = vmatprep.subr.mxu0 0.0
        %3209 = vmatpush1.msra.mxu0 0.0
        %3210 = vmatprep.subr.mxu0 0.0
        %3211 = vmatpush1.msra.mxu0 0.0
        %3212 = vmatprep.subr.mxu0 0.0
        %3213 = vmatpush1.msra.mxu0 0.0
        %3214 = vmatprep.subr.mxu0 0.0
        %3215 = vmatpush1.msra.mxu0 0.0
        %3216 = vmatprep.subr.mxu0 0.0
        %3217 = vmatpush1.msra.mxu0 0.0
        %3218 = vmatprep.subr.mxu0 0.0
        %3219 = vmatpush1.msra.mxu0 0.0
        %3220 = vmatprep.subr.mxu0 0.0
        %3221 = vmatpush1.msra.mxu0 0.0
        %3222 = vmatprep.subr.mxu0 0.0
        %3223 = vmatpush1.msra.mxu0 0.0
        %3224 = vmatprep.subr.mxu0 0.0
        %3225 = vmatpush1.msra.mxu0 0.0
        %3226 = vmatprep.subr.mxu0 0.0
        %3227 = vmatpush1.msra.mxu0 0.0
        %3228 = vmatprep.subr.mxu0 0.0
        %3229 = vmatpush1.msra.mxu0 0.0
        %3230 = vmatprep.subr.mxu0 0.0
        %3231 = vmatpush1.msra.mxu0 0.0
        %3232 = vmatprep.subr.mxu0 0.0
        %3233 = vmatpush1.msra.mxu0 0.0
        %3234 = vmatprep.subr.mxu0 0.0
        %3235 = vmatpush1.msra.mxu0 0.0
        %3236 = vmatprep.subr.mxu0 0.0
        %3237 = vmatpush1.msra.mxu0 0.0
        %3238 = vmatprep.subr.mxu0 0.0
        %3239 = vmatpush1.msra.mxu0 0.0
        %3240 = vmatprep.subr.mxu0 0.0
        %3241 = vmatpush1.msra.mxu0 0.0
        %3242 = vmatprep.subr.mxu0 0.0
        %3243 = vmatpush1.msra.mxu0 0.0
        %3244 = vmatprep.subr.mxu0 0.0
        %3245 = vmatpush1.msra.mxu0 0.0
        %3246 = vmatprep.mubr.f32.mxu0 0.0
        %3247 = vmatmul.mubr.f32.gmra.mrb[0].mxu0 %v3074
        %v3248 = vpop.f32.mrb[0].mxu0
        %v3249 = vadd.f32 0.0, %v3248
        %v3250 = vpop.f32.mrb[0].mxu0
        %v3251 = vadd.f32 0.0, %v3250
        %3252 = vmatprep.mubr.f32.mxu0 0.0
        %3253 = vmatmul.mubr.f32.gmra.mrb[0].mxu0 %v3077
        %v3254 = vpop.f32.mrb[0].mxu0
        %v3255 = vadd.f32 0.0, %v3254
        %v3256 = vpop.f32.mrb[0].mxu0
        %v3257 = vadd.f32 0.0, %v3256
        %3258 = vmatprep.mubr.f32.mxu0 0.0
        %3259 = vmatmul.mubr.f32.gmra.mrb[0].mxu0 %v3080
        %v3260 = vpop.f32.mrb[0].mxu0
        %v3261 = vadd.f32 0.0, %v3260
        %v3262 = vpop.f32.mrb[0].mxu0
        %v3263 = vadd.f32 0.0, %v3262
        %3264 = vmatprep.mubr.f32.mxu0 0.0
        %3265 = vmatmul.mubr.f32.gmra.mrb[0].mxu0 %v3083
        %v3266 = vpop.f32.mrb[0].mxu0
        %v3267 = vadd.f32 0.0, %v3266
        %v3268 = vpop.f32.mrb[0].mxu0
        %v3269 = vadd.f32 0.0, %v3268
        %3270 = vdwg.mxu0
        %v3271 = vadd.f32 %v2932, %v3249
        %v3272 = vadd.f32 %v2933, %v3251
        %v3273 = vadd.f32 %v2934, %v3255
        %v3274 = vadd.f32 %v2935, %v3257
        %v3275 = vadd.f32 %v2936, %v3261
        %v3276 = vadd.f32 %v2937, %v3263
        %v3277 = vadd.f32 %v2938, %v3267
        %v3278 = vadd.f32 %v2939, %v3269
        %s3279 = scalar_lea.vmem [#allocation2], 224
        %v3280 = vld [vmem:[%s3279] sm:$0xff]
        %v3281 = vld [vmem:[%s3279 + $0x8] sm:$0xff]
        %v3282 = vld [vmem:[%s3279 + $0x10] sm:$0xff]
        %v3283 = vld [vmem:[%s3279 + $0x18] sm:$0xff]
        %v3285 = vsel %vm1523, %v3280, 0
        %v3288 = vsel %vm1523, %v3281, 0
        %v3291 = vsel %vm1523, %v3282, 0
        %v3294 = vsel %vm1523, %v3283, 0
        %3296 = vmatprep.subr.mxu0 %v2989
        %3297 = vmatpush1.msra.mxu0 %v2988
        %3298 = vmatprep.subr.mxu0 %v2991
        %3299 = vmatpush1.msra.mxu0 %v2990
        %3300 = vmatprep.subr.mxu0 %v2993
        %3301 = vmatpush1.msra.mxu0 %v2992
        %3302 = vmatprep.subr.mxu0 %v2995
        %3303 = vmatpush1.msra.mxu0 %v2994
        %3304 = vmatprep.subr.mxu0 0.0
        %3305 = vmatpush1.msra.mxu0 0.0
        %3306 = vmatprep.subr.mxu0 0.0
        %3307 = vmatpush1.msra.mxu0 0.0
        %3308 = vmatprep.subr.mxu0 0.0
        %3309 = vmatpush1.msra.mxu0 0.0
        %3310 = vmatprep.subr.mxu0 0.0
        %3311 = vmatpush1.msra.mxu0 0.0
        %3312 = vmatprep.subr.mxu0 0.0
        %3313 = vmatpush1.msra.mxu0 0.0
        %3314 = vmatprep.subr.mxu0 0.0
        %3315 = vmatpush1.msra.mxu0 0.0
        %3316 = vmatprep.subr.mxu0 0.0
        %3317 = vmatpush1.msra.mxu0 0.0
        %3318 = vmatprep.subr.mxu0 0.0
        %3319 = vmatpush1.msra.mxu0 0.0
        %3320 = vmatprep.subr.mxu0 0.0
        %3321 = vmatpush1.msra.mxu0 0.0
        %3322 = vmatprep.subr.mxu0 0.0
        %3323 = vmatpush1.msra.mxu0 0.0
        %3324 = vmatprep.subr.mxu0 0.0
        %3325 = vmatpush1.msra.mxu0 0.0
        %3326 = vmatprep.subr.mxu0 0.0
        %3327 = vmatpush1.msra.mxu0 0.0
        %3328 = vmatprep.subr.mxu0 0.0
        %3329 = vmatpush1.msra.mxu0 0.0
        %3330 = vmatprep.subr.mxu0 0.0
        %3331 = vmatpush1.msra.mxu0 0.0
        %3332 = vmatprep.subr.mxu0 0.0
        %3333 = vmatpush1.msra.mxu0 0.0
        %3334 = vmatprep.subr.mxu0 0.0
        %3335 = vmatpush1.msra.mxu0 0.0
        %3336 = vmatprep.subr.mxu0 0.0
        %3337 = vmatpush1.msra.mxu0 0.0
        %3338 = vmatprep.subr.mxu0 0.0
        %3339 = vmatpush1.msra.mxu0 0.0
        %3340 = vmatprep.subr.mxu0 0.0
        %3341 = vmatpush1.msra.mxu0 0.0
        %3342 = vmatprep.subr.mxu0 0.0
        %3343 = vmatpush1.msra.mxu0 0.0
        %3344 = vmatprep.subr.mxu0 0.0
        %3345 = vmatpush1.msra.mxu0 0.0
        %3346 = vmatprep.subr.mxu0 0.0
        %3347 = vmatpush1.msra.mxu0 0.0
        %3348 = vmatprep.subr.mxu0 0.0
        %3349 = vmatpush1.msra.mxu0 0.0
        %3350 = vmatprep.subr.mxu0 0.0
        %3351 = vmatpush1.msra.mxu0 0.0
        %3352 = vmatprep.subr.mxu0 0.0
        %3353 = vmatpush1.msra.mxu0 0.0
        %3354 = vmatprep.subr.mxu0 0.0
        %3355 = vmatpush1.msra.mxu0 0.0
        %3356 = vmatprep.subr.mxu0 0.0
        %3357 = vmatpush1.msra.mxu0 0.0
        %3358 = vmatprep.subr.mxu0 0.0
        %3359 = vmatpush1.msra.mxu0 0.0
        %3360 = vmatprep.mubr.f32.mxu0 0.0
        %3361 = vmatmul.mubr.f32.gmra.mrb[0].mxu0 %v3285
        %v3362 = vpop.f32.mrb[0].mxu0
        %v3363 = vadd.f32 0.0, %v3362
        %v3364 = vpop.f32.mrb[0].mxu0
        %v3365 = vadd.f32 0.0, %v3364
        %3366 = vmatprep.mubr.f32.mxu0 0.0
        %3367 = vmatmul.mubr.f32.gmra.mrb[0].mxu0 %v3288
        %v3368 = vpop.f32.mrb[0].mxu0
        %v3369 = vadd.f32 0.0, %v3368
        %v3370 = vpop.f32.mrb[0].mxu0
        %v3371 = vadd.f32 0.0, %v3370
        %3372 = vmatprep.mubr.f32.mxu0 0.0
        %3373 = vmatmul.mubr.f32.gmra.mrb[0].mxu0 %v3291
        %v3374 = vpop.f32.mrb[0].mxu0
        %v3375 = vadd.f32 0.0, %v3374
        %v3376 = vpop.f32.mrb[0].mxu0
        %v3377 = vadd.f32 0.0, %v3376
        %3378 = vmatprep.mubr.f32.mxu0 0.0
        %3379 = vmatmul.mubr.f32.gmra.mrb[0].mxu0 %v3294
        %v3380 = vpop.f32.mrb[0].mxu0
        %v3381 = vadd.f32 0.0, %v3380
        %v3382 = vpop.f32.mrb[0].mxu0
        %v3383 = vadd.f32 0.0, %v3382
        %3384 = vdwg.mxu0
        %v3385 = vadd.f32 %v3174, %v3363
        %v3386 = vadd.f32 %v3175, %v3365
        %v3387 = vadd.f32 %v3176, %v3369
        %v3388 = vadd.f32 %v3177, %v3371
        %v3389 = vadd.f32 %v3178, %v3375
        %v3390 = vadd.f32 %v3179, %v3377
        %v3391 = vadd.f32 %v3180, %v3381
        %v3392 = vadd.f32 %v3181, %v3383
        %3393 = vmatprep.subr.mxu0 %v2997
        %3394 = vmatpush1.msra.mxu0 %v2996
        %3395 = vmatprep.subr.mxu0 %v2999
        %3396 = vmatpush1.msra.mxu0 %v2998
        %3397 = vmatprep.subr.mxu0 %v3001
        %3398 = vmatpush1.msra.mxu0 %v3000
        %3399 = vmatprep.subr.mxu0 %v3003
        %3400 = vmatpush1.msra.mxu0 %v3002
        %3401 = vmatprep.subr.mxu0 0.0
        %3402 = vmatpush1.msra.mxu0 0.0
        %3403 = vmatprep.subr.mxu0 0.0
        %3404 = vmatpush1.msra.mxu0 0.0
        %3405 = vmatprep.subr.mxu0 0.0
        %3406 = vmatpush1.msra.mxu0 0.0
        %3407 = vmatprep.subr.mxu0 0.0
        %3408 = vmatpush1.msra.mxu0 0.0
        %3409 = vmatprep.subr.mxu0 0.0
        %3410 = vmatpush1.msra.mxu0 0.0
        %3411 = vmatprep.subr.mxu0 0.0
        %3412 = vmatpush1.msra.mxu0 0.0
        %3413 = vmatprep.subr.mxu0 0.0
        %3414 = vmatpush1.msra.mxu0 0.0
        %3415 = vmatprep.subr.mxu0 0.0
        %3416 = vmatpush1.msra.mxu0 0.0
        %3417 = vmatprep.subr.mxu0 0.0
        %3418 = vmatpush1.msra.mxu0 0.0
        %3419 = vmatprep.subr.mxu0 0.0
        %3420 = vmatpush1.msra.mxu0 0.0
        %3421 = vmatprep.subr.mxu0 0.0
        %3422 = vmatpush1.msra.mxu0 0.0
        %3423 = vmatprep.subr.mxu0 0.0
        %3424 = vmatpush1.msra.mxu0 0.0
        %3425 = vmatprep.subr.mxu0 0.0
        %3426 = vmatpush1.msra.mxu0 0.0
        %3427 = vmatprep.subr.mxu0 0.0
        %3428 = vmatpush1.msra.mxu0 0.0
        %3429 = vmatprep.subr.mxu0 0.0
        %3430 = vmatpush1.msra.mxu0 0.0
        %3431 = vmatprep.subr.mxu0 0.0
        %3432 = vmatpush1.msra.mxu0 0.0
        %3433 = vmatprep.subr.mxu0 0.0
        %3434 = vmatpush1.msra.mxu0 0.0
        %3435 = vmatprep.subr.mxu0 0.0
        %3436 = vmatpush1.msra.mxu0 0.0
        %3437 = vmatprep.subr.mxu0 0.0
        %3438 = vmatpush1.msra.mxu0 0.0
        %3439 = vmatprep.subr.mxu0 0.0
        %3440 = vmatpush1.msra.mxu0 0.0
        %3441 = vmatprep.subr.mxu0 0.0
        %3442 = vmatpush1.msra.mxu0 0.0
        %3443 = vmatprep.subr.mxu0 0.0
        %3444 = vmatpush1.msra.mxu0 0.0
        %3445 = vmatprep.subr.mxu0 0.0
        %3446 = vmatpush1.msra.mxu0 0.0
        %3447 = vmatprep.subr.mxu0 0.0
        %3448 = vmatpush1.msra.mxu0 0.0
        %3449 = vmatprep.subr.mxu0 0.0
        %3450 = vmatpush1.msra.mxu0 0.0
        %3451 = vmatprep.subr.mxu0 0.0
        %3452 = vmatpush1.msra.mxu0 0.0
        %3453 = vmatprep.subr.mxu0 0.0
        %3454 = vmatpush1.msra.mxu0 0.0
        %3455 = vmatprep.subr.mxu0 0.0
        %3456 = vmatpush1.msra.mxu0 0.0
        %3457 = vmatprep.mubr.f32.mxu0 0.0
        %3458 = vmatmul.mubr.f32.gmra.mrb[0].mxu0 %v3285
        %v3459 = vpop.f32.mrb[0].mxu0
        %v3460 = vadd.f32 0.0, %v3459
        %v3461 = vpop.f32.mrb[0].mxu0
        %v3462 = vadd.f32 0.0, %v3461
        %3463 = vmatprep.mubr.f32.mxu0 0.0
        %3464 = vmatmul.mubr.f32.gmra.mrb[0].mxu0 %v3288
        %v3465 = vpop.f32.mrb[0].mxu0
        %v3466 = vadd.f32 0.0, %v3465
        %v3467 = vpop.f32.mrb[0].mxu0
        %v3468 = vadd.f32 0.0, %v3467
        %3469 = vmatprep.mubr.f32.mxu0 0.0
        %3470 = vmatmul.mubr.f32.gmra.mrb[0].mxu0 %v3291
        %v3471 = vpop.f32.mrb[0].mxu0
        %v3472 = vadd.f32 0.0, %v3471
        %v3473 = vpop.f32.mrb[0].mxu0
        %v3474 = vadd.f32 0.0, %v3473
        %3475 = vmatprep.mubr.f32.mxu0 0.0
        %3476 = vmatmul.mubr.f32.gmra.mrb[0].mxu0 %v3294
        %v3477 = vpop.f32.mrb[0].mxu0
        %v3478 = vadd.f32 0.0, %v3477
        %v3479 = vpop.f32.mrb[0].mxu0
        %v3480 = vadd.f32 0.0, %v3479
        %3481 = vdwg.mxu0
        %v3482 = vadd.f32 %v3271, %v3460
        %v3483 = vadd.f32 %v3272, %v3462
        %v3484 = vadd.f32 %v3273, %v3466
        %v3485 = vadd.f32 %v3274, %v3468
        %v3486 = vadd.f32 %v3275, %v3472
        %v3487 = vadd.f32 %v3276, %v3474
        %v3488 = vadd.f32 %v3277, %v3478
        %v3489 = vadd.f32 %v3278, %v3480
        %3490 = vrot.lane.b32.xlu0 %v2988, 127
        %v3491 = vpop.permute.xlu0 %3490
        %3492 = vrot.lane.b32.xlu0 %v2990, 127
        %v3493 = vpop.permute.xlu0 %3492
        %3494 = vrot.lane.b32.xlu0 %v2992, 127
        %v3495 = vpop.permute.xlu0 %3494
        %3496 = vrot.lane.b32.xlu0 %v2994, 127
        %v3497 = vpop.permute.xlu0 %3496
        %3498 = vrot.lane.b32.xlu0 %v2996, 127
        %v3499 = vpop.permute.xlu0 %3498
        %3500 = vrot.lane.b32.xlu0 %v2998, 127
        %v3501 = vpop.permute.xlu0 %3500
        %3502 = vrot.lane.b32.xlu0 %v3000, 127
        %v3503 = vpop.permute.xlu0 %3502
        %3504 = vrot.lane.b32.xlu0 %v3002, 127
        %v3505 = vpop.permute.xlu0 %3504
        %3506 = vrot.lane.b32.xlu0 %v2989, 127
        %v3507 = vpop.permute.xlu0 %3506
        %3508 = vrot.lane.b32.xlu0 %v2991, 127
        %v3509 = vpop.permute.xlu0 %3508
        %3510 = vrot.lane.b32.xlu0 %v2993, 127
        %v3511 = vpop.permute.xlu0 %3510
        %3512 = vrot.lane.b32.xlu0 %v2995, 127
        %v3513 = vpop.permute.xlu0 %3512
        %3514 = vrot.lane.b32.xlu0 %v2997, 127
        %v3515 = vpop.permute.xlu0 %3514
        %3516 = vrot.lane.b32.xlu0 %v2999, 127
        %v3517 = vpop.permute.xlu0 %3516
        %3518 = vrot.lane.b32.xlu0 %v3001, 127
        %v3519 = vpop.permute.xlu0 %3518
        %3520 = vrot.lane.b32.xlu0 %v3003, 127
        %v3521 = vpop.permute.xlu0 %3520
        %v3522 = vsel %vm1228, %v3491, %v3507
        %v3523 = vsel %vm1228, %v3493, %v3509
        %v3524 = vsel %vm1228, %v3495, %v3511
        %v3525 = vsel %vm1228, %v3497, %v3513
        %v3526 = vsel %vm1228, %v3499, %v3515
        %v3527 = vsel %vm1228, %v3501, %v3517
        %v3528 = vsel %vm1228, %v3503, %v3519
        %v3529 = vsel %vm1228, %v3505, %v3521
        %v3530 = vsel %vm1228, %v3507, %v3491
        %v3531 = vsel %vm1228, %v3509, %v3493
        %v3532 = vsel %vm1228, %v3511, %v3495
        %v3533 = vsel %vm1228, %v3513, %v3497
        %v3534 = vsel %vm1228, %v3515, %v3499
        %v3535 = vsel %vm1228, %v3517, %v3501
        %v3536 = vsel %vm1228, %v3519, %v3503
        %v3537 = vsel %vm1228, %v3521, %v3505
        %v3538 = vsel %vm1249, %v3522, 0.0
        %v3539 = vsel %vm1250, %v3530, 0.0
        %v3540 = vsel %vm1249, %v3523, 0.0
        %v3541 = vsel %vm1250, %v3531, 0.0
        %v3542 = vsel %vm1249, %v3524, 0.0
        %v3543 = vsel %vm1250, %v3532, 0.0
        %v3544 = vsel %vm1249, %v3525, 0.0
        %v3545 = vsel %vm1250, %v3533, 0.0
        %v3546 = vsel %vm1249, %v3526, 0.0
        %v3547 = vsel %vm1250, %v3534, 0.0
        %v3548 = vsel %vm1249, %v3527, 0.0
        %v3549 = vsel %vm1250, %v3535, 0.0
        %v3550 = vsel %vm1249, %v3528, 0.0
        %v3551 = vsel %vm1250, %v3536, 0.0
        %v3552 = vsel %vm1249, %v3529, 0.0
        %v3553 = vsel %vm1250, %v3537, 0.0
        %s3554 = scalar_lea.vmem [#allocation2], 256
        %v3555 = vld [vmem:[%s3554] sm:$0xff]
        %v3556 = vld [vmem:[%s3554 + $0x8] sm:$0xff]
        %v3557 = vld [vmem:[%s3554 + $0x10] sm:$0xff]
        %v3558 = vld [vmem:[%s3554 + $0x18] sm:$0xff]
        %v3560 = vsel %vm1523, %v3555, 0
        %v3563 = vsel %vm1523, %v3556, 0
        %v3566 = vsel %vm1523, %v3557, 0
        %v3569 = vsel %vm1523, %v3558, 0
        %3571 = vmatprep.subr.mxu0 %v3539
        %3572 = vmatpush1.msra.mxu0 %v3538
        %3573 = vmatprep.subr.mxu0 %v3541
        %3574 = vmatpush1.msra.mxu0 %v3540
        %3575 = vmatprep.subr.mxu0 %v3543
        %3576 = vmatpush1.msra.mxu0 %v3542
        %3577 = vmatprep.subr.mxu0 %v3545
        %3578 = vmatpush1.msra.mxu0 %v3544
        %3579 = vmatprep.subr.mxu0 0.0
        %3580 = vmatpush1.msra.mxu0 0.0
        %3581 = vmatprep.subr.mxu0 0.0
        %3582 = vmatpush1.msra.mxu0 0.0
        %3583 = vmatprep.subr.mxu0 0.0
        %3584 = vmatpush1.msra.mxu0 0.0
        %3585 = vmatprep.subr.mxu0 0.0
        %3586 = vmatpush1.msra.mxu0 0.0
        %3587 = vmatprep.subr.mxu0 0.0
        %3588 = vmatpush1.msra.mxu0 0.0
        %3589 = vmatprep.subr.mxu0 0.0
        %3590 = vmatpush1.msra.mxu0 0.0
        %3591 = vmatprep.subr.mxu0 0.0
        %3592 = vmatpush1.msra.mxu0 0.0
        %3593 = vmatprep.subr.mxu0 0.0
        %3594 = vmatpush1.msra.mxu0 0.0
        %3595 = vmatprep.subr.mxu0 0.0
        %3596 = vmatpush1.msra.mxu0 0.0
        %3597 = vmatprep.subr.mxu0 0.0
        %3598 = vmatpush1.msra.mxu0 0.0
        %3599 = vmatprep.subr.mxu0 0.0
        %3600 = vmatpush1.msra.mxu0 0.0
        %3601 = vmatprep.subr.mxu0 0.0
        %3602 = vmatpush1.msra.mxu0 0.0
        %3603 = vmatprep.subr.mxu0 0.0
        %3604 = vmatpush1.msra.mxu0 0.0
        %3605 = vmatprep.subr.mxu0 0.0
        %3606 = vmatpush1.msra.mxu0 0.0
        %3607 = vmatprep.subr.mxu0 0.0
        %3608 = vmatpush1.msra.mxu0 0.0
        %3609 = vmatprep.subr.mxu0 0.0
        %3610 = vmatpush1.msra.mxu0 0.0
        %3611 = vmatprep.subr.mxu0 0.0
        %3612 = vmatpush1.msra.mxu0 0.0
        %3613 = vmatprep.subr.mxu0 0.0
        %3614 = vmatpush1.msra.mxu0 0.0
        %3615 = vmatprep.subr.mxu0 0.0
        %3616 = vmatpush1.msra.mxu0 0.0
        %3617 = vmatprep.subr.mxu0 0.0
        %3618 = vmatpush1.msra.mxu0 0.0
        %3619 = vmatprep.subr.mxu0 0.0
        %3620 = vmatpush1.msra.mxu0 0.0
        %3621 = vmatprep.subr.mxu0 0.0
        %3622 = vmatpush1.msra.mxu0 0.0
        %3623 = vmatprep.subr.mxu0 0.0
        %3624 = vmatpush1.msra.mxu0 0.0
        %3625 = vmatprep.subr.mxu0 0.0
        %3626 = vmatpush1.msra.mxu0 0.0
        %3627 = vmatprep.subr.mxu0 0.0
        %3628 = vmatpush1.msra.mxu0 0.0
        %3629 = vmatprep.subr.mxu0 0.0
        %3630 = vmatpush1.msra.mxu0 0.0
        %3631 = vmatprep.subr.mxu0 0.0
        %3632 = vmatpush1.msra.mxu0 0.0
        %3633 = vmatprep.subr.mxu0 0.0
        %3634 = vmatpush1.msra.mxu0 0.0
        %3635 = vmatprep.mubr.f32.mxu0 0.0
        %3636 = vmatmul.mubr.f32.gmra.mrb[0].mxu0 %v3560
        %v3637 = vpop.f32.mrb[0].mxu0
        %v3638 = vadd.f32 0.0, %v3637
        %v3639 = vpop.f32.mrb[0].mxu0
        %v3640 = vadd.f32 0.0, %v3639
        %3641 = vmatprep.mubr.f32.mxu0 0.0
        %3642 = vmatmul.mubr.f32.gmra.mrb[0].mxu0 %v3563
        %v3643 = vpop.f32.mrb[0].mxu0
        %v3644 = vadd.f32 0.0, %v3643
        %v3645 = vpop.f32.mrb[0].mxu0
        %v3646 = vadd.f32 0.0, %v3645
        %3647 = vmatprep.mubr.f32.mxu0 0.0
        %3648 = vmatmul.mubr.f32.gmra.mrb[0].mxu0 %v3566
        %v3649 = vpop.f32.mrb[0].mxu0
        %v3650 = vadd.f32 0.0, %v3649
        %v3651 = vpop.f32.mrb[0].mxu0
        %v3652 = vadd.f32 0.0, %v3651
        %3653 = vmatprep.mubr.f32.mxu0 0.0
        %3654 = vmatmul.mubr.f32.gmra.mrb[0].mxu0 %v3569
        %v3655 = vpop.f32.mrb[0].mxu0
        %v3656 = vadd.f32 0.0, %v3655
        %v3657 = vpop.f32.mrb[0].mxu0
        %v3658 = vadd.f32 0.0, %v3657
        %3659 = vdwg.mxu0
        %v3660 = vadd.f32 %v3385, %v3638
        %v3661 = vadd.f32 %v3386, %v3640
        %v3662 = vadd.f32 %v3387, %v3644
        %v3663 = vadd.f32 %v3388, %v3646
        %v3664 = vadd.f32 %v3389, %v3650
        %v3665 = vadd.f32 %v3390, %v3652
        %v3666 = vadd.f32 %v3391, %v3656
        %v3667 = vadd.f32 %v3392, %v3658
        %3668 = vmatprep.subr.mxu0 %v3547
        %3669 = vmatpush1.msra.mxu0 %v3546
        %3670 = vmatprep.subr.mxu0 %v3549
        %3671 = vmatpush1.msra.mxu0 %v3548
        %3672 = vmatprep.subr.mxu0 %v3551
        %3673 = vmatpush1.msra.mxu0 %v3550
        %3674 = vmatprep.subr.mxu0 %v3553
        %3675 = vmatpush1.msra.mxu0 %v3552
        %3676 = vmatprep.subr.mxu0 0.0
        %3677 = vmatpush1.msra.mxu0 0.0
        %3678 = vmatprep.subr.mxu0 0.0
        %3679 = vmatpush1.msra.mxu0 0.0
        %3680 = vmatprep.subr.mxu0 0.0
        %3681 = vmatpush1.msra.mxu0 0.0
        %3682 = vmatprep.subr.mxu0 0.0
        %3683 = vmatpush1.msra.mxu0 0.0
        %3684 = vmatprep.subr.mxu0 0.0
        %3685 = vmatpush1.msra.mxu0 0.0
        %3686 = vmatprep.subr.mxu0 0.0
        %3687 = vmatpush1.msra.mxu0 0.0
        %3688 = vmatprep.subr.mxu0 0.0
        %3689 = vmatpush1.msra.mxu0 0.0
        %3690 = vmatprep.subr.mxu0 0.0
        %3691 = vmatpush1.msra.mxu0 0.0
        %3692 = vmatprep.subr.mxu0 0.0
        %3693 = vmatpush1.msra.mxu0 0.0
        %3694 = vmatprep.subr.mxu0 0.0
        %3695 = vmatpush1.msra.mxu0 0.0
        %3696 = vmatprep.subr.mxu0 0.0
        %3697 = vmatpush1.msra.mxu0 0.0
        %3698 = vmatprep.subr.mxu0 0.0
        %3699 = vmatpush1.msra.mxu0 0.0
        %3700 = vmatprep.subr.mxu0 0.0
        %3701 = vmatpush1.msra.mxu0 0.0
        %3702 = vmatprep.subr.mxu0 0.0
        %3703 = vmatpush1.msra.mxu0 0.0
        %3704 = vmatprep.subr.mxu0 0.0
        %3705 = vmatpush1.msra.mxu0 0.0
        %3706 = vmatprep.subr.mxu0 0.0
        %3707 = vmatpush1.msra.mxu0 0.0
        %3708 = vmatprep.subr.mxu0 0.0
        %3709 = vmatpush1.msra.mxu0 0.0
        %3710 = vmatprep.subr.mxu0 0.0
        %3711 = vmatpush1.msra.mxu0 0.0
        %3712 = vmatprep.subr.mxu0 0.0
        %3713 = vmatpush1.msra.mxu0 0.0
        %3714 = vmatprep.subr.mxu0 0.0
        %3715 = vmatpush1.msra.mxu0 0.0
        %3716 = vmatprep.subr.mxu0 0.0
        %3717 = vmatpush1.msra.mxu0 0.0
        %3718 = vmatprep.subr.mxu0 0.0
        %3719 = vmatpush1.msra.mxu0 0.0
        %3720 = vmatprep.subr.mxu0 0.0
        %3721 = vmatpush1.msra.mxu0 0.0
        %3722 = vmatprep.subr.mxu0 0.0
        %3723 = vmatpush1.msra.mxu0 0.0
        %3724 = vmatprep.subr.mxu0 0.0
        %3725 = vmatpush1.msra.mxu0 0.0
        %3726 = vmatprep.subr.mxu0 0.0
        %3727 = vmatpush1.msra.mxu0 0.0
        %3728 = vmatprep.subr.mxu0 0.0
        %3729 = vmatpush1.msra.mxu0 0.0
        %3730 = vmatprep.subr.mxu0 0.0
        %3731 = vmatpush1.msra.mxu0 0.0
        %3732 = vmatprep.mubr.f32.mxu0 0.0
        %3733 = vmatmul.mubr.f32.gmra.mrb[0].mxu0 %v3560
        %v3734 = vpop.f32.mrb[0].mxu0
        %v3735 = vadd.f32 0.0, %v3734
        %v3736 = vpop.f32.mrb[0].mxu0
        %v3737 = vadd.f32 0.0, %v3736
        %3738 = vmatprep.mubr.f32.mxu0 0.0
        %3739 = vmatmul.mubr.f32.gmra.mrb[0].mxu0 %v3563
        %v3740 = vpop.f32.mrb[0].mxu0
        %v3741 = vadd.f32 0.0, %v3740
        %v3742 = vpop.f32.mrb[0].mxu0
        %v3743 = vadd.f32 0.0, %v3742
        %3744 = vmatprep.mubr.f32.mxu0 0.0
        %3745 = vmatmul.mubr.f32.gmra.mrb[0].mxu0 %v3566
        %v3746 = vpop.f32.mrb[0].mxu0
        %v3747 = vadd.f32 0.0, %v3746
        %v3748 = vpop.f32.mrb[0].mxu0
        %v3749 = vadd.f32 0.0, %v3748
        %3750 = vmatprep.mubr.f32.mxu0 0.0
        %3751 = vmatmul.mubr.f32.gmra.mrb[0].mxu0 %v3569
        %v3752 = vpop.f32.mrb[0].mxu0
        %v3753 = vadd.f32 0.0, %v3752
        %v3754 = vpop.f32.mrb[0].mxu0
        %v3755 = vadd.f32 0.0, %v3754
        %3756 = vdwg.mxu0
        %v3757 = vadd.f32 %v3482, %v3735
        %v3758 = vadd.f32 %v3483, %v3737
        %v3759 = vadd.f32 %v3484, %v3741
        %v3760 = vadd.f32 %v3485, %v3743
        %v3761 = vadd.f32 %v3486, %v3747
        %v3762 = vadd.f32 %v3487, %v3749
        %v3763 = vadd.f32 %v3488, %v3753
        %v3764 = vadd.f32 %v3489, %v3755
        %v3765 = vadd.f32 %v236, %v3660
        %v3766 = vadd.f32 %v237, %v3661
        %v3767 = vadd.f32 %v238, %v3662
        %v3768 = vadd.f32 %v239, %v3663
        %v3769 = vadd.f32 %v240, %v3664
        %v3770 = vadd.f32 %v241, %v3665
        %v3771 = vadd.f32 %v242, %v3666
        %v3772 = vadd.f32 %v243, %v3667
        %v3773 = vadd.f32 %v244, %v3757
        %v3774 = vadd.f32 %v245, %v3758
        %v3775 = vadd.f32 %v246, %v3759
        %v3776 = vadd.f32 %v247, %v3760
        %v3777 = vadd.f32 %v248, %v3761
        %v3778 = vadd.f32 %v249, %v3762
        %v3779 = vadd.f32 %v250, %v3763
        %v3780 = vadd.f32 %v251, %v3764
        %s3781 = scalar_lea.vmem %s212, 32
        %v3782 = vld [vmem:[%s3781] sm:$0xff]
        %v3783 = vld [vmem:[%s3781 + $0x8] sm:$0xff]
        %v3784 = vld [vmem:[%s3781 + $0x10] sm:$0xff]
        %v3785 = vld [vmem:[%s3781 + $0x18] sm:$0xff]
        %v3786 = vld [vmem:[%s3781 + $0x40] sm:$0xff]
        %v3787 = vld [vmem:[%s3781 + $0x48] sm:$0xff]
        %v3788 = vld [vmem:[%s3781 + $0x50] sm:$0xff]
        %v3789 = vld [vmem:[%s3781 + $0x58] sm:$0xff]
        %v3790 = vadd.f32 %v3660, %v3661
        %3791 = vadd.xlane.f32.xlu0 %v3790
        %v3792 = vpop.xlane.xlu0 %3791
        %v3793 = vadd.f32 %v3662, %v3663
        %3794 = vadd.xlane.f32.xlu0 %v3793
        %v3795 = vpop.xlane.xlu0 %3794
        %v3796 = vadd.f32 %v3664, %v3665
        %3797 = vadd.xlane.f32.xlu0 %v3796
        %v3798 = vpop.xlane.xlu0 %3797
        %v3799 = vadd.f32 %v3666, %v3667
        %3800 = vadd.xlane.f32.xlu0 %v3799
        %v3801 = vpop.xlane.xlu0 %3800
        %v3802 = vadd.f32 %v3757, %v3758
        %3803 = vadd.xlane.f32.xlu0 %v3802
        %v3804 = vpop.xlane.xlu0 %3803
        %v3805 = vadd.f32 %v3759, %v3760
        %3806 = vadd.xlane.f32.xlu0 %v3805
        %v3807 = vpop.xlane.xlu0 %3806
        %v3808 = vadd.f32 %v3761, %v3762
        %3809 = vadd.xlane.f32.xlu0 %v3808
        %v3810 = vpop.xlane.xlu0 %3809
        %v3811 = vadd.f32 %v3763, %v3764
        %3812 = vadd.xlane.f32.xlu0 %v3811
        %v3813 = vpop.xlane.xlu0 %3812
        %v3814 = vmul.f32 %v3660, %v3660
        %v3815 = vmul.f32 %v3661, %v3661
        %v3816 = vmul.f32 %v3662, %v3662
        %v3817 = vmul.f32 %v3663, %v3663
        %v3818 = vmul.f32 %v3664, %v3664
        %v3819 = vmul.f32 %v3665, %v3665
        %v3820 = vmul.f32 %v3666, %v3666
        %v3821 = vmul.f32 %v3667, %v3667
        %v3822 = vmul.f32 %v3757, %v3757
        %v3823 = vmul.f32 %v3758, %v3758
        %v3824 = vmul.f32 %v3759, %v3759
        %v3825 = vmul.f32 %v3760, %v3760
        %v3826 = vmul.f32 %v3761, %v3761
        %v3827 = vmul.f32 %v3762, %v3762
        %v3828 = vmul.f32 %v3763, %v3763
        %v3829 = vmul.f32 %v3764, %v3764
        %v3830 = vadd.f32 %v3814, %v3815
        %3831 = vadd.xlane.f32.xlu0 %v3830
        %v3832 = vpop.xlane.xlu0 %3831
        %v3833 = vadd.f32 %v3816, %v3817
        %3834 = vadd.xlane.f32.xlu0 %v3833
        %v3835 = vpop.xlane.xlu0 %3834
        %v3836 = vadd.f32 %v3818, %v3819
        %3837 = vadd.xlane.f32.xlu0 %v3836
        %v3838 = vpop.xlane.xlu0 %3837
        %v3839 = vadd.f32 %v3820, %v3821
        %3840 = vadd.xlane.f32.xlu0 %v3839
        %v3841 = vpop.xlane.xlu0 %3840
        %v3842 = vadd.f32 %v3822, %v3823
        %3843 = vadd.xlane.f32.xlu0 %v3842
        %v3844 = vpop.xlane.xlu0 %3843
        %v3845 = vadd.f32 %v3824, %v3825
        %3846 = vadd.xlane.f32.xlu0 %v3845
        %v3847 = vpop.xlane.xlu0 %3846
        %v3848 = vadd.f32 %v3826, %v3827
        %3849 = vadd.xlane.f32.xlu0 %v3848
        %v3850 = vpop.xlane.xlu0 %3849
        %v3851 = vadd.f32 %v3828, %v3829
        %3852 = vadd.xlane.f32.xlu0 %v3851
        %v3853 = vpop.xlane.xlu0 %3852
        %v3854 = vmul.f32 %v3792, 0.00390625
        %v3855 = vmul.f32 %v3795, 0.00390625
        %v3856 = vmul.f32 %v3798, 0.00390625
        %v3857 = vmul.f32 %v3801, 0.00390625
        %v3858 = vmul.f32 %v3804, 0.00390625
        %v3859 = vmul.f32 %v3807, 0.00390625
        %v3860 = vmul.f32 %v3810, 0.00390625
        %v3861 = vmul.f32 %v3813, 0.00390625
        %v3862 = vmul.f32 %v3832, 0.00390625
        %v3863 = vmul.f32 %v3835, 0.00390625
        %v3864 = vmul.f32 %v3838, 0.00390625
        %v3865 = vmul.f32 %v3841, 0.00390625
        %v3866 = vmul.f32 %v3844, 0.00390625
        %v3867 = vmul.f32 %v3847, 0.00390625
        %v3868 = vmul.f32 %v3850, 0.00390625
        %v3869 = vmul.f32 %v3853, 0.00390625
        %v3870 = vmul.f32 %v3854, %v3854
        %v3871 = vmul.f32 %v3855, %v3855
        %v3872 = vmul.f32 %v3856, %v3856
        %v3873 = vmul.f32 %v3857, %v3857
        %v3874 = vmul.f32 %v3858, %v3858
        %v3875 = vmul.f32 %v3859, %v3859
        %v3876 = vmul.f32 %v3860, %v3860
        %v3877 = vmul.f32 %v3861, %v3861
        %v3878 = vsub.f32 %v3862, %v3870
        %v3879 = vsub.f32 %v3863, %v3871
        %v3880 = vsub.f32 %v3864, %v3872
        %v3881 = vsub.f32 %v3865, %v3873
        %v3882 = vsub.f32 %v3866, %v3874
        %v3883 = vsub.f32 %v3867, %v3875
        %v3884 = vsub.f32 %v3868, %v3876
        %v3885 = vsub.f32 %v3869, %v3877
        %v3886 = vmax.f32 %v3878, 0.0
        %v3887 = vmax.f32 %v3879, 0.0
        %v3888 = vmax.f32 %v3880, 0.0
        %v3889 = vmax.f32 %v3881, 0.0
        %v3890 = vmax.f32 %v3882, 0.0
        %v3891 = vmax.f32 %v3883, 0.0
        %v3892 = vmax.f32 %v3884, 0.0
        %v3893 = vmax.f32 %v3885, 0.0
        %v3894 = vadd.f32 %v3886, 1e-05
        %v3895 = vadd.f32 %v3887, 1e-05
        %v3896 = vadd.f32 %v3888, 1e-05
        %v3897 = vadd.f32 %v3889, 1e-05
        %v3898 = vadd.f32 %v3890, 1e-05
        %v3899 = vadd.f32 %v3891, 1e-05
        %v3900 = vadd.f32 %v3892, 1e-05
        %v3901 = vadd.f32 %v3893, 1e-05
        %v3902 = vrsqrt.pop %v3894
        %v3903 = vrsqrt.pop %v3895
        %v3904 = vrsqrt.pop %v3896
        %v3905 = vrsqrt.pop %v3897
        %v3906 = vrsqrt.pop %v3898
        %v3907 = vrsqrt.pop %v3899
        %v3908 = vrsqrt.pop %v3900
        %v3909 = vrsqrt.pop %v3901
        %v3910 = vadd.f32 %v3854, %v3855
        %v3911 = vadd.f32 %v3910, %v3856
        %v3912 = vadd.f32 %v3911, %v3857
        %v3913 = vrot.slane %v3912, 4
        %v3914 = vadd.f32 %v3912, %v3913
        %v3915 = vrot.slane %v3914, 2
        %v3916 = vadd.f32 %v3914, %v3915
        %v3917 = vrot.slane %v3916, 1
        %v3918 = vadd.f32 %v3916, %v3917
        %v3919 = vadd.f32 %v3858, %v3859
        %v3920 = vadd.f32 %v3919, %v3860
        %v3921 = vadd.f32 %v3920, %v3861
        %v3922 = vrot.slane %v3921, 4
        %v3923 = vadd.f32 %v3921, %v3922
        %v3924 = vrot.slane %v3923, 2
        %v3925 = vadd.f32 %v3923, %v3924
        %v3926 = vrot.slane %v3925, 1
        %v3927 = vadd.f32 %v3925, %v3926
        %v3928 = vmul.f32 %v3918, %v398
        %v3929 = vmul.f32 %v3927, %v398
        %v3930 = vsub.f32 %v3854, %v3928
        %v3931 = vsub.f32 %v3855, %v3928
        %v3932 = vsub.f32 %v3856, %v3928
        %v3933 = vsub.f32 %v3857, %v3928
        %v3934 = vsub.f32 %v3858, %v3929
        %v3935 = vsub.f32 %v3859, %v3929
        %v3936 = vsub.f32 %v3860, %v3929
        %v3937 = vsub.f32 %v3861, %v3929
        %v3938 = vmul.f32 %v3930, %v3930
        %v3939 = vmul.f32 %v3931, %v3931
        %v3940 = vmul.f32 %v3932, %v3932
        %v3941 = vmul.f32 %v3933, %v3933
        %v3942 = vmul.f32 %v3934, %v3934
        %v3943 = vmul.f32 %v3935, %v3935
        %v3944 = vmul.f32 %v3936, %v3936
        %v3945 = vmul.f32 %v3937, %v3937
        %v3946 = vadd.f32 %v3938, %v3939
        %v3947 = vadd.f32 %v3946, %v3940
        %v3948 = vadd.f32 %v3947, %v3941
        %v3949 = vrot.slane %v3948, 4
        %v3950 = vadd.f32 %v3948, %v3949
        %v3951 = vrot.slane %v3950, 2
        %v3952 = vadd.f32 %v3950, %v3951
        %v3953 = vrot.slane %v3952, 1
        %v3954 = vadd.f32 %v3952, %v3953
        %v3955 = vadd.f32 %v3942, %v3943
        %v3956 = vadd.f32 %v3955, %v3944
        %v3957 = vadd.f32 %v3956, %v3945
        %v3958 = vrot.slane %v3957, 4
        %v3959 = vadd.f32 %v3957, %v3958
        %v3960 = vrot.slane %v3959, 2
        %v3961 = vadd.f32 %v3959, %v3960
        %v3962 = vrot.slane %v3961, 1
        %v3963 = vadd.f32 %v3961, %v3962
        %v3964 = vmul.f32 %v3954, %v435
        %v3965 = vmul.f32 %v3963, %v435
        %v3966 = vadd.f32 %v3964, 1e-05
        %v3967 = vadd.f32 %v3965, 1e-05
        %v3968 = vrsqrt.pop %v3966
        %v3969 = vrsqrt.pop %v3967
        %v3970 = vmul.f32 %v3930, %v3968
        %v3971 = vmul.f32 %v3931, %v3968
        %v3972 = vmul.f32 %v3932, %v3968
        %v3973 = vmul.f32 %v3933, %v3968
        %v3974 = vmul.f32 %v3934, %v3969
        %v3975 = vmul.f32 %v3935, %v3969
        %v3976 = vmul.f32 %v3936, %v3969
        %v3977 = vmul.f32 %v3937, %v3969
        %v3978 = vmul.f32 %v3782, %v3902
        %v3979 = vmul.f32 %v3783, %v3903
        %v3980 = vmul.f32 %v3784, %v3904
        %v3981 = vmul.f32 %v3785, %v3905
        %v3982 = vmul.f32 %v3786, %v3906
        %v3983 = vmul.f32 %v3787, %v3907
        %v3984 = vmul.f32 %v3788, %v3908
        %v3985 = vmul.f32 %v3789, %v3909
        %v3986 = vmul.f32 %v3970, %v3782
        %v3987 = vmul.f32 %v3971, %v3783
        %v3988 = vmul.f32 %v3972, %v3784
        %v3989 = vmul.f32 %v3973, %v3785
        %v3990 = vmul.f32 %v3974, %v3786
        %v3991 = vmul.f32 %v3975, %v3787
        %v3992 = vmul.f32 %v3976, %v3788
        %v3993 = vmul.f32 %v3977, %v3789
        %v3994 = vmul.f32 %v3854, %v3902
        %v3995 = vmul.f32 %v3855, %v3903
        %v3996 = vmul.f32 %v3856, %v3904
        %v3997 = vmul.f32 %v3857, %v3905
        %v3998 = vmul.f32 %v3858, %v3906
        %v3999 = vmul.f32 %v3859, %v3907
        %v4000 = vmul.f32 %v3860, %v3908
        %v4001 = vmul.f32 %v3861, %v3909
        %v4002 = vsub.f32 %v3986, %v3994
        %v4003 = vsub.f32 %v3987, %v3995
        %v4004 = vsub.f32 %v3988, %v3996
        %v4005 = vsub.f32 %v3989, %v3997
        %v4006 = vsub.f32 %v3990, %v3998
        %v4007 = vsub.f32 %v3991, %v3999
        %v4008 = vsub.f32 %v3992, %v4000
        %v4009 = vsub.f32 %v3993, %v4001
        %4018 = vrot.lane.b32.xlu0 %v4002, 127
        %v4019 = vpop.permute.xlu0 %4018
        %4020 = vrot.lane.b32.xlu0 %v4003, 127
        %v4021 = vpop.permute.xlu0 %4020
        %4022 = vrot.lane.b32.xlu0 %v4004, 127
        %v4023 = vpop.permute.xlu0 %4022
        %4024 = vrot.lane.b32.xlu0 %v4005, 127
        %v4025 = vpop.permute.xlu0 %4024
        %4026 = vrot.lane.b32.xlu0 %v4006, 127
        %v4027 = vpop.permute.xlu0 %4026
        %4028 = vrot.lane.b32.xlu0 %v4007, 127
        %v4029 = vpop.permute.xlu0 %4028
        %4030 = vrot.lane.b32.xlu0 %v4008, 127
        %v4031 = vpop.permute.xlu0 %4030
        %4032 = vrot.lane.b32.xlu0 %v4009, 127
        %v4033 = vpop.permute.xlu0 %4032
        %v4042 = vmul.f32 %v3782, %v4019
        %v4043 = vmul.f32 %v3783, %v4021
        %v4044 = vmul.f32 %v3784, %v4023
        %v4045 = vmul.f32 %v3785, %v4025
        %v4046 = vmul.f32 %v3786, %v4027
        %v4047 = vmul.f32 %v3787, %v4029
        %v4048 = vmul.f32 %v3788, %v4031
        %v4049 = vmul.f32 %v3789, %v4033
        %4058 = vrot.lane.b32.xlu0 %v3782, 126
        %v4059 = vpop.permute.xlu0 %4058
        %4060 = vrot.lane.b32.xlu0 %v3783, 126
        %v4061 = vpop.permute.xlu0 %4060
        %4062 = vrot.lane.b32.xlu0 %v3784, 126
        %v4063 = vpop.permute.xlu0 %4062
        %4064 = vrot.lane.b32.xlu0 %v3785, 126
        %v4065 = vpop.permute.xlu0 %4064
        %4066 = vrot.lane.b32.xlu0 %v3786, 126
        %v4067 = vpop.permute.xlu0 %4066
        %4068 = vrot.lane.b32.xlu0 %v3787, 126
        %v4069 = vpop.permute.xlu0 %4068
        %4070 = vrot.lane.b32.xlu0 %v3788, 126
        %v4071 = vpop.permute.xlu0 %4070
        %4072 = vrot.lane.b32.xlu0 %v3789, 126
        %v4073 = vpop.permute.xlu0 %4072
        %v4082 = vadd.f32 %v4042, %v4059
        %v4083 = vadd.f32 %v4043, %v4061
        %v4084 = vadd.f32 %v4044, %v4063
        %v4085 = vadd.f32 %v4045, %v4065
        %v4086 = vadd.f32 %v4046, %v4067
        %v4087 = vadd.f32 %v4047, %v4069
        %v4088 = vadd.f32 %v4048, %v4071
        %v4089 = vadd.f32 %v4049, %v4073
        %4091 = vset.pattern.permute.xlu0 0
        %4092 = vperm.xlu0 %4091, %v3978
        %v4093 = vpop.permute.xlu0 %4092
        %4096 = vset.pattern.permute.xlu0 0
        %4097 = vperm.xlu0 %4096, %v3979
        %v4098 = vpop.permute.xlu0 %4097
        %4101 = vset.pattern.permute.xlu0 0
        %4102 = vperm.xlu0 %4101, %v3980
        %v4103 = vpop.permute.xlu0 %4102
        %4106 = vset.pattern.permute.xlu0 0
        %4107 = vperm.xlu0 %4106, %v3981
        %v4108 = vpop.permute.xlu0 %4107
        %4111 = vset.pattern.permute.xlu0 0
        %4112 = vperm.xlu0 %4111, %v3982
        %v4113 = vpop.permute.xlu0 %4112
        %4116 = vset.pattern.permute.xlu0 0
        %4117 = vperm.xlu0 %4116, %v3983
        %v4118 = vpop.permute.xlu0 %4117
        %4121 = vset.pattern.permute.xlu0 0
        %4122 = vperm.xlu0 %4121, %v3984
        %v4123 = vpop.permute.xlu0 %4122
        %4126 = vset.pattern.permute.xlu0 0
        %4127 = vperm.xlu0 %4126, %v3985
        %v4128 = vpop.permute.xlu0 %4127
        %v4130 = vmul.f32 %v3660, %v4093
        %v4131 = vmul.f32 %v3661, %v4093
        %v4132 = vmul.f32 %v3662, %v4098
        %v4133 = vmul.f32 %v3663, %v4098
        %v4134 = vmul.f32 %v3664, %v4103
        %v4135 = vmul.f32 %v3665, %v4103
        %v4136 = vmul.f32 %v3666, %v4108
        %v4137 = vmul.f32 %v3667, %v4108
        %v4138 = vmul.f32 %v3757, %v4113
        %v4139 = vmul.f32 %v3758, %v4113
        %v4140 = vmul.f32 %v3759, %v4118
        %v4141 = vmul.f32 %v3760, %v4118
        %v4142 = vmul.f32 %v3761, %v4123
        %v4143 = vmul.f32 %v3762, %v4123
        %v4144 = vmul.f32 %v3763, %v4128
        %v4145 = vmul.f32 %v3764, %v4128
        %4147 = vset.pattern.permute.xlu0 0
        %4148 = vperm.xlu0 %4147, %v4082
        %v4149 = vpop.permute.xlu0 %4148
        %4152 = vset.pattern.permute.xlu0 0
        %4153 = vperm.xlu0 %4152, %v4083
        %v4154 = vpop.permute.xlu0 %4153
        %4157 = vset.pattern.permute.xlu0 0
        %4158 = vperm.xlu0 %4157, %v4084
        %v4159 = vpop.permute.xlu0 %4158
        %4162 = vset.pattern.permute.xlu0 0
        %4163 = vperm.xlu0 %4162, %v4085
        %v4164 = vpop.permute.xlu0 %4163
        %4167 = vset.pattern.permute.xlu0 0
        %4168 = vperm.xlu0 %4167, %v4086
        %v4169 = vpop.permute.xlu0 %4168
        %4172 = vset.pattern.permute.xlu0 0
        %4173 = vperm.xlu0 %4172, %v4087
        %v4174 = vpop.permute.xlu0 %4173
        %4177 = vset.pattern.permute.xlu0 0
        %4178 = vperm.xlu0 %4177, %v4088
        %v4179 = vpop.permute.xlu0 %4178
        %4182 = vset.pattern.permute.xlu0 0
        %4183 = vperm.xlu0 %4182, %v4089
        %v4184 = vpop.permute.xlu0 %4183
        %v4186 = vadd.f32 %v4130, %v4149
        %v4187 = vadd.f32 %v4131, %v4149
        %v4188 = vadd.f32 %v4132, %v4154
        %v4189 = vadd.f32 %v4133, %v4154
        %v4190 = vadd.f32 %v4134, %v4159
        %v4191 = vadd.f32 %v4135, %v4159
        %v4192 = vadd.f32 %v4136, %v4164
        %v4193 = vadd.f32 %v4137, %v4164
        %v4194 = vadd.f32 %v4138, %v4169
        %v4195 = vadd.f32 %v4139, %v4169
        %v4196 = vadd.f32 %v4140, %v4174
        %v4197 = vadd.f32 %v4141, %v4174
        %v4198 = vadd.f32 %v4142, %v4179
        %v4199 = vadd.f32 %v4143, %v4179
        %v4200 = vadd.f32 %v4144, %v4184
        %v4201 = vadd.f32 %v4145, %v4184
        %4202 = vrot.lane.b32.xlu0 %v4186, 32
        %v4203 = vpop.permute.xlu0 %4202
        %4204 = vrot.lane.b32.xlu0 %v4188, 32
        %v4205 = vpop.permute.xlu0 %4204
        %4206 = vrot.lane.b32.xlu0 %v4190, 32
        %v4207 = vpop.permute.xlu0 %4206
        %4208 = vrot.lane.b32.xlu0 %v4192, 32
        %v4209 = vpop.permute.xlu0 %4208
        %4210 = vrot.lane.b32.xlu0 %v4194, 32
        %v4211 = vpop.permute.xlu0 %4210
        %4212 = vrot.lane.b32.xlu0 %v4196, 32
        %v4213 = vpop.permute.xlu0 %4212
        %4214 = vrot.lane.b32.xlu0 %v4198, 32
        %v4215 = vpop.permute.xlu0 %4214
        %4216 = vrot.lane.b32.xlu0 %v4200, 32
        %v4217 = vpop.permute.xlu0 %4216
        %4218 = vrot.lane.b32.xlu0 %v4187, 32
        %v4219 = vpop.permute.xlu0 %4218
        %4220 = vrot.lane.b32.xlu0 %v4189, 32
        %v4221 = vpop.permute.xlu0 %4220
        %4222 = vrot.lane.b32.xlu0 %v4191, 32
        %v4223 = vpop.permute.xlu0 %4222
        %4224 = vrot.lane.b32.xlu0 %v4193, 32
        %v4225 = vpop.permute.xlu0 %4224
        %4226 = vrot.lane.b32.xlu0 %v4195, 32
        %v4227 = vpop.permute.xlu0 %4226
        %4228 = vrot.lane.b32.xlu0 %v4197, 32
        %v4229 = vpop.permute.xlu0 %4228
        %4230 = vrot.lane.b32.xlu0 %v4199, 32
        %v4231 = vpop.permute.xlu0 %4230
        %4232 = vrot.lane.b32.xlu0 %v4201, 32
        %v4233 = vpop.permute.xlu0 %4232
        %v4234 = vsel %vm706, %v4203, %v4219
        %v4235 = vsel %vm706, %v4205, %v4221
        %v4236 = vsel %vm706, %v4207, %v4223
        %v4237 = vsel %vm706, %v4209, %v4225
        %v4238 = vsel %vm706, %v4211, %v4227
        %v4239 = vsel %vm706, %v4213, %v4229
        %v4240 = vsel %vm706, %v4215, %v4231
        %v4241 = vsel %vm706, %v4217, %v4233
        %v4242 = vsel %vm706, %v4219, %v4203
        %v4243 = vsel %vm706, %v4221, %v4205
        %v4244 = vsel %vm706, %v4223, %v4207
        %v4245 = vsel %vm706, %v4225, %v4209
        %v4246 = vsel %vm706, %v4227, %v4211
        %v4247 = vsel %vm706, %v4229, %v4213
        %v4248 = vsel %vm706, %v4231, %v4215
        %v4249 = vsel %vm706, %v4233, %v4217
        %v4250 = vsel %vm727, %v4242, 0.0
        %v4251 = vsel %vm728, %v4234, 0.0
        %v4252 = vsel %vm727, %v4243, 0.0
        %v4253 = vsel %vm728, %v4235, 0.0
        %v4254 = vsel %vm727, %v4244, 0.0
        %v4255 = vsel %vm728, %v4236, 0.0
        %v4256 = vsel %vm727, %v4245, 0.0
        %v4257 = vsel %vm728, %v4237, 0.0
        %v4258 = vsel %vm727, %v4246, 0.0
        %v4259 = vsel %vm728, %v4238, 0.0
        %v4260 = vsel %vm727, %v4247, 0.0
        %v4261 = vsel %vm728, %v4239, 0.0
        %v4262 = vsel %vm727, %v4248, 0.0
        %v4263 = vsel %vm728, %v4240, 0.0
        %v4264 = vsel %vm727, %v4249, 0.0
        %v4265 = vsel %vm728, %v4241, 0.0
        %v4266 = vadd.f32 %v4186, %v4250
        %v4267 = vadd.f32 %v4187, %v4251
        %v4268 = vadd.f32 %v4188, %v4252
        %v4269 = vadd.f32 %v4189, %v4253
        %v4270 = vadd.f32 %v4190, %v4254
        %v4271 = vadd.f32 %v4191, %v4255
        %v4272 = vadd.f32 %v4192, %v4256
        %v4273 = vadd.f32 %v4193, %v4257
        %v4274 = vadd.f32 %v4194, %v4258
        %v4275 = vadd.f32 %v4195, %v4259
        %v4276 = vadd.f32 %v4196, %v4260
        %v4277 = vadd.f32 %v4197, %v4261
        %v4278 = vadd.f32 %v4198, %v4262
        %v4279 = vadd.f32 %v4199, %v4263
        %v4280 = vadd.f32 %v4200, %v4264
        %v4281 = vadd.f32 %v4201, %v4265
        %4282 = vrot.lane.b32.xlu0 %v4186, 16
        %v4283 = vpop.permute.xlu0 %4282
        %4284 = vrot.lane.b32.xlu0 %v4188, 16
        %v4285 = vpop.permute.xlu0 %4284
        %4286 = vrot.lane.b32.xlu0 %v4190, 16
        %v4287 = vpop.permute.xlu0 %4286
        %4288 = vrot.lane.b32.xlu0 %v4192, 16
        %v4289 = vpop.permute.xlu0 %4288
        %4290 = vrot.lane.b32.xlu0 %v4194, 16
        %v4291 = vpop.permute.xlu0 %4290
        %4292 = vrot.lane.b32.xlu0 %v4196, 16
        %v4293 = vpop.permute.xlu0 %4292
        %4294 = vrot.lane.b32.xlu0 %v4198, 16
        %v4295 = vpop.permute.xlu0 %4294
        %4296 = vrot.lane.b32.xlu0 %v4200, 16
        %v4297 = vpop.permute.xlu0 %4296
        %4298 = vrot.lane.b32.xlu0 %v4187, 16
        %v4299 = vpop.permute.xlu0 %4298
        %4300 = vrot.lane.b32.xlu0 %v4189, 16
        %v4301 = vpop.permute.xlu0 %4300
        %4302 = vrot.lane.b32.xlu0 %v4191, 16
        %v4303 = vpop.permute.xlu0 %4302
        %4304 = vrot.lane.b32.xlu0 %v4193, 16
        %v4305 = vpop.permute.xlu0 %4304
        %4306 = vrot.lane.b32.xlu0 %v4195, 16
        %v4307 = vpop.permute.xlu0 %4306
        %4308 = vrot.lane.b32.xlu0 %v4197, 16
        %v4309 = vpop.permute.xlu0 %4308
        %4310 = vrot.lane.b32.xlu0 %v4199, 16
        %v4311 = vpop.permute.xlu0 %4310
        %4312 = vrot.lane.b32.xlu0 %v4201, 16
        %v4313 = vpop.permute.xlu0 %4312
        %v4314 = vsel %vm793, %v4283, %v4299
        %v4315 = vsel %vm793, %v4285, %v4301
        %v4316 = vsel %vm793, %v4287, %v4303
        %v4317 = vsel %vm793, %v4289, %v4305
        %v4318 = vsel %vm793, %v4291, %v4307
        %v4319 = vsel %vm793, %v4293, %v4309
        %v4320 = vsel %vm793, %v4295, %v4311
        %v4321 = vsel %vm793, %v4297, %v4313
        %v4322 = vsel %vm793, %v4299, %v4283
        %v4323 = vsel %vm793, %v4301, %v4285
        %v4324 = vsel %vm793, %v4303, %v4287
        %v4325 = vsel %vm793, %v4305, %v4289
        %v4326 = vsel %vm793, %v4307, %v4291
        %v4327 = vsel %vm793, %v4309, %v4293
        %v4328 = vsel %vm793, %v4311, %v4295
        %v4329 = vsel %vm793, %v4313, %v4297
        %v4330 = vsel %vm814, %v4322, 0.0
        %v4331 = vsel %vm815, %v4314, 0.0
        %v4332 = vsel %vm814, %v4323, 0.0
        %v4333 = vsel %vm815, %v4315, 0.0
        %v4334 = vsel %vm814, %v4324, 0.0
        %v4335 = vsel %vm815, %v4316, 0.0
        %v4336 = vsel %vm814, %v4325, 0.0
        %v4337 = vsel %vm815, %v4317, 0.0
        %v4338 = vsel %vm814, %v4326, 0.0
        %v4339 = vsel %vm815, %v4318, 0.0
        %v4340 = vsel %vm814, %v4327, 0.0
        %v4341 = vsel %vm815, %v4319, 0.0
        %v4342 = vsel %vm814, %v4328, 0.0
        %v4343 = vsel %vm815, %v4320, 0.0
        %v4344 = vsel %vm814, %v4329, 0.0
        %v4345 = vsel %vm815, %v4321, 0.0
        %v4346 = vadd.f32 %v4266, %v4330
        %v4347 = vadd.f32 %v4267, %v4331
        %v4348 = vadd.f32 %v4268, %v4332
        %v4349 = vadd.f32 %v4269, %v4333
        %v4350 = vadd.f32 %v4270, %v4334
        %v4351 = vadd.f32 %v4271, %v4335
        %v4352 = vadd.f32 %v4272, %v4336
        %v4353 = vadd.f32 %v4273, %v4337
        %v4354 = vadd.f32 %v4274, %v4338
        %v4355 = vadd.f32 %v4275, %v4339
        %v4356 = vadd.f32 %v4276, %v4340
        %v4357 = vadd.f32 %v4277, %v4341
        %v4358 = vadd.f32 %v4278, %v4342
        %v4359 = vadd.f32 %v4279, %v4343
        %v4360 = vadd.f32 %v4280, %v4344
        %v4361 = vadd.f32 %v4281, %v4345
        %4362 = vrot.lane.b32.xlu0 %v4186, 112
        %v4363 = vpop.permute.xlu0 %4362
        %4364 = vrot.lane.b32.xlu0 %v4188, 112
        %v4365 = vpop.permute.xlu0 %4364
        %4366 = vrot.lane.b32.xlu0 %v4190, 112
        %v4367 = vpop.permute.xlu0 %4366
        %4368 = vrot.lane.b32.xlu0 %v4192, 112
        %v4369 = vpop.permute.xlu0 %4368
        %4370 = vrot.lane.b32.xlu0 %v4194, 112
        %v4371 = vpop.permute.xlu0 %4370
        %4372 = vrot.lane.b32.xlu0 %v4196, 112
        %v4373 = vpop.permute.xlu0 %4372
        %4374 = vrot.lane.b32.xlu0 %v4198, 112
        %v4375 = vpop.permute.xlu0 %4374
        %4376 = vrot.lane.b32.xlu0 %v4200, 112
        %v4377 = vpop.permute.xlu0 %4376
        %4378 = vrot.lane.b32.xlu0 %v4187, 112
        %v4379 = vpop.permute.xlu0 %4378
        %4380 = vrot.lane.b32.xlu0 %v4189, 112
        %v4381 = vpop.permute.xlu0 %4380
        %4382 = vrot.lane.b32.xlu0 %v4191, 112
        %v4383 = vpop.permute.xlu0 %4382
        %4384 = vrot.lane.b32.xlu0 %v4193, 112
        %v4385 = vpop.permute.xlu0 %4384
        %4386 = vrot.lane.b32.xlu0 %v4195, 112
        %v4387 = vpop.permute.xlu0 %4386
        %4388 = vrot.lane.b32.xlu0 %v4197, 112
        %v4389 = vpop.permute.xlu0 %4388
        %4390 = vrot.lane.b32.xlu0 %v4199, 112
        %v4391 = vpop.permute.xlu0 %4390
        %4392 = vrot.lane.b32.xlu0 %v4201, 112
        %v4393 = vpop.permute.xlu0 %4392
        %v4394 = vsel %vm880, %v4363, %v4379
        %v4395 = vsel %vm880, %v4365, %v4381
        %v4396 = vsel %vm880, %v4367, %v4383
        %v4397 = vsel %vm880, %v4369, %v4385
        %v4398 = vsel %vm880, %v4371, %v4387
        %v4399 = vsel %vm880, %v4373, %v4389
        %v4400 = vsel %vm880, %v4375, %v4391
        %v4401 = vsel %vm880, %v4377, %v4393
        %v4402 = vsel %vm880, %v4379, %v4363
        %v4403 = vsel %vm880, %v4381, %v4365
        %v4404 = vsel %vm880, %v4383, %v4367
        %v4405 = vsel %vm880, %v4385, %v4369
        %v4406 = vsel %vm880, %v4387, %v4371
        %v4407 = vsel %vm880, %v4389, %v4373
        %v4408 = vsel %vm880, %v4391, %v4375
        %v4409 = vsel %vm880, %v4393, %v4377
        %v4410 = vsel %vm901, %v4394, 0.0
        %v4411 = vsel %vm902, %v4402, 0.0
        %v4412 = vsel %vm901, %v4395, 0.0
        %v4413 = vsel %vm902, %v4403, 0.0
        %v4414 = vsel %vm901, %v4396, 0.0
        %v4415 = vsel %vm902, %v4404, 0.0
        %v4416 = vsel %vm901, %v4397, 0.0
        %v4417 = vsel %vm902, %v4405, 0.0
        %v4418 = vsel %vm901, %v4398, 0.0
        %v4419 = vsel %vm902, %v4406, 0.0
        %v4420 = vsel %vm901, %v4399, 0.0
        %v4421 = vsel %vm902, %v4407, 0.0
        %v4422 = vsel %vm901, %v4400, 0.0
        %v4423 = vsel %vm902, %v4408, 0.0
        %v4424 = vsel %vm901, %v4401, 0.0
        %v4425 = vsel %vm902, %v4409, 0.0
        %v4426 = vadd.f32 %v4346, %v4410
        %v4427 = vadd.f32 %v4347, %v4411
        %v4428 = vadd.f32 %v4348, %v4412
        %v4429 = vadd.f32 %v4349, %v4413
        %v4430 = vadd.f32 %v4350, %v4414
        %v4431 = vadd.f32 %v4351, %v4415
        %v4432 = vadd.f32 %v4352, %v4416
        %v4433 = vadd.f32 %v4353, %v4417
        %v4434 = vadd.f32 %v4354, %v4418
        %v4435 = vadd.f32 %v4355, %v4419
        %v4436 = vadd.f32 %v4356, %v4420
        %v4437 = vadd.f32 %v4357, %v4421
        %v4438 = vadd.f32 %v4358, %v4422
        %v4439 = vadd.f32 %v4359, %v4423
        %v4440 = vadd.f32 %v4360, %v4424
        %v4441 = vadd.f32 %v4361, %v4425
        %4442 = vrot.lane.b32.xlu0 %v4186, 96
        %v4443 = vpop.permute.xlu0 %4442
        %4444 = vrot.lane.b32.xlu0 %v4188, 96
        %v4445 = vpop.permute.xlu0 %4444
        %4446 = vrot.lane.b32.xlu0 %v4190, 96
        %v4447 = vpop.permute.xlu0 %4446
        %4448 = vrot.lane.b32.xlu0 %v4192, 96
        %v4449 = vpop.permute.xlu0 %4448
        %4450 = vrot.lane.b32.xlu0 %v4194, 96
        %v4451 = vpop.permute.xlu0 %4450
        %4452 = vrot.lane.b32.xlu0 %v4196, 96
        %v4453 = vpop.permute.xlu0 %4452
        %4454 = vrot.lane.b32.xlu0 %v4198, 96
        %v4455 = vpop.permute.xlu0 %4454
        %4456 = vrot.lane.b32.xlu0 %v4200, 96
        %v4457 = vpop.permute.xlu0 %4456
        %4458 = vrot.lane.b32.xlu0 %v4187, 96
        %v4459 = vpop.permute.xlu0 %4458
        %4460 = vrot.lane.b32.xlu0 %v4189, 96
        %v4461 = vpop.permute.xlu0 %4460
        %4462 = vrot.lane.b32.xlu0 %v4191, 96
        %v4463 = vpop.permute.xlu0 %4462
        %4464 = vrot.lane.b32.xlu0 %v4193, 96
        %v4465 = vpop.permute.xlu0 %4464
        %4466 = vrot.lane.b32.xlu0 %v4195, 96
        %v4467 = vpop.permute.xlu0 %4466
        %4468 = vrot.lane.b32.xlu0 %v4197, 96
        %v4469 = vpop.permute.xlu0 %4468
        %4470 = vrot.lane.b32.xlu0 %v4199, 96
        %v4471 = vpop.permute.xlu0 %4470
        %4472 = vrot.lane.b32.xlu0 %v4201, 96
        %v4473 = vpop.permute.xlu0 %4472
        %v4474 = vsel %vm967, %v4443, %v4459
        %v4475 = vsel %vm967, %v4445, %v4461
        %v4476 = vsel %vm967, %v4447, %v4463
        %v4477 = vsel %vm967, %v4449, %v4465
        %v4478 = vsel %vm967, %v4451, %v4467
        %v4479 = vsel %vm967, %v4453, %v4469
        %v4480 = vsel %vm967, %v4455, %v4471
        %v4481 = vsel %vm967, %v4457, %v4473
        %v4482 = vsel %vm967, %v4459, %v4443
        %v4483 = vsel %vm967, %v4461, %v4445
        %v4484 = vsel %vm967, %v4463, %v4447
        %v4485 = vsel %vm967, %v4465, %v4449
        %v4486 = vsel %vm967, %v4467, %v4451
        %v4487 = vsel %vm967, %v4469, %v4453
        %v4488 = vsel %vm967, %v4471, %v4455
        %v4489 = vsel %vm967, %v4473, %v4457
        %v4490 = vsel %vm988, %v4474, 0.0
        %v4491 = vsel %vm989, %v4482, 0.0
        %v4492 = vsel %vm988, %v4475, 0.0
        %v4493 = vsel %vm989, %v4483, 0.0
        %v4494 = vsel %vm988, %v4476, 0.0
        %v4495 = vsel %vm989, %v4484, 0.0
        %v4496 = vsel %vm988, %v4477, 0.0
        %v4497 = vsel %vm989, %v4485, 0.0
        %v4498 = vsel %vm988, %v4478, 0.0
        %v4499 = vsel %vm989, %v4486, 0.0
        %v4500 = vsel %vm988, %v4479, 0.0
        %v4501 = vsel %vm989, %v4487, 0.0
        %v4502 = vsel %vm988, %v4480, 0.0
        %v4503 = vsel %vm989, %v4488, 0.0
        %v4504 = vsel %vm988, %v4481, 0.0
        %v4505 = vsel %vm989, %v4489, 0.0
        %v4506 = vadd.f32 %v4426, %v4490
        %v4507 = vadd.f32 %v4427, %v4491
        %v4508 = vadd.f32 %v4428, %v4492
        %v4509 = vadd.f32 %v4429, %v4493
        %v4510 = vadd.f32 %v4430, %v4494
        %v4511 = vadd.f32 %v4431, %v4495
        %v4512 = vadd.f32 %v4432, %v4496
        %v4513 = vadd.f32 %v4433, %v4497
        %v4514 = vadd.f32 %v4434, %v4498
        %v4515 = vadd.f32 %v4435, %v4499
        %v4516 = vadd.f32 %v4436, %v4500
        %v4517 = vadd.f32 %v4437, %v4501
        %v4518 = vadd.f32 %v4438, %v4502
        %v4519 = vadd.f32 %v4439, %v4503
        %v4520 = vadd.f32 %v4440, %v4504
        %v4521 = vadd.f32 %v4441, %v4505
        %4522 = vrot.lane.b32.xlu0 %v4506, 2
        %v4523 = vpop.permute.xlu0 %4522
        %4524 = vrot.lane.b32.xlu0 %v4508, 2
        %v4525 = vpop.permute.xlu0 %4524
        %4526 = vrot.lane.b32.xlu0 %v4510, 2
        %v4527 = vpop.permute.xlu0 %4526
        %4528 = vrot.lane.b32.xlu0 %v4512, 2
        %v4529 = vpop.permute.xlu0 %4528
        %4530 = vrot.lane.b32.xlu0 %v4514, 2
        %v4531 = vpop.permute.xlu0 %4530
        %4532 = vrot.lane.b32.xlu0 %v4516, 2
        %v4533 = vpop.permute.xlu0 %4532
        %4534 = vrot.lane.b32.xlu0 %v4518, 2
        %v4535 = vpop.permute.xlu0 %4534
        %4536 = vrot.lane.b32.xlu0 %v4520, 2
        %v4537 = vpop.permute.xlu0 %4536
        %4538 = vrot.lane.b32.xlu0 %v4507, 2
        %v4539 = vpop.permute.xlu0 %4538
        %4540 = vrot.lane.b32.xlu0 %v4509, 2
        %v4541 = vpop.permute.xlu0 %4540
        %4542 = vrot.lane.b32.xlu0 %v4511, 2
        %v4543 = vpop.permute.xlu0 %4542
        %4544 = vrot.lane.b32.xlu0 %v4513, 2
        %v4545 = vpop.permute.xlu0 %4544
        %4546 = vrot.lane.b32.xlu0 %v4515, 2
        %v4547 = vpop.permute.xlu0 %4546
        %4548 = vrot.lane.b32.xlu0 %v4517, 2
        %v4549 = vpop.permute.xlu0 %4548
        %4550 = vrot.lane.b32.xlu0 %v4519, 2
        %v4551 = vpop.permute.xlu0 %4550
        %4552 = vrot.lane.b32.xlu0 %v4521, 2
        %v4553 = vpop.permute.xlu0 %4552
        %v4554 = vsel %vm1054, %v4523, %v4539
        %v4555 = vsel %vm1054, %v4525, %v4541
        %v4556 = vsel %vm1054, %v4527, %v4543
        %v4557 = vsel %vm1054, %v4529, %v4545
        %v4558 = vsel %vm1054, %v4531, %v4547
        %v4559 = vsel %vm1054, %v4533, %v4549
        %v4560 = vsel %vm1054, %v4535, %v4551
        %v4561 = vsel %vm1054, %v4537, %v4553
        %v4562 = vsel %vm1054, %v4539, %v4523
        %v4563 = vsel %vm1054, %v4541, %v4525
        %v4564 = vsel %vm1054, %v4543, %v4527
        %v4565 = vsel %vm1054, %v4545, %v4529
        %v4566 = vsel %vm1054, %v4547, %v4531
        %v4567 = vsel %vm1054, %v4549, %v4533
        %v4568 = vsel %vm1054, %v4551, %v4535
        %v4569 = vsel %vm1054, %v4553, %v4537
        %v4570 = vsel %vm1075, %v4562, 0.0
        %v4571 = vsel %vm1076, %v4554, 0.0
        %v4572 = vsel %vm1075, %v4563, 0.0
        %v4573 = vsel %vm1076, %v4555, 0.0
        %v4574 = vsel %vm1075, %v4564, 0.0
        %v4575 = vsel %vm1076, %v4556, 0.0
        %v4576 = vsel %vm1075, %v4565, 0.0
        %v4577 = vsel %vm1076, %v4557, 0.0
        %v4578 = vsel %vm1075, %v4566, 0.0
        %v4579 = vsel %vm1076, %v4558, 0.0
        %v4580 = vsel %vm1075, %v4567, 0.0
        %v4581 = vsel %vm1076, %v4559, 0.0
        %v4582 = vsel %vm1075, %v4568, 0.0
        %v4583 = vsel %vm1076, %v4560, 0.0
        %v4584 = vsel %vm1075, %v4569, 0.0
        %v4585 = vsel %vm1076, %v4561, 0.0
        %v4586 = vadd.f32 %v4506, %v4570
        %v4587 = vadd.f32 %v4507, %v4571
        %v4588 = vadd.f32 %v4508, %v4572
        %v4589 = vadd.f32 %v4509, %v4573
        %v4590 = vadd.f32 %v4510, %v4574
        %v4591 = vadd.f32 %v4511, %v4575
        %v4592 = vadd.f32 %v4512, %v4576
        %v4593 = vadd.f32 %v4513, %v4577
        %v4594 = vadd.f32 %v4514, %v4578
        %v4595 = vadd.f32 %v4515, %v4579
        %v4596 = vadd.f32 %v4516, %v4580
        %v4597 = vadd.f32 %v4517, %v4581
        %v4598 = vadd.f32 %v4518, %v4582
        %v4599 = vadd.f32 %v4519, %v4583
        %v4600 = vadd.f32 %v4520, %v4584
        %v4601 = vadd.f32 %v4521, %v4585
        %4602 = vrot.lane.b32.xlu0 %v4506, 1
        %v4603 = vpop.permute.xlu0 %4602
        %4604 = vrot.lane.b32.xlu0 %v4508, 1
        %v4605 = vpop.permute.xlu0 %4604
        %4606 = vrot.lane.b32.xlu0 %v4510, 1
        %v4607 = vpop.permute.xlu0 %4606
        %4608 = vrot.lane.b32.xlu0 %v4512, 1
        %v4609 = vpop.permute.xlu0 %4608
        %4610 = vrot.lane.b32.xlu0 %v4514, 1
        %v4611 = vpop.permute.xlu0 %4610
        %4612 = vrot.lane.b32.xlu0 %v4516, 1
        %v4613 = vpop.permute.xlu0 %4612
        %4614 = vrot.lane.b32.xlu0 %v4518, 1
        %v4615 = vpop.permute.xlu0 %4614
        %4616 = vrot.lane.b32.xlu0 %v4520, 1
        %v4617 = vpop.permute.xlu0 %4616
        %4618 = vrot.lane.b32.xlu0 %v4507, 1
        %v4619 = vpop.permute.xlu0 %4618
        %4620 = vrot.lane.b32.xlu0 %v4509, 1
        %v4621 = vpop.permute.xlu0 %4620
        %4622 = vrot.lane.b32.xlu0 %v4511, 1
        %v4623 = vpop.permute.xlu0 %4622
        %4624 = vrot.lane.b32.xlu0 %v4513, 1
        %v4625 = vpop.permute.xlu0 %4624
        %4626 = vrot.lane.b32.xlu0 %v4515, 1
        %v4627 = vpop.permute.xlu0 %4626
        %4628 = vrot.lane.b32.xlu0 %v4517, 1
        %v4629 = vpop.permute.xlu0 %4628
        %4630 = vrot.lane.b32.xlu0 %v4519, 1
        %v4631 = vpop.permute.xlu0 %4630
        %4632 = vrot.lane.b32.xlu0 %v4521, 1
        %v4633 = vpop.permute.xlu0 %4632
        %v4634 = vsel %vm1141, %v4603, %v4619
        %v4635 = vsel %vm1141, %v4605, %v4621
        %v4636 = vsel %vm1141, %v4607, %v4623
        %v4637 = vsel %vm1141, %v4609, %v4625
        %v4638 = vsel %vm1141, %v4611, %v4627
        %v4639 = vsel %vm1141, %v4613, %v4629
        %v4640 = vsel %vm1141, %v4615, %v4631
        %v4641 = vsel %vm1141, %v4617, %v4633
        %v4642 = vsel %vm1141, %v4619, %v4603
        %v4643 = vsel %vm1141, %v4621, %v4605
        %v4644 = vsel %vm1141, %v4623, %v4607
        %v4645 = vsel %vm1141, %v4625, %v4609
        %v4646 = vsel %vm1141, %v4627, %v4611
        %v4647 = vsel %vm1141, %v4629, %v4613
        %v4648 = vsel %vm1141, %v4631, %v4615
        %v4649 = vsel %vm1141, %v4633, %v4617
        %v4650 = vsel %vm1162, %v4642, 0.0
        %v4651 = vsel %vm1163, %v4634, 0.0
        %v4652 = vsel %vm1162, %v4643, 0.0
        %v4653 = vsel %vm1163, %v4635, 0.0
        %v4654 = vsel %vm1162, %v4644, 0.0
        %v4655 = vsel %vm1163, %v4636, 0.0
        %v4656 = vsel %vm1162, %v4645, 0.0
        %v4657 = vsel %vm1163, %v4637, 0.0
        %v4658 = vsel %vm1162, %v4646, 0.0
        %v4659 = vsel %vm1163, %v4638, 0.0
        %v4660 = vsel %vm1162, %v4647, 0.0
        %v4661 = vsel %vm1163, %v4639, 0.0
        %v4662 = vsel %vm1162, %v4648, 0.0
        %v4663 = vsel %vm1163, %v4640, 0.0
        %v4664 = vsel %vm1162, %v4649, 0.0
        %v4665 = vsel %vm1163, %v4641, 0.0
        %v4666 = vadd.f32 %v4586, %v4650
        %v4667 = vadd.f32 %v4587, %v4651
        %v4668 = vadd.f32 %v4588, %v4652
        %v4669 = vadd.f32 %v4589, %v4653
        %v4670 = vadd.f32 %v4590, %v4654
        %v4671 = vadd.f32 %v4591, %v4655
        %v4672 = vadd.f32 %v4592, %v4656
        %v4673 = vadd.f32 %v4593, %v4657
        %v4674 = vadd.f32 %v4594, %v4658
        %v4675 = vadd.f32 %v4595, %v4659
        %v4676 = vadd.f32 %v4596, %v4660
        %v4677 = vadd.f32 %v4597, %v4661
        %v4678 = vadd.f32 %v4598, %v4662
        %v4679 = vadd.f32 %v4599, %v4663
        %v4680 = vadd.f32 %v4600, %v4664
        %v4681 = vadd.f32 %v4601, %v4665
        %4682 = vrot.lane.b32.xlu0 %v4506, 127
        %v4683 = vpop.permute.xlu0 %4682
        %4684 = vrot.lane.b32.xlu0 %v4508, 127
        %v4685 = vpop.permute.xlu0 %4684
        %4686 = vrot.lane.b32.xlu0 %v4510, 127
        %v4687 = vpop.permute.xlu0 %4686
        %4688 = vrot.lane.b32.xlu0 %v4512, 127
        %v4689 = vpop.permute.xlu0 %4688
        %4690 = vrot.lane.b32.xlu0 %v4514, 127
        %v4691 = vpop.permute.xlu0 %4690
        %4692 = vrot.lane.b32.xlu0 %v4516, 127
        %v4693 = vpop.permute.xlu0 %4692
        %4694 = vrot.lane.b32.xlu0 %v4518, 127
        %v4695 = vpop.permute.xlu0 %4694
        %4696 = vrot.lane.b32.xlu0 %v4520, 127
        %v4697 = vpop.permute.xlu0 %4696
        %4698 = vrot.lane.b32.xlu0 %v4507, 127
        %v4699 = vpop.permute.xlu0 %4698
        %4700 = vrot.lane.b32.xlu0 %v4509, 127
        %v4701 = vpop.permute.xlu0 %4700
        %4702 = vrot.lane.b32.xlu0 %v4511, 127
        %v4703 = vpop.permute.xlu0 %4702
        %4704 = vrot.lane.b32.xlu0 %v4513, 127
        %v4705 = vpop.permute.xlu0 %4704
        %4706 = vrot.lane.b32.xlu0 %v4515, 127
        %v4707 = vpop.permute.xlu0 %4706
        %4708 = vrot.lane.b32.xlu0 %v4517, 127
        %v4709 = vpop.permute.xlu0 %4708
        %4710 = vrot.lane.b32.xlu0 %v4519, 127
        %v4711 = vpop.permute.xlu0 %4710
        %4712 = vrot.lane.b32.xlu0 %v4521, 127
        %v4713 = vpop.permute.xlu0 %4712
        %v4714 = vsel %vm1228, %v4683, %v4699
        %v4715 = vsel %vm1228, %v4685, %v4701
        %v4716 = vsel %vm1228, %v4687, %v4703
        %v4717 = vsel %vm1228, %v4689, %v4705
        %v4718 = vsel %vm1228, %v4691, %v4707
        %v4719 = vsel %vm1228, %v4693, %v4709
        %v4720 = vsel %vm1228, %v4695, %v4711
        %v4721 = vsel %vm1228, %v4697, %v4713
        %v4722 = vsel %vm1228, %v4699, %v4683
        %v4723 = vsel %vm1228, %v4701, %v4685
        %v4724 = vsel %vm1228, %v4703, %v4687
        %v4725 = vsel %vm1228, %v4705, %v4689
        %v4726 = vsel %vm1228, %v4707, %v4691
        %v4727 = vsel %vm1228, %v4709, %v4693
        %v4728 = vsel %vm1228, %v4711, %v4695
        %v4729 = vsel %vm1228, %v4713, %v4697
        %v4730 = vsel %vm1249, %v4714, 0.0
        %v4731 = vsel %vm1250, %v4722, 0.0
        %v4732 = vsel %vm1249, %v4715, 0.0
        %v4733 = vsel %vm1250, %v4723, 0.0
        %v4734 = vsel %vm1249, %v4716, 0.0
        %v4735 = vsel %vm1250, %v4724, 0.0
        %v4736 = vsel %vm1249, %v4717, 0.0
        %v4737 = vsel %vm1250, %v4725, 0.0
        %v4738 = vsel %vm1249, %v4718, 0.0
        %v4739 = vsel %vm1250, %v4726, 0.0
        %v4740 = vsel %vm1249, %v4719, 0.0
        %v4741 = vsel %vm1250, %v4727, 0.0
        %v4742 = vsel %vm1249, %v4720, 0.0
        %v4743 = vsel %vm1250, %v4728, 0.0
        %v4744 = vsel %vm1249, %v4721, 0.0
        %v4745 = vsel %vm1250, %v4729, 0.0
        %v4746 = vadd.f32 %v4666, %v4730
        %v4747 = vadd.f32 %v4667, %v4731
        %v4748 = vadd.f32 %v4668, %v4732
        %v4749 = vadd.f32 %v4669, %v4733
        %v4750 = vadd.f32 %v4670, %v4734
        %v4751 = vadd.f32 %v4671, %v4735
        %v4752 = vadd.f32 %v4672, %v4736
        %v4753 = vadd.f32 %v4673, %v4737
        %v4754 = vadd.f32 %v4674, %v4738
        %v4755 = vadd.f32 %v4675, %v4739
        %v4756 = vadd.f32 %v4676, %v4740
        %v4757 = vadd.f32 %v4677, %v4741
        %v4758 = vadd.f32 %v4678, %v4742
        %v4759 = vadd.f32 %v4679, %v4743
        %v4760 = vadd.f32 %v4680, %v4744
        %v4761 = vadd.f32 %v4681, %v4745
        %4762 = vrot.lane.b32.xlu0 %v4506, 126
        %v4763 = vpop.permute.xlu0 %4762
        %4764 = vrot.lane.b32.xlu0 %v4508, 126
        %v4765 = vpop.permute.xlu0 %4764
        %4766 = vrot.lane.b32.xlu0 %v4510, 126
        %v4767 = vpop.permute.xlu0 %4766
        %4768 = vrot.lane.b32.xlu0 %v4512, 126
        %v4769 = vpop.permute.xlu0 %4768
        %4770 = vrot.lane.b32.xlu0 %v4514, 126
        %v4771 = vpop.permute.xlu0 %4770
        %4772 = vrot.lane.b32.xlu0 %v4516, 126
        %v4773 = vpop.permute.xlu0 %4772
        %4774 = vrot.lane.b32.xlu0 %v4518, 126
        %v4775 = vpop.permute.xlu0 %4774
        %4776 = vrot.lane.b32.xlu0 %v4520, 126
        %v4777 = vpop.permute.xlu0 %4776
        %4778 = vrot.lane.b32.xlu0 %v4507, 126
        %v4779 = vpop.permute.xlu0 %4778
        %4780 = vrot.lane.b32.xlu0 %v4509, 126
        %v4781 = vpop.permute.xlu0 %4780
        %4782 = vrot.lane.b32.xlu0 %v4511, 126
        %v4783 = vpop.permute.xlu0 %4782
        %4784 = vrot.lane.b32.xlu0 %v4513, 126
        %v4785 = vpop.permute.xlu0 %4784
        %4786 = vrot.lane.b32.xlu0 %v4515, 126
        %v4787 = vpop.permute.xlu0 %4786
        %4788 = vrot.lane.b32.xlu0 %v4517, 126
        %v4789 = vpop.permute.xlu0 %4788
        %4790 = vrot.lane.b32.xlu0 %v4519, 126
        %v4791 = vpop.permute.xlu0 %4790
        %4792 = vrot.lane.b32.xlu0 %v4521, 126
        %v4793 = vpop.permute.xlu0 %4792
        %v4794 = vsel %vm1315, %v4763, %v4779
        %v4795 = vsel %vm1315, %v4765, %v4781
        %v4796 = vsel %vm1315, %v4767, %v4783
        %v4797 = vsel %vm1315, %v4769, %v4785
        %v4798 = vsel %vm1315, %v4771, %v4787
        %v4799 = vsel %vm1315, %v4773, %v4789
        %v4800 = vsel %vm1315, %v4775, %v4791
        %v4801 = vsel %vm1315, %v4777, %v4793
        %v4802 = vsel %vm1315, %v4779, %v4763
        %v4803 = vsel %vm1315, %v4781, %v4765
        %v4804 = vsel %vm1315, %v4783, %v4767
        %v4805 = vsel %vm1315, %v4785, %v4769
        %v4806 = vsel %vm1315, %v4787, %v4771
        %v4807 = vsel %vm1315, %v4789, %v4773
        %v4808 = vsel %vm1315, %v4791, %v4775
        %v4809 = vsel %vm1315, %v4793, %v4777
        %v4810 = vsel %vm1336, %v4794, 0.0
        %v4811 = vsel %vm1337, %v4802, 0.0
        %v4812 = vsel %vm1336, %v4795, 0.0
        %v4813 = vsel %vm1337, %v4803, 0.0
        %v4814 = vsel %vm1336, %v4796, 0.0
        %v4815 = vsel %vm1337, %v4804, 0.0
        %v4816 = vsel %vm1336, %v4797, 0.0
        %v4817 = vsel %vm1337, %v4805, 0.0
        %v4818 = vsel %vm1336, %v4798, 0.0
        %v4819 = vsel %vm1337, %v4806, 0.0
        %v4820 = vsel %vm1336, %v4799, 0.0
        %v4821 = vsel %vm1337, %v4807, 0.0
        %v4822 = vsel %vm1336, %v4800, 0.0
        %v4823 = vsel %vm1337, %v4808, 0.0
        %v4824 = vsel %vm1336, %v4801, 0.0
        %v4825 = vsel %vm1337, %v4809, 0.0
        %v4826 = vadd.f32 %v4746, %v4810
        %v4827 = vadd.f32 %v4747, %v4811
        %v4828 = vadd.f32 %v4748, %v4812
        %v4829 = vadd.f32 %v4749, %v4813
        %v4830 = vadd.f32 %v4750, %v4814
        %v4831 = vadd.f32 %v4751, %v4815
        %v4832 = vadd.f32 %v4752, %v4816
        %v4833 = vadd.f32 %v4753, %v4817
        %v4834 = vadd.f32 %v4754, %v4818
        %v4835 = vadd.f32 %v4755, %v4819
        %v4836 = vadd.f32 %v4756, %v4820
        %v4837 = vadd.f32 %v4757, %v4821
        %v4838 = vadd.f32 %v4758, %v4822
        %v4839 = vadd.f32 %v4759, %v4823
        %v4840 = vadd.f32 %v4760, %v4824
        %v4841 = vadd.f32 %v4761, %v4825
        %v4842 = vmul.f32 %v4826, 0.04
        %v4843 = vmul.f32 %v4827, 0.04
        %v4844 = vmul.f32 %v4828, 0.04
        %v4845 = vmul.f32 %v4829, 0.04
        %v4846 = vmul.f32 %v4830, 0.04
        %v4847 = vmul.f32 %v4831, 0.04
        %v4848 = vmul.f32 %v4832, 0.04
        %v4849 = vmul.f32 %v4833, 0.04
        %v4850 = vmul.f32 %v4834, 0.04
        %v4851 = vmul.f32 %v4835, 0.04
        %v4852 = vmul.f32 %v4836, 0.04
        %v4853 = vmul.f32 %v4837, 0.04
        %v4854 = vmul.f32 %v4838, 0.04
        %v4855 = vmul.f32 %v4839, 0.04
        %v4856 = vmul.f32 %v4840, 0.04
        %v4857 = vmul.f32 %v4841, 0.04
        %4858 = vrot.lane.b32.xlu0 %v4842, 16
        %v4859 = vpop.permute.xlu0 %4858
        %4860 = vrot.lane.b32.xlu0 %v4844, 16
        %v4861 = vpop.permute.xlu0 %4860
        %4862 = vrot.lane.b32.xlu0 %v4846, 16
        %v4863 = vpop.permute.xlu0 %4862
        %4864 = vrot.lane.b32.xlu0 %v4848, 16
        %v4865 = vpop.permute.xlu0 %4864
        %4866 = vrot.lane.b32.xlu0 %v4850, 16
        %v4867 = vpop.permute.xlu0 %4866
        %4868 = vrot.lane.b32.xlu0 %v4852, 16
        %v4869 = vpop.permute.xlu0 %4868
        %4870 = vrot.lane.b32.xlu0 %v4854, 16
        %v4871 = vpop.permute.xlu0 %4870
        %4872 = vrot.lane.b32.xlu0 %v4856, 16
        %v4873 = vpop.permute.xlu0 %4872
        %4874 = vrot.lane.b32.xlu0 %v4843, 16
        %v4875 = vpop.permute.xlu0 %4874
        %4876 = vrot.lane.b32.xlu0 %v4845, 16
        %v4877 = vpop.permute.xlu0 %4876
        %4878 = vrot.lane.b32.xlu0 %v4847, 16
        %v4879 = vpop.permute.xlu0 %4878
        %4880 = vrot.lane.b32.xlu0 %v4849, 16
        %v4881 = vpop.permute.xlu0 %4880
        %4882 = vrot.lane.b32.xlu0 %v4851, 16
        %v4883 = vpop.permute.xlu0 %4882
        %4884 = vrot.lane.b32.xlu0 %v4853, 16
        %v4885 = vpop.permute.xlu0 %4884
        %4886 = vrot.lane.b32.xlu0 %v4855, 16
        %v4887 = vpop.permute.xlu0 %4886
        %4888 = vrot.lane.b32.xlu0 %v4857, 16
        %v4889 = vpop.permute.xlu0 %4888
        %v4890 = vsel %vm793, %v4859, %v4875
        %v4891 = vsel %vm793, %v4861, %v4877
        %v4892 = vsel %vm793, %v4863, %v4879
        %v4893 = vsel %vm793, %v4865, %v4881
        %v4894 = vsel %vm793, %v4867, %v4883
        %v4895 = vsel %vm793, %v4869, %v4885
        %v4896 = vsel %vm793, %v4871, %v4887
        %v4897 = vsel %vm793, %v4873, %v4889
        %v4898 = vsel %vm793, %v4875, %v4859
        %v4899 = vsel %vm793, %v4877, %v4861
        %v4900 = vsel %vm793, %v4879, %v4863
        %v4901 = vsel %vm793, %v4881, %v4865
        %v4902 = vsel %vm793, %v4883, %v4867
        %v4903 = vsel %vm793, %v4885, %v4869
        %v4904 = vsel %vm793, %v4887, %v4871
        %v4905 = vsel %vm793, %v4889, %v4873
        %v4906 = vsel %vm814, %v4898, 0.0
        %v4907 = vsel %vm815, %v4890, 0.0
        %v4908 = vsel %vm814, %v4899, 0.0
        %v4909 = vsel %vm815, %v4891, 0.0
        %v4910 = vsel %vm814, %v4900, 0.0
        %v4911 = vsel %vm815, %v4892, 0.0
        %v4912 = vsel %vm814, %v4901, 0.0
        %v4913 = vsel %vm815, %v4893, 0.0
        %v4914 = vsel %vm814, %v4902, 0.0
        %v4915 = vsel %vm815, %v4894, 0.0
        %v4916 = vsel %vm814, %v4903, 0.0
        %v4917 = vsel %vm815, %v4895, 0.0
        %v4918 = vsel %vm814, %v4904, 0.0
        %v4919 = vsel %vm815, %v4896, 0.0
        %v4920 = vsel %vm814, %v4905, 0.0
        %v4921 = vsel %vm815, %v4897, 0.0
        %4922 = vrot.lane.b32.xlu0 %v4906, 1
        %v4923 = vpop.permute.xlu0 %4922
        %4924 = vrot.lane.b32.xlu0 %v4908, 1
        %v4925 = vpop.permute.xlu0 %4924
        %4926 = vrot.lane.b32.xlu0 %v4910, 1
        %v4927 = vpop.permute.xlu0 %4926
        %4928 = vrot.lane.b32.xlu0 %v4912, 1
        %v4929 = vpop.permute.xlu0 %4928
        %4930 = vrot.lane.b32.xlu0 %v4914, 1
        %v4931 = vpop.permute.xlu0 %4930
        %4932 = vrot.lane.b32.xlu0 %v4916, 1
        %v4933 = vpop.permute.xlu0 %4932
        %4934 = vrot.lane.b32.xlu0 %v4918, 1
        %v4935 = vpop.permute.xlu0 %4934
        %4936 = vrot.lane.b32.xlu0 %v4920, 1
        %v4937 = vpop.permute.xlu0 %4936
        %4938 = vrot.lane.b32.xlu0 %v4907, 1
        %v4939 = vpop.permute.xlu0 %4938
        %4940 = vrot.lane.b32.xlu0 %v4909, 1
        %v4941 = vpop.permute.xlu0 %4940
        %4942 = vrot.lane.b32.xlu0 %v4911, 1
        %v4943 = vpop.permute.xlu0 %4942
        %4944 = vrot.lane.b32.xlu0 %v4913, 1
        %v4945 = vpop.permute.xlu0 %4944
        %4946 = vrot.lane.b32.xlu0 %v4915, 1
        %v4947 = vpop.permute.xlu0 %4946
        %4948 = vrot.lane.b32.xlu0 %v4917, 1
        %v4949 = vpop.permute.xlu0 %4948
        %4950 = vrot.lane.b32.xlu0 %v4919, 1
        %v4951 = vpop.permute.xlu0 %4950
        %4952 = vrot.lane.b32.xlu0 %v4921, 1
        %v4953 = vpop.permute.xlu0 %4952
        %v4954 = vsel %vm1141, %v4923, %v4939
        %v4955 = vsel %vm1141, %v4925, %v4941
        %v4956 = vsel %vm1141, %v4927, %v4943
        %v4957 = vsel %vm1141, %v4929, %v4945
        %v4958 = vsel %vm1141, %v4931, %v4947
        %v4959 = vsel %vm1141, %v4933, %v4949
        %v4960 = vsel %vm1141, %v4935, %v4951
        %v4961 = vsel %vm1141, %v4937, %v4953
        %v4962 = vsel %vm1141, %v4939, %v4923
        %v4963 = vsel %vm1141, %v4941, %v4925
        %v4964 = vsel %vm1141, %v4943, %v4927
        %v4965 = vsel %vm1141, %v4945, %v4929
        %v4966 = vsel %vm1141, %v4947, %v4931
        %v4967 = vsel %vm1141, %v4949, %v4933
        %v4968 = vsel %vm1141, %v4951, %v4935
        %v4969 = vsel %vm1141, %v4953, %v4937
        %v4970 = vsel %vm1162, %v4962, 0.0
        %v4971 = vsel %vm1163, %v4954, 0.0
        %v4972 = vsel %vm1162, %v4963, 0.0
        %v4973 = vsel %vm1163, %v4955, 0.0
        %v4974 = vsel %vm1162, %v4964, 0.0
        %v4975 = vsel %vm1163, %v4956, 0.0
        %v4976 = vsel %vm1162, %v4965, 0.0
        %v4977 = vsel %vm1163, %v4957, 0.0
        %v4978 = vsel %vm1162, %v4966, 0.0
        %v4979 = vsel %vm1163, %v4958, 0.0
        %v4980 = vsel %vm1162, %v4967, 0.0
        %v4981 = vsel %vm1163, %v4959, 0.0
        %v4982 = vsel %vm1162, %v4968, 0.0
        %v4983 = vsel %vm1163, %v4960, 0.0
        %v4984 = vsel %vm1162, %v4969, 0.0
        %v4985 = vsel %vm1163, %v4961, 0.0
        %s4986 = scalar_lea.vmem [#allocation2], 288
        %v4987 = vld [vmem:[%s4986] sm:$0xff]
        %v4988 = vld [vmem:[%s4986 + $0x8] sm:$0xff]
        %v4989 = vld [vmem:[%s4986 + $0x10] sm:$0xff]
        %v4990 = vld [vmem:[%s4986 + $0x18] sm:$0xff]
        %s4991 = scalar_lea.vmem [#allocation2], 320
        %v4992 = vld [vmem:[%s4991] sm:$0xff]
        %v4993 = vld [vmem:[%s4991 + $0x8] sm:$0xff]
        %v4994 = vld [vmem:[%s4991 + $0x10] sm:$0xff]
        %v4995 = vld [vmem:[%s4991 + $0x18] sm:$0xff]
        %v4997 = vsel %vm1523, %v4992, 0
        %v5000 = vsel %vm1523, %v4993, 0
        %v5003 = vsel %vm1523, %v4994, 0
        %v5006 = vsel %vm1523, %v4995, 0
        %5008 = vmatprep.subr.mxu0 %v4907
        %5009 = vmatpush1.msra.mxu0 %v4906
        %5010 = vmatprep.subr.mxu0 %v4909
        %5011 = vmatpush1.msra.mxu0 %v4908
        %5012 = vmatprep.subr.mxu0 %v4911
        %5013 = vmatpush1.msra.mxu0 %v4910
        %5014 = vmatprep.subr.mxu0 %v4913
        %5015 = vmatpush1.msra.mxu0 %v4912
        %5016 = vmatprep.subr.mxu0 0.0
        %5017 = vmatpush1.msra.mxu0 0.0
        %5018 = vmatprep.subr.mxu0 0.0
        %5019 = vmatpush1.msra.mxu0 0.0
        %5020 = vmatprep.subr.mxu0 0.0
        %5021 = vmatpush1.msra.mxu0 0.0
        %5022 = vmatprep.subr.mxu0 0.0
        %5023 = vmatpush1.msra.mxu0 0.0
        %5024 = vmatprep.subr.mxu0 0.0
        %5025 = vmatpush1.msra.mxu0 0.0
        %5026 = vmatprep.subr.mxu0 0.0
        %5027 = vmatpush1.msra.mxu0 0.0
        %5028 = vmatprep.subr.mxu0 0.0
        %5029 = vmatpush1.msra.mxu0 0.0
        %5030 = vmatprep.subr.mxu0 0.0
        %5031 = vmatpush1.msra.mxu0 0.0
        %5032 = vmatprep.subr.mxu0 0.0
        %5033 = vmatpush1.msra.mxu0 0.0
        %5034 = vmatprep.subr.mxu0 0.0
        %5035 = vmatpush1.msra.mxu0 0.0
        %5036 = vmatprep.subr.mxu0 0.0
        %5037 = vmatpush1.msra.mxu0 0.0
        %5038 = vmatprep.subr.mxu0 0.0
        %5039 = vmatpush1.msra.mxu0 0.0
        %5040 = vmatprep.subr.mxu0 0.0
        %5041 = vmatpush1.msra.mxu0 0.0
        %5042 = vmatprep.subr.mxu0 0.0
        %5043 = vmatpush1.msra.mxu0 0.0
        %5044 = vmatprep.subr.mxu0 0.0
        %5045 = vmatpush1.msra.mxu0 0.0
        %5046 = vmatprep.subr.mxu0 0.0
        %5047 = vmatpush1.msra.mxu0 0.0
        %5048 = vmatprep.subr.mxu0 0.0
        %5049 = vmatpush1.msra.mxu0 0.0
        %5050 = vmatprep.subr.mxu0 0.0
        %5051 = vmatpush1.msra.mxu0 0.0
        %5052 = vmatprep.subr.mxu0 0.0
        %5053 = vmatpush1.msra.mxu0 0.0
        %5054 = vmatprep.subr.mxu0 0.0
        %5055 = vmatpush1.msra.mxu0 0.0
        %5056 = vmatprep.subr.mxu0 0.0
        %5057 = vmatpush1.msra.mxu0 0.0
        %5058 = vmatprep.subr.mxu0 0.0
        %5059 = vmatpush1.msra.mxu0 0.0
        %5060 = vmatprep.subr.mxu0 0.0
        %5061 = vmatpush1.msra.mxu0 0.0
        %5062 = vmatprep.subr.mxu0 0.0
        %5063 = vmatpush1.msra.mxu0 0.0
        %5064 = vmatprep.subr.mxu0 0.0
        %5065 = vmatpush1.msra.mxu0 0.0
        %5066 = vmatprep.subr.mxu0 0.0
        %5067 = vmatpush1.msra.mxu0 0.0
        %5068 = vmatprep.subr.mxu0 0.0
        %5069 = vmatpush1.msra.mxu0 0.0
        %5070 = vmatprep.subr.mxu0 0.0
        %5071 = vmatpush1.msra.mxu0 0.0
        %5072 = vmatprep.mubr.f32.mxu0 0.0
        %5073 = vmatmul.mubr.f32.gmra.mrb[0].mxu0 %v4997
        %v5074 = vpop.f32.mrb[0].mxu0
        %v5075 = vadd.f32 0.0, %v5074
        %v5076 = vpop.f32.mrb[0].mxu0
        %v5077 = vadd.f32 0.0, %v5076
        %5078 = vmatprep.mubr.f32.mxu0 0.0
        %5079 = vmatmul.mubr.f32.gmra.mrb[0].mxu0 %v5000
        %v5080 = vpop.f32.mrb[0].mxu0
        %v5081 = vadd.f32 0.0, %v5080
        %v5082 = vpop.f32.mrb[0].mxu0
        %v5083 = vadd.f32 0.0, %v5082
        %5084 = vmatprep.mubr.f32.mxu0 0.0
        %5085 = vmatmul.mubr.f32.gmra.mrb[0].mxu0 %v5003
        %v5086 = vpop.f32.mrb[0].mxu0
        %v5087 = vadd.f32 0.0, %v5086
        %v5088 = vpop.f32.mrb[0].mxu0
        %v5089 = vadd.f32 0.0, %v5088
        %5090 = vmatprep.mubr.f32.mxu0 0.0
        %5091 = vmatmul.mubr.f32.gmra.mrb[0].mxu0 %v5006
        %v5092 = vpop.f32.mrb[0].mxu0
        %v5093 = vadd.f32 0.0, %v5092
        %v5094 = vpop.f32.mrb[0].mxu0
        %v5095 = vadd.f32 0.0, %v5094
        %5096 = vdwg.mxu0
        %v5098 = vsel %vm1523, %v4987, 0
        %v5101 = vsel %vm1523, %v4988, 0
        %v5104 = vsel %vm1523, %v4989, 0
        %v5107 = vsel %vm1523, %v4990, 0
        %5109 = vmatprep.subr.mxu0 %v4971
        %5110 = vmatpush1.msra.mxu0 %v4970
        %5111 = vmatprep.subr.mxu0 %v4973
        %5112 = vmatpush1.msra.mxu0 %v4972
        %5113 = vmatprep.subr.mxu0 %v4975
        %5114 = vmatpush1.msra.mxu0 %v4974
        %5115 = vmatprep.subr.mxu0 %v4977
        %5116 = vmatpush1.msra.mxu0 %v4976
        %5117 = vmatprep.subr.mxu0 0.0
        %5118 = vmatpush1.msra.mxu0 0.0
        %5119 = vmatprep.subr.mxu0 0.0
        %5120 = vmatpush1.msra.mxu0 0.0
        %5121 = vmatprep.subr.mxu0 0.0
        %5122 = vmatpush1.msra.mxu0 0.0
        %5123 = vmatprep.subr.mxu0 0.0
        %5124 = vmatpush1.msra.mxu0 0.0
        %5125 = vmatprep.subr.mxu0 0.0
        %5126 = vmatpush1.msra.mxu0 0.0
        %5127 = vmatprep.subr.mxu0 0.0
        %5128 = vmatpush1.msra.mxu0 0.0
        %5129 = vmatprep.subr.mxu0 0.0
        %5130 = vmatpush1.msra.mxu0 0.0
        %5131 = vmatprep.subr.mxu0 0.0
        %5132 = vmatpush1.msra.mxu0 0.0
        %5133 = vmatprep.subr.mxu0 0.0
        %5134 = vmatpush1.msra.mxu0 0.0
        %5135 = vmatprep.subr.mxu0 0.0
        %5136 = vmatpush1.msra.mxu0 0.0
        %5137 = vmatprep.subr.mxu0 0.0
        %5138 = vmatpush1.msra.mxu0 0.0
        %5139 = vmatprep.subr.mxu0 0.0
        %5140 = vmatpush1.msra.mxu0 0.0
        %5141 = vmatprep.subr.mxu0 0.0
        %5142 = vmatpush1.msra.mxu0 0.0
        %5143 = vmatprep.subr.mxu0 0.0
        %5144 = vmatpush1.msra.mxu0 0.0
        %5145 = vmatprep.subr.mxu0 0.0
        %5146 = vmatpush1.msra.mxu0 0.0
        %5147 = vmatprep.subr.mxu0 0.0
        %5148 = vmatpush1.msra.mxu0 0.0
        %5149 = vmatprep.subr.mxu0 0.0
        %5150 = vmatpush1.msra.mxu0 0.0
        %5151 = vmatprep.subr.mxu0 0.0
        %5152 = vmatpush1.msra.mxu0 0.0
        %5153 = vmatprep.subr.mxu0 0.0
        %5154 = vmatpush1.msra.mxu0 0.0
        %5155 = vmatprep.subr.mxu0 0.0
        %5156 = vmatpush1.msra.mxu0 0.0
        %5157 = vmatprep.subr.mxu0 0.0
        %5158 = vmatpush1.msra.mxu0 0.0
        %5159 = vmatprep.subr.mxu0 0.0
        %5160 = vmatpush1.msra.mxu0 0.0
        %5161 = vmatprep.subr.mxu0 0.0
        %5162 = vmatpush1.msra.mxu0 0.0
        %5163 = vmatprep.subr.mxu0 0.0
        %5164 = vmatpush1.msra.mxu0 0.0
        %5165 = vmatprep.subr.mxu0 0.0
        %5166 = vmatpush1.msra.mxu0 0.0
        %5167 = vmatprep.subr.mxu0 0.0
        %5168 = vmatpush1.msra.mxu0 0.0
        %5169 = vmatprep.subr.mxu0 0.0
        %5170 = vmatpush1.msra.mxu0 0.0
        %5171 = vmatprep.subr.mxu0 0.0
        %5172 = vmatpush1.msra.mxu0 0.0
        %5173 = vmatprep.mubr.f32.mxu0 0.0
        %5174 = vmatmul.mubr.f32.gmra.mrb[0].mxu0 %v5098
        %v5175 = vpop.f32.mrb[0].mxu0
        %v5176 = vadd.f32 %v5075, %v5175
        %v5177 = vpop.f32.mrb[0].mxu0
        %v5178 = vadd.f32 %v5077, %v5177
        %5179 = vmatprep.mubr.f32.mxu0 0.0
        %5180 = vmatmul.mubr.f32.gmra.mrb[0].mxu0 %v5101
        %v5181 = vpop.f32.mrb[0].mxu0
        %v5182 = vadd.f32 %v5081, %v5181
        %v5183 = vpop.f32.mrb[0].mxu0
        %v5184 = vadd.f32 %v5083, %v5183
        %5185 = vmatprep.mubr.f32.mxu0 0.0
        %5186 = vmatmul.mubr.f32.gmra.mrb[0].mxu0 %v5104
        %v5187 = vpop.f32.mrb[0].mxu0
        %v5188 = vadd.f32 %v5087, %v5187
        %v5189 = vpop.f32.mrb[0].mxu0
        %v5190 = vadd.f32 %v5089, %v5189
        %5191 = vmatprep.mubr.f32.mxu0 0.0
        %5192 = vmatmul.mubr.f32.gmra.mrb[0].mxu0 %v5107
        %v5193 = vpop.f32.mrb[0].mxu0
        %v5194 = vadd.f32 %v5093, %v5193
        %v5195 = vpop.f32.mrb[0].mxu0
        %v5196 = vadd.f32 %v5095, %v5195
        %5197 = vdwg.mxu0
        %5198 = vmatprep.subr.mxu0 %v4915
        %5199 = vmatpush1.msra.mxu0 %v4914
        %5200 = vmatprep.subr.mxu0 %v4917
        %5201 = vmatpush1.msra.mxu0 %v4916
        %5202 = vmatprep.subr.mxu0 %v4919
        %5203 = vmatpush1.msra.mxu0 %v4918
        %5204 = vmatprep.subr.mxu0 %v4921
        %5205 = vmatpush1.msra.mxu0 %v4920
        %5206 = vmatprep.subr.mxu0 0.0
        %5207 = vmatpush1.msra.mxu0 0.0
        %5208 = vmatprep.subr.mxu0 0.0
        %5209 = vmatpush1.msra.mxu0 0.0
        %5210 = vmatprep.subr.mxu0 0.0
        %5211 = vmatpush1.msra.mxu0 0.0
        %5212 = vmatprep.subr.mxu0 0.0
        %5213 = vmatpush1.msra.mxu0 0.0
        %5214 = vmatprep.subr.mxu0 0.0
        %5215 = vmatpush1.msra.mxu0 0.0
        %5216 = vmatprep.subr.mxu0 0.0
        %5217 = vmatpush1.msra.mxu0 0.0
        %5218 = vmatprep.subr.mxu0 0.0
        %5219 = vmatpush1.msra.mxu0 0.0
        %5220 = vmatprep.subr.mxu0 0.0
        %5221 = vmatpush1.msra.mxu0 0.0
        %5222 = vmatprep.subr.mxu0 0.0
        %5223 = vmatpush1.msra.mxu0 0.0
        %5224 = vmatprep.subr.mxu0 0.0
        %5225 = vmatpush1.msra.mxu0 0.0
        %5226 = vmatprep.subr.mxu0 0.0
        %5227 = vmatpush1.msra.mxu0 0.0
        %5228 = vmatprep.subr.mxu0 0.0
        %5229 = vmatpush1.msra.mxu0 0.0
        %5230 = vmatprep.subr.mxu0 0.0
        %5231 = vmatpush1.msra.mxu0 0.0
        %5232 = vmatprep.subr.mxu0 0.0
        %5233 = vmatpush1.msra.mxu0 0.0
        %5234 = vmatprep.subr.mxu0 0.0
        %5235 = vmatpush1.msra.mxu0 0.0
        %5236 = vmatprep.subr.mxu0 0.0
        %5237 = vmatpush1.msra.mxu0 0.0
        %5238 = vmatprep.subr.mxu0 0.0
        %5239 = vmatpush1.msra.mxu0 0.0
        %5240 = vmatprep.subr.mxu0 0.0
        %5241 = vmatpush1.msra.mxu0 0.0
        %5242 = vmatprep.subr.mxu0 0.0
        %5243 = vmatpush1.msra.mxu0 0.0
        %5244 = vmatprep.subr.mxu0 0.0
        %5245 = vmatpush1.msra.mxu0 0.0
        %5246 = vmatprep.subr.mxu0 0.0
        %5247 = vmatpush1.msra.mxu0 0.0
        %5248 = vmatprep.subr.mxu0 0.0
        %5249 = vmatpush1.msra.mxu0 0.0
        %5250 = vmatprep.subr.mxu0 0.0
        %5251 = vmatpush1.msra.mxu0 0.0
        %5252 = vmatprep.subr.mxu0 0.0
        %5253 = vmatpush1.msra.mxu0 0.0
        %5254 = vmatprep.subr.mxu0 0.0
        %5255 = vmatpush1.msra.mxu0 0.0
        %5256 = vmatprep.subr.mxu0 0.0
        %5257 = vmatpush1.msra.mxu0 0.0
        %5258 = vmatprep.subr.mxu0 0.0
        %5259 = vmatpush1.msra.mxu0 0.0
        %5260 = vmatprep.subr.mxu0 0.0
        %5261 = vmatpush1.msra.mxu0 0.0
        %5262 = vmatprep.mubr.f32.mxu0 0.0
        %5263 = vmatmul.mubr.f32.gmra.mrb[0].mxu0 %v4997
        %v5264 = vpop.f32.mrb[0].mxu0
        %v5265 = vadd.f32 0.0, %v5264
        %v5266 = vpop.f32.mrb[0].mxu0
        %v5267 = vadd.f32 0.0, %v5266
        %5268 = vmatprep.mubr.f32.mxu0 0.0
        %5269 = vmatmul.mubr.f32.gmra.mrb[0].mxu0 %v5000
        %v5270 = vpop.f32.mrb[0].mxu0
        %v5271 = vadd.f32 0.0, %v5270
        %v5272 = vpop.f32.mrb[0].mxu0
        %v5273 = vadd.f32 0.0, %v5272
        %5274 = vmatprep.mubr.f32.mxu0 0.0
        %5275 = vmatmul.mubr.f32.gmra.mrb[0].mxu0 %v5003
        %v5276 = vpop.f32.mrb[0].mxu0
        %v5277 = vadd.f32 0.0, %v5276
        %v5278 = vpop.f32.mrb[0].mxu0
        %v5279 = vadd.f32 0.0, %v5278
        %5280 = vmatprep.mubr.f32.mxu0 0.0
        %5281 = vmatmul.mubr.f32.gmra.mrb[0].mxu0 %v5006
        %v5282 = vpop.f32.mrb[0].mxu0
        %v5283 = vadd.f32 0.0, %v5282
        %v5284 = vpop.f32.mrb[0].mxu0
        %v5285 = vadd.f32 0.0, %v5284
        %5286 = vdwg.mxu0
        %5287 = vmatprep.subr.mxu0 %v4979
        %5288 = vmatpush1.msra.mxu0 %v4978
        %5289 = vmatprep.subr.mxu0 %v4981
        %5290 = vmatpush1.msra.mxu0 %v4980
        %5291 = vmatprep.subr.mxu0 %v4983
        %5292 = vmatpush1.msra.mxu0 %v4982
        %5293 = vmatprep.subr.mxu0 %v4985
        %5294 = vmatpush1.msra.mxu0 %v4984
        %5295 = vmatprep.subr.mxu0 0.0
        %5296 = vmatpush1.msra.mxu0 0.0
        %5297 = vmatprep.subr.mxu0 0.0
        %5298 = vmatpush1.msra.mxu0 0.0
        %5299 = vmatprep.subr.mxu0 0.0
        %5300 = vmatpush1.msra.mxu0 0.0
        %5301 = vmatprep.subr.mxu0 0.0
        %5302 = vmatpush1.msra.mxu0 0.0
        %5303 = vmatprep.subr.mxu0 0.0
        %5304 = vmatpush1.msra.mxu0 0.0
        %5305 = vmatprep.subr.mxu0 0.0
        %5306 = vmatpush1.msra.mxu0 0.0
        %5307 = vmatprep.subr.mxu0 0.0
        %5308 = vmatpush1.msra.mxu0 0.0
        %5309 = vmatprep.subr.mxu0 0.0
        %5310 = vmatpush1.msra.mxu0 0.0
        %5311 = vmatprep.subr.mxu0 0.0
        %5312 = vmatpush1.msra.mxu0 0.0
        %5313 = vmatprep.subr.mxu0 0.0
        %5314 = vmatpush1.msra.mxu0 0.0
        %5315 = vmatprep.subr.mxu0 0.0
        %5316 = vmatpush1.msra.mxu0 0.0
        %5317 = vmatprep.subr.mxu0 0.0
        %5318 = vmatpush1.msra.mxu0 0.0
        %5319 = vmatprep.subr.mxu0 0.0
        %5320 = vmatpush1.msra.mxu0 0.0
        %5321 = vmatprep.subr.mxu0 0.0
        %5322 = vmatpush1.msra.mxu0 0.0
        %5323 = vmatprep.subr.mxu0 0.0
        %5324 = vmatpush1.msra.mxu0 0.0
        %5325 = vmatprep.subr.mxu0 0.0
        %5326 = vmatpush1.msra.mxu0 0.0
        %5327 = vmatprep.subr.mxu0 0.0
        %5328 = vmatpush1.msra.mxu0 0.0
        %5329 = vmatprep.subr.mxu0 0.0
        %5330 = vmatpush1.msra.mxu0 0.0
        %5331 = vmatprep.subr.mxu0 0.0
        %5332 = vmatpush1.msra.mxu0 0.0
        %5333 = vmatprep.subr.mxu0 0.0
        %5334 = vmatpush1.msra.mxu0 0.0
        %5335 = vmatprep.subr.mxu0 0.0
        %5336 = vmatpush1.msra.mxu0 0.0
        %5337 = vmatprep.subr.mxu0 0.0
        %5338 = vmatpush1.msra.mxu0 0.0
        %5339 = vmatprep.subr.mxu0 0.0
        %5340 = vmatpush1.msra.mxu0 0.0
        %5341 = vmatprep.subr.mxu0 0.0
        %5342 = vmatpush1.msra.mxu0 0.0
        %5343 = vmatprep.subr.mxu0 0.0
        %5344 = vmatpush1.msra.mxu0 0.0
        %5345 = vmatprep.subr.mxu0 0.0
        %5346 = vmatpush1.msra.mxu0 0.0
        %5347 = vmatprep.subr.mxu0 0.0
        %5348 = vmatpush1.msra.mxu0 0.0
        %5349 = vmatprep.subr.mxu0 0.0
        %5350 = vmatpush1.msra.mxu0 0.0
        %5351 = vmatprep.mubr.f32.mxu0 0.0
        %5352 = vmatmul.mubr.f32.gmra.mrb[0].mxu0 %v5098
        %v5353 = vpop.f32.mrb[0].mxu0
        %v5354 = vadd.f32 %v5265, %v5353
        %v5355 = vpop.f32.mrb[0].mxu0
        %v5356 = vadd.f32 %v5267, %v5355
        %5357 = vmatprep.mubr.f32.mxu0 0.0
        %5358 = vmatmul.mubr.f32.gmra.mrb[0].mxu0 %v5101
        %v5359 = vpop.f32.mrb[0].mxu0
        %v5360 = vadd.f32 %v5271, %v5359
        %v5361 = vpop.f32.mrb[0].mxu0
        %v5362 = vadd.f32 %v5273, %v5361
        %5363 = vmatprep.mubr.f32.mxu0 0.0
        %5364 = vmatmul.mubr.f32.gmra.mrb[0].mxu0 %v5104
        %v5365 = vpop.f32.mrb[0].mxu0
        %v5366 = vadd.f32 %v5277, %v5365
        %v5367 = vpop.f32.mrb[0].mxu0
        %v5368 = vadd.f32 %v5279, %v5367
        %5369 = vmatprep.mubr.f32.mxu0 0.0
        %5370 = vmatmul.mubr.f32.gmra.mrb[0].mxu0 %v5107
        %v5371 = vpop.f32.mrb[0].mxu0
        %v5372 = vadd.f32 %v5283, %v5371
        %v5373 = vpop.f32.mrb[0].mxu0
        %v5374 = vadd.f32 %v5285, %v5373
        %5375 = vdwg.mxu0
        %5376 = vrot.lane.b32.xlu0 %v4906, 127
        %v5377 = vpop.permute.xlu0 %5376
        %5378 = vrot.lane.b32.xlu0 %v4908, 127
        %v5379 = vpop.permute.xlu0 %5378
        %5380 = vrot.lane.b32.xlu0 %v4910, 127
        %v5381 = vpop.permute.xlu0 %5380
        %5382 = vrot.lane.b32.xlu0 %v4912, 127
        %v5383 = vpop.permute.xlu0 %5382
        %5384 = vrot.lane.b32.xlu0 %v4914, 127
        %v5385 = vpop.permute.xlu0 %5384
        %5386 = vrot.lane.b32.xlu0 %v4916, 127
        %v5387 = vpop.permute.xlu0 %5386
        %5388 = vrot.lane.b32.xlu0 %v4918, 127
        %v5389 = vpop.permute.xlu0 %5388
        %5390 = vrot.lane.b32.xlu0 %v4920, 127
        %v5391 = vpop.permute.xlu0 %5390
        %5392 = vrot.lane.b32.xlu0 %v4907, 127
        %v5393 = vpop.permute.xlu0 %5392
        %5394 = vrot.lane.b32.xlu0 %v4909, 127
        %v5395 = vpop.permute.xlu0 %5394
        %5396 = vrot.lane.b32.xlu0 %v4911, 127
        %v5397 = vpop.permute.xlu0 %5396
        %5398 = vrot.lane.b32.xlu0 %v4913, 127
        %v5399 = vpop.permute.xlu0 %5398
        %5400 = vrot.lane.b32.xlu0 %v4915, 127
        %v5401 = vpop.permute.xlu0 %5400
        %5402 = vrot.lane.b32.xlu0 %v4917, 127
        %v5403 = vpop.permute.xlu0 %5402
        %5404 = vrot.lane.b32.xlu0 %v4919, 127
        %v5405 = vpop.permute.xlu0 %5404
        %5406 = vrot.lane.b32.xlu0 %v4921, 127
        %v5407 = vpop.permute.xlu0 %5406
        %v5408 = vsel %vm1228, %v5377, %v5393
        %v5409 = vsel %vm1228, %v5379, %v5395
        %v5410 = vsel %vm1228, %v5381, %v5397
        %v5411 = vsel %vm1228, %v5383, %v5399
        %v5412 = vsel %vm1228, %v5385, %v5401
        %v5413 = vsel %vm1228, %v5387, %v5403
        %v5414 = vsel %vm1228, %v5389, %v5405
        %v5415 = vsel %vm1228, %v5391, %v5407
        %v5416 = vsel %vm1228, %v5393, %v5377
        %v5417 = vsel %vm1228, %v5395, %v5379
        %v5418 = vsel %vm1228, %v5397, %v5381
        %v5419 = vsel %vm1228, %v5399, %v5383
        %v5420 = vsel %vm1228, %v5401, %v5385
        %v5421 = vsel %vm1228, %v5403, %v5387
        %v5422 = vsel %vm1228, %v5405, %v5389
        %v5423 = vsel %vm1228, %v5407, %v5391
        %v5424 = vsel %vm1249, %v5408, 0.0
        %v5425 = vsel %vm1250, %v5416, 0.0
        %v5426 = vsel %vm1249, %v5409, 0.0
        %v5427 = vsel %vm1250, %v5417, 0.0
        %v5428 = vsel %vm1249, %v5410, 0.0
        %v5429 = vsel %vm1250, %v5418, 0.0
        %v5430 = vsel %vm1249, %v5411, 0.0
        %v5431 = vsel %vm1250, %v5419, 0.0
        %v5432 = vsel %vm1249, %v5412, 0.0
        %v5433 = vsel %vm1250, %v5420, 0.0
        %v5434 = vsel %vm1249, %v5413, 0.0
        %v5435 = vsel %vm1250, %v5421, 0.0
        %v5436 = vsel %vm1249, %v5414, 0.0
        %v5437 = vsel %vm1250, %v5422, 0.0
        %v5438 = vsel %vm1249, %v5415, 0.0
        %v5439 = vsel %vm1250, %v5423, 0.0
        %s5440 = scalar_lea.vmem [#allocation2], 352
        %v5441 = vld [vmem:[%s5440] sm:$0xff]
        %v5442 = vld [vmem:[%s5440 + $0x8] sm:$0xff]
        %v5443 = vld [vmem:[%s5440 + $0x10] sm:$0xff]
        %v5444 = vld [vmem:[%s5440 + $0x18] sm:$0xff]
        %v5446 = vsel %vm1523, %v5441, 0
        %v5449 = vsel %vm1523, %v5442, 0
        %v5452 = vsel %vm1523, %v5443, 0
        %v5455 = vsel %vm1523, %v5444, 0
        %5457 = vmatprep.subr.mxu0 %v5425
        %5458 = vmatpush1.msra.mxu0 %v5424
        %5459 = vmatprep.subr.mxu0 %v5427
        %5460 = vmatpush1.msra.mxu0 %v5426
        %5461 = vmatprep.subr.mxu0 %v5429
        %5462 = vmatpush1.msra.mxu0 %v5428
        %5463 = vmatprep.subr.mxu0 %v5431
        %5464 = vmatpush1.msra.mxu0 %v5430
        %5465 = vmatprep.subr.mxu0 0.0
        %5466 = vmatpush1.msra.mxu0 0.0
        %5467 = vmatprep.subr.mxu0 0.0
        %5468 = vmatpush1.msra.mxu0 0.0
        %5469 = vmatprep.subr.mxu0 0.0
        %5470 = vmatpush1.msra.mxu0 0.0
        %5471 = vmatprep.subr.mxu0 0.0
        %5472 = vmatpush1.msra.mxu0 0.0
        %5473 = vmatprep.subr.mxu0 0.0
        %5474 = vmatpush1.msra.mxu0 0.0
        %5475 = vmatprep.subr.mxu0 0.0
        %5476 = vmatpush1.msra.mxu0 0.0
        %5477 = vmatprep.subr.mxu0 0.0
        %5478 = vmatpush1.msra.mxu0 0.0
        %5479 = vmatprep.subr.mxu0 0.0
        %5480 = vmatpush1.msra.mxu0 0.0
        %5481 = vmatprep.subr.mxu0 0.0
        %5482 = vmatpush1.msra.mxu0 0.0
        %5483 = vmatprep.subr.mxu0 0.0
        %5484 = vmatpush1.msra.mxu0 0.0
        %5485 = vmatprep.subr.mxu0 0.0
        %5486 = vmatpush1.msra.mxu0 0.0
        %5487 = vmatprep.subr.mxu0 0.0
        %5488 = vmatpush1.msra.mxu0 0.0
        %5489 = vmatprep.subr.mxu0 0.0
        %5490 = vmatpush1.msra.mxu0 0.0
        %5491 = vmatprep.subr.mxu0 0.0
        %5492 = vmatpush1.msra.mxu0 0.0
        %5493 = vmatprep.subr.mxu0 0.0
        %5494 = vmatpush1.msra.mxu0 0.0
        %5495 = vmatprep.subr.mxu0 0.0
        %5496 = vmatpush1.msra.mxu0 0.0
        %5497 = vmatprep.subr.mxu0 0.0
        %5498 = vmatpush1.msra.mxu0 0.0
        %5499 = vmatprep.subr.mxu0 0.0
        %5500 = vmatpush1.msra.mxu0 0.0
        %5501 = vmatprep.subr.mxu0 0.0
        %5502 = vmatpush1.msra.mxu0 0.0
        %5503 = vmatprep.subr.mxu0 0.0
        %5504 = vmatpush1.msra.mxu0 0.0
        %5505 = vmatprep.subr.mxu0 0.0
        %5506 = vmatpush1.msra.mxu0 0.0
        %5507 = vmatprep.subr.mxu0 0.0
        %5508 = vmatpush1.msra.mxu0 0.0
        %5509 = vmatprep.subr.mxu0 0.0
        %5510 = vmatpush1.msra.mxu0 0.0
        %5511 = vmatprep.subr.mxu0 0.0
        %5512 = vmatpush1.msra.mxu0 0.0
        %5513 = vmatprep.subr.mxu0 0.0
        %5514 = vmatpush1.msra.mxu0 0.0
        %5515 = vmatprep.subr.mxu0 0.0
        %5516 = vmatpush1.msra.mxu0 0.0
        %5517 = vmatprep.subr.mxu0 0.0
        %5518 = vmatpush1.msra.mxu0 0.0
        %5519 = vmatprep.subr.mxu0 0.0
        %5520 = vmatpush1.msra.mxu0 0.0
        %5521 = vmatprep.mubr.f32.mxu0 0.0
        %5522 = vmatmul.mubr.f32.gmra.mrb[0].mxu0 %v5446
        %v5523 = vpop.f32.mrb[0].mxu0
        %v5524 = vadd.f32 0.0, %v5523
        %v5525 = vpop.f32.mrb[0].mxu0
        %v5526 = vadd.f32 0.0, %v5525
        %5527 = vmatprep.mubr.f32.mxu0 0.0
        %5528 = vmatmul.mubr.f32.gmra.mrb[0].mxu0 %v5449
        %v5529 = vpop.f32.mrb[0].mxu0
        %v5530 = vadd.f32 0.0, %v5529
        %v5531 = vpop.f32.mrb[0].mxu0
        %v5532 = vadd.f32 0.0, %v5531
        %5533 = vmatprep.mubr.f32.mxu0 0.0
        %5534 = vmatmul.mubr.f32.gmra.mrb[0].mxu0 %v5452
        %v5535 = vpop.f32.mrb[0].mxu0
        %v5536 = vadd.f32 0.0, %v5535
        %v5537 = vpop.f32.mrb[0].mxu0
        %v5538 = vadd.f32 0.0, %v5537
        %5539 = vmatprep.mubr.f32.mxu0 0.0
        %5540 = vmatmul.mubr.f32.gmra.mrb[0].mxu0 %v5455
        %v5541 = vpop.f32.mrb[0].mxu0
        %v5542 = vadd.f32 0.0, %v5541
        %v5543 = vpop.f32.mrb[0].mxu0
        %v5544 = vadd.f32 0.0, %v5543
        %5545 = vdwg.mxu0
        %v5546 = vadd.f32 %v5176, %v5524
        %v5547 = vadd.f32 %v5178, %v5526
        %v5548 = vadd.f32 %v5182, %v5530
        %v5549 = vadd.f32 %v5184, %v5532
        %v5550 = vadd.f32 %v5188, %v5536
        %v5551 = vadd.f32 %v5190, %v5538
        %v5552 = vadd.f32 %v5194, %v5542
        %v5553 = vadd.f32 %v5196, %v5544
        %5554 = vmatprep.subr.mxu0 %v5433
        %5555 = vmatpush1.msra.mxu0 %v5432
        %5556 = vmatprep.subr.mxu0 %v5435
        %5557 = vmatpush1.msra.mxu0 %v5434
        %5558 = vmatprep.subr.mxu0 %v5437
        %5559 = vmatpush1.msra.mxu0 %v5436
        %5560 = vmatprep.subr.mxu0 %v5439
        %5561 = vmatpush1.msra.mxu0 %v5438
        %5562 = vmatprep.subr.mxu0 0.0
        %5563 = vmatpush1.msra.mxu0 0.0
        %5564 = vmatprep.subr.mxu0 0.0
        %5565 = vmatpush1.msra.mxu0 0.0
        %5566 = vmatprep.subr.mxu0 0.0
        %5567 = vmatpush1.msra.mxu0 0.0
        %5568 = vmatprep.subr.mxu0 0.0
        %5569 = vmatpush1.msra.mxu0 0.0
        %5570 = vmatprep.subr.mxu0 0.0
        %5571 = vmatpush1.msra.mxu0 0.0
        %5572 = vmatprep.subr.mxu0 0.0
        %5573 = vmatpush1.msra.mxu0 0.0
        %5574 = vmatprep.subr.mxu0 0.0
        %5575 = vmatpush1.msra.mxu0 0.0
        %5576 = vmatprep.subr.mxu0 0.0
        %5577 = vmatpush1.msra.mxu0 0.0
        %5578 = vmatprep.subr.mxu0 0.0
        %5579 = vmatpush1.msra.mxu0 0.0
        %5580 = vmatprep.subr.mxu0 0.0
        %5581 = vmatpush1.msra.mxu0 0.0
        %5582 = vmatprep.subr.mxu0 0.0
        %5583 = vmatpush1.msra.mxu0 0.0
        %5584 = vmatprep.subr.mxu0 0.0
        %5585 = vmatpush1.msra.mxu0 0.0
        %5586 = vmatprep.subr.mxu0 0.0
        %5587 = vmatpush1.msra.mxu0 0.0
        %5588 = vmatprep.subr.mxu0 0.0
        %5589 = vmatpush1.msra.mxu0 0.0
        %5590 = vmatprep.subr.mxu0 0.0
        %5591 = vmatpush1.msra.mxu0 0.0
        %5592 = vmatprep.subr.mxu0 0.0
        %5593 = vmatpush1.msra.mxu0 0.0
        %5594 = vmatprep.subr.mxu0 0.0
        %5595 = vmatpush1.msra.mxu0 0.0
        %5596 = vmatprep.subr.mxu0 0.0
        %5597 = vmatpush1.msra.mxu0 0.0
        %5598 = vmatprep.subr.mxu0 0.0
        %5599 = vmatpush1.msra.mxu0 0.0
        %5600 = vmatprep.subr.mxu0 0.0
        %5601 = vmatpush1.msra.mxu0 0.0
        %5602 = vmatprep.subr.mxu0 0.0
        %5603 = vmatpush1.msra.mxu0 0.0
        %5604 = vmatprep.subr.mxu0 0.0
        %5605 = vmatpush1.msra.mxu0 0.0
        %5606 = vmatprep.subr.mxu0 0.0
        %5607 = vmatpush1.msra.mxu0 0.0
        %5608 = vmatprep.subr.mxu0 0.0
        %5609 = vmatpush1.msra.mxu0 0.0
        %5610 = vmatprep.subr.mxu0 0.0
        %5611 = vmatpush1.msra.mxu0 0.0
        %5612 = vmatprep.subr.mxu0 0.0
        %5613 = vmatpush1.msra.mxu0 0.0
        %5614 = vmatprep.subr.mxu0 0.0
        %5615 = vmatpush1.msra.mxu0 0.0
        %5616 = vmatprep.subr.mxu0 0.0
        %5617 = vmatpush1.msra.mxu0 0.0
        %5618 = vmatprep.mubr.f32.mxu0 0.0
        %5619 = vmatmul.mubr.f32.gmra.mrb[0].mxu0 %v5446
        %v5620 = vpop.f32.mrb[0].mxu0
        %v5621 = vadd.f32 0.0, %v5620
        %v5622 = vpop.f32.mrb[0].mxu0
        %v5623 = vadd.f32 0.0, %v5622
        %5624 = vmatprep.mubr.f32.mxu0 0.0
        %5625 = vmatmul.mubr.f32.gmra.mrb[0].mxu0 %v5449
        %v5626 = vpop.f32.mrb[0].mxu0
        %v5627 = vadd.f32 0.0, %v5626
        %v5628 = vpop.f32.mrb[0].mxu0
        %v5629 = vadd.f32 0.0, %v5628
        %5630 = vmatprep.mubr.f32.mxu0 0.0
        %5631 = vmatmul.mubr.f32.gmra.mrb[0].mxu0 %v5452
        %v5632 = vpop.f32.mrb[0].mxu0
        %v5633 = vadd.f32 0.0, %v5632
        %v5634 = vpop.f32.mrb[0].mxu0
        %v5635 = vadd.f32 0.0, %v5634
        %5636 = vmatprep.mubr.f32.mxu0 0.0
        %5637 = vmatmul.mubr.f32.gmra.mrb[0].mxu0 %v5455
        %v5638 = vpop.f32.mrb[0].mxu0
        %v5639 = vadd.f32 0.0, %v5638
        %v5640 = vpop.f32.mrb[0].mxu0
        %v5641 = vadd.f32 0.0, %v5640
        %5642 = vdwg.mxu0
        %v5643 = vadd.f32 %v5354, %v5621
        %v5644 = vadd.f32 %v5356, %v5623
        %v5645 = vadd.f32 %v5360, %v5627
        %v5646 = vadd.f32 %v5362, %v5629
        %v5647 = vadd.f32 %v5366, %v5633
        %v5648 = vadd.f32 %v5368, %v5635
        %v5649 = vadd.f32 %v5372, %v5639
        %v5650 = vadd.f32 %v5374, %v5641
        %5651 = vrot.lane.b32.xlu0 %v4842, 1
        %v5652 = vpop.permute.xlu0 %5651
        %5653 = vrot.lane.b32.xlu0 %v4844, 1
        %v5654 = vpop.permute.xlu0 %5653
        %5655 = vrot.lane.b32.xlu0 %v4846, 1
        %v5656 = vpop.permute.xlu0 %5655
        %5657 = vrot.lane.b32.xlu0 %v4848, 1
        %v5658 = vpop.permute.xlu0 %5657
        %5659 = vrot.lane.b32.xlu0 %v4850, 1
        %v5660 = vpop.permute.xlu0 %5659
        %5661 = vrot.lane.b32.xlu0 %v4852, 1
        %v5662 = vpop.permute.xlu0 %5661
        %5663 = vrot.lane.b32.xlu0 %v4854, 1
        %v5664 = vpop.permute.xlu0 %5663
        %5665 = vrot.lane.b32.xlu0 %v4856, 1
        %v5666 = vpop.permute.xlu0 %5665
        %5667 = vrot.lane.b32.xlu0 %v4843, 1
        %v5668 = vpop.permute.xlu0 %5667
        %5669 = vrot.lane.b32.xlu0 %v4845, 1
        %v5670 = vpop.permute.xlu0 %5669
        %5671 = vrot.lane.b32.xlu0 %v4847, 1
        %v5672 = vpop.permute.xlu0 %5671
        %5673 = vrot.lane.b32.xlu0 %v4849, 1
        %v5674 = vpop.permute.xlu0 %5673
        %5675 = vrot.lane.b32.xlu0 %v4851, 1
        %v5676 = vpop.permute.xlu0 %5675
        %5677 = vrot.lane.b32.xlu0 %v4853, 1
        %v5678 = vpop.permute.xlu0 %5677
        %5679 = vrot.lane.b32.xlu0 %v4855, 1
        %v5680 = vpop.permute.xlu0 %5679
        %5681 = vrot.lane.b32.xlu0 %v4857, 1
        %v5682 = vpop.permute.xlu0 %5681
        %v5683 = vsel %vm1141, %v5652, %v5668
        %v5684 = vsel %vm1141, %v5654, %v5670
        %v5685 = vsel %vm1141, %v5656, %v5672
        %v5686 = vsel %vm1141, %v5658, %v5674
        %v5687 = vsel %vm1141, %v5660, %v5676
        %v5688 = vsel %vm1141, %v5662, %v5678
        %v5689 = vsel %vm1141, %v5664, %v5680
        %v5690 = vsel %vm1141, %v5666, %v5682
        %v5691 = vsel %vm1141, %v5668, %v5652
        %v5692 = vsel %vm1141, %v5670, %v5654
        %v5693 = vsel %vm1141, %v5672, %v5656
        %v5694 = vsel %vm1141, %v5674, %v5658
        %v5695 = vsel %vm1141, %v5676, %v5660
        %v5696 = vsel %vm1141, %v5678, %v5662
        %v5697 = vsel %vm1141, %v5680, %v5664
        %v5698 = vsel %vm1141, %v5682, %v5666
        %v5699 = vsel %vm1162, %v5691, 0.0
        %v5700 = vsel %vm1163, %v5683, 0.0
        %v5701 = vsel %vm1162, %v5692, 0.0
        %v5702 = vsel %vm1163, %v5684, 0.0
        %v5703 = vsel %vm1162, %v5693, 0.0
        %v5704 = vsel %vm1163, %v5685, 0.0
        %v5705 = vsel %vm1162, %v5694, 0.0
        %v5706 = vsel %vm1163, %v5686, 0.0
        %v5707 = vsel %vm1162, %v5695, 0.0
        %v5708 = vsel %vm1163, %v5687, 0.0
        %v5709 = vsel %vm1162, %v5696, 0.0
        %v5710 = vsel %vm1163, %v5688, 0.0
        %v5711 = vsel %vm1162, %v5697, 0.0
        %v5712 = vsel %vm1163, %v5689, 0.0
        %v5713 = vsel %vm1162, %v5698, 0.0
        %v5714 = vsel %vm1163, %v5690, 0.0
        %s5715 = scalar_lea.vmem [#allocation2], 384
        %v5716 = vld [vmem:[%s5715] sm:$0xff]
        %v5717 = vld [vmem:[%s5715 + $0x8] sm:$0xff]
        %v5718 = vld [vmem:[%s5715 + $0x10] sm:$0xff]
        %v5719 = vld [vmem:[%s5715 + $0x18] sm:$0xff]
        %v5721 = vsel %vm1523, %v5716, 0
        %v5724 = vsel %vm1523, %v5717, 0
        %v5727 = vsel %vm1523, %v5718, 0
        %v5730 = vsel %vm1523, %v5719, 0
        %5732 = vmatprep.subr.mxu0 %v5700
        %5733 = vmatpush1.msra.mxu0 %v5699
        %5734 = vmatprep.subr.mxu0 %v5702
        %5735 = vmatpush1.msra.mxu0 %v5701
        %5736 = vmatprep.subr.mxu0 %v5704
        %5737 = vmatpush1.msra.mxu0 %v5703
        %5738 = vmatprep.subr.mxu0 %v5706
        %5739 = vmatpush1.msra.mxu0 %v5705
        %5740 = vmatprep.subr.mxu0 0.0
        %5741 = vmatpush1.msra.mxu0 0.0
        %5742 = vmatprep.subr.mxu0 0.0
        %5743 = vmatpush1.msra.mxu0 0.0
        %5744 = vmatprep.subr.mxu0 0.0
        %5745 = vmatpush1.msra.mxu0 0.0
        %5746 = vmatprep.subr.mxu0 0.0
        %5747 = vmatpush1.msra.mxu0 0.0
        %5748 = vmatprep.subr.mxu0 0.0
        %5749 = vmatpush1.msra.mxu0 0.0
        %5750 = vmatprep.subr.mxu0 0.0
        %5751 = vmatpush1.msra.mxu0 0.0
        %5752 = vmatprep.subr.mxu0 0.0
        %5753 = vmatpush1.msra.mxu0 0.0
        %5754 = vmatprep.subr.mxu0 0.0
        %5755 = vmatpush1.msra.mxu0 0.0
        %5756 = vmatprep.subr.mxu0 0.0
        %5757 = vmatpush1.msra.mxu0 0.0
        %5758 = vmatprep.subr.mxu0 0.0
        %5759 = vmatpush1.msra.mxu0 0.0
        %5760 = vmatprep.subr.mxu0 0.0
        %5761 = vmatpush1.msra.mxu0 0.0
        %5762 = vmatprep.subr.mxu0 0.0
        %5763 = vmatpush1.msra.mxu0 0.0
        %5764 = vmatprep.subr.mxu0 0.0
        %5765 = vmatpush1.msra.mxu0 0.0
        %5766 = vmatprep.subr.mxu0 0.0
        %5767 = vmatpush1.msra.mxu0 0.0
        %5768 = vmatprep.subr.mxu0 0.0
        %5769 = vmatpush1.msra.mxu0 0.0
        %5770 = vmatprep.subr.mxu0 0.0
        %5771 = vmatpush1.msra.mxu0 0.0
        %5772 = vmatprep.subr.mxu0 0.0
        %5773 = vmatpush1.msra.mxu0 0.0
        %5774 = vmatprep.subr.mxu0 0.0
        %5775 = vmatpush1.msra.mxu0 0.0
        %5776 = vmatprep.subr.mxu0 0.0
        %5777 = vmatpush1.msra.mxu0 0.0
        %5778 = vmatprep.subr.mxu0 0.0
        %5779 = vmatpush1.msra.mxu0 0.0
        %5780 = vmatprep.subr.mxu0 0.0
        %5781 = vmatpush1.msra.mxu0 0.0
        %5782 = vmatprep.subr.mxu0 0.0
        %5783 = vmatpush1.msra.mxu0 0.0
        %5784 = vmatprep.subr.mxu0 0.0
        %5785 = vmatpush1.msra.mxu0 0.0
        %5786 = vmatprep.subr.mxu0 0.0
        %5787 = vmatpush1.msra.mxu0 0.0
        %5788 = vmatprep.subr.mxu0 0.0
        %5789 = vmatpush1.msra.mxu0 0.0
        %5790 = vmatprep.subr.mxu0 0.0
        %5791 = vmatpush1.msra.mxu0 0.0
        %5792 = vmatprep.subr.mxu0 0.0
        %5793 = vmatpush1.msra.mxu0 0.0
        %5794 = vmatprep.subr.mxu0 0.0
        %5795 = vmatpush1.msra.mxu0 0.0
        %5796 = vmatprep.mubr.f32.mxu0 0.0
        %5797 = vmatmul.mubr.f32.gmra.mrb[0].mxu0 %v5721
        %v5798 = vpop.f32.mrb[0].mxu0
        %v5799 = vadd.f32 0.0, %v5798
        %v5800 = vpop.f32.mrb[0].mxu0
        %v5801 = vadd.f32 0.0, %v5800
        %5802 = vmatprep.mubr.f32.mxu0 0.0
        %5803 = vmatmul.mubr.f32.gmra.mrb[0].mxu0 %v5724
        %v5804 = vpop.f32.mrb[0].mxu0
        %v5805 = vadd.f32 0.0, %v5804
        %v5806 = vpop.f32.mrb[0].mxu0
        %v5807 = vadd.f32 0.0, %v5806
        %5808 = vmatprep.mubr.f32.mxu0 0.0
        %5809 = vmatmul.mubr.f32.gmra.mrb[0].mxu0 %v5727
        %v5810 = vpop.f32.mrb[0].mxu0
        %v5811 = vadd.f32 0.0, %v5810
        %v5812 = vpop.f32.mrb[0].mxu0
        %v5813 = vadd.f32 0.0, %v5812
        %5814 = vmatprep.mubr.f32.mxu0 0.0
        %5815 = vmatmul.mubr.f32.gmra.mrb[0].mxu0 %v5730
        %v5816 = vpop.f32.mrb[0].mxu0
        %v5817 = vadd.f32 0.0, %v5816
        %v5818 = vpop.f32.mrb[0].mxu0
        %v5819 = vadd.f32 0.0, %v5818
        %5820 = vdwg.mxu0
        %v5821 = vadd.f32 %v5546, %v5799
        %v5822 = vadd.f32 %v5547, %v5801
        %v5823 = vadd.f32 %v5548, %v5805
        %v5824 = vadd.f32 %v5549, %v5807
        %v5825 = vadd.f32 %v5550, %v5811
        %v5826 = vadd.f32 %v5551, %v5813
        %v5827 = vadd.f32 %v5552, %v5817
        %v5828 = vadd.f32 %v5553, %v5819
        %5829 = vmatprep.subr.mxu0 %v5708
        %5830 = vmatpush1.msra.mxu0 %v5707
        %5831 = vmatprep.subr.mxu0 %v5710
        %5832 = vmatpush1.msra.mxu0 %v5709
        %5833 = vmatprep.subr.mxu0 %v5712
        %5834 = vmatpush1.msra.mxu0 %v5711
        %5835 = vmatprep.subr.mxu0 %v5714
        %5836 = vmatpush1.msra.mxu0 %v5713
        %5837 = vmatprep.subr.mxu0 0.0
        %5838 = vmatpush1.msra.mxu0 0.0
        %5839 = vmatprep.subr.mxu0 0.0
        %5840 = vmatpush1.msra.mxu0 0.0
        %5841 = vmatprep.subr.mxu0 0.0
        %5842 = vmatpush1.msra.mxu0 0.0
        %5843 = vmatprep.subr.mxu0 0.0
        %5844 = vmatpush1.msra.mxu0 0.0
        %5845 = vmatprep.subr.mxu0 0.0
        %5846 = vmatpush1.msra.mxu0 0.0
        %5847 = vmatprep.subr.mxu0 0.0
        %5848 = vmatpush1.msra.mxu0 0.0
        %5849 = vmatprep.subr.mxu0 0.0
        %5850 = vmatpush1.msra.mxu0 0.0
        %5851 = vmatprep.subr.mxu0 0.0
        %5852 = vmatpush1.msra.mxu0 0.0
        %5853 = vmatprep.subr.mxu0 0.0
        %5854 = vmatpush1.msra.mxu0 0.0
        %5855 = vmatprep.subr.mxu0 0.0
        %5856 = vmatpush1.msra.mxu0 0.0
        %5857 = vmatprep.subr.mxu0 0.0
        %5858 = vmatpush1.msra.mxu0 0.0
        %5859 = vmatprep.subr.mxu0 0.0
        %5860 = vmatpush1.msra.mxu0 0.0
        %5861 = vmatprep.subr.mxu0 0.0
        %5862 = vmatpush1.msra.mxu0 0.0
        %5863 = vmatprep.subr.mxu0 0.0
        %5864 = vmatpush1.msra.mxu0 0.0
        %5865 = vmatprep.subr.mxu0 0.0
        %5866 = vmatpush1.msra.mxu0 0.0
        %5867 = vmatprep.subr.mxu0 0.0
        %5868 = vmatpush1.msra.mxu0 0.0
        %5869 = vmatprep.subr.mxu0 0.0
        %5870 = vmatpush1.msra.mxu0 0.0
        %5871 = vmatprep.subr.mxu0 0.0
        %5872 = vmatpush1.msra.mxu0 0.0
        %5873 = vmatprep.subr.mxu0 0.0
        %5874 = vmatpush1.msra.mxu0 0.0
        %5875 = vmatprep.subr.mxu0 0.0
        %5876 = vmatpush1.msra.mxu0 0.0
        %5877 = vmatprep.subr.mxu0 0.0
        %5878 = vmatpush1.msra.mxu0 0.0
        %5879 = vmatprep.subr.mxu0 0.0
        %5880 = vmatpush1.msra.mxu0 0.0
        %5881 = vmatprep.subr.mxu0 0.0
        %5882 = vmatpush1.msra.mxu0 0.0
        %5883 = vmatprep.subr.mxu0 0.0
        %5884 = vmatpush1.msra.mxu0 0.0
        %5885 = vmatprep.subr.mxu0 0.0
        %5886 = vmatpush1.msra.mxu0 0.0
        %5887 = vmatprep.subr.mxu0 0.0
        %5888 = vmatpush1.msra.mxu0 0.0
        %5889 = vmatprep.subr.mxu0 0.0
        %5890 = vmatpush1.msra.mxu0 0.0
        %5891 = vmatprep.subr.mxu0 0.0
        %5892 = vmatpush1.msra.mxu0 0.0
        %5893 = vmatprep.mubr.f32.mxu0 0.0
        %5894 = vmatmul.mubr.f32.gmra.mrb[0].mxu0 %v5721
        %v5895 = vpop.f32.mrb[0].mxu0
        %v5896 = vadd.f32 0.0, %v5895
        %v5897 = vpop.f32.mrb[0].mxu0
        %v5898 = vadd.f32 0.0, %v5897
        %5899 = vmatprep.mubr.f32.mxu0 0.0
        %5900 = vmatmul.mubr.f32.gmra.mrb[0].mxu0 %v5724
        %v5901 = vpop.f32.mrb[0].mxu0
        %v5902 = vadd.f32 0.0, %v5901
        %v5903 = vpop.f32.mrb[0].mxu0
        %v5904 = vadd.f32 0.0, %v5903
        %5905 = vmatprep.mubr.f32.mxu0 0.0
        %5906 = vmatmul.mubr.f32.gmra.mrb[0].mxu0 %v5727
        %v5907 = vpop.f32.mrb[0].mxu0
        %v5908 = vadd.f32 0.0, %v5907
        %v5909 = vpop.f32.mrb[0].mxu0
        %v5910 = vadd.f32 0.0, %v5909
        %5911 = vmatprep.mubr.f32.mxu0 0.0
        %5912 = vmatmul.mubr.f32.gmra.mrb[0].mxu0 %v5730
        %v5913 = vpop.f32.mrb[0].mxu0
        %v5914 = vadd.f32 0.0, %v5913
        %v5915 = vpop.f32.mrb[0].mxu0
        %v5916 = vadd.f32 0.0, %v5915
        %5917 = vdwg.mxu0
        %v5918 = vadd.f32 %v5643, %v5896
        %v5919 = vadd.f32 %v5644, %v5898
        %v5920 = vadd.f32 %v5645, %v5902
        %v5921 = vadd.f32 %v5646, %v5904
        %v5922 = vadd.f32 %v5647, %v5908
        %v5923 = vadd.f32 %v5648, %v5910
        %v5924 = vadd.f32 %v5649, %v5914
        %v5925 = vadd.f32 %v5650, %v5916
        %s5926 = scalar_lea.vmem [#allocation2], 416
        %v5927 = vld [vmem:[%s5926] sm:$0xff]
        %v5928 = vld [vmem:[%s5926 + $0x8] sm:$0xff]
        %v5929 = vld [vmem:[%s5926 + $0x10] sm:$0xff]
        %v5930 = vld [vmem:[%s5926 + $0x18] sm:$0xff]
        %v5932 = vsel %vm1523, %v5927, 0
        %v5935 = vsel %vm1523, %v5928, 0
        %v5938 = vsel %vm1523, %v5929, 0
        %v5941 = vsel %vm1523, %v5930, 0
        %5943 = vmatprep.subr.mxu0 %v4843
        %5944 = vmatpush1.msra.mxu0 %v4842
        %5945 = vmatprep.subr.mxu0 %v4845
        %5946 = vmatpush1.msra.mxu0 %v4844
        %5947 = vmatprep.subr.mxu0 %v4847
        %5948 = vmatpush1.msra.mxu0 %v4846
        %5949 = vmatprep.subr.mxu0 %v4849
        %5950 = vmatpush1.msra.mxu0 %v4848
        %5951 = vmatprep.subr.mxu0 0.0
        %5952 = vmatpush1.msra.mxu0 0.0
        %5953 = vmatprep.subr.mxu0 0.0
        %5954 = vmatpush1.msra.mxu0 0.0
        %5955 = vmatprep.subr.mxu0 0.0
        %5956 = vmatpush1.msra.mxu0 0.0
        %5957 = vmatprep.subr.mxu0 0.0
        %5958 = vmatpush1.msra.mxu0 0.0
        %5959 = vmatprep.subr.mxu0 0.0
        %5960 = vmatpush1.msra.mxu0 0.0
        %5961 = vmatprep.subr.mxu0 0.0
        %5962 = vmatpush1.msra.mxu0 0.0
        %5963 = vmatprep.subr.mxu0 0.0
        %5964 = vmatpush1.msra.mxu0 0.0
        %5965 = vmatprep.subr.mxu0 0.0
        %5966 = vmatpush1.msra.mxu0 0.0
        %5967 = vmatprep.subr.mxu0 0.0
        %5968 = vmatpush1.msra.mxu0 0.0
        %5969 = vmatprep.subr.mxu0 0.0
        %5970 = vmatpush1.msra.mxu0 0.0
        %5971 = vmatprep.subr.mxu0 0.0
        %5972 = vmatpush1.msra.mxu0 0.0
        %5973 = vmatprep.subr.mxu0 0.0
        %5974 = vmatpush1.msra.mxu0 0.0
        %5975 = vmatprep.subr.mxu0 0.0
        %5976 = vmatpush1.msra.mxu0 0.0
        %5977 = vmatprep.subr.mxu0 0.0
        %5978 = vmatpush1.msra.mxu0 0.0
        %5979 = vmatprep.subr.mxu0 0.0
        %5980 = vmatpush1.msra.mxu0 0.0
        %5981 = vmatprep.subr.mxu0 0.0
        %5982 = vmatpush1.msra.mxu0 0.0
        %5983 = vmatprep.subr.mxu0 0.0
        %5984 = vmatpush1.msra.mxu0 0.0
        %5985 = vmatprep.subr.mxu0 0.0
        %5986 = vmatpush1.msra.mxu0 0.0
        %5987 = vmatprep.subr.mxu0 0.0
        %5988 = vmatpush1.msra.mxu0 0.0
        %5989 = vmatprep.subr.mxu0 0.0
        %5990 = vmatpush1.msra.mxu0 0.0
        %5991 = vmatprep.subr.mxu0 0.0
        %5992 = vmatpush1.msra.mxu0 0.0
        %5993 = vmatprep.subr.mxu0 0.0
        %5994 = vmatpush1.msra.mxu0 0.0
        %5995 = vmatprep.subr.mxu0 0.0
        %5996 = vmatpush1.msra.mxu0 0.0
        %5997 = vmatprep.subr.mxu0 0.0
        %5998 = vmatpush1.msra.mxu0 0.0
        %5999 = vmatprep.subr.mxu0 0.0
        %6000 = vmatpush1.msra.mxu0 0.0
        %6001 = vmatprep.subr.mxu0 0.0
        %6002 = vmatpush1.msra.mxu0 0.0
        %6003 = vmatprep.subr.mxu0 0.0
        %6004 = vmatpush1.msra.mxu0 0.0
        %6005 = vmatprep.subr.mxu0 0.0
        %6006 = vmatpush1.msra.mxu0 0.0
        %6007 = vmatprep.mubr.f32.mxu0 0.0
        %6008 = vmatmul.mubr.f32.gmra.mrb[0].mxu0 %v5932
        %v6009 = vpop.f32.mrb[0].mxu0
        %v6010 = vadd.f32 0.0, %v6009
        %v6011 = vpop.f32.mrb[0].mxu0
        %v6012 = vadd.f32 0.0, %v6011
        %6013 = vmatprep.mubr.f32.mxu0 0.0
        %6014 = vmatmul.mubr.f32.gmra.mrb[0].mxu0 %v5935
        %v6015 = vpop.f32.mrb[0].mxu0
        %v6016 = vadd.f32 0.0, %v6015
        %v6017 = vpop.f32.mrb[0].mxu0
        %v6018 = vadd.f32 0.0, %v6017
        %6019 = vmatprep.mubr.f32.mxu0 0.0
        %6020 = vmatmul.mubr.f32.gmra.mrb[0].mxu0 %v5938
        %v6021 = vpop.f32.mrb[0].mxu0
        %v6022 = vadd.f32 0.0, %v6021
        %v6023 = vpop.f32.mrb[0].mxu0
        %v6024 = vadd.f32 0.0, %v6023
        %6025 = vmatprep.mubr.f32.mxu0 0.0
        %6026 = vmatmul.mubr.f32.gmra.mrb[0].mxu0 %v5941
        %v6027 = vpop.f32.mrb[0].mxu0
        %v6028 = vadd.f32 0.0, %v6027
        %v6029 = vpop.f32.mrb[0].mxu0
        %v6030 = vadd.f32 0.0, %v6029
        %6031 = vdwg.mxu0
        %v6032 = vadd.f32 %v5821, %v6010
        %v6033 = vadd.f32 %v5822, %v6012
        %v6034 = vadd.f32 %v5823, %v6016
        %v6035 = vadd.f32 %v5824, %v6018
        %v6036 = vadd.f32 %v5825, %v6022
        %v6037 = vadd.f32 %v5826, %v6024
        %v6038 = vadd.f32 %v5827, %v6028
        %v6039 = vadd.f32 %v5828, %v6030
        %6040 = vmatprep.subr.mxu0 %v4851
        %6041 = vmatpush1.msra.mxu0 %v4850
        %6042 = vmatprep.subr.mxu0 %v4853
        %6043 = vmatpush1.msra.mxu0 %v4852
        %6044 = vmatprep.subr.mxu0 %v4855
        %6045 = vmatpush1.msra.mxu0 %v4854
        %6046 = vmatprep.subr.mxu0 %v4857
        %6047 = vmatpush1.msra.mxu0 %v4856
        %6048 = vmatprep.subr.mxu0 0.0
        %6049 = vmatpush1.msra.mxu0 0.0
        %6050 = vmatprep.subr.mxu0 0.0
        %6051 = vmatpush1.msra.mxu0 0.0
        %6052 = vmatprep.subr.mxu0 0.0
        %6053 = vmatpush1.msra.mxu0 0.0
        %6054 = vmatprep.subr.mxu0 0.0
        %6055 = vmatpush1.msra.mxu0 0.0
        %6056 = vmatprep.subr.mxu0 0.0
        %6057 = vmatpush1.msra.mxu0 0.0
        %6058 = vmatprep.subr.mxu0 0.0
        %6059 = vmatpush1.msra.mxu0 0.0
        %6060 = vmatprep.subr.mxu0 0.0
        %6061 = vmatpush1.msra.mxu0 0.0
        %6062 = vmatprep.subr.mxu0 0.0
        %6063 = vmatpush1.msra.mxu0 0.0
        %6064 = vmatprep.subr.mxu0 0.0
        %6065 = vmatpush1.msra.mxu0 0.0
        %6066 = vmatprep.subr.mxu0 0.0
        %6067 = vmatpush1.msra.mxu0 0.0
        %6068 = vmatprep.subr.mxu0 0.0
        %6069 = vmatpush1.msra.mxu0 0.0
        %6070 = vmatprep.subr.mxu0 0.0
        %6071 = vmatpush1.msra.mxu0 0.0
        %6072 = vmatprep.subr.mxu0 0.0
        %6073 = vmatpush1.msra.mxu0 0.0
        %6074 = vmatprep.subr.mxu0 0.0
        %6075 = vmatpush1.msra.mxu0 0.0
        %6076 = vmatprep.subr.mxu0 0.0
        %6077 = vmatpush1.msra.mxu0 0.0
        %6078 = vmatprep.subr.mxu0 0.0
        %6079 = vmatpush1.msra.mxu0 0.0
        %6080 = vmatprep.subr.mxu0 0.0
        %6081 = vmatpush1.msra.mxu0 0.0
        %6082 = vmatprep.subr.mxu0 0.0
        %6083 = vmatpush1.msra.mxu0 0.0
        %6084 = vmatprep.subr.mxu0 0.0
        %6085 = vmatpush1.msra.mxu0 0.0
        %6086 = vmatprep.subr.mxu0 0.0
        %6087 = vmatpush1.msra.mxu0 0.0
        %6088 = vmatprep.subr.mxu0 0.0
        %6089 = vmatpush1.msra.mxu0 0.0
        %6090 = vmatprep.subr.mxu0 0.0
        %6091 = vmatpush1.msra.mxu0 0.0
        %6092 = vmatprep.subr.mxu0 0.0
        %6093 = vmatpush1.msra.mxu0 0.0
        %6094 = vmatprep.subr.mxu0 0.0
        %6095 = vmatpush1.msra.mxu0 0.0
        %6096 = vmatprep.subr.mxu0 0.0
        %6097 = vmatpush1.msra.mxu0 0.0
        %6098 = vmatprep.subr.mxu0 0.0
        %6099 = vmatpush1.msra.mxu0 0.0
        %6100 = vmatprep.subr.mxu0 0.0
        %6101 = vmatpush1.msra.mxu0 0.0
        %6102 = vmatprep.subr.mxu0 0.0
        %6103 = vmatpush1.msra.mxu0 0.0
        %6104 = vmatprep.mubr.f32.mxu0 0.0
        %6105 = vmatmul.mubr.f32.gmra.mrb[0].mxu0 %v5932
        %v6106 = vpop.f32.mrb[0].mxu0
        %v6107 = vadd.f32 0.0, %v6106
        %v6108 = vpop.f32.mrb[0].mxu0
        %v6109 = vadd.f32 0.0, %v6108
        %6110 = vmatprep.mubr.f32.mxu0 0.0
        %6111 = vmatmul.mubr.f32.gmra.mrb[0].mxu0 %v5935
        %v6112 = vpop.f32.mrb[0].mxu0
        %v6113 = vadd.f32 0.0, %v6112
        %v6114 = vpop.f32.mrb[0].mxu0
        %v6115 = vadd.f32 0.0, %v6114
        %6116 = vmatprep.mubr.f32.mxu0 0.0
        %6117 = vmatmul.mubr.f32.gmra.mrb[0].mxu0 %v5938
        %v6118 = vpop.f32.mrb[0].mxu0
        %v6119 = vadd.f32 0.0, %v6118
        %v6120 = vpop.f32.mrb[0].mxu0
        %v6121 = vadd.f32 0.0, %v6120
        %6122 = vmatprep.mubr.f32.mxu0 0.0
        %6123 = vmatmul.mubr.f32.gmra.mrb[0].mxu0 %v5941
        %v6124 = vpop.f32.mrb[0].mxu0
        %v6125 = vadd.f32 0.0, %v6124
        %v6126 = vpop.f32.mrb[0].mxu0
        %v6127 = vadd.f32 0.0, %v6126
        %6128 = vdwg.mxu0
        %v6129 = vadd.f32 %v5918, %v6107
        %v6130 = vadd.f32 %v5919, %v6109
        %v6131 = vadd.f32 %v5920, %v6113
        %v6132 = vadd.f32 %v5921, %v6115
        %v6133 = vadd.f32 %v5922, %v6119
        %v6134 = vadd.f32 %v5923, %v6121
        %v6135 = vadd.f32 %v5924, %v6125
        %v6136 = vadd.f32 %v5925, %v6127
        %6137 = vrot.lane.b32.xlu0 %v4842, 127
        %v6138 = vpop.permute.xlu0 %6137
        %6139 = vrot.lane.b32.xlu0 %v4844, 127
        %v6140 = vpop.permute.xlu0 %6139
        %6141 = vrot.lane.b32.xlu0 %v4846, 127
        %v6142 = vpop.permute.xlu0 %6141
        %6143 = vrot.lane.b32.xlu0 %v4848, 127
        %v6144 = vpop.permute.xlu0 %6143
        %6145 = vrot.lane.b32.xlu0 %v4850, 127
        %v6146 = vpop.permute.xlu0 %6145
        %6147 = vrot.lane.b32.xlu0 %v4852, 127
        %v6148 = vpop.permute.xlu0 %6147
        %6149 = vrot.lane.b32.xlu0 %v4854, 127
        %v6150 = vpop.permute.xlu0 %6149
        %6151 = vrot.lane.b32.xlu0 %v4856, 127
        %v6152 = vpop.permute.xlu0 %6151
        %6153 = vrot.lane.b32.xlu0 %v4843, 127
        %v6154 = vpop.permute.xlu0 %6153
        %6155 = vrot.lane.b32.xlu0 %v4845, 127
        %v6156 = vpop.permute.xlu0 %6155
        %6157 = vrot.lane.b32.xlu0 %v4847, 127
        %v6158 = vpop.permute.xlu0 %6157
        %6159 = vrot.lane.b32.xlu0 %v4849, 127
        %v6160 = vpop.permute.xlu0 %6159
        %6161 = vrot.lane.b32.xlu0 %v4851, 127
        %v6162 = vpop.permute.xlu0 %6161
        %6163 = vrot.lane.b32.xlu0 %v4853, 127
        %v6164 = vpop.permute.xlu0 %6163
        %6165 = vrot.lane.b32.xlu0 %v4855, 127
        %v6166 = vpop.permute.xlu0 %6165
        %6167 = vrot.lane.b32.xlu0 %v4857, 127
        %v6168 = vpop.permute.xlu0 %6167
        %v6169 = vsel %vm1228, %v6138, %v6154
        %v6170 = vsel %vm1228, %v6140, %v6156
        %v6171 = vsel %vm1228, %v6142, %v6158
        %v6172 = vsel %vm1228, %v6144, %v6160
        %v6173 = vsel %vm1228, %v6146, %v6162
        %v6174 = vsel %vm1228, %v6148, %v6164
        %v6175 = vsel %vm1228, %v6150, %v6166
        %v6176 = vsel %vm1228, %v6152, %v6168
        %v6177 = vsel %vm1228, %v6154, %v6138
        %v6178 = vsel %vm1228, %v6156, %v6140
        %v6179 = vsel %vm1228, %v6158, %v6142
        %v6180 = vsel %vm1228, %v6160, %v6144
        %v6181 = vsel %vm1228, %v6162, %v6146
        %v6182 = vsel %vm1228, %v6164, %v6148
        %v6183 = vsel %vm1228, %v6166, %v6150
        %v6184 = vsel %vm1228, %v6168, %v6152
        %v6185 = vsel %vm1249, %v6169, 0.0
        %v6186 = vsel %vm1250, %v6177, 0.0
        %v6187 = vsel %vm1249, %v6170, 0.0
        %v6188 = vsel %vm1250, %v6178, 0.0
        %v6189 = vsel %vm1249, %v6171, 0.0
        %v6190 = vsel %vm1250, %v6179, 0.0
        %v6191 = vsel %vm1249, %v6172, 0.0
        %v6192 = vsel %vm1250, %v6180, 0.0
        %v6193 = vsel %vm1249, %v6173, 0.0
        %v6194 = vsel %vm1250, %v6181, 0.0
        %v6195 = vsel %vm1249, %v6174, 0.0
        %v6196 = vsel %vm1250, %v6182, 0.0
        %v6197 = vsel %vm1249, %v6175, 0.0
        %v6198 = vsel %vm1250, %v6183, 0.0
        %v6199 = vsel %vm1249, %v6176, 0.0
        %v6200 = vsel %vm1250, %v6184, 0.0
        %s6201 = scalar_lea.vmem [#allocation2], 448
        %v6202 = vld [vmem:[%s6201] sm:$0xff]
        %v6203 = vld [vmem:[%s6201 + $0x8] sm:$0xff]
        %v6204 = vld [vmem:[%s6201 + $0x10] sm:$0xff]
        %v6205 = vld [vmem:[%s6201 + $0x18] sm:$0xff]
        %v6207 = vsel %vm1523, %v6202, 0
        %v6210 = vsel %vm1523, %v6203, 0
        %v6213 = vsel %vm1523, %v6204, 0
        %v6216 = vsel %vm1523, %v6205, 0
        %6218 = vmatprep.subr.mxu0 %v6186
        %6219 = vmatpush1.msra.mxu0 %v6185
        %6220 = vmatprep.subr.mxu0 %v6188
        %6221 = vmatpush1.msra.mxu0 %v6187
        %6222 = vmatprep.subr.mxu0 %v6190
        %6223 = vmatpush1.msra.mxu0 %v6189
        %6224 = vmatprep.subr.mxu0 %v6192
        %6225 = vmatpush1.msra.mxu0 %v6191
        %6226 = vmatprep.subr.mxu0 0.0
        %6227 = vmatpush1.msra.mxu0 0.0
        %6228 = vmatprep.subr.mxu0 0.0
        %6229 = vmatpush1.msra.mxu0 0.0
        %6230 = vmatprep.subr.mxu0 0.0
        %6231 = vmatpush1.msra.mxu0 0.0
        %6232 = vmatprep.subr.mxu0 0.0
        %6233 = vmatpush1.msra.mxu0 0.0
        %6234 = vmatprep.subr.mxu0 0.0
        %6235 = vmatpush1.msra.mxu0 0.0
        %6236 = vmatprep.subr.mxu0 0.0
        %6237 = vmatpush1.msra.mxu0 0.0
        %6238 = vmatprep.subr.mxu0 0.0
        %6239 = vmatpush1.msra.mxu0 0.0
        %6240 = vmatprep.subr.mxu0 0.0
        %6241 = vmatpush1.msra.mxu0 0.0
        %6242 = vmatprep.subr.mxu0 0.0
        %6243 = vmatpush1.msra.mxu0 0.0
        %6244 = vmatprep.subr.mxu0 0.0
        %6245 = vmatpush1.msra.mxu0 0.0
        %6246 = vmatprep.subr.mxu0 0.0
        %6247 = vmatpush1.msra.mxu0 0.0
        %6248 = vmatprep.subr.mxu0 0.0
        %6249 = vmatpush1.msra.mxu0 0.0
        %6250 = vmatprep.subr.mxu0 0.0
        %6251 = vmatpush1.msra.mxu0 0.0
        %6252 = vmatprep.subr.mxu0 0.0
        %6253 = vmatpush1.msra.mxu0 0.0
        %6254 = vmatprep.subr.mxu0 0.0
        %6255 = vmatpush1.msra.mxu0 0.0
        %6256 = vmatprep.subr.mxu0 0.0
        %6257 = vmatpush1.msra.mxu0 0.0
        %6258 = vmatprep.subr.mxu0 0.0
        %6259 = vmatpush1.msra.mxu0 0.0
        %6260 = vmatprep.subr.mxu0 0.0
        %6261 = vmatpush1.msra.mxu0 0.0
        %6262 = vmatprep.subr.mxu0 0.0
        %6263 = vmatpush1.msra.mxu0 0.0
        %6264 = vmatprep.subr.mxu0 0.0
        %6265 = vmatpush1.msra.mxu0 0.0
        %6266 = vmatprep.subr.mxu0 0.0
        %6267 = vmatpush1.msra.mxu0 0.0
        %6268 = vmatprep.subr.mxu0 0.0
        %6269 = vmatpush1.msra.mxu0 0.0
        %6270 = vmatprep.subr.mxu0 0.0
        %6271 = vmatpush1.msra.mxu0 0.0
        %6272 = vmatprep.subr.mxu0 0.0
        %6273 = vmatpush1.msra.mxu0 0.0
        %6274 = vmatprep.subr.mxu0 0.0
        %6275 = vmatpush1.msra.mxu0 0.0
        %6276 = vmatprep.subr.mxu0 0.0
        %6277 = vmatpush1.msra.mxu0 0.0
        %6278 = vmatprep.subr.mxu0 0.0
        %6279 = vmatpush1.msra.mxu0 0.0
        %6280 = vmatprep.subr.mxu0 0.0
        %6281 = vmatpush1.msra.mxu0 0.0
        %6282 = vmatprep.mubr.f32.mxu0 0.0
        %6283 = vmatmul.mubr.f32.gmra.mrb[0].mxu0 %v6207
        %v6284 = vpop.f32.mrb[0].mxu0
        %v6285 = vadd.f32 0.0, %v6284
        %v6286 = vpop.f32.mrb[0].mxu0
        %v6287 = vadd.f32 0.0, %v6286
        %6288 = vmatprep.mubr.f32.mxu0 0.0
        %6289 = vmatmul.mubr.f32.gmra.mrb[0].mxu0 %v6210
        %v6290 = vpop.f32.mrb[0].mxu0
        %v6291 = vadd.f32 0.0, %v6290
        %v6292 = vpop.f32.mrb[0].mxu0
        %v6293 = vadd.f32 0.0, %v6292
        %6294 = vmatprep.mubr.f32.mxu0 0.0
        %6295 = vmatmul.mubr.f32.gmra.mrb[0].mxu0 %v6213
        %v6296 = vpop.f32.mrb[0].mxu0
        %v6297 = vadd.f32 0.0, %v6296
        %v6298 = vpop.f32.mrb[0].mxu0
        %v6299 = vadd.f32 0.0, %v6298
        %6300 = vmatprep.mubr.f32.mxu0 0.0
        %6301 = vmatmul.mubr.f32.gmra.mrb[0].mxu0 %v6216
        %v6302 = vpop.f32.mrb[0].mxu0
        %v6303 = vadd.f32 0.0, %v6302
        %v6304 = vpop.f32.mrb[0].mxu0
        %v6305 = vadd.f32 0.0, %v6304
        %6306 = vdwg.mxu0
        %v6307 = vadd.f32 %v6032, %v6285
        %v6308 = vadd.f32 %v6033, %v6287
        %v6309 = vadd.f32 %v6034, %v6291
        %v6310 = vadd.f32 %v6035, %v6293
        %v6311 = vadd.f32 %v6036, %v6297
        %v6312 = vadd.f32 %v6037, %v6299
        %v6313 = vadd.f32 %v6038, %v6303
        %v6314 = vadd.f32 %v6039, %v6305
        %6315 = vmatprep.subr.mxu0 %v6194
        %6316 = vmatpush1.msra.mxu0 %v6193
        %6317 = vmatprep.subr.mxu0 %v6196
        %6318 = vmatpush1.msra.mxu0 %v6195
        %6319 = vmatprep.subr.mxu0 %v6198
        %6320 = vmatpush1.msra.mxu0 %v6197
        %6321 = vmatprep.subr.mxu0 %v6200
        %6322 = vmatpush1.msra.mxu0 %v6199
        %6323 = vmatprep.subr.mxu0 0.0
        %6324 = vmatpush1.msra.mxu0 0.0
        %6325 = vmatprep.subr.mxu0 0.0
        %6326 = vmatpush1.msra.mxu0 0.0
        %6327 = vmatprep.subr.mxu0 0.0
        %6328 = vmatpush1.msra.mxu0 0.0
        %6329 = vmatprep.subr.mxu0 0.0
        %6330 = vmatpush1.msra.mxu0 0.0
        %6331 = vmatprep.subr.mxu0 0.0
        %6332 = vmatpush1.msra.mxu0 0.0
        %6333 = vmatprep.subr.mxu0 0.0
        %6334 = vmatpush1.msra.mxu0 0.0
        %6335 = vmatprep.subr.mxu0 0.0
        %6336 = vmatpush1.msra.mxu0 0.0
        %6337 = vmatprep.subr.mxu0 0.0
        %6338 = vmatpush1.msra.mxu0 0.0
        %6339 = vmatprep.subr.mxu0 0.0
        %6340 = vmatpush1.msra.mxu0 0.0
        %6341 = vmatprep.subr.mxu0 0.0
        %6342 = vmatpush1.msra.mxu0 0.0
        %6343 = vmatprep.subr.mxu0 0.0
        %6344 = vmatpush1.msra.mxu0 0.0
        %6345 = vmatprep.subr.mxu0 0.0
        %6346 = vmatpush1.msra.mxu0 0.0
        %6347 = vmatprep.subr.mxu0 0.0
        %6348 = vmatpush1.msra.mxu0 0.0
        %6349 = vmatprep.subr.mxu0 0.0
        %6350 = vmatpush1.msra.mxu0 0.0
        %6351 = vmatprep.subr.mxu0 0.0
        %6352 = vmatpush1.msra.mxu0 0.0
        %6353 = vmatprep.subr.mxu0 0.0
        %6354 = vmatpush1.msra.mxu0 0.0
        %6355 = vmatprep.subr.mxu0 0.0
        %6356 = vmatpush1.msra.mxu0 0.0
        %6357 = vmatprep.subr.mxu0 0.0
        %6358 = vmatpush1.msra.mxu0 0.0
        %6359 = vmatprep.subr.mxu0 0.0
        %6360 = vmatpush1.msra.mxu0 0.0
        %6361 = vmatprep.subr.mxu0 0.0
        %6362 = vmatpush1.msra.mxu0 0.0
        %6363 = vmatprep.subr.mxu0 0.0
        %6364 = vmatpush1.msra.mxu0 0.0
        %6365 = vmatprep.subr.mxu0 0.0
        %6366 = vmatpush1.msra.mxu0 0.0
        %6367 = vmatprep.subr.mxu0 0.0
        %6368 = vmatpush1.msra.mxu0 0.0
        %6369 = vmatprep.subr.mxu0 0.0
        %6370 = vmatpush1.msra.mxu0 0.0
        %6371 = vmatprep.subr.mxu0 0.0
        %6372 = vmatpush1.msra.mxu0 0.0
        %6373 = vmatprep.subr.mxu0 0.0
        %6374 = vmatpush1.msra.mxu0 0.0
        %6375 = vmatprep.subr.mxu0 0.0
        %6376 = vmatpush1.msra.mxu0 0.0
        %6377 = vmatprep.subr.mxu0 0.0
        %6378 = vmatpush1.msra.mxu0 0.0
        %6379 = vmatprep.mubr.f32.mxu0 0.0
        %6380 = vmatmul.mubr.f32.gmra.mrb[0].mxu0 %v6207
        %v6381 = vpop.f32.mrb[0].mxu0
        %v6382 = vadd.f32 0.0, %v6381
        %v6383 = vpop.f32.mrb[0].mxu0
        %v6384 = vadd.f32 0.0, %v6383
        %6385 = vmatprep.mubr.f32.mxu0 0.0
        %6386 = vmatmul.mubr.f32.gmra.mrb[0].mxu0 %v6210
        %v6387 = vpop.f32.mrb[0].mxu0
        %v6388 = vadd.f32 0.0, %v6387
        %v6389 = vpop.f32.mrb[0].mxu0
        %v6390 = vadd.f32 0.0, %v6389
        %6391 = vmatprep.mubr.f32.mxu0 0.0
        %6392 = vmatmul.mubr.f32.gmra.mrb[0].mxu0 %v6213
        %v6393 = vpop.f32.mrb[0].mxu0
        %v6394 = vadd.f32 0.0, %v6393
        %v6395 = vpop.f32.mrb[0].mxu0
        %v6396 = vadd.f32 0.0, %v6395
        %6397 = vmatprep.mubr.f32.mxu0 0.0
        %6398 = vmatmul.mubr.f32.gmra.mrb[0].mxu0 %v6216
        %v6399 = vpop.f32.mrb[0].mxu0
        %v6400 = vadd.f32 0.0, %v6399
        %v6401 = vpop.f32.mrb[0].mxu0
        %v6402 = vadd.f32 0.0, %v6401
        %6403 = vdwg.mxu0
        %v6404 = vadd.f32 %v6129, %v6382
        %v6405 = vadd.f32 %v6130, %v6384
        %v6406 = vadd.f32 %v6131, %v6388
        %v6407 = vadd.f32 %v6132, %v6390
        %v6408 = vadd.f32 %v6133, %v6394
        %v6409 = vadd.f32 %v6134, %v6396
        %v6410 = vadd.f32 %v6135, %v6400
        %v6411 = vadd.f32 %v6136, %v6402
        %6412 = vrot.lane.b32.xlu0 %v4842, 112
        %v6413 = vpop.permute.xlu0 %6412
        %6414 = vrot.lane.b32.xlu0 %v4844, 112
        %v6415 = vpop.permute.xlu0 %6414
        %6416 = vrot.lane.b32.xlu0 %v4846, 112
        %v6417 = vpop.permute.xlu0 %6416
        %6418 = vrot.lane.b32.xlu0 %v4848, 112
        %v6419 = vpop.permute.xlu0 %6418
        %6420 = vrot.lane.b32.xlu0 %v4850, 112
        %v6421 = vpop.permute.xlu0 %6420
        %6422 = vrot.lane.b32.xlu0 %v4852, 112
        %v6423 = vpop.permute.xlu0 %6422
        %6424 = vrot.lane.b32.xlu0 %v4854, 112
        %v6425 = vpop.permute.xlu0 %6424
        %6426 = vrot.lane.b32.xlu0 %v4856, 112
        %v6427 = vpop.permute.xlu0 %6426
        %6428 = vrot.lane.b32.xlu0 %v4843, 112
        %v6429 = vpop.permute.xlu0 %6428
        %6430 = vrot.lane.b32.xlu0 %v4845, 112
        %v6431 = vpop.permute.xlu0 %6430
        %6432 = vrot.lane.b32.xlu0 %v4847, 112
        %v6433 = vpop.permute.xlu0 %6432
        %6434 = vrot.lane.b32.xlu0 %v4849, 112
        %v6435 = vpop.permute.xlu0 %6434
        %6436 = vrot.lane.b32.xlu0 %v4851, 112
        %v6437 = vpop.permute.xlu0 %6436
        %6438 = vrot.lane.b32.xlu0 %v4853, 112
        %v6439 = vpop.permute.xlu0 %6438
        %6440 = vrot.lane.b32.xlu0 %v4855, 112
        %v6441 = vpop.permute.xlu0 %6440
        %6442 = vrot.lane.b32.xlu0 %v4857, 112
        %v6443 = vpop.permute.xlu0 %6442
        %v6444 = vsel %vm880, %v6413, %v6429
        %v6445 = vsel %vm880, %v6415, %v6431
        %v6446 = vsel %vm880, %v6417, %v6433
        %v6447 = vsel %vm880, %v6419, %v6435
        %v6448 = vsel %vm880, %v6421, %v6437
        %v6449 = vsel %vm880, %v6423, %v6439
        %v6450 = vsel %vm880, %v6425, %v6441
        %v6451 = vsel %vm880, %v6427, %v6443
        %v6452 = vsel %vm880, %v6429, %v6413
        %v6453 = vsel %vm880, %v6431, %v6415
        %v6454 = vsel %vm880, %v6433, %v6417
        %v6455 = vsel %vm880, %v6435, %v6419
        %v6456 = vsel %vm880, %v6437, %v6421
        %v6457 = vsel %vm880, %v6439, %v6423
        %v6458 = vsel %vm880, %v6441, %v6425
        %v6459 = vsel %vm880, %v6443, %v6427
        %v6460 = vsel %vm901, %v6444, 0.0
        %v6461 = vsel %vm902, %v6452, 0.0
        %v6462 = vsel %vm901, %v6445, 0.0
        %v6463 = vsel %vm902, %v6453, 0.0
        %v6464 = vsel %vm901, %v6446, 0.0
        %v6465 = vsel %vm902, %v6454, 0.0
        %v6466 = vsel %vm901, %v6447, 0.0
        %v6467 = vsel %vm902, %v6455, 0.0
        %v6468 = vsel %vm901, %v6448, 0.0
        %v6469 = vsel %vm902, %v6456, 0.0
        %v6470 = vsel %vm901, %v6449, 0.0
        %v6471 = vsel %vm902, %v6457, 0.0
        %v6472 = vsel %vm901, %v6450, 0.0
        %v6473 = vsel %vm902, %v6458, 0.0
        %v6474 = vsel %vm901, %v6451, 0.0
        %v6475 = vsel %vm902, %v6459, 0.0
        %6476 = vrot.lane.b32.xlu0 %v6460, 1
        %v6477 = vpop.permute.xlu0 %6476
        %6478 = vrot.lane.b32.xlu0 %v6462, 1
        %v6479 = vpop.permute.xlu0 %6478
        %6480 = vrot.lane.b32.xlu0 %v6464, 1
        %v6481 = vpop.permute.xlu0 %6480
        %6482 = vrot.lane.b32.xlu0 %v6466, 1
        %v6483 = vpop.permute.xlu0 %6482
        %6484 = vrot.lane.b32.xlu0 %v6468, 1
        %v6485 = vpop.permute.xlu0 %6484
        %6486 = vrot.lane.b32.xlu0 %v6470, 1
        %v6487 = vpop.permute.xlu0 %6486
        %6488 = vrot.lane.b32.xlu0 %v6472, 1
        %v6489 = vpop.permute.xlu0 %6488
        %6490 = vrot.lane.b32.xlu0 %v6474, 1
        %v6491 = vpop.permute.xlu0 %6490
        %6492 = vrot.lane.b32.xlu0 %v6461, 1
        %v6493 = vpop.permute.xlu0 %6492
        %6494 = vrot.lane.b32.xlu0 %v6463, 1
        %v6495 = vpop.permute.xlu0 %6494
        %6496 = vrot.lane.b32.xlu0 %v6465, 1
        %v6497 = vpop.permute.xlu0 %6496
        %6498 = vrot.lane.b32.xlu0 %v6467, 1
        %v6499 = vpop.permute.xlu0 %6498
        %6500 = vrot.lane.b32.xlu0 %v6469, 1
        %v6501 = vpop.permute.xlu0 %6500
        %6502 = vrot.lane.b32.xlu0 %v6471, 1
        %v6503 = vpop.permute.xlu0 %6502
        %6504 = vrot.lane.b32.xlu0 %v6473, 1
        %v6505 = vpop.permute.xlu0 %6504
        %6506 = vrot.lane.b32.xlu0 %v6475, 1
        %v6507 = vpop.permute.xlu0 %6506
        %v6508 = vsel %vm1141, %v6477, %v6493
        %v6509 = vsel %vm1141, %v6479, %v6495
        %v6510 = vsel %vm1141, %v6481, %v6497
        %v6511 = vsel %vm1141, %v6483, %v6499
        %v6512 = vsel %vm1141, %v6485, %v6501
        %v6513 = vsel %vm1141, %v6487, %v6503
        %v6514 = vsel %vm1141, %v6489, %v6505
        %v6515 = vsel %vm1141, %v6491, %v6507
        %v6516 = vsel %vm1141, %v6493, %v6477
        %v6517 = vsel %vm1141, %v6495, %v6479
        %v6518 = vsel %vm1141, %v6497, %v6481
        %v6519 = vsel %vm1141, %v6499, %v6483
        %v6520 = vsel %vm1141, %v6501, %v6485
        %v6521 = vsel %vm1141, %v6503, %v6487
        %v6522 = vsel %vm1141, %v6505, %v6489
        %v6523 = vsel %vm1141, %v6507, %v6491
        %v6524 = vsel %vm1162, %v6516, 0.0
        %v6525 = vsel %vm1163, %v6508, 0.0
        %v6526 = vsel %vm1162, %v6517, 0.0
        %v6527 = vsel %vm1163, %v6509, 0.0
        %v6528 = vsel %vm1162, %v6518, 0.0
        %v6529 = vsel %vm1163, %v6510, 0.0
        %v6530 = vsel %vm1162, %v6519, 0.0
        %v6531 = vsel %vm1163, %v6511, 0.0
        %v6532 = vsel %vm1162, %v6520, 0.0
        %v6533 = vsel %vm1163, %v6512, 0.0
        %v6534 = vsel %vm1162, %v6521, 0.0
        %v6535 = vsel %vm1163, %v6513, 0.0
        %v6536 = vsel %vm1162, %v6522, 0.0
        %v6537 = vsel %vm1163, %v6514, 0.0
        %v6538 = vsel %vm1162, %v6523, 0.0
        %v6539 = vsel %vm1163, %v6515, 0.0
        %s6540 = scalar_lea.vmem [#allocation2], 480
        %v6541 = vld [vmem:[%s6540] sm:$0xff]
        %v6542 = vld [vmem:[%s6540 + $0x8] sm:$0xff]
        %v6543 = vld [vmem:[%s6540 + $0x10] sm:$0xff]
        %v6544 = vld [vmem:[%s6540 + $0x18] sm:$0xff]
        %v6546 = vsel %vm1523, %v6541, 0
        %v6549 = vsel %vm1523, %v6542, 0
        %v6552 = vsel %vm1523, %v6543, 0
        %v6555 = vsel %vm1523, %v6544, 0
        %6557 = vmatprep.subr.mxu0 %v6525
        %6558 = vmatpush1.msra.mxu0 %v6524
        %6559 = vmatprep.subr.mxu0 %v6527
        %6560 = vmatpush1.msra.mxu0 %v6526
        %6561 = vmatprep.subr.mxu0 %v6529
        %6562 = vmatpush1.msra.mxu0 %v6528
        %6563 = vmatprep.subr.mxu0 %v6531
        %6564 = vmatpush1.msra.mxu0 %v6530
        %6565 = vmatprep.subr.mxu0 0.0
        %6566 = vmatpush1.msra.mxu0 0.0
        %6567 = vmatprep.subr.mxu0 0.0
        %6568 = vmatpush1.msra.mxu0 0.0
        %6569 = vmatprep.subr.mxu0 0.0
        %6570 = vmatpush1.msra.mxu0 0.0
        %6571 = vmatprep.subr.mxu0 0.0
        %6572 = vmatpush1.msra.mxu0 0.0
        %6573 = vmatprep.subr.mxu0 0.0
        %6574 = vmatpush1.msra.mxu0 0.0
        %6575 = vmatprep.subr.mxu0 0.0
        %6576 = vmatpush1.msra.mxu0 0.0
        %6577 = vmatprep.subr.mxu0 0.0
        %6578 = vmatpush1.msra.mxu0 0.0
        %6579 = vmatprep.subr.mxu0 0.0
        %6580 = vmatpush1.msra.mxu0 0.0
        %6581 = vmatprep.subr.mxu0 0.0
        %6582 = vmatpush1.msra.mxu0 0.0
        %6583 = vmatprep.subr.mxu0 0.0
        %6584 = vmatpush1.msra.mxu0 0.0
        %6585 = vmatprep.subr.mxu0 0.0
        %6586 = vmatpush1.msra.mxu0 0.0
        %6587 = vmatprep.subr.mxu0 0.0
        %6588 = vmatpush1.msra.mxu0 0.0
        %6589 = vmatprep.subr.mxu0 0.0
        %6590 = vmatpush1.msra.mxu0 0.0
        %6591 = vmatprep.subr.mxu0 0.0
        %6592 = vmatpush1.msra.mxu0 0.0
        %6593 = vmatprep.subr.mxu0 0.0
        %6594 = vmatpush1.msra.mxu0 0.0
        %6595 = vmatprep.subr.mxu0 0.0
        %6596 = vmatpush1.msra.mxu0 0.0
        %6597 = vmatprep.subr.mxu0 0.0
        %6598 = vmatpush1.msra.mxu0 0.0
        %6599 = vmatprep.subr.mxu0 0.0
        %6600 = vmatpush1.msra.mxu0 0.0
        %6601 = vmatprep.subr.mxu0 0.0
        %6602 = vmatpush1.msra.mxu0 0.0
        %6603 = vmatprep.subr.mxu0 0.0
        %6604 = vmatpush1.msra.mxu0 0.0
        %6605 = vmatprep.subr.mxu0 0.0
        %6606 = vmatpush1.msra.mxu0 0.0
        %6607 = vmatprep.subr.mxu0 0.0
        %6608 = vmatpush1.msra.mxu0 0.0
        %6609 = vmatprep.subr.mxu0 0.0
        %6610 = vmatpush1.msra.mxu0 0.0
        %6611 = vmatprep.subr.mxu0 0.0
        %6612 = vmatpush1.msra.mxu0 0.0
        %6613 = vmatprep.subr.mxu0 0.0
        %6614 = vmatpush1.msra.mxu0 0.0
        %6615 = vmatprep.subr.mxu0 0.0
        %6616 = vmatpush1.msra.mxu0 0.0
        %6617 = vmatprep.subr.mxu0 0.0
        %6618 = vmatpush1.msra.mxu0 0.0
        %6619 = vmatprep.subr.mxu0 0.0
        %6620 = vmatpush1.msra.mxu0 0.0
        %6621 = vmatprep.mubr.f32.mxu0 0.0
        %6622 = vmatmul.mubr.f32.gmra.mrb[0].mxu0 %v6546
        %v6623 = vpop.f32.mrb[0].mxu0
        %v6624 = vadd.f32 0.0, %v6623
        %v6625 = vpop.f32.mrb[0].mxu0
        %v6626 = vadd.f32 0.0, %v6625
        %6627 = vmatprep.mubr.f32.mxu0 0.0
        %6628 = vmatmul.mubr.f32.gmra.mrb[0].mxu0 %v6549
        %v6629 = vpop.f32.mrb[0].mxu0
        %v6630 = vadd.f32 0.0, %v6629
        %v6631 = vpop.f32.mrb[0].mxu0
        %v6632 = vadd.f32 0.0, %v6631
        %6633 = vmatprep.mubr.f32.mxu0 0.0
        %6634 = vmatmul.mubr.f32.gmra.mrb[0].mxu0 %v6552
        %v6635 = vpop.f32.mrb[0].mxu0
        %v6636 = vadd.f32 0.0, %v6635
        %v6637 = vpop.f32.mrb[0].mxu0
        %v6638 = vadd.f32 0.0, %v6637
        %6639 = vmatprep.mubr.f32.mxu0 0.0
        %6640 = vmatmul.mubr.f32.gmra.mrb[0].mxu0 %v6555
        %v6641 = vpop.f32.mrb[0].mxu0
        %v6642 = vadd.f32 0.0, %v6641
        %v6643 = vpop.f32.mrb[0].mxu0
        %v6644 = vadd.f32 0.0, %v6643
        %6645 = vdwg.mxu0
        %v6646 = vadd.f32 %v6307, %v6624
        %v6647 = vadd.f32 %v6308, %v6626
        %v6648 = vadd.f32 %v6309, %v6630
        %v6649 = vadd.f32 %v6310, %v6632
        %v6650 = vadd.f32 %v6311, %v6636
        %v6651 = vadd.f32 %v6312, %v6638
        %v6652 = vadd.f32 %v6313, %v6642
        %v6653 = vadd.f32 %v6314, %v6644
        %6654 = vmatprep.subr.mxu0 %v6533
        %6655 = vmatpush1.msra.mxu0 %v6532
        %6656 = vmatprep.subr.mxu0 %v6535
        %6657 = vmatpush1.msra.mxu0 %v6534
        %6658 = vmatprep.subr.mxu0 %v6537
        %6659 = vmatpush1.msra.mxu0 %v6536
        %6660 = vmatprep.subr.mxu0 %v6539
        %6661 = vmatpush1.msra.mxu0 %v6538
        %6662 = vmatprep.subr.mxu0 0.0
        %6663 = vmatpush1.msra.mxu0 0.0
        %6664 = vmatprep.subr.mxu0 0.0
        %6665 = vmatpush1.msra.mxu0 0.0
        %6666 = vmatprep.subr.mxu0 0.0
        %6667 = vmatpush1.msra.mxu0 0.0
        %6668 = vmatprep.subr.mxu0 0.0
        %6669 = vmatpush1.msra.mxu0 0.0
        %6670 = vmatprep.subr.mxu0 0.0
        %6671 = vmatpush1.msra.mxu0 0.0
        %6672 = vmatprep.subr.mxu0 0.0
        %6673 = vmatpush1.msra.mxu0 0.0
        %6674 = vmatprep.subr.mxu0 0.0
        %6675 = vmatpush1.msra.mxu0 0.0
        %6676 = vmatprep.subr.mxu0 0.0
        %6677 = vmatpush1.msra.mxu0 0.0
        %6678 = vmatprep.subr.mxu0 0.0
        %6679 = vmatpush1.msra.mxu0 0.0
        %6680 = vmatprep.subr.mxu0 0.0
        %6681 = vmatpush1.msra.mxu0 0.0
        %6682 = vmatprep.subr.mxu0 0.0
        %6683 = vmatpush1.msra.mxu0 0.0
        %6684 = vmatprep.subr.mxu0 0.0
        %6685 = vmatpush1.msra.mxu0 0.0
        %6686 = vmatprep.subr.mxu0 0.0
        %6687 = vmatpush1.msra.mxu0 0.0
        %6688 = vmatprep.subr.mxu0 0.0
        %6689 = vmatpush1.msra.mxu0 0.0
        %6690 = vmatprep.subr.mxu0 0.0
        %6691 = vmatpush1.msra.mxu0 0.0
        %6692 = vmatprep.subr.mxu0 0.0
        %6693 = vmatpush1.msra.mxu0 0.0
        %6694 = vmatprep.subr.mxu0 0.0
        %6695 = vmatpush1.msra.mxu0 0.0
        %6696 = vmatprep.subr.mxu0 0.0
        %6697 = vmatpush1.msra.mxu0 0.0
        %6698 = vmatprep.subr.mxu0 0.0
        %6699 = vmatpush1.msra.mxu0 0.0
        %6700 = vmatprep.subr.mxu0 0.0
        %6701 = vmatpush1.msra.mxu0 0.0
        %6702 = vmatprep.subr.mxu0 0.0
        %6703 = vmatpush1.msra.mxu0 0.0
        %6704 = vmatprep.subr.mxu0 0.0
        %6705 = vmatpush1.msra.mxu0 0.0
        %6706 = vmatprep.subr.mxu0 0.0
        %6707 = vmatpush1.msra.mxu0 0.0
        %6708 = vmatprep.subr.mxu0 0.0
        %6709 = vmatpush1.msra.mxu0 0.0
        %6710 = vmatprep.subr.mxu0 0.0
        %6711 = vmatpush1.msra.mxu0 0.0
        %6712 = vmatprep.subr.mxu0 0.0
        %6713 = vmatpush1.msra.mxu0 0.0
        %6714 = vmatprep.subr.mxu0 0.0
        %6715 = vmatpush1.msra.mxu0 0.0
        %6716 = vmatprep.subr.mxu0 0.0
        %6717 = vmatpush1.msra.mxu0 0.0
        %6718 = vmatprep.mubr.f32.mxu0 0.0
        %6719 = vmatmul.mubr.f32.gmra.mrb[0].mxu0 %v6546
        %v6720 = vpop.f32.mrb[0].mxu0
        %v6721 = vadd.f32 0.0, %v6720
        %v6722 = vpop.f32.mrb[0].mxu0
        %v6723 = vadd.f32 0.0, %v6722
        %6724 = vmatprep.mubr.f32.mxu0 0.0
        %6725 = vmatmul.mubr.f32.gmra.mrb[0].mxu0 %v6549
        %v6726 = vpop.f32.mrb[0].mxu0
        %v6727 = vadd.f32 0.0, %v6726
        %v6728 = vpop.f32.mrb[0].mxu0
        %v6729 = vadd.f32 0.0, %v6728
        %6730 = vmatprep.mubr.f32.mxu0 0.0
        %6731 = vmatmul.mubr.f32.gmra.mrb[0].mxu0 %v6552
        %v6732 = vpop.f32.mrb[0].mxu0
        %v6733 = vadd.f32 0.0, %v6732
        %v6734 = vpop.f32.mrb[0].mxu0
        %v6735 = vadd.f32 0.0, %v6734
        %6736 = vmatprep.mubr.f32.mxu0 0.0
        %6737 = vmatmul.mubr.f32.gmra.mrb[0].mxu0 %v6555
        %v6738 = vpop.f32.mrb[0].mxu0
        %v6739 = vadd.f32 0.0, %v6738
        %v6740 = vpop.f32.mrb[0].mxu0
        %v6741 = vadd.f32 0.0, %v6740
        %6742 = vdwg.mxu0
        %v6743 = vadd.f32 %v6404, %v6721
        %v6744 = vadd.f32 %v6405, %v6723
        %v6745 = vadd.f32 %v6406, %v6727
        %v6746 = vadd.f32 %v6407, %v6729
        %v6747 = vadd.f32 %v6408, %v6733
        %v6748 = vadd.f32 %v6409, %v6735
        %v6749 = vadd.f32 %v6410, %v6739
        %v6750 = vadd.f32 %v6411, %v6741
        %s6751 = scalar_lea.vmem [#allocation2], 512
        %v6752 = vld [vmem:[%s6751] sm:$0xff]
        %v6753 = vld [vmem:[%s6751 + $0x8] sm:$0xff]
        %v6754 = vld [vmem:[%s6751 + $0x10] sm:$0xff]
        %v6755 = vld [vmem:[%s6751 + $0x18] sm:$0xff]
        %v6757 = vsel %vm1523, %v6752, 0
        %v6760 = vsel %vm1523, %v6753, 0
        %v6763 = vsel %vm1523, %v6754, 0
        %v6766 = vsel %vm1523, %v6755, 0
        %6768 = vmatprep.subr.mxu0 %v6461
        %6769 = vmatpush1.msra.mxu0 %v6460
        %6770 = vmatprep.subr.mxu0 %v6463
        %6771 = vmatpush1.msra.mxu0 %v6462
        %6772 = vmatprep.subr.mxu0 %v6465
        %6773 = vmatpush1.msra.mxu0 %v6464
        %6774 = vmatprep.subr.mxu0 %v6467
        %6775 = vmatpush1.msra.mxu0 %v6466
        %6776 = vmatprep.subr.mxu0 0.0
        %6777 = vmatpush1.msra.mxu0 0.0
        %6778 = vmatprep.subr.mxu0 0.0
        %6779 = vmatpush1.msra.mxu0 0.0
        %6780 = vmatprep.subr.mxu0 0.0
        %6781 = vmatpush1.msra.mxu0 0.0
        %6782 = vmatprep.subr.mxu0 0.0
        %6783 = vmatpush1.msra.mxu0 0.0
        %6784 = vmatprep.subr.mxu0 0.0
        %6785 = vmatpush1.msra.mxu0 0.0
        %6786 = vmatprep.subr.mxu0 0.0
        %6787 = vmatpush1.msra.mxu0 0.0
        %6788 = vmatprep.subr.mxu0 0.0
        %6789 = vmatpush1.msra.mxu0 0.0
        %6790 = vmatprep.subr.mxu0 0.0
        %6791 = vmatpush1.msra.mxu0 0.0
        %6792 = vmatprep.subr.mxu0 0.0
        %6793 = vmatpush1.msra.mxu0 0.0
        %6794 = vmatprep.subr.mxu0 0.0
        %6795 = vmatpush1.msra.mxu0 0.0
        %6796 = vmatprep.subr.mxu0 0.0
        %6797 = vmatpush1.msra.mxu0 0.0
        %6798 = vmatprep.subr.mxu0 0.0
        %6799 = vmatpush1.msra.mxu0 0.0
        %6800 = vmatprep.subr.mxu0 0.0
        %6801 = vmatpush1.msra.mxu0 0.0
        %6802 = vmatprep.subr.mxu0 0.0
        %6803 = vmatpush1.msra.mxu0 0.0
        %6804 = vmatprep.subr.mxu0 0.0
        %6805 = vmatpush1.msra.mxu0 0.0
        %6806 = vmatprep.subr.mxu0 0.0
        %6807 = vmatpush1.msra.mxu0 0.0
        %6808 = vmatprep.subr.mxu0 0.0
        %6809 = vmatpush1.msra.mxu0 0.0
        %6810 = vmatprep.subr.mxu0 0.0
        %6811 = vmatpush1.msra.mxu0 0.0
        %6812 = vmatprep.subr.mxu0 0.0
        %6813 = vmatpush1.msra.mxu0 0.0
        %6814 = vmatprep.subr.mxu0 0.0
        %6815 = vmatpush1.msra.mxu0 0.0
        %6816 = vmatprep.subr.mxu0 0.0
        %6817 = vmatpush1.msra.mxu0 0.0
        %6818 = vmatprep.subr.mxu0 0.0
        %6819 = vmatpush1.msra.mxu0 0.0
        %6820 = vmatprep.subr.mxu0 0.0
        %6821 = vmatpush1.msra.mxu0 0.0
        %6822 = vmatprep.subr.mxu0 0.0
        %6823 = vmatpush1.msra.mxu0 0.0
        %6824 = vmatprep.subr.mxu0 0.0
        %6825 = vmatpush1.msra.mxu0 0.0
        %6826 = vmatprep.subr.mxu0 0.0
        %6827 = vmatpush1.msra.mxu0 0.0
        %6828 = vmatprep.subr.mxu0 0.0
        %6829 = vmatpush1.msra.mxu0 0.0
        %6830 = vmatprep.subr.mxu0 0.0
        %6831 = vmatpush1.msra.mxu0 0.0
        %6832 = vmatprep.mubr.f32.mxu0 0.0
        %6833 = vmatmul.mubr.f32.gmra.mrb[0].mxu0 %v6757
        %v6834 = vpop.f32.mrb[0].mxu0
        %v6835 = vadd.f32 0.0, %v6834
        %v6836 = vpop.f32.mrb[0].mxu0
        %v6837 = vadd.f32 0.0, %v6836
        %6838 = vmatprep.mubr.f32.mxu0 0.0
        %6839 = vmatmul.mubr.f32.gmra.mrb[0].mxu0 %v6760
        %v6840 = vpop.f32.mrb[0].mxu0
        %v6841 = vadd.f32 0.0, %v6840
        %v6842 = vpop.f32.mrb[0].mxu0
        %v6843 = vadd.f32 0.0, %v6842
        %6844 = vmatprep.mubr.f32.mxu0 0.0
        %6845 = vmatmul.mubr.f32.gmra.mrb[0].mxu0 %v6763
        %v6846 = vpop.f32.mrb[0].mxu0
        %v6847 = vadd.f32 0.0, %v6846
        %v6848 = vpop.f32.mrb[0].mxu0
        %v6849 = vadd.f32 0.0, %v6848
        %6850 = vmatprep.mubr.f32.mxu0 0.0
        %6851 = vmatmul.mubr.f32.gmra.mrb[0].mxu0 %v6766
        %v6852 = vpop.f32.mrb[0].mxu0
        %v6853 = vadd.f32 0.0, %v6852
        %v6854 = vpop.f32.mrb[0].mxu0
        %v6855 = vadd.f32 0.0, %v6854
        %6856 = vdwg.mxu0
        %v6857 = vadd.f32 %v6646, %v6835
        %v6858 = vadd.f32 %v6647, %v6837
        %v6859 = vadd.f32 %v6648, %v6841
        %v6860 = vadd.f32 %v6649, %v6843
        %v6861 = vadd.f32 %v6650, %v6847
        %v6862 = vadd.f32 %v6651, %v6849
        %v6863 = vadd.f32 %v6652, %v6853
        %v6864 = vadd.f32 %v6653, %v6855
        %6865 = vmatprep.subr.mxu0 %v6469
        %6866 = vmatpush1.msra.mxu0 %v6468
        %6867 = vmatprep.subr.mxu0 %v6471
        %6868 = vmatpush1.msra.mxu0 %v6470
        %6869 = vmatprep.subr.mxu0 %v6473
        %6870 = vmatpush1.msra.mxu0 %v6472
        %6871 = vmatprep.subr.mxu0 %v6475
        %6872 = vmatpush1.msra.mxu0 %v6474
        %6873 = vmatprep.subr.mxu0 0.0
        %6874 = vmatpush1.msra.mxu0 0.0
        %6875 = vmatprep.subr.mxu0 0.0
        %6876 = vmatpush1.msra.mxu0 0.0
        %6877 = vmatprep.subr.mxu0 0.0
        %6878 = vmatpush1.msra.mxu0 0.0
        %6879 = vmatprep.subr.mxu0 0.0
        %6880 = vmatpush1.msra.mxu0 0.0
        %6881 = vmatprep.subr.mxu0 0.0
        %6882 = vmatpush1.msra.mxu0 0.0
        %6883 = vmatprep.subr.mxu0 0.0
        %6884 = vmatpush1.msra.mxu0 0.0
        %6885 = vmatprep.subr.mxu0 0.0
        %6886 = vmatpush1.msra.mxu0 0.0
        %6887 = vmatprep.subr.mxu0 0.0
        %6888 = vmatpush1.msra.mxu0 0.0
        %6889 = vmatprep.subr.mxu0 0.0
        %6890 = vmatpush1.msra.mxu0 0.0
        %6891 = vmatprep.subr.mxu0 0.0
        %6892 = vmatpush1.msra.mxu0 0.0
        %6893 = vmatprep.subr.mxu0 0.0
        %6894 = vmatpush1.msra.mxu0 0.0
        %6895 = vmatprep.subr.mxu0 0.0
        %6896 = vmatpush1.msra.mxu0 0.0
        %6897 = vmatprep.subr.mxu0 0.0
        %6898 = vmatpush1.msra.mxu0 0.0
        %6899 = vmatprep.subr.mxu0 0.0
        %6900 = vmatpush1.msra.mxu0 0.0
        %6901 = vmatprep.subr.mxu0 0.0
        %6902 = vmatpush1.msra.mxu0 0.0
        %6903 = vmatprep.subr.mxu0 0.0
        %6904 = vmatpush1.msra.mxu0 0.0
        %6905 = vmatprep.subr.mxu0 0.0
        %6906 = vmatpush1.msra.mxu0 0.0
        %6907 = vmatprep.subr.mxu0 0.0
        %6908 = vmatpush1.msra.mxu0 0.0
        %6909 = vmatprep.subr.mxu0 0.0
        %6910 = vmatpush1.msra.mxu0 0.0
        %6911 = vmatprep.subr.mxu0 0.0
        %6912 = vmatpush1.msra.mxu0 0.0
        %6913 = vmatprep.subr.mxu0 0.0
        %6914 = vmatpush1.msra.mxu0 0.0
        %6915 = vmatprep.subr.mxu0 0.0
        %6916 = vmatpush1.msra.mxu0 0.0
        %6917 = vmatprep.subr.mxu0 0.0
        %6918 = vmatpush1.msra.mxu0 0.0
        %6919 = vmatprep.subr.mxu0 0.0
        %6920 = vmatpush1.msra.mxu0 0.0
        %6921 = vmatprep.subr.mxu0 0.0
        %6922 = vmatpush1.msra.mxu0 0.0
        %6923 = vmatprep.subr.mxu0 0.0
        %6924 = vmatpush1.msra.mxu0 0.0
        %6925 = vmatprep.subr.mxu0 0.0
        %6926 = vmatpush1.msra.mxu0 0.0
        %6927 = vmatprep.subr.mxu0 0.0
        %6928 = vmatpush1.msra.mxu0 0.0
        %6929 = vmatprep.mubr.f32.mxu0 0.0
        %6930 = vmatmul.mubr.f32.gmra.mrb[0].mxu0 %v6757
        %v6931 = vpop.f32.mrb[0].mxu0
        %v6932 = vadd.f32 0.0, %v6931
        %v6933 = vpop.f32.mrb[0].mxu0
        %v6934 = vadd.f32 0.0, %v6933
        %6935 = vmatprep.mubr.f32.mxu0 0.0
        %6936 = vmatmul.mubr.f32.gmra.mrb[0].mxu0 %v6760
        %v6937 = vpop.f32.mrb[0].mxu0
        %v6938 = vadd.f32 0.0, %v6937
        %v6939 = vpop.f32.mrb[0].mxu0
        %v6940 = vadd.f32 0.0, %v6939
        %6941 = vmatprep.mubr.f32.mxu0 0.0
        %6942 = vmatmul.mubr.f32.gmra.mrb[0].mxu0 %v6763
        %v6943 = vpop.f32.mrb[0].mxu0
        %v6944 = vadd.f32 0.0, %v6943
        %v6945 = vpop.f32.mrb[0].mxu0
        %v6946 = vadd.f32 0.0, %v6945
        %6947 = vmatprep.mubr.f32.mxu0 0.0
        %6948 = vmatmul.mubr.f32.gmra.mrb[0].mxu0 %v6766
        %v6949 = vpop.f32.mrb[0].mxu0
        %v6950 = vadd.f32 0.0, %v6949
        %v6951 = vpop.f32.mrb[0].mxu0
        %v6952 = vadd.f32 0.0, %v6951
        %6953 = vdwg.mxu0
        %v6954 = vadd.f32 %v6743, %v6932
        %v6955 = vadd.f32 %v6744, %v6934
        %v6956 = vadd.f32 %v6745, %v6938
        %v6957 = vadd.f32 %v6746, %v6940
        %v6958 = vadd.f32 %v6747, %v6944
        %v6959 = vadd.f32 %v6748, %v6946
        %v6960 = vadd.f32 %v6749, %v6950
        %v6961 = vadd.f32 %v6750, %v6952
        %6962 = vrot.lane.b32.xlu0 %v6460, 127
        %v6963 = vpop.permute.xlu0 %6962
        %6964 = vrot.lane.b32.xlu0 %v6462, 127
        %v6965 = vpop.permute.xlu0 %6964
        %6966 = vrot.lane.b32.xlu0 %v6464, 127
        %v6967 = vpop.permute.xlu0 %6966
        %6968 = vrot.lane.b32.xlu0 %v6466, 127
        %v6969 = vpop.permute.xlu0 %6968
        %6970 = vrot.lane.b32.xlu0 %v6468, 127
        %v6971 = vpop.permute.xlu0 %6970
        %6972 = vrot.lane.b32.xlu0 %v6470, 127
        %v6973 = vpop.permute.xlu0 %6972
        %6974 = vrot.lane.b32.xlu0 %v6472, 127
        %v6975 = vpop.permute.xlu0 %6974
        %6976 = vrot.lane.b32.xlu0 %v6474, 127
        %v6977 = vpop.permute.xlu0 %6976
        %6978 = vrot.lane.b32.xlu0 %v6461, 127
        %v6979 = vpop.permute.xlu0 %6978
        %6980 = vrot.lane.b32.xlu0 %v6463, 127
        %v6981 = vpop.permute.xlu0 %6980
        %6982 = vrot.lane.b32.xlu0 %v6465, 127
        %v6983 = vpop.permute.xlu0 %6982
        %6984 = vrot.lane.b32.xlu0 %v6467, 127
        %v6985 = vpop.permute.xlu0 %6984
        %6986 = vrot.lane.b32.xlu0 %v6469, 127
        %v6987 = vpop.permute.xlu0 %6986
        %6988 = vrot.lane.b32.xlu0 %v6471, 127
        %v6989 = vpop.permute.xlu0 %6988
        %6990 = vrot.lane.b32.xlu0 %v6473, 127
        %v6991 = vpop.permute.xlu0 %6990
        %6992 = vrot.lane.b32.xlu0 %v6475, 127
        %v6993 = vpop.permute.xlu0 %6992
        %v6994 = vsel %vm1228, %v6963, %v6979
        %v6995 = vsel %vm1228, %v6965, %v6981
        %v6996 = vsel %vm1228, %v6967, %v6983
        %v6997 = vsel %vm1228, %v6969, %v6985
        %v6998 = vsel %vm1228, %v6971, %v6987
        %v6999 = vsel %vm1228, %v6973, %v6989
        %v7000 = vsel %vm1228, %v6975, %v6991
        %v7001 = vsel %vm1228, %v6977, %v6993
        %v7002 = vsel %vm1228, %v6979, %v6963
        %v7003 = vsel %vm1228, %v6981, %v6965
        %v7004 = vsel %vm1228, %v6983, %v6967
        %v7005 = vsel %vm1228, %v6985, %v6969
        %v7006 = vsel %vm1228, %v6987, %v6971
        %v7007 = vsel %vm1228, %v6989, %v6973
        %v7008 = vsel %vm1228, %v6991, %v6975
        %v7009 = vsel %vm1228, %v6993, %v6977
        %v7010 = vsel %vm1249, %v6994, 0.0
        %v7011 = vsel %vm1250, %v7002, 0.0
        %v7012 = vsel %vm1249, %v6995, 0.0
        %v7013 = vsel %vm1250, %v7003, 0.0
        %v7014 = vsel %vm1249, %v6996, 0.0
        %v7015 = vsel %vm1250, %v7004, 0.0
        %v7016 = vsel %vm1249, %v6997, 0.0
        %v7017 = vsel %vm1250, %v7005, 0.0
        %v7018 = vsel %vm1249, %v6998, 0.0
        %v7019 = vsel %vm1250, %v7006, 0.0
        %v7020 = vsel %vm1249, %v6999, 0.0
        %v7021 = vsel %vm1250, %v7007, 0.0
        %v7022 = vsel %vm1249, %v7000, 0.0
        %v7023 = vsel %vm1250, %v7008, 0.0
        %v7024 = vsel %vm1249, %v7001, 0.0
        %v7025 = vsel %vm1250, %v7009, 0.0
        %s7026 = scalar_lea.vmem [#allocation2], 544
        %v7027 = vld [vmem:[%s7026] sm:$0xff]
        %v7028 = vld [vmem:[%s7026 + $0x8] sm:$0xff]
        %v7029 = vld [vmem:[%s7026 + $0x10] sm:$0xff]
        %v7030 = vld [vmem:[%s7026 + $0x18] sm:$0xff]
        %v7032 = vsel %vm1523, %v7027, 0
        %v7035 = vsel %vm1523, %v7028, 0
        %v7038 = vsel %vm1523, %v7029, 0
        %v7041 = vsel %vm1523, %v7030, 0
        %7043 = vmatprep.subr.mxu0 %v7011
        %7044 = vmatpush1.msra.mxu0 %v7010
        %7045 = vmatprep.subr.mxu0 %v7013
        %7046 = vmatpush1.msra.mxu0 %v7012
        %7047 = vmatprep.subr.mxu0 %v7015
        %7048 = vmatpush1.msra.mxu0 %v7014
        %7049 = vmatprep.subr.mxu0 %v7017
        %7050 = vmatpush1.msra.mxu0 %v7016
        %7051 = vmatprep.subr.mxu0 0.0
        %7052 = vmatpush1.msra.mxu0 0.0
        %7053 = vmatprep.subr.mxu0 0.0
        %7054 = vmatpush1.msra.mxu0 0.0
        %7055 = vmatprep.subr.mxu0 0.0
        %7056 = vmatpush1.msra.mxu0 0.0
        %7057 = vmatprep.subr.mxu0 0.0
        %7058 = vmatpush1.msra.mxu0 0.0
        %7059 = vmatprep.subr.mxu0 0.0
        %7060 = vmatpush1.msra.mxu0 0.0
        %7061 = vmatprep.subr.mxu0 0.0
        %7062 = vmatpush1.msra.mxu0 0.0
        %7063 = vmatprep.subr.mxu0 0.0
        %7064 = vmatpush1.msra.mxu0 0.0
        %7065 = vmatprep.subr.mxu0 0.0
        %7066 = vmatpush1.msra.mxu0 0.0
        %7067 = vmatprep.subr.mxu0 0.0
        %7068 = vmatpush1.msra.mxu0 0.0
        %7069 = vmatprep.subr.mxu0 0.0
        %7070 = vmatpush1.msra.mxu0 0.0
        %7071 = vmatprep.subr.mxu0 0.0
        %7072 = vmatpush1.msra.mxu0 0.0
        %7073 = vmatprep.subr.mxu0 0.0
        %7074 = vmatpush1.msra.mxu0 0.0
        %7075 = vmatprep.subr.mxu0 0.0
        %7076 = vmatpush1.msra.mxu0 0.0
        %7077 = vmatprep.subr.mxu0 0.0
        %7078 = vmatpush1.msra.mxu0 0.0
        %7079 = vmatprep.subr.mxu0 0.0
        %7080 = vmatpush1.msra.mxu0 0.0
        %7081 = vmatprep.subr.mxu0 0.0
        %7082 = vmatpush1.msra.mxu0 0.0
        %7083 = vmatprep.subr.mxu0 0.0
        %7084 = vmatpush1.msra.mxu0 0.0
        %7085 = vmatprep.subr.mxu0 0.0
        %7086 = vmatpush1.msra.mxu0 0.0
        %7087 = vmatprep.subr.mxu0 0.0
        %7088 = vmatpush1.msra.mxu0 0.0
        %7089 = vmatprep.subr.mxu0 0.0
        %7090 = vmatpush1.msra.mxu0 0.0
        %7091 = vmatprep.subr.mxu0 0.0
        %7092 = vmatpush1.msra.mxu0 0.0
        %7093 = vmatprep.subr.mxu0 0.0
        %7094 = vmatpush1.msra.mxu0 0.0
        %7095 = vmatprep.subr.mxu0 0.0
        %7096 = vmatpush1.msra.mxu0 0.0
        %7097 = vmatprep.subr.mxu0 0.0
        %7098 = vmatpush1.msra.mxu0 0.0
        %7099 = vmatprep.subr.mxu0 0.0
        %7100 = vmatpush1.msra.mxu0 0.0
        %7101 = vmatprep.subr.mxu0 0.0
        %7102 = vmatpush1.msra.mxu0 0.0
        %7103 = vmatprep.subr.mxu0 0.0
        %7104 = vmatpush1.msra.mxu0 0.0
        %7105 = vmatprep.subr.mxu0 0.0
        %7106 = vmatpush1.msra.mxu0 0.0
        %7107 = vmatprep.mubr.f32.mxu0 0.0
        %7108 = vmatmul.mubr.f32.gmra.mrb[0].mxu0 %v7032
        %v7109 = vpop.f32.mrb[0].mxu0
        %v7110 = vadd.f32 0.0, %v7109
        %v7111 = vpop.f32.mrb[0].mxu0
        %v7112 = vadd.f32 0.0, %v7111
        %7113 = vmatprep.mubr.f32.mxu0 0.0
        %7114 = vmatmul.mubr.f32.gmra.mrb[0].mxu0 %v7035
        %v7115 = vpop.f32.mrb[0].mxu0
        %v7116 = vadd.f32 0.0, %v7115
        %v7117 = vpop.f32.mrb[0].mxu0
        %v7118 = vadd.f32 0.0, %v7117
        %7119 = vmatprep.mubr.f32.mxu0 0.0
        %7120 = vmatmul.mubr.f32.gmra.mrb[0].mxu0 %v7038
        %v7121 = vpop.f32.mrb[0].mxu0
        %v7122 = vadd.f32 0.0, %v7121
        %v7123 = vpop.f32.mrb[0].mxu0
        %v7124 = vadd.f32 0.0, %v7123
        %7125 = vmatprep.mubr.f32.mxu0 0.0
        %7126 = vmatmul.mubr.f32.gmra.mrb[0].mxu0 %v7041
        %v7127 = vpop.f32.mrb[0].mxu0
        %v7128 = vadd.f32 0.0, %v7127
        %v7129 = vpop.f32.mrb[0].mxu0
        %v7130 = vadd.f32 0.0, %v7129
        %7131 = vdwg.mxu0
        %v7132 = vadd.f32 %v6857, %v7110
        %v7133 = vadd.f32 %v6858, %v7112
        %v7134 = vadd.f32 %v6859, %v7116
        %v7135 = vadd.f32 %v6860, %v7118
        %v7136 = vadd.f32 %v6861, %v7122
        %v7137 = vadd.f32 %v6862, %v7124
        %v7138 = vadd.f32 %v6863, %v7128
        %v7139 = vadd.f32 %v6864, %v7130
        %7140 = vmatprep.subr.mxu0 %v7019
        %7141 = vmatpush1.msra.mxu0 %v7018
        %7142 = vmatprep.subr.mxu0 %v7021
        %7143 = vmatpush1.msra.mxu0 %v7020
        %7144 = vmatprep.subr.mxu0 %v7023
        %7145 = vmatpush1.msra.mxu0 %v7022
        %7146 = vmatprep.subr.mxu0 %v7025
        %7147 = vmatpush1.msra.mxu0 %v7024
        %7148 = vmatprep.subr.mxu0 0.0
        %7149 = vmatpush1.msra.mxu0 0.0
        %7150 = vmatprep.subr.mxu0 0.0
        %7151 = vmatpush1.msra.mxu0 0.0
        %7152 = vmatprep.subr.mxu0 0.0
        %7153 = vmatpush1.msra.mxu0 0.0
        %7154 = vmatprep.subr.mxu0 0.0
        %7155 = vmatpush1.msra.mxu0 0.0
        %7156 = vmatprep.subr.mxu0 0.0
        %7157 = vmatpush1.msra.mxu0 0.0
        %7158 = vmatprep.subr.mxu0 0.0
        %7159 = vmatpush1.msra.mxu0 0.0
        %7160 = vmatprep.subr.mxu0 0.0
        %7161 = vmatpush1.msra.mxu0 0.0
        %7162 = vmatprep.subr.mxu0 0.0
        %7163 = vmatpush1.msra.mxu0 0.0
        %7164 = vmatprep.subr.mxu0 0.0
        %7165 = vmatpush1.msra.mxu0 0.0
        %7166 = vmatprep.subr.mxu0 0.0
        %7167 = vmatpush1.msra.mxu0 0.0
        %7168 = vmatprep.subr.mxu0 0.0
        %7169 = vmatpush1.msra.mxu0 0.0
        %7170 = vmatprep.subr.mxu0 0.0
        %7171 = vmatpush1.msra.mxu0 0.0
        %7172 = vmatprep.subr.mxu0 0.0
        %7173 = vmatpush1.msra.mxu0 0.0
        %7174 = vmatprep.subr.mxu0 0.0
        %7175 = vmatpush1.msra.mxu0 0.0
        %7176 = vmatprep.subr.mxu0 0.0
        %7177 = vmatpush1.msra.mxu0 0.0
        %7178 = vmatprep.subr.mxu0 0.0
        %7179 = vmatpush1.msra.mxu0 0.0
        %7180 = vmatprep.subr.mxu0 0.0
        %7181 = vmatpush1.msra.mxu0 0.0
        %7182 = vmatprep.subr.mxu0 0.0
        %7183 = vmatpush1.msra.mxu0 0.0
        %7184 = vmatprep.subr.mxu0 0.0
        %7185 = vmatpush1.msra.mxu0 0.0
        %7186 = vmatprep.subr.mxu0 0.0
        %7187 = vmatpush1.msra.mxu0 0.0
        %7188 = vmatprep.subr.mxu0 0.0
        %7189 = vmatpush1.msra.mxu0 0.0
        %7190 = vmatprep.subr.mxu0 0.0
        %7191 = vmatpush1.msra.mxu0 0.0
        %7192 = vmatprep.subr.mxu0 0.0
        %7193 = vmatpush1.msra.mxu0 0.0
        %7194 = vmatprep.subr.mxu0 0.0
        %7195 = vmatpush1.msra.mxu0 0.0
        %7196 = vmatprep.subr.mxu0 0.0
        %7197 = vmatpush1.msra.mxu0 0.0
        %7198 = vmatprep.subr.mxu0 0.0
        %7199 = vmatpush1.msra.mxu0 0.0
        %7200 = vmatprep.subr.mxu0 0.0
        %7201 = vmatpush1.msra.mxu0 0.0
        %7202 = vmatprep.subr.mxu0 0.0
        %7203 = vmatpush1.msra.mxu0 0.0
        %7204 = vmatprep.mubr.f32.mxu0 0.0
        %7205 = vmatmul.mubr.f32.gmra.mrb[0].mxu0 %v7032
        %v7206 = vpop.f32.mrb[0].mxu0
        %v7207 = vadd.f32 0.0, %v7206
        %v7208 = vpop.f32.mrb[0].mxu0
        %v7209 = vadd.f32 0.0, %v7208
        %7210 = vmatprep.mubr.f32.mxu0 0.0
        %7211 = vmatmul.mubr.f32.gmra.mrb[0].mxu0 %v7035
        %v7212 = vpop.f32.mrb[0].mxu0
        %v7213 = vadd.f32 0.0, %v7212
        %v7214 = vpop.f32.mrb[0].mxu0
        %v7215 = vadd.f32 0.0, %v7214
        %7216 = vmatprep.mubr.f32.mxu0 0.0
        %7217 = vmatmul.mubr.f32.gmra.mrb[0].mxu0 %v7038
        %v7218 = vpop.f32.mrb[0].mxu0
        %v7219 = vadd.f32 0.0, %v7218
        %v7220 = vpop.f32.mrb[0].mxu0
        %v7221 = vadd.f32 0.0, %v7220
        %7222 = vmatprep.mubr.f32.mxu0 0.0
        %7223 = vmatmul.mubr.f32.gmra.mrb[0].mxu0 %v7041
        %v7224 = vpop.f32.mrb[0].mxu0
        %v7225 = vadd.f32 0.0, %v7224
        %v7226 = vpop.f32.mrb[0].mxu0
        %v7227 = vadd.f32 0.0, %v7226
        %7228 = vdwg.mxu0
        %v7229 = vadd.f32 %v6954, %v7207
        %v7230 = vadd.f32 %v6955, %v7209
        %v7231 = vadd.f32 %v6956, %v7213
        %v7232 = vadd.f32 %v6957, %v7215
        %v7233 = vadd.f32 %v6958, %v7219
        %v7234 = vadd.f32 %v6959, %v7221
        %v7235 = vadd.f32 %v6960, %v7225
        %v7236 = vadd.f32 %v6961, %v7227
        %v7237 = vadd.f32 %v3765, %v7132
        %v7238 = vadd.f32 %v3766, %v7133
        %v7239 = vadd.f32 %v3767, %v7134
        %v7240 = vadd.f32 %v3768, %v7135
        %v7241 = vadd.f32 %v3769, %v7136
        %v7242 = vadd.f32 %v3770, %v7137
        %v7243 = vadd.f32 %v3771, %v7138
        %v7244 = vadd.f32 %v3772, %v7139
        %v7245 = vadd.f32 %v3773, %v7229
        %v7246 = vadd.f32 %v3774, %v7230
        %v7247 = vadd.f32 %v3775, %v7231
        %v7248 = vadd.f32 %v3776, %v7232
        %v7249 = vadd.f32 %v3777, %v7233
        %v7250 = vadd.f32 %v3778, %v7234
        %v7251 = vadd.f32 %v3779, %v7235
        %v7252 = vadd.f32 %v3780, %v7236
        %7253 = vst [vmem:[%s199] sm:$0xff] %v7237
        %7254 = vst [vmem:[%s199 + $0x8] sm:$0xff] %v7238
        %7255 = vst [vmem:[%s199 + $0x10] sm:$0xff] %v7239
        %7256 = vst [vmem:[%s199 + $0x18] sm:$0xff] %v7240
        %7257 = vst [vmem:[%s199 + $0x20] sm:$0xff] %v7241
        %7258 = vst [vmem:[%s199 + $0x28] sm:$0xff] %v7242
        %7259 = vst [vmem:[%s199 + $0x30] sm:$0xff] %v7243
        %7260 = vst [vmem:[%s199 + $0x38] sm:$0xff] %v7244
        %7261 = vst [vmem:[%s199 + $0x40] sm:$0xff] %v7245
        %7262 = vst [vmem:[%s199 + $0x48] sm:$0xff] %v7246
        %7263 = vst [vmem:[%s199 + $0x50] sm:$0xff] %v7247
        %7264 = vst [vmem:[%s199 + $0x58] sm:$0xff] %v7248
        %7265 = vst [vmem:[%s199 + $0x60] sm:$0xff] %v7249
        %7266 = vst [vmem:[%s199 + $0x68] sm:$0xff] %v7250
        %7267 = vst [vmem:[%s199 + $0x70] sm:$0xff] %v7251
        %7268 = vst [vmem:[%s199 + $0x78] sm:$0xff] %v7252
        %s7269 = sand.u32 %s99, 1
        %s7270 = scalar_lea.sflag [#allocation4], %s7269
        %s7271 = sand.u32 %s99, 1
        %s7272 = smul.addr %s7271, 128
        %s7273 = scalar_lea.vmem [#allocation5], %s7272
        // Predicated region
        $region37: #{tpu_custom_call.1} parent=31 // pred_check
          %p7274 = pneg %p109
        $region38: #{tpu_custom_call.1} parent=31 // pred_check_branch
          %7276 = sbr.rel (%p7274) target = $region40
        $region39: #{tpu_custom_call.1} parent=31 // pred_region
          %s7277 = smul.u32 2, %s18
          %s7279 = ssub.s32 2048, 2048
          %7280 = vsyncadd %s7270, %s7279
          %s7281 = smul.addr %s7277, 8
          %s7282 = smul.addr %s7281, 128
          %s7283 = scalar_lea.hbm %s3, %s7282
          %s7284 = sshll.u32 %s7273, 4
          %s7285 = int_to_ptr.vmem [resolvable:$true] %s7284
          %7290 = dma.vmem_to_hbm [thread:$0]  %s7285, 2048, %s7283, %s7270, 256, 256, 16
        $region40: #{tpu_custom_call.1} parent=31 // pred_fallthru
          _
      $region32: #{tpu_custom_call.1} parent=5 // pred_fallthru
        _
      %p7291 = scmp.le.s32.totalorder 2, %s13
      // Predicated region
      $region41: #{tpu_custom_call.1} parent=5 // pred_check
        %p7292 = pneg %p7291
      $region42: #{tpu_custom_call.1} parent=5 // pred_check_branch
        %7294 = sbr.rel (%p7292) target = $region44
      $region43: #{tpu_custom_call.1} parent=5 // pred_region
        %s7295 = ssub.s32 %s13, 2
        // Predicated region
        $region45: #{tpu_custom_call.1} parent=43 // pred_check
          %p7296 = pneg %p115
        $region46: #{tpu_custom_call.1} parent=43 // pred_check_branch
          %7298 = sbr.rel (%p7296) target = $region48
        $region47: #{tpu_custom_call.1} parent=43 // pred_region
          %s7299 = sand.u32 %s100, 1
          %s7300 = scalar_lea.sflag [#allocation4], %s7299
          %s7301 = sand.u32 %s100, 1
          %s7302 = smul.addr %s7301, 128
          %s7303 = scalar_lea.vmem [#allocation5], %s7302
          %7304 = dma.done %s7300, 2048
        $region48: #{tpu_custom_call.1} parent=43 // pred_fallthru
          _
      $region44: #{tpu_custom_call.1} parent=5 // pred_fallthru
        _
    $region6: #{tpu_custom_call.1} parent=1 // loop_footer
      %s17 = sadd.s32 1, %s13
    $region7: #{tpu_custom_call.1} parent=1 // loop_footer_branch
      %12 = sbr.rel target = $region3
    $region8: #{tpu_custom_call.1} parent=1 // loop_exit
      _
    %7305 = vsyncpa [#allocation3], 1
    %s7306 = scalar_lea.sflag [#allocation3], 1
    %7307 = vsyncpa %s7306, 1
    %7308 = vsyncpa [#allocation4], 1
    %s7309 = scalar_lea.sflag [#allocation4], 1
    %7310 = vsyncpa %s7309, 1

</llo_original>
